<compile_context>
chip_gen: v6e
topology: v6e:2x2x1
jax: 0.10.0
libtpu: 0.0.40
codegen_flags: <defaults>
</compile_context>

<pallas_src>
import jax
import jax.numpy as jnp
from jax import lax
from jax.experimental import pallas as pl
from jax.experimental.pallas import tpu as pltpu

# "settings" (deterministic, in-script)
B = 2                    # batch of meshes / poses
H = 64                   # settings.IMAGE_HEIGHT / CROP_SIZE[1]
W = 64                   # settings.IMAGE_WIDTH  / CROP_SIZE[0]
HW = H * W               # 4096 pixels per image
WP = 128                 # lane-dense tile width (full vreg lane width)
HP = HW // WP            # 32 sublane rows per image
NUM_FACES = 12           # cube mesh
FACE_STRIDE = 12         # packed floats per face: [A0,B0,C0,A1,B1,C1,Az,Bz,Cz,r,g,b]
FX = 64.0
FY = 64.0
CX = W / 2.0
CY = H / 2.0
BIG = 1e9


def _tensorcores_per_chip() -> int:
    """Best-effort TC-per-chip detection; falls back to 1 (batch folding)."""
    try:
        kind = jax.devices()[0].device_kind.lower()
    except Exception:
        return 1
    # dual-TC / megacore chips: v4, v5p, v7x.  v5e / v6e are single-TC.
    return 2 if any(tag in kind for tag in ("v4", "v5p", "v7", "7x")) else 1


def _make_raster_kernel(bb):
    """Kernel factory. One grid step renders `bb` batch elements.

    face_ref : SMEM 1D (B * NUM_FACES * FACE_STRIDE,) packed per-face scalars
               (affine barycentric / z-plane coefficients + flat-shaded RGB,
               face validity folded into the w0 plane).
    out_ref  : VMEM (bb, 5, HP, WP) = [r, g, b, depth, mask] planes.
    """
    def kernel(face_ref, out_ref):
        g = pl.program_id(0)

        # lane-dense pixel coordinates, computed once per grid step.
        # flat pixel index p = r*WP + c ; with W=64, WP=128:
        #   y = p // W = 2*r + (c >> 6),  x = p % W = c & 63
        r = lax.broadcasted_iota(jnp.int32, (HP, WP), 0)
        c = lax.broadcasted_iota(jnp.int32, (HP, WP), 1)
        yi = (r << 1) + (c >> 6)
        xi = c & (W - 1)
        xs = xi.astype(jnp.float32) + 0.5
        ys = yi.astype(jnp.float32) + 0.5

        for i in range(bb):                      # static unroll over folded batch
            b = g * bb + i

            def face_body(f, carry):
                zbuf, fid, msk = carry
                base = (b * NUM_FACES + f) * FACE_STRIDE
                a0 = face_ref[base + 0]
                b0 = face_ref[base + 1]
                c0 = face_ref[base + 2]
                a1 = face_ref[base + 3]
                b1 = face_ref[base + 4]
                c1 = face_ref[base + 5]
                az = face_ref[base + 6]
                bz = face_ref[base + 7]
                cz = face_ref[base + 8]

                # affine barycentric weights and z plane (inv_area pre-folded)
                w0 = a0 * xs + b0 * ys + c0
                w1 = a1 * xs + b1 * ys + c1
                w2 = 1.0 - w0 - w1
                z = az * xs + bz * ys + cz

                # invalid / degenerate / behind-camera faces: w0 == -1 everywhere
                inside = (w0 >= 0.0) & (w1 >= 0.0) & (w2 >= 0.0)
                hit = inside & (z < zbuf)

                zbuf = jnp.where(hit, z, zbuf)
                fid = jnp.where(hit, f, fid)
                msk = jnp.where(inside, 1.0, msk)
                return zbuf, fid, msk

            init = (jnp.full((HP, WP), BIG, jnp.float32),   # z-buffer
                    jnp.full((HP, WP), -1, jnp.int32),      # winning face id
                    jnp.zeros((HP, WP), jnp.float32))       # silhouette
            zbuf, fid, msk = lax.fori_loop(0, NUM_FACES, face_body, init,
                                           unroll=True)

            # resolve RGB from the winning face id (background = white,
            # matching pytorch3d's default blend background).
            def color_body(f, carry):
                cr, cg, cb = carry
                base = (b * NUM_FACES + f) * FACE_STRIDE
                sel = fid == f
                cr = jnp.where(sel, face_ref[base + 9], cr)
                cg = jnp.where(sel, face_ref[base + 10], cg)
                cb = jnp.where(sel, face_ref[base + 11], cb)
                return cr, cg, cb

            cinit = (jnp.ones((HP, WP), jnp.float32),
                     jnp.ones((HP, WP), jnp.float32),
                     jnp.ones((HP, WP), jnp.float32))
            cr, cg, cb = lax.fori_loop(0, NUM_FACES, color_body, cinit,
                                       unroll=True)

            out_ref[i, 0] = cr
            out_ref[i, 1] = cg
            out_ref[i, 2] = cb
            out_ref[i, 3] = jnp.where(zbuf > BIG * 0.5, -1.0, zbuf)  # -1 bg like pytorch3d zbuf
            out_ref[i, 4] = msk

    return kernel


def drender_forward(verts, faces, R, T, base_colors):
    """verts (V,3), faces (F,3) int32, R (B,3,3), T (B,3), base_colors (B,3).

    Returns (rendered_image (B,H,W,3), rendered_depth (B,H,W,1),
             rendered_mask (B,H,W,1)) — same as DRender.forward.
    """
    # camera transform, PyTorch3D row-vector convention: X_cam = X_world @ R + T
    v_cam = jnp.einsum("vj,bjk->bvk", verts, R) + T[:, None, :]        # (B,V,3)
    fv = v_cam[:, faces, :]                                            # (B,F,3,3)
    zv = fv[..., 2]                                                    # (B,F,3)
    z_safe = jnp.where(zv > 1e-3, zv, 1.0)                             # NaN-free projection
    x_pix = FX * fv[..., 0] / z_safe + CX
    y_pix = FY * fv[..., 1] / z_safe + CY
    # TODO(synk): PyTorch3D NDC convention (+Y up / +X left) and perspective-
    # correct barycentric z are not applied; images may be mirrored and depth
    # is screen-space interpolated (matches perspective_correct=False).

    # flat phong (Lambert + ambient) per face, light pointing toward camera
    e1 = fv[:, :, 1, :] - fv[:, :, 0, :]
    e2 = fv[:, :, 2, :] - fv[:, :, 0, :]
    n = jnp.cross(e1, e2)
    n = n / (jnp.linalg.norm(n, axis=-1, keepdims=True) + 1e-8)
    light = jnp.array([0.0, 0.0, -1.0], jnp.float32)
    shade = 0.3 + 0.7 * jnp.abs(n @ light)                             # (B,F)
    rgb = (base_colors[:, None, :] * shade[..., None]).astype(jnp.float32)

    # affine edge-function / z-plane coefficients per face (inv_area folded in)
    x0, x1, x2 = x_pix[..., 0], x_pix[..., 1], x_pix[..., 2]
    y0, y1, y2 = y_pix[..., 0], y_pix[..., 1], y_pix[..., 2]
    z0, z1, z2 = zv[..., 0], zv[..., 1], zv[..., 2]

    area = (x1 - x0) * (y2 - y0) - (x2 - x0) * (y1 - y0)
    good = (jnp.abs(area) > 1e-8) & jnp.all(zv > 1e-3, axis=-1)        # (B,F)
    inv_area = 1.0 / jnp.where(jnp.abs(area) > 1e-8, area, 1.0)

    A0 = (y1 - y2) * inv_area
    B0 = (x2 - x1) * inv_area
    C0 = (x1 * y2 - x2 * y1) * inv_area
    A1 = (y2 - y0) * inv_area
    B1 = (x0 - x2) * inv_area
    C1 = (x2 * y0 - x0 * y2) * inv_area
    # z = w0*z0 + w1*z1 + (1-w0-w1)*z2  → affine in (x, y)
    Az = A0 * (z0 - z2) + A1 * (z1 - z2)
    Bz = B0 * (z0 - z2) + B1 * (z1 - z2)
    Cz = C0 * (z0 - z2) + C1 * (z1 - z2) + z2

    coeffs = jnp.stack([A0, B0, C0, A1, B1, C1, Az, Bz, Cz], axis=-1)  # (B,F,9)
    # invalid face ⇒ w0 == -1 everywhere, all other coefficients benign.
    bad_row = jnp.array([0.0, 0.0, -1.0, 0.0, 0.0, 0.0, 0.0, 0.0, 2.0 * BIG],
                        jnp.float32)
    coeffs = jnp.where(good[..., None], coeffs, bad_row)

    # flat 1D SMEM face table, built with a single concatenate (no scatter ops)
    face_data = jnp.concatenate([coeffs, rgb], axis=-1).reshape(-1)    # (B*F*12,)

    # chip-aware grid: fold batch into one step on single-TC chips, keep a
    # parallel batch axis on dual-TC chips so each core renders one image.
    bb = B if _tensorcores_per_chip() == 1 else 1
    grid_steps = B // bb

    out = pl.pallas_call(
        _make_raster_kernel(bb),
        out_shape=jax.ShapeDtypeStruct((B, 5, HP, WP), jnp.float32),
        grid_spec=pltpu.PrefetchScalarGridSpec(
            num_scalar_prefetch=0,
            grid=(grid_steps,),
            in_specs=[pl.BlockSpec(memory_space=pltpu.MemorySpace.SMEM)],
            out_specs=pl.BlockSpec((bb, 5, HP, WP), lambda g: (g, 0, 0, 0)),
        ),
        compiler_params=pltpu.CompilerParams(
            dimension_semantics=("parallel",)),
    )(face_data)

    # reshape lane-dense buffers back to image layout (wrapper-side plumbing).
    # The (HP, WP) → (H, W) reshapes are contiguous (free); only the RGB
    # channel transpose is a real op, kept to preserve (B,H,W,3) semantics.
    planes = out.reshape(B, 5, H, W)
    rendered_image = jnp.transpose(planes[:, 0:3], (0, 2, 3, 1))       # (B,H,W,3)
    rendered_depth = planes[:, 3][..., None]                           # (B,H,W,1)
    rendered_mask = planes[:, 4][..., None]                            # (B,H,W,1)
    # crop_data(data) == data[:, :H, :W] is an identity at render resolution
    return rendered_image, rendered_depth, rendered_mask


if __name__ == "__main__":
    key = jax.random.PRNGKey(0)
    k1, k2 = jax.random.split(key)

    # deterministic cube mesh (8 verts, 12 triangle faces)
    verts = 0.5 * jnp.array(
        [[-1, -1, -1], [-1, -1, 1], [-1, 1, -1], [-1, 1, 1],
         [1, -1, -1], [1, -1, 1], [1, 1, -1], [1, 1, 1]], jnp.float32)
    faces = jnp.array(
        [[0, 1, 3], [0, 3, 2], [4, 6, 7], [4, 7, 5],
         [0, 4, 5], [0, 5, 1], [2, 3, 7], [2, 7, 6],
         [0, 2, 6], [0, 6, 4], [1, 5, 7], [1, 7, 3]], jnp.int32)

    # pose: small y-axis rotations, cube placed 3 units in front of the camera
    angles = jax.random.uniform(k1, (B,), minval=-0.5, maxval=0.5)
    c, s = jnp.cos(angles), jnp.sin(angles)
    zr, on = jnp.zeros_like(c), jnp.ones_like(c)
    R = jnp.stack([jnp.stack([c, zr, s], -1),
                   jnp.stack([zr, on, zr], -1),
                   jnp.stack([-s, zr, c], -1)], axis=-2)          # (B,3,3)
    T = jnp.stack([jnp.zeros(B), jnp.zeros(B), jnp.full((B,), 3.0)], axis=-1)
    base_colors = jax.random.uniform(k2, (B, 3), minval=0.3, maxval=1.0)

    img, depth, mask = jax.jit(drender_forward)(verts, faces, R, T, base_colors)
    jax.block_until_ready((img, depth, mask))

    assert img.shape == (B, H, W, 3)
    assert depth.shape == (B, H, W, 1)
    assert mask.shape == (B, H, W, 1)
    print("KERNEL_OK")
</pallas_src>

<mosaic_0001>
module attributes {stable_mosaic.version = 11 : i64} {
  func.func @kernel(%arg0: i32, %arg1: memref<288xf32, #tpu.memory_space<smem>>, %arg2: memref<2x5x32x128xf32, #tpu.memory_space<vmem>>) attributes {dimension_semantics = [#tpu.dimension_semantics<parallel>], iteration_bounds = array<i64: 1>, scalar_prefetch = 0 : i64, scratch_operands = 0 : i64, tpu.core_type = #tpu.core_type<tc>, window_params = [{transform_indices = @transform_0, window_bounds = array<i64: 288>}, {transform_indices = @transform_1, window_bounds = array<i64: 2, 5, 32, 128>}]} {
    %0 = tpu.iota {dimensions = array<i32: 0>} : vector<32x128xi32>
    %1 = tpu.iota {dimensions = array<i32: 1>} : vector<32x128xi32>
    %c1_i32 = arith.constant 1 : i32
    %2 = vector.broadcast %c1_i32 : i32 to vector<32x128xi32>
    %3 = arith.shli %0, %2 : vector<32x128xi32>
    %c6_i32 = arith.constant 6 : i32
    %4 = vector.broadcast %c6_i32 : i32 to vector<32x128xi32>
    %5 = arith.shrsi %1, %4 : vector<32x128xi32>
    %6 = arith.addi %3, %5 : vector<32x128xi32>
    %c63_i32 = arith.constant 63 : i32
    %7 = vector.broadcast %c63_i32 : i32 to vector<32x128xi32>
    %8 = arith.andi %1, %7 : vector<32x128xi32>
    %9 = arith.sitofp %8 : vector<32x128xi32> to vector<32x128xf32>
    %cst = arith.constant 5.000000e-01 : f32
    %10 = vector.broadcast %cst : f32 to vector<32x128xf32>
    %11 = arith.addf %9, %10 : vector<32x128xf32>
    %12 = arith.sitofp %6 : vector<32x128xi32> to vector<32x128xf32>
    %cst_0 = arith.constant 5.000000e-01 : f32
    %13 = vector.broadcast %cst_0 : f32 to vector<32x128xf32>
    %14 = arith.addf %12, %13 : vector<32x128xf32>
    %c2_i32 = arith.constant 2 : i32
    %15 = arith.muli %arg0, %c2_i32 : i32
    %c0_i32 = arith.constant 0 : i32
    %16 = arith.addi %15, %c0_i32 : i32
    %cst_1 = arith.constant 1.000000e+09 : f32
    %17 = vector.broadcast %cst_1 : f32 to vector<32x128xf32>
    %c-1_i32 = arith.constant -1 : i32
    %18 = vector.broadcast %c-1_i32 : i32 to vector<32x128xi32>
    %cst_2 = arith.constant 0.000000e+00 : f32
    %19 = vector.broadcast %cst_2 : f32 to vector<32x128xf32>
    %c0_i32_3 = arith.constant 0 : i32
    %c12_i32 = arith.constant 12 : i32
    %20 = arith.muli %16, %c12_i32 : i32
    %21 = arith.addi %20, %c0_i32_3 : i32
    %c12_i32_4 = arith.constant 12 : i32
    %22 = arith.muli %21, %c12_i32_4 : i32
    %c0_i32_5 = arith.constant 0 : i32
    %23 = arith.addi %22, %c0_i32_5 : i32
    %24 = arith.index_cast %23 : i32 to index
    %25 = memref.load %arg1[%24] : memref<288xf32, #tpu.memory_space<smem>>
    %c1_i32_6 = arith.constant 1 : i32
    %26 = arith.addi %22, %c1_i32_6 : i32
    %27 = arith.index_cast %26 : i32 to index
    %28 = memref.load %arg1[%27] : memref<288xf32, #tpu.memory_space<smem>>
    %c2_i32_7 = arith.constant 2 : i32
    %29 = arith.addi %22, %c2_i32_7 : i32
    %30 = arith.index_cast %29 : i32 to index
    %31 = memref.load %arg1[%30] : memref<288xf32, #tpu.memory_space<smem>>
    %c3_i32 = arith.constant 3 : i32
    %32 = arith.addi %22, %c3_i32 : i32
    %33 = arith.index_cast %32 : i32 to index
    %34 = memref.load %arg1[%33] : memref<288xf32, #tpu.memory_space<smem>>
    %c4_i32 = arith.constant 4 : i32
    %35 = arith.addi %22, %c4_i32 : i32
    %36 = arith.index_cast %35 : i32 to index
    %37 = memref.load %arg1[%36] : memref<288xf32, #tpu.memory_space<smem>>
    %c5_i32 = arith.constant 5 : i32
    %38 = arith.addi %22, %c5_i32 : i32
    %39 = arith.index_cast %38 : i32 to index
    %40 = memref.load %arg1[%39] : memref<288xf32, #tpu.memory_space<smem>>
    %c6_i32_8 = arith.constant 6 : i32
    %41 = arith.addi %22, %c6_i32_8 : i32
    %42 = arith.index_cast %41 : i32 to index
    %43 = memref.load %arg1[%42] : memref<288xf32, #tpu.memory_space<smem>>
    %c7_i32 = arith.constant 7 : i32
    %44 = arith.addi %22, %c7_i32 : i32
    %45 = arith.index_cast %44 : i32 to index
    %46 = memref.load %arg1[%45] : memref<288xf32, #tpu.memory_space<smem>>
    %c8_i32 = arith.constant 8 : i32
    %47 = arith.addi %22, %c8_i32 : i32
    %48 = arith.index_cast %47 : i32 to index
    %49 = memref.load %arg1[%48] : memref<288xf32, #tpu.memory_space<smem>>
    %50 = vector.broadcast %25 : f32 to vector<32x128xf32>
    %51 = arith.mulf %50, %11 : vector<32x128xf32>
    %52 = vector.broadcast %28 : f32 to vector<32x128xf32>
    %53 = arith.mulf %52, %14 : vector<32x128xf32>
    %54 = arith.addf %51, %53 : vector<32x128xf32>
    %55 = vector.broadcast %31 : f32 to vector<32x128xf32>
    %56 = arith.addf %54, %55 : vector<32x128xf32>
    %57 = vector.broadcast %34 : f32 to vector<32x128xf32>
    %58 = arith.mulf %57, %11 : vector<32x128xf32>
    %59 = vector.broadcast %37 : f32 to vector<32x128xf32>
    %60 = arith.mulf %59, %14 : vector<32x128xf32>
    %61 = arith.addf %58, %60 : vector<32x128xf32>
    %62 = vector.broadcast %40 : f32 to vector<32x128xf32>
    %63 = arith.addf %61, %62 : vector<32x128xf32>
    %cst_9 = arith.constant 1.000000e+00 : f32
    %64 = vector.broadcast %cst_9 : f32 to vector<32x128xf32>
    %65 = arith.subf %64, %56 : vector<32x128xf32>
    %66 = arith.subf %65, %63 : vector<32x128xf32>
    %67 = vector.broadcast %43 : f32 to vector<32x128xf32>
    %68 = arith.mulf %67, %11 : vector<32x128xf32>
    %69 = vector.broadcast %46 : f32 to vector<32x128xf32>
    %70 = arith.mulf %69, %14 : vector<32x128xf32>
    %71 = arith.addf %68, %70 : vector<32x128xf32>
    %72 = vector.broadcast %49 : f32 to vector<32x128xf32>
    %73 = arith.addf %71, %72 : vector<32x128xf32>
    %cst_10 = arith.constant 0.000000e+00 : f32
    %74 = vector.broadcast %cst_10 : f32 to vector<32x128xf32>
    %75 = arith.cmpf oge, %56, %74 : vector<32x128xf32>
    %cst_11 = arith.constant 0.000000e+00 : f32
    %76 = vector.broadcast %cst_11 : f32 to vector<32x128xf32>
    %77 = arith.cmpf oge, %63, %76 : vector<32x128xf32>
    %78 = arith.andi %75, %77 : vector<32x128xi1>
    %cst_12 = arith.constant 0.000000e+00 : f32
    %79 = vector.broadcast %cst_12 : f32 to vector<32x128xf32>
    %80 = arith.cmpf oge, %66, %79 : vector<32x128xf32>
    %81 = arith.andi %78, %80 : vector<32x128xi1>
    %82 = arith.cmpf olt, %73, %17 : vector<32x128xf32>
    %83 = arith.andi %81, %82 : vector<32x128xi1>
    %84 = arith.select %83, %73, %17 : vector<32x128xi1>, vector<32x128xf32>
    %85 = vector.broadcast %c0_i32_3 : i32 to vector<32x128xi32>
    %86 = arith.select %83, %85, %18 : vector<32x128xi1>, vector<32x128xi32>
    %cst_13 = arith.constant 1.000000e+00 : f32
    %87 = vector.broadcast %cst_13 : f32 to vector<32x128xf32>
    %88 = arith.select %81, %87, %19 : vector<32x128xi1>, vector<32x128xf32>
    %c1_i32_14 = arith.constant 1 : i32
    %c12_i32_15 = arith.constant 12 : i32
    %89 = arith.muli %16, %c12_i32_15 : i32
    %90 = arith.addi %89, %c1_i32_14 : i32
    %c12_i32_16 = arith.constant 12 : i32
    %91 = arith.muli %90, %c12_i32_16 : i32
    %c0_i32_17 = arith.constant 0 : i32
    %92 = arith.addi %91, %c0_i32_17 : i32
    %93 = arith.index_cast %92 : i32 to index
    %94 = memref.load %arg1[%93] : memref<288xf32, #tpu.memory_space<smem>>
    %c1_i32_18 = arith.constant 1 : i32
    %95 = arith.addi %91, %c1_i32_18 : i32
    %96 = arith.index_cast %95 : i32 to index
    %97 = memref.load %arg1[%96] : memref<288xf32, #tpu.memory_space<smem>>
    %c2_i32_19 = arith.constant 2 : i32
    %98 = arith.addi %91, %c2_i32_19 : i32
    %99 = arith.index_cast %98 : i32 to index
    %100 = memref.load %arg1[%99] : memref<288xf32, #tpu.memory_space<smem>>
    %c3_i32_20 = arith.constant 3 : i32
    %101 = arith.addi %91, %c3_i32_20 : i32
    %102 = arith.index_cast %101 : i32 to index
    %103 = memref.load %arg1[%102] : memref<288xf32, #tpu.memory_space<smem>>
    %c4_i32_21 = arith.constant 4 : i32
    %104 = arith.addi %91, %c4_i32_21 : i32
    %105 = arith.index_cast %104 : i32 to index
    %106 = memref.load %arg1[%105] : memref<288xf32, #tpu.memory_space<smem>>
    %c5_i32_22 = arith.constant 5 : i32
    %107 = arith.addi %91, %c5_i32_22 : i32
    %108 = arith.index_cast %107 : i32 to index
    %109 = memref.load %arg1[%108] : memref<288xf32, #tpu.memory_space<smem>>
    %c6_i32_23 = arith.constant 6 : i32
    %110 = arith.addi %91, %c6_i32_23 : i32
    %111 = arith.index_cast %110 : i32 to index
    %112 = memref.load %arg1[%111] : memref<288xf32, #tpu.memory_space<smem>>
    %c7_i32_24 = arith.constant 7 : i32
    %113 = arith.addi %91, %c7_i32_24 : i32
    %114 = arith.index_cast %113 : i32 to index
    %115 = memref.load %arg1[%114] : memref<288xf32, #tpu.memory_space<smem>>
    %c8_i32_25 = arith.constant 8 : i32
    %116 = arith.addi %91, %c8_i32_25 : i32
    %117 = arith.index_cast %116 : i32 to index
    %118 = memref.load %arg1[%117] : memref<288xf32, #tpu.memory_space<smem>>
    %119 = vector.broadcast %94 : f32 to vector<32x128xf32>
    %120 = arith.mulf %119, %11 : vector<32x128xf32>
    %121 = vector.broadcast %97 : f32 to vector<32x128xf32>
    %122 = arith.mulf %121, %14 : vector<32x128xf32>
    %123 = arith.addf %120, %122 : vector<32x128xf32>
    %124 = vector.broadcast %100 : f32 to vector<32x128xf32>
    %125 = arith.addf %123, %124 : vector<32x128xf32>
    %126 = vector.broadcast %103 : f32 to vector<32x128xf32>
    %127 = arith.mulf %126, %11 : vector<32x128xf32>
    %128 = vector.broadcast %106 : f32 to vector<32x128xf32>
    %129 = arith.mulf %128, %14 : vector<32x128xf32>
    %130 = arith.addf %127, %129 : vector<32x128xf32>
    %131 = vector.broadcast %109 : f32 to vector<32x128xf32>
    %132 = arith.addf %130, %131 : vector<32x128xf32>
    %cst_26 = arith.constant 1.000000e+00 : f32
    %133 = vector.broadcast %cst_26 : f32 to vector<32x128xf32>
    %134 = arith.subf %133, %125 : vector<32x128xf32>
    %135 = arith.subf %134, %132 : vector<32x128xf32>
    %136 = vector.broadcast %112 : f32 to vector<32x128xf32>
    %137 = arith.mulf %136, %11 : vector<32x128xf32>
    %138 = vector.broadcast %115 : f32 to vector<32x128xf32>
    %139 = arith.mulf %138, %14 : vector<32x128xf32>
    %140 = arith.addf %137, %139 : vector<32x128xf32>
    %141 = vector.broadcast %118 : f32 to vector<32x128xf32>
    %142 = arith.addf %140, %141 : vector<32x128xf32>
    %cst_27 = arith.constant 0.000000e+00 : f32
    %143 = vector.broadcast %cst_27 : f32 to vector<32x128xf32>
    %144 = arith.cmpf oge, %125, %143 : vector<32x128xf32>
    %cst_28 = arith.constant 0.000000e+00 : f32
    %145 = vector.broadcast %cst_28 : f32 to vector<32x128xf32>
    %146 = arith.cmpf oge, %132, %145 : vector<32x128xf32>
    %147 = arith.andi %144, %146 : vector<32x128xi1>
    %cst_29 = arith.constant 0.000000e+00 : f32
    %148 = vector.broadcast %cst_29 : f32 to vector<32x128xf32>
    %149 = arith.cmpf oge, %135, %148 : vector<32x128xf32>
    %150 = arith.andi %147, %149 : vector<32x128xi1>
    %151 = arith.cmpf olt, %142, %84 : vector<32x128xf32>
    %152 = arith.andi %150, %151 : vector<32x128xi1>
    %153 = arith.select %152, %142, %84 : vector<32x128xi1>, vector<32x128xf32>
    %154 = vector.broadcast %c1_i32_14 : i32 to vector<32x128xi32>
    %155 = arith.select %152, %154, %86 : vector<32x128xi1>, vector<32x128xi32>
    %cst_30 = arith.constant 1.000000e+00 : f32
    %156 = vector.broadcast %cst_30 : f32 to vector<32x128xf32>
    %157 = arith.select %150, %156, %88 : vector<32x128xi1>, vector<32x128xf32>
    %c2_i32_31 = arith.constant 2 : i32
    %c12_i32_32 = arith.constant 12 : i32
    %158 = arith.muli %16, %c12_i32_32 : i32
    %159 = arith.addi %158, %c2_i32_31 : i32
    %c12_i32_33 = arith.constant 12 : i32
    %160 = arith.muli %159, %c12_i32_33 : i32
    %c0_i32_34 = arith.constant 0 : i32
    %161 = arith.addi %160, %c0_i32_34 : i32
    %162 = arith.index_cast %161 : i32 to index
    %163 = memref.load %arg1[%162] : memref<288xf32, #tpu.memory_space<smem>>
    %c1_i32_35 = arith.constant 1 : i32
    %164 = arith.addi %160, %c1_i32_35 : i32
    %165 = arith.index_cast %164 : i32 to index
    %166 = memref.load %arg1[%165] : memref<288xf32, #tpu.memory_space<smem>>
    %c2_i32_36 = arith.constant 2 : i32
    %167 = arith.addi %160, %c2_i32_36 : i32
    %168 = arith.index_cast %167 : i32 to index
    %169 = memref.load %arg1[%168] : memref<288xf32, #tpu.memory_space<smem>>
    %c3_i32_37 = arith.constant 3 : i32
    %170 = arith.addi %160, %c3_i32_37 : i32
    %171 = arith.index_cast %170 : i32 to index
    %172 = memref.load %arg1[%171] : memref<288xf32, #tpu.memory_space<smem>>
    %c4_i32_38 = arith.constant 4 : i32
    %173 = arith.addi %160, %c4_i32_38 : i32
    %174 = arith.index_cast %173 : i32 to index
    %175 = memref.load %arg1[%174] : memref<288xf32, #tpu.memory_space<smem>>
    %c5_i32_39 = arith.constant 5 : i32
    %176 = arith.addi %160, %c5_i32_39 : i32
    %177 = arith.index_cast %176 : i32 to index
    %178 = memref.load %arg1[%177] : memref<288xf32, #tpu.memory_space<smem>>
    %c6_i32_40 = arith.constant 6 : i32
    %179 = arith.addi %160, %c6_i32_40 : i32
    %180 = arith.index_cast %179 : i32 to index
    %181 = memref.load %arg1[%180] : memref<288xf32, #tpu.memory_space<smem>>
    %c7_i32_41 = arith.constant 7 : i32
    %182 = arith.addi %160, %c7_i32_41 : i32
    %183 = arith.index_cast %182 : i32 to index
    %184 = memref.load %arg1[%183] : memref<288xf32, #tpu.memory_space<smem>>
    %c8_i32_42 = arith.constant 8 : i32
    %185 = arith.addi %160, %c8_i32_42 : i32
    %186 = arith.index_cast %185 : i32 to index
    %187 = memref.load %arg1[%186] : memref<288xf32, #tpu.memory_space<smem>>
    %188 = vector.broadcast %163 : f32 to vector<32x128xf32>
    %189 = arith.mulf %188, %11 : vector<32x128xf32>
    %190 = vector.broadcast %166 : f32 to vector<32x128xf32>
    %191 = arith.mulf %190, %14 : vector<32x128xf32>
    %192 = arith.addf %189, %191 : vector<32x128xf32>
    %193 = vector.broadcast %169 : f32 to vector<32x128xf32>
    %194 = arith.addf %192, %193 : vector<32x128xf32>
    %195 = vector.broadcast %172 : f32 to vector<32x128xf32>
    %196 = arith.mulf %195, %11 : vector<32x128xf32>
    %197 = vector.broadcast %175 : f32 to vector<32x128xf32>
    %198 = arith.mulf %197, %14 : vector<32x128xf32>
    %199 = arith.addf %196, %198 : vector<32x128xf32>
    %200 = vector.broadcast %178 : f32 to vector<32x128xf32>
    %201 = arith.addf %199, %200 : vector<32x128xf32>
    %cst_43 = arith.constant 1.000000e+00 : f32
    %202 = vector.broadcast %cst_43 : f32 to vector<32x128xf32>
    %203 = arith.subf %202, %194 : vector<32x128xf32>
    %204 = arith.subf %203, %201 : vector<32x128xf32>
    %205 = vector.broadcast %181 : f32 to vector<32x128xf32>
    %206 = arith.mulf %205, %11 : vector<32x128xf32>
    %207 = vector.broadcast %184 : f32 to vector<32x128xf32>
    %208 = arith.mulf %207, %14 : vector<32x128xf32>
    %209 = arith.addf %206, %208 : vector<32x128xf32>
    %210 = vector.broadcast %187 : f32 to vector<32x128xf32>
    %211 = arith.addf %209, %210 : vector<32x128xf32>
    %cst_44 = arith.constant 0.000000e+00 : f32
    %212 = vector.broadcast %cst_44 : f32 to vector<32x128xf32>
    %213 = arith.cmpf oge, %194, %212 : vector<32x128xf32>
    %cst_45 = arith.constant 0.000000e+00 : f32
    %214 = vector.broadcast %cst_45 : f32 to vector<32x128xf32>
    %215 = arith.cmpf oge, %201, %214 : vector<32x128xf32>
    %216 = arith.andi %213, %215 : vector<32x128xi1>
    %cst_46 = arith.constant 0.000000e+00 : f32
    %217 = vector.broadcast %cst_46 : f32 to vector<32x128xf32>
    %218 = arith.cmpf oge, %204, %217 : vector<32x128xf32>
    %219 = arith.andi %216, %218 : vector<32x128xi1>
    %220 = arith.cmpf olt, %211, %153 : vector<32x128xf32>
    %221 = arith.andi %219, %220 : vector<32x128xi1>
    %222 = arith.select %221, %211, %153 : vector<32x128xi1>, vector<32x128xf32>
    %223 = vector.broadcast %c2_i32_31 : i32 to vector<32x128xi32>
    %224 = arith.select %221, %223, %155 : vector<32x128xi1>, vector<32x128xi32>
    %cst_47 = arith.constant 1.000000e+00 : f32
    %225 = vector.broadcast %cst_47 : f32 to vector<32x128xf32>
    %226 = arith.select %219, %225, %157 : vector<32x128xi1>, vector<32x128xf32>
    %c3_i32_48 = arith.constant 3 : i32
    %c12_i32_49 = arith.constant 12 : i32
    %227 = arith.muli %16, %c12_i32_49 : i32
    %228 = arith.addi %227, %c3_i32_48 : i32
    %c12_i32_50 = arith.constant 12 : i32
    %229 = arith.muli %228, %c12_i32_50 : i32
    %c0_i32_51 = arith.constant 0 : i32
    %230 = arith.addi %229, %c0_i32_51 : i32
    %231 = arith.index_cast %230 : i32 to index
    %232 = memref.load %arg1[%231] : memref<288xf32, #tpu.memory_space<smem>>
    %c1_i32_52 = arith.constant 1 : i32
    %233 = arith.addi %229, %c1_i32_52 : i32
    %234 = arith.index_cast %233 : i32 to index
    %235 = memref.load %arg1[%234] : memref<288xf32, #tpu.memory_space<smem>>
    %c2_i32_53 = arith.constant 2 : i32
    %236 = arith.addi %229, %c2_i32_53 : i32
    %237 = arith.index_cast %236 : i32 to index
    %238 = memref.load %arg1[%237] : memref<288xf32, #tpu.memory_space<smem>>
    %c3_i32_54 = arith.constant 3 : i32
    %239 = arith.addi %229, %c3_i32_54 : i32
    %240 = arith.index_cast %239 : i32 to index
    %241 = memref.load %arg1[%240] : memref<288xf32, #tpu.memory_space<smem>>
    %c4_i32_55 = arith.constant 4 : i32
    %242 = arith.addi %229, %c4_i32_55 : i32
    %243 = arith.index_cast %242 : i32 to index
    %244 = memref.load %arg1[%243] : memref<288xf32, #tpu.memory_space<smem>>
    %c5_i32_56 = arith.constant 5 : i32
    %245 = arith.addi %229, %c5_i32_56 : i32
    %246 = arith.index_cast %245 : i32 to index
    %247 = memref.load %arg1[%246] : memref<288xf32, #tpu.memory_space<smem>>
    %c6_i32_57 = arith.constant 6 : i32
    %248 = arith.addi %229, %c6_i32_57 : i32
    %249 = arith.index_cast %248 : i32 to index
    %250 = memref.load %arg1[%249] : memref<288xf32, #tpu.memory_space<smem>>
    %c7_i32_58 = arith.constant 7 : i32
    %251 = arith.addi %229, %c7_i32_58 : i32
    %252 = arith.index_cast %251 : i32 to index
    %253 = memref.load %arg1[%252] : memref<288xf32, #tpu.memory_space<smem>>
    %c8_i32_59 = arith.constant 8 : i32
    %254 = arith.addi %229, %c8_i32_59 : i32
    %255 = arith.index_cast %254 : i32 to index
    %256 = memref.load %arg1[%255] : memref<288xf32, #tpu.memory_space<smem>>
    %257 = vector.broadcast %232 : f32 to vector<32x128xf32>
    %258 = arith.mulf %257, %11 : vector<32x128xf32>
    %259 = vector.broadcast %235 : f32 to vector<32x128xf32>
    %260 = arith.mulf %259, %14 : vector<32x128xf32>
    %261 = arith.addf %258, %260 : vector<32x128xf32>
    %262 = vector.broadcast %238 : f32 to vector<32x128xf32>
    %263 = arith.addf %261, %262 : vector<32x128xf32>
    %264 = vector.broadcast %241 : f32 to vector<32x128xf32>
    %265 = arith.mulf %264, %11 : vector<32x128xf32>
    %266 = vector.broadcast %244 : f32 to vector<32x128xf32>
    %267 = arith.mulf %266, %14 : vector<32x128xf32>
    %268 = arith.addf %265, %267 : vector<32x128xf32>
    %269 = vector.broadcast %247 : f32 to vector<32x128xf32>
    %270 = arith.addf %268, %269 : vector<32x128xf32>
    %cst_60 = arith.constant 1.000000e+00 : f32
    %271 = vector.broadcast %cst_60 : f32 to vector<32x128xf32>
    %272 = arith.subf %271, %263 : vector<32x128xf32>
    %273 = arith.subf %272, %270 : vector<32x128xf32>
    %274 = vector.broadcast %250 : f32 to vector<32x128xf32>
    %275 = arith.mulf %274, %11 : vector<32x128xf32>
    %276 = vector.broadcast %253 : f32 to vector<32x128xf32>
    %277 = arith.mulf %276, %14 : vector<32x128xf32>
    %278 = arith.addf %275, %277 : vector<32x128xf32>
    %279 = vector.broadcast %256 : f32 to vector<32x128xf32>
    %280 = arith.addf %278, %279 : vector<32x128xf32>
    %cst_61 = arith.constant 0.000000e+00 : f32
    %281 = vector.broadcast %cst_61 : f32 to vector<32x128xf32>
    %282 = arith.cmpf oge, %263, %281 : vector<32x128xf32>
    %cst_62 = arith.constant 0.000000e+00 : f32
    %283 = vector.broadcast %cst_62 : f32 to vector<32x128xf32>
    %284 = arith.cmpf oge, %270, %283 : vector<32x128xf32>
    %285 = arith.andi %282, %284 : vector<32x128xi1>
    %cst_63 = arith.constant 0.000000e+00 : f32
    %286 = vector.broadcast %cst_63 : f32 to vector<32x128xf32>
    %287 = arith.cmpf oge, %273, %286 : vector<32x128xf32>
    %288 = arith.andi %285, %287 : vector<32x128xi1>
    %289 = arith.cmpf olt, %280, %222 : vector<32x128xf32>
    %290 = arith.andi %288, %289 : vector<32x128xi1>
    %291 = arith.select %290, %280, %222 : vector<32x128xi1>, vector<32x128xf32>
    %292 = vector.broadcast %c3_i32_48 : i32 to vector<32x128xi32>
    %293 = arith.select %290, %292, %224 : vector<32x128xi1>, vector<32x128xi32>
    %cst_64 = arith.constant 1.000000e+00 : f32
    %294 = vector.broadcast %cst_64 : f32 to vector<32x128xf32>
    %295 = arith.select %288, %294, %226 : vector<32x128xi1>, vector<32x128xf32>
    %c4_i32_65 = arith.constant 4 : i32
    %c12_i32_66 = arith.constant 12 : i32
    %296 = arith.muli %16, %c12_i32_66 : i32
    %297 = arith.addi %296, %c4_i32_65 : i32
    %c12_i32_67 = arith.constant 12 : i32
    %298 = arith.muli %297, %c12_i32_67 : i32
    %c0_i32_68 = arith.constant 0 : i32
    %299 = arith.addi %298, %c0_i32_68 : i32
    %300 = arith.index_cast %299 : i32 to index
    %301 = memref.load %arg1[%300] : memref<288xf32, #tpu.memory_space<smem>>
    %c1_i32_69 = arith.constant 1 : i32
    %302 = arith.addi %298, %c1_i32_69 : i32
    %303 = arith.index_cast %302 : i32 to index
    %304 = memref.load %arg1[%303] : memref<288xf32, #tpu.memory_space<smem>>
    %c2_i32_70 = arith.constant 2 : i32
    %305 = arith.addi %298, %c2_i32_70 : i32
    %306 = arith.index_cast %305 : i32 to index
    %307 = memref.load %arg1[%306] : memref<288xf32, #tpu.memory_space<smem>>
    %c3_i32_71 = arith.constant 3 : i32
    %308 = arith.addi %298, %c3_i32_71 : i32
    %309 = arith.index_cast %308 : i32 to index
    %310 = memref.load %arg1[%309] : memref<288xf32, #tpu.memory_space<smem>>
    %c4_i32_72 = arith.constant 4 : i32
    %311 = arith.addi %298, %c4_i32_72 : i32
    %312 = arith.index_cast %311 : i32 to index
    %313 = memref.load %arg1[%312] : memref<288xf32, #tpu.memory_space<smem>>
    %c5_i32_73 = arith.constant 5 : i32
    %314 = arith.addi %298, %c5_i32_73 : i32
    %315 = arith.index_cast %314 : i32 to index
    %316 = memref.load %arg1[%315] : memref<288xf32, #tpu.memory_space<smem>>
    %c6_i32_74 = arith.constant 6 : i32
    %317 = arith.addi %298, %c6_i32_74 : i32
    %318 = arith.index_cast %317 : i32 to index
    %319 = memref.load %arg1[%318] : memref<288xf32, #tpu.memory_space<smem>>
    %c7_i32_75 = arith.constant 7 : i32
    %320 = arith.addi %298, %c7_i32_75 : i32
    %321 = arith.index_cast %320 : i32 to index
    %322 = memref.load %arg1[%321] : memref<288xf32, #tpu.memory_space<smem>>
    %c8_i32_76 = arith.constant 8 : i32
    %323 = arith.addi %298, %c8_i32_76 : i32
    %324 = arith.index_cast %323 : i32 to index
    %325 = memref.load %arg1[%324] : memref<288xf32, #tpu.memory_space<smem>>
    %326 = vector.broadcast %301 : f32 to vector<32x128xf32>
    %327 = arith.mulf %326, %11 : vector<32x128xf32>
    %328 = vector.broadcast %304 : f32 to vector<32x128xf32>
    %329 = arith.mulf %328, %14 : vector<32x128xf32>
    %330 = arith.addf %327, %329 : vector<32x128xf32>
    %331 = vector.broadcast %307 : f32 to vector<32x128xf32>
    %332 = arith.addf %330, %331 : vector<32x128xf32>
    %333 = vector.broadcast %310 : f32 to vector<32x128xf32>
    %334 = arith.mulf %333, %11 : vector<32x128xf32>
    %335 = vector.broadcast %313 : f32 to vector<32x128xf32>
    %336 = arith.mulf %335, %14 : vector<32x128xf32>
    %337 = arith.addf %334, %336 : vector<32x128xf32>
    %338 = vector.broadcast %316 : f32 to vector<32x128xf32>
    %339 = arith.addf %337, %338 : vector<32x128xf32>
    %cst_77 = arith.constant 1.000000e+00 : f32
    %340 = vector.broadcast %cst_77 : f32 to vector<32x128xf32>
    %341 = arith.subf %340, %332 : vector<32x128xf32>
    %342 = arith.subf %341, %339 : vector<32x128xf32>
    %343 = vector.broadcast %319 : f32 to vector<32x128xf32>
    %344 = arith.mulf %343, %11 : vector<32x128xf32>
    %345 = vector.broadcast %322 : f32 to vector<32x128xf32>
    %346 = arith.mulf %345, %14 : vector<32x128xf32>
    %347 = arith.addf %344, %346 : vector<32x128xf32>
    %348 = vector.broadcast %325 : f32 to vector<32x128xf32>
    %349 = arith.addf %347, %348 : vector<32x128xf32>
    %cst_78 = arith.constant 0.000000e+00 : f32
    %350 = vector.broadcast %cst_78 : f32 to vector<32x128xf32>
    %351 = arith.cmpf oge, %332, %350 : vector<32x128xf32>
    %cst_79 = arith.constant 0.000000e+00 : f32
    %352 = vector.broadcast %cst_79 : f32 to vector<32x128xf32>
    %353 = arith.cmpf oge, %339, %352 : vector<32x128xf32>
    %354 = arith.andi %351, %353 : vector<32x128xi1>
    %cst_80 = arith.constant 0.000000e+00 : f32
    %355 = vector.broadcast %cst_80 : f32 to vector<32x128xf32>
    %356 = arith.cmpf oge, %342, %355 : vector<32x128xf32>
    %357 = arith.andi %354, %356 : vector<32x128xi1>
    %358 = arith.cmpf olt, %349, %291 : vector<32x128xf32>
    %359 = arith.andi %357, %358 : vector<32x128xi1>
    %360 = arith.select %359, %349, %291 : vector<32x128xi1>, vector<32x128xf32>
    %361 = vector.broadcast %c4_i32_65 : i32 to vector<32x128xi32>
    %362 = arith.select %359, %361, %293 : vector<32x128xi1>, vector<32x128xi32>
    %cst_81 = arith.constant 1.000000e+00 : f32
    %363 = vector.broadcast %cst_81 : f32 to vector<32x128xf32>
    %364 = arith.select %357, %363, %295 : vector<32x128xi1>, vector<32x128xf32>
    %c5_i32_82 = arith.constant 5 : i32
    %c12_i32_83 = arith.constant 12 : i32
    %365 = arith.muli %16, %c12_i32_83 : i32
    %366 = arith.addi %365, %c5_i32_82 : i32
    %c12_i32_84 = arith.constant 12 : i32
    %367 = arith.muli %366, %c12_i32_84 : i32
    %c0_i32_85 = arith.constant 0 : i32
    %368 = arith.addi %367, %c0_i32_85 : i32
    %369 = arith.index_cast %368 : i32 to index
    %370 = memref.load %arg1[%369] : memref<288xf32, #tpu.memory_space<smem>>
    %c1_i32_86 = arith.constant 1 : i32
    %371 = arith.addi %367, %c1_i32_86 : i32
    %372 = arith.index_cast %371 : i32 to index
    %373 = memref.load %arg1[%372] : memref<288xf32, #tpu.memory_space<smem>>
    %c2_i32_87 = arith.constant 2 : i32
    %374 = arith.addi %367, %c2_i32_87 : i32
    %375 = arith.index_cast %374 : i32 to index
    %376 = memref.load %arg1[%375] : memref<288xf32, #tpu.memory_space<smem>>
    %c3_i32_88 = arith.constant 3 : i32
    %377 = arith.addi %367, %c3_i32_88 : i32
    %378 = arith.index_cast %377 : i32 to index
    %379 = memref.load %arg1[%378] : memref<288xf32, #tpu.memory_space<smem>>
    %c4_i32_89 = arith.constant 4 : i32
    %380 = arith.addi %367, %c4_i32_89 : i32
    %381 = arith.index_cast %380 : i32 to index
    %382 = memref.load %arg1[%381] : memref<288xf32, #tpu.memory_space<smem>>
    %c5_i32_90 = arith.constant 5 : i32
    %383 = arith.addi %367, %c5_i32_90 : i32
    %384 = arith.index_cast %383 : i32 to index
    %385 = memref.load %arg1[%384] : memref<288xf32, #tpu.memory_space<smem>>
    %c6_i32_91 = arith.constant 6 : i32
    %386 = arith.addi %367, %c6_i32_91 : i32
    %387 = arith.index_cast %386 : i32 to index
    %388 = memref.load %arg1[%387] : memref<288xf32, #tpu.memory_space<smem>>
    %c7_i32_92 = arith.constant 7 : i32
    %389 = arith.addi %367, %c7_i32_92 : i32
    %390 = arith.index_cast %389 : i32 to index
    %391 = memref.load %arg1[%390] : memref<288xf32, #tpu.memory_space<smem>>
    %c8_i32_93 = arith.constant 8 : i32
    %392 = arith.addi %367, %c8_i32_93 : i32
    %393 = arith.index_cast %392 : i32 to index
    %394 = memref.load %arg1[%393] : memref<288xf32, #tpu.memory_space<smem>>
    %395 = vector.broadcast %370 : f32 to vector<32x128xf32>
    %396 = arith.mulf %395, %11 : vector<32x128xf32>
    %397 = vector.broadcast %373 : f32 to vector<32x128xf32>
    %398 = arith.mulf %397, %14 : vector<32x128xf32>
    %399 = arith.addf %396, %398 : vector<32x128xf32>
    %400 = vector.broadcast %376 : f32 to vector<32x128xf32>
    %401 = arith.addf %399, %400 : vector<32x128xf32>
    %402 = vector.broadcast %379 : f32 to vector<32x128xf32>
    %403 = arith.mulf %402, %11 : vector<32x128xf32>
    %404 = vector.broadcast %382 : f32 to vector<32x128xf32>
    %405 = arith.mulf %404, %14 : vector<32x128xf32>
    %406 = arith.addf %403, %405 : vector<32x128xf32>
    %407 = vector.broadcast %385 : f32 to vector<32x128xf32>
    %408 = arith.addf %406, %407 : vector<32x128xf32>
    %cst_94 = arith.constant 1.000000e+00 : f32
    %409 = vector.broadcast %cst_94 : f32 to vector<32x128xf32>
    %410 = arith.subf %409, %401 : vector<32x128xf32>
    %411 = arith.subf %410, %408 : vector<32x128xf32>
    %412 = vector.broadcast %388 : f32 to vector<32x128xf32>
    %413 = arith.mulf %412, %11 : vector<32x128xf32>
    %414 = vector.broadcast %391 : f32 to vector<32x128xf32>
    %415 = arith.mulf %414, %14 : vector<32x128xf32>
    %416 = arith.addf %413, %415 : vector<32x128xf32>
    %417 = vector.broadcast %394 : f32 to vector<32x128xf32>
    %418 = arith.addf %416, %417 : vector<32x128xf32>
    %cst_95 = arith.constant 0.000000e+00 : f32
    %419 = vector.broadcast %cst_95 : f32 to vector<32x128xf32>
    %420 = arith.cmpf oge, %401, %419 : vector<32x128xf32>
    %cst_96 = arith.constant 0.000000e+00 : f32
    %421 = vector.broadcast %cst_96 : f32 to vector<32x128xf32>
    %422 = arith.cmpf oge, %408, %421 : vector<32x128xf32>
    %423 = arith.andi %420, %422 : vector<32x128xi1>
    %cst_97 = arith.constant 0.000000e+00 : f32
    %424 = vector.broadcast %cst_97 : f32 to vector<32x128xf32>
    %425 = arith.cmpf oge, %411, %424 : vector<32x128xf32>
    %426 = arith.andi %423, %425 : vector<32x128xi1>
    %427 = arith.cmpf olt, %418, %360 : vector<32x128xf32>
    %428 = arith.andi %426, %427 : vector<32x128xi1>
    %429 = arith.select %428, %418, %360 : vector<32x128xi1>, vector<32x128xf32>
    %430 = vector.broadcast %c5_i32_82 : i32 to vector<32x128xi32>
    %431 = arith.select %428, %430, %362 : vector<32x128xi1>, vector<32x128xi32>
    %cst_98 = arith.constant 1.000000e+00 : f32
    %432 = vector.broadcast %cst_98 : f32 to vector<32x128xf32>
    %433 = arith.select %426, %432, %364 : vector<32x128xi1>, vector<32x128xf32>
    %c6_i32_99 = arith.constant 6 : i32
    %c12_i32_100 = arith.constant 12 : i32
    %434 = arith.muli %16, %c12_i32_100 : i32
    %435 = arith.addi %434, %c6_i32_99 : i32
    %c12_i32_101 = arith.constant 12 : i32
    %436 = arith.muli %435, %c12_i32_101 : i32
    %c0_i32_102 = arith.constant 0 : i32
    %437 = arith.addi %436, %c0_i32_102 : i32
    %438 = arith.index_cast %437 : i32 to index
    %439 = memref.load %arg1[%438] : memref<288xf32, #tpu.memory_space<smem>>
    %c1_i32_103 = arith.constant 1 : i32
    %440 = arith.addi %436, %c1_i32_103 : i32
    %441 = arith.index_cast %440 : i32 to index
    %442 = memref.load %arg1[%441] : memref<288xf32, #tpu.memory_space<smem>>
    %c2_i32_104 = arith.constant 2 : i32
    %443 = arith.addi %436, %c2_i32_104 : i32
    %444 = arith.index_cast %443 : i32 to index
    %445 = memref.load %arg1[%444] : memref<288xf32, #tpu.memory_space<smem>>
    %c3_i32_105 = arith.constant 3 : i32
    %446 = arith.addi %436, %c3_i32_105 : i32
    %447 = arith.index_cast %446 : i32 to index
    %448 = memref.load %arg1[%447] : memref<288xf32, #tpu.memory_space<smem>>
    %c4_i32_106 = arith.constant 4 : i32
    %449 = arith.addi %436, %c4_i32_106 : i32
    %450 = arith.index_cast %449 : i32 to index
    %451 = memref.load %arg1[%450] : memref<288xf32, #tpu.memory_space<smem>>
    %c5_i32_107 = arith.constant 5 : i32
    %452 = arith.addi %436, %c5_i32_107 : i32
    %453 = arith.index_cast %452 : i32 to index
    %454 = memref.load %arg1[%453] : memref<288xf32, #tpu.memory_space<smem>>
    %c6_i32_108 = arith.constant 6 : i32
    %455 = arith.addi %436, %c6_i32_108 : i32
    %456 = arith.index_cast %455 : i32 to index
    %457 = memref.load %arg1[%456] : memref<288xf32, #tpu.memory_space<smem>>
    %c7_i32_109 = arith.constant 7 : i32
    %458 = arith.addi %436, %c7_i32_109 : i32
    %459 = arith.index_cast %458 : i32 to index
    %460 = memref.load %arg1[%459] : memref<288xf32, #tpu.memory_space<smem>>
    %c8_i32_110 = arith.constant 8 : i32
    %461 = arith.addi %436, %c8_i32_110 : i32
    %462 = arith.index_cast %461 : i32 to index
    %463 = memref.load %arg1[%462] : memref<288xf32, #tpu.memory_space<smem>>
    %464 = vector.broadcast %439 : f32 to vector<32x128xf32>
    %465 = arith.mulf %464, %11 : vector<32x128xf32>
    %466 = vector.broadcast %442 : f32 to vector<32x128xf32>
    %467 = arith.mulf %466, %14 : vector<32x128xf32>
    %468 = arith.addf %465, %467 : vector<32x128xf32>
    %469 = vector.broadcast %445 : f32 to vector<32x128xf32>
    %470 = arith.addf %468, %469 : vector<32x128xf32>
    %471 = vector.broadcast %448 : f32 to vector<32x128xf32>
    %472 = arith.mulf %471, %11 : vector<32x128xf32>
    %473 = vector.broadcast %451 : f32 to vector<32x128xf32>
    %474 = arith.mulf %473, %14 : vector<32x128xf32>
    %475 = arith.addf %472, %474 : vector<32x128xf32>
    %476 = vector.broadcast %454 : f32 to vector<32x128xf32>
    %477 = arith.addf %475, %476 : vector<32x128xf32>
    %cst_111 = arith.constant 1.000000e+00 : f32
    %478 = vector.broadcast %cst_111 : f32 to vector<32x128xf32>
    %479 = arith.subf %478, %470 : vector<32x128xf32>
    %480 = arith.subf %479, %477 : vector<32x128xf32>
    %481 = vector.broadcast %457 : f32 to vector<32x128xf32>
    %482 = arith.mulf %481, %11 : vector<32x128xf32>
    %483 = vector.broadcast %460 : f32 to vector<32x128xf32>
    %484 = arith.mulf %483, %14 : vector<32x128xf32>
    %485 = arith.addf %482, %484 : vector<32x128xf32>
    %486 = vector.broadcast %463 : f32 to vector<32x128xf32>
    %487 = arith.addf %485, %486 : vector<32x128xf32>
    %cst_112 = arith.constant 0.000000e+00 : f32
    %488 = vector.broadcast %cst_112 : f32 to vector<32x128xf32>
    %489 = arith.cmpf oge, %470, %488 : vector<32x128xf32>
    %cst_113 = arith.constant 0.000000e+00 : f32
    %490 = vector.broadcast %cst_113 : f32 to vector<32x128xf32>
    %491 = arith.cmpf oge, %477, %490 : vector<32x128xf32>
    %492 = arith.andi %489, %491 : vector<32x128xi1>
    %cst_114 = arith.constant 0.000000e+00 : f32
    %493 = vector.broadcast %cst_114 : f32 to vector<32x128xf32>
    %494 = arith.cmpf oge, %480, %493 : vector<32x128xf32>
    %495 = arith.andi %492, %494 : vector<32x128xi1>
    %496 = arith.cmpf olt, %487, %429 : vector<32x128xf32>
    %497 = arith.andi %495, %496 : vector<32x128xi1>
    %498 = arith.select %497, %487, %429 : vector<32x128xi1>, vector<32x128xf32>
    %499 = vector.broadcast %c6_i32_99 : i32 to vector<32x128xi32>
    %500 = arith.select %497, %499, %431 : vector<32x128xi1>, vector<32x128xi32>
    %cst_115 = arith.constant 1.000000e+00 : f32
    %501 = vector.broadcast %cst_115 : f32 to vector<32x128xf32>
    %502 = arith.select %495, %501, %433 : vector<32x128xi1>, vector<32x128xf32>
    %c7_i32_116 = arith.constant 7 : i32
    %c12_i32_117 = arith.constant 12 : i32
    %503 = arith.muli %16, %c12_i32_117 : i32
    %504 = arith.addi %503, %c7_i32_116 : i32
    %c12_i32_118 = arith.constant 12 : i32
    %505 = arith.muli %504, %c12_i32_118 : i32
    %c0_i32_119 = arith.constant 0 : i32
    %506 = arith.addi %505, %c0_i32_119 : i32
    %507 = arith.index_cast %506 : i32 to index
    %508 = memref.load %arg1[%507] : memref<288xf32, #tpu.memory_space<smem>>
    %c1_i32_120 = arith.constant 1 : i32
    %509 = arith.addi %505, %c1_i32_120 : i32
    %510 = arith.index_cast %509 : i32 to index
    %511 = memref.load %arg1[%510] : memref<288xf32, #tpu.memory_space<smem>>
    %c2_i32_121 = arith.constant 2 : i32
    %512 = arith.addi %505, %c2_i32_121 : i32
    %513 = arith.index_cast %512 : i32 to index
    %514 = memref.load %arg1[%513] : memref<288xf32, #tpu.memory_space<smem>>
    %c3_i32_122 = arith.constant 3 : i32
    %515 = arith.addi %505, %c3_i32_122 : i32
    %516 = arith.index_cast %515 : i32 to index
    %517 = memref.load %arg1[%516] : memref<288xf32, #tpu.memory_space<smem>>
    %c4_i32_123 = arith.constant 4 : i32
    %518 = arith.addi %505, %c4_i32_123 : i32
    %519 = arith.index_cast %518 : i32 to index
    %520 = memref.load %arg1[%519] : memref<288xf32, #tpu.memory_space<smem>>
    %c5_i32_124 = arith.constant 5 : i32
    %521 = arith.addi %505, %c5_i32_124 : i32
    %522 = arith.index_cast %521 : i32 to index
    %523 = memref.load %arg1[%522] : memref<288xf32, #tpu.memory_space<smem>>
    %c6_i32_125 = arith.constant 6 : i32
    %524 = arith.addi %505, %c6_i32_125 : i32
    %525 = arith.index_cast %524 : i32 to index
    %526 = memref.load %arg1[%525] : memref<288xf32, #tpu.memory_space<smem>>
    %c7_i32_126 = arith.constant 7 : i32
    %527 = arith.addi %505, %c7_i32_126 : i32
    %528 = arith.index_cast %527 : i32 to index
    %529 = memref.load %arg1[%528] : memref<288xf32, #tpu.memory_space<smem>>
    %c8_i32_127 = arith.constant 8 : i32
    %530 = arith.addi %505, %c8_i32_127 : i32
    %531 = arith.index_cast %530 : i32 to index
    %532 = memref.load %arg1[%531] : memref<288xf32, #tpu.memory_space<smem>>
    %533 = vector.broadcast %508 : f32 to vector<32x128xf32>
    %534 = arith.mulf %533, %11 : vector<32x128xf32>
    %535 = vector.broadcast %511 : f32 to vector<32x128xf32>
    %536 = arith.mulf %535, %14 : vector<32x128xf32>
    %537 = arith.addf %534, %536 : vector<32x128xf32>
    %538 = vector.broadcast %514 : f32 to vector<32x128xf32>
    %539 = arith.addf %537, %538 : vector<32x128xf32>
    %540 = vector.broadcast %517 : f32 to vector<32x128xf32>
    %541 = arith.mulf %540, %11 : vector<32x128xf32>
    %542 = vector.broadcast %520 : f32 to vector<32x128xf32>
    %543 = arith.mulf %542, %14 : vector<32x128xf32>
    %544 = arith.addf %541, %543 : vector<32x128xf32>
    %545 = vector.broadcast %523 : f32 to vector<32x128xf32>
    %546 = arith.addf %544, %545 : vector<32x128xf32>
    %cst_128 = arith.constant 1.000000e+00 : f32
    %547 = vector.broadcast %cst_128 : f32 to vector<32x128xf32>
    %548 = arith.subf %547, %539 : vector<32x128xf32>
    %549 = arith.subf %548, %546 : vector<32x128xf32>
    %550 = vector.broadcast %526 : f32 to vector<32x128xf32>
    %551 = arith.mulf %550, %11 : vector<32x128xf32>
    %552 = vector.broadcast %529 : f32 to vector<32x128xf32>
    %553 = arith.mulf %552, %14 : vector<32x128xf32>
    %554 = arith.addf %551, %553 : vector<32x128xf32>
    %555 = vector.broadcast %532 : f32 to vector<32x128xf32>
    %556 = arith.addf %554, %555 : vector<32x128xf32>
    %cst_129 = arith.constant 0.000000e+00 : f32
    %557 = vector.broadcast %cst_129 : f32 to vector<32x128xf32>
    %558 = arith.cmpf oge, %539, %557 : vector<32x128xf32>
    %cst_130 = arith.constant 0.000000e+00 : f32
    %559 = vector.broadcast %cst_130 : f32 to vector<32x128xf32>
    %560 = arith.cmpf oge, %546, %559 : vector<32x128xf32>
    %561 = arith.andi %558, %560 : vector<32x128xi1>
    %cst_131 = arith.constant 0.000000e+00 : f32
    %562 = vector.broadcast %cst_131 : f32 to vector<32x128xf32>
    %563 = arith.cmpf oge, %549, %562 : vector<32x128xf32>
    %564 = arith.andi %561, %563 : vector<32x128xi1>
    %565 = arith.cmpf olt, %556, %498 : vector<32x128xf32>
    %566 = arith.andi %564, %565 : vector<32x128xi1>
    %567 = arith.select %566, %556, %498 : vector<32x128xi1>, vector<32x128xf32>
    %568 = vector.broadcast %c7_i32_116 : i32 to vector<32x128xi32>
    %569 = arith.select %566, %568, %500 : vector<32x128xi1>, vector<32x128xi32>
    %cst_132 = arith.constant 1.000000e+00 : f32
    %570 = vector.broadcast %cst_132 : f32 to vector<32x128xf32>
    %571 = arith.select %564, %570, %502 : vector<32x128xi1>, vector<32x128xf32>
    %c8_i32_133 = arith.constant 8 : i32
    %c12_i32_134 = arith.constant 12 : i32
    %572 = arith.muli %16, %c12_i32_134 : i32
    %573 = arith.addi %572, %c8_i32_133 : i32
    %c12_i32_135 = arith.constant 12 : i32
    %574 = arith.muli %573, %c12_i32_135 : i32
    %c0_i32_136 = arith.constant 0 : i32
    %575 = arith.addi %574, %c0_i32_136 : i32
    %576 = arith.index_cast %575 : i32 to index
    %577 = memref.load %arg1[%576] : memref<288xf32, #tpu.memory_space<smem>>
    %c1_i32_137 = arith.constant 1 : i32
    %578 = arith.addi %574, %c1_i32_137 : i32
    %579 = arith.index_cast %578 : i32 to index
    %580 = memref.load %arg1[%579] : memref<288xf32, #tpu.memory_space<smem>>
    %c2_i32_138 = arith.constant 2 : i32
    %581 = arith.addi %574, %c2_i32_138 : i32
    %582 = arith.index_cast %581 : i32 to index
    %583 = memref.load %arg1[%582] : memref<288xf32, #tpu.memory_space<smem>>
    %c3_i32_139 = arith.constant 3 : i32
    %584 = arith.addi %574, %c3_i32_139 : i32
    %585 = arith.index_cast %584 : i32 to index
    %586 = memref.load %arg1[%585] : memref<288xf32, #tpu.memory_space<smem>>
    %c4_i32_140 = arith.constant 4 : i32
    %587 = arith.addi %574, %c4_i32_140 : i32
    %588 = arith.index_cast %587 : i32 to index
    %589 = memref.load %arg1[%588] : memref<288xf32, #tpu.memory_space<smem>>
    %c5_i32_141 = arith.constant 5 : i32
    %590 = arith.addi %574, %c5_i32_141 : i32
    %591 = arith.index_cast %590 : i32 to index
    %592 = memref.load %arg1[%591] : memref<288xf32, #tpu.memory_space<smem>>
    %c6_i32_142 = arith.constant 6 : i32
    %593 = arith.addi %574, %c6_i32_142 : i32
    %594 = arith.index_cast %593 : i32 to index
    %595 = memref.load %arg1[%594] : memref<288xf32, #tpu.memory_space<smem>>
    %c7_i32_143 = arith.constant 7 : i32
    %596 = arith.addi %574, %c7_i32_143 : i32
    %597 = arith.index_cast %596 : i32 to index
    %598 = memref.load %arg1[%597] : memref<288xf32, #tpu.memory_space<smem>>
    %c8_i32_144 = arith.constant 8 : i32
    %599 = arith.addi %574, %c8_i32_144 : i32
    %600 = arith.index_cast %599 : i32 to index
    %601 = memref.load %arg1[%600] : memref<288xf32, #tpu.memory_space<smem>>
    %602 = vector.broadcast %577 : f32 to vector<32x128xf32>
    %603 = arith.mulf %602, %11 : vector<32x128xf32>
    %604 = vector.broadcast %580 : f32 to vector<32x128xf32>
    %605 = arith.mulf %604, %14 : vector<32x128xf32>
    %606 = arith.addf %603, %605 : vector<32x128xf32>
    %607 = vector.broadcast %583 : f32 to vector<32x128xf32>
    %608 = arith.addf %606, %607 : vector<32x128xf32>
    %609 = vector.broadcast %586 : f32 to vector<32x128xf32>
    %610 = arith.mulf %609, %11 : vector<32x128xf32>
    %611 = vector.broadcast %589 : f32 to vector<32x128xf32>
    %612 = arith.mulf %611, %14 : vector<32x128xf32>
    %613 = arith.addf %610, %612 : vector<32x128xf32>
    %614 = vector.broadcast %592 : f32 to vector<32x128xf32>
    %615 = arith.addf %613, %614 : vector<32x128xf32>
    %cst_145 = arith.constant 1.000000e+00 : f32
    %616 = vector.broadcast %cst_145 : f32 to vector<32x128xf32>
    %617 = arith.subf %616, %608 : vector<32x128xf32>
    %618 = arith.subf %617, %615 : vector<32x128xf32>
    %619 = vector.broadcast %595 : f32 to vector<32x128xf32>
    %620 = arith.mulf %619, %11 : vector<32x128xf32>
    %621 = vector.broadcast %598 : f32 to vector<32x128xf32>
    %622 = arith.mulf %621, %14 : vector<32x128xf32>
    %623 = arith.addf %620, %622 : vector<32x128xf32>
    %624 = vector.broadcast %601 : f32 to vector<32x128xf32>
    %625 = arith.addf %623, %624 : vector<32x128xf32>
    %cst_146 = arith.constant 0.000000e+00 : f32
    %626 = vector.broadcast %cst_146 : f32 to vector<32x128xf32>
    %627 = arith.cmpf oge, %608, %626 : vector<32x128xf32>
    %cst_147 = arith.constant 0.000000e+00 : f32
    %628 = vector.broadcast %cst_147 : f32 to vector<32x128xf32>
    %629 = arith.cmpf oge, %615, %628 : vector<32x128xf32>
    %630 = arith.andi %627, %629 : vector<32x128xi1>
    %cst_148 = arith.constant 0.000000e+00 : f32
    %631 = vector.broadcast %cst_148 : f32 to vector<32x128xf32>
    %632 = arith.cmpf oge, %618, %631 : vector<32x128xf32>
    %633 = arith.andi %630, %632 : vector<32x128xi1>
    %634 = arith.cmpf olt, %625, %567 : vector<32x128xf32>
    %635 = arith.andi %633, %634 : vector<32x128xi1>
    %636 = arith.select %635, %625, %567 : vector<32x128xi1>, vector<32x128xf32>
    %637 = vector.broadcast %c8_i32_133 : i32 to vector<32x128xi32>
    %638 = arith.select %635, %637, %569 : vector<32x128xi1>, vector<32x128xi32>
    %cst_149 = arith.constant 1.000000e+00 : f32
    %639 = vector.broadcast %cst_149 : f32 to vector<32x128xf32>
    %640 = arith.select %633, %639, %571 : vector<32x128xi1>, vector<32x128xf32>
    %c9_i32 = arith.constant 9 : i32
    %c12_i32_150 = arith.constant 12 : i32
    %641 = arith.muli %16, %c12_i32_150 : i32
    %642 = arith.addi %641, %c9_i32 : i32
    %c12_i32_151 = arith.constant 12 : i32
    %643 = arith.muli %642, %c12_i32_151 : i32
    %c0_i32_152 = arith.constant 0 : i32
    %644 = arith.addi %643, %c0_i32_152 : i32
    %645 = arith.index_cast %644 : i32 to index
    %646 = memref.load %arg1[%645] : memref<288xf32, #tpu.memory_space<smem>>
    %c1_i32_153 = arith.constant 1 : i32
    %647 = arith.addi %643, %c1_i32_153 : i32
    %648 = arith.index_cast %647 : i32 to index
    %649 = memref.load %arg1[%648] : memref<288xf32, #tpu.memory_space<smem>>
    %c2_i32_154 = arith.constant 2 : i32
    %650 = arith.addi %643, %c2_i32_154 : i32
    %651 = arith.index_cast %650 : i32 to index
    %652 = memref.load %arg1[%651] : memref<288xf32, #tpu.memory_space<smem>>
    %c3_i32_155 = arith.constant 3 : i32
    %653 = arith.addi %643, %c3_i32_155 : i32
    %654 = arith.index_cast %653 : i32 to index
    %655 = memref.load %arg1[%654] : memref<288xf32, #tpu.memory_space<smem>>
    %c4_i32_156 = arith.constant 4 : i32
    %656 = arith.addi %643, %c4_i32_156 : i32
    %657 = arith.index_cast %656 : i32 to index
    %658 = memref.load %arg1[%657] : memref<288xf32, #tpu.memory_space<smem>>
    %c5_i32_157 = arith.constant 5 : i32
    %659 = arith.addi %643, %c5_i32_157 : i32
    %660 = arith.index_cast %659 : i32 to index
    %661 = memref.load %arg1[%660] : memref<288xf32, #tpu.memory_space<smem>>
    %c6_i32_158 = arith.constant 6 : i32
    %662 = arith.addi %643, %c6_i32_158 : i32
    %663 = arith.index_cast %662 : i32 to index
    %664 = memref.load %arg1[%663] : memref<288xf32, #tpu.memory_space<smem>>
    %c7_i32_159 = arith.constant 7 : i32
    %665 = arith.addi %643, %c7_i32_159 : i32
    %666 = arith.index_cast %665 : i32 to index
    %667 = memref.load %arg1[%666] : memref<288xf32, #tpu.memory_space<smem>>
    %c8_i32_160 = arith.constant 8 : i32
    %668 = arith.addi %643, %c8_i32_160 : i32
    %669 = arith.index_cast %668 : i32 to index
    %670 = memref.load %arg1[%669] : memref<288xf32, #tpu.memory_space<smem>>
    %671 = vector.broadcast %646 : f32 to vector<32x128xf32>
    %672 = arith.mulf %671, %11 : vector<32x128xf32>
    %673 = vector.broadcast %649 : f32 to vector<32x128xf32>
    %674 = arith.mulf %673, %14 : vector<32x128xf32>
    %675 = arith.addf %672, %674 : vector<32x128xf32>
    %676 = vector.broadcast %652 : f32 to vector<32x128xf32>
    %677 = arith.addf %675, %676 : vector<32x128xf32>
    %678 = vector.broadcast %655 : f32 to vector<32x128xf32>
    %679 = arith.mulf %678, %11 : vector<32x128xf32>
    %680 = vector.broadcast %658 : f32 to vector<32x128xf32>
    %681 = arith.mulf %680, %14 : vector<32x128xf32>
    %682 = arith.addf %679, %681 : vector<32x128xf32>
    %683 = vector.broadcast %661 : f32 to vector<32x128xf32>
    %684 = arith.addf %682, %683 : vector<32x128xf32>
    %cst_161 = arith.constant 1.000000e+00 : f32
    %685 = vector.broadcast %cst_161 : f32 to vector<32x128xf32>
    %686 = arith.subf %685, %677 : vector<32x128xf32>
    %687 = arith.subf %686, %684 : vector<32x128xf32>
    %688 = vector.broadcast %664 : f32 to vector<32x128xf32>
    %689 = arith.mulf %688, %11 : vector<32x128xf32>
    %690 = vector.broadcast %667 : f32 to vector<32x128xf32>
    %691 = arith.mulf %690, %14 : vector<32x128xf32>
    %692 = arith.addf %689, %691 : vector<32x128xf32>
    %693 = vector.broadcast %670 : f32 to vector<32x128xf32>
    %694 = arith.addf %692, %693 : vector<32x128xf32>
    %cst_162 = arith.constant 0.000000e+00 : f32
    %695 = vector.broadcast %cst_162 : f32 to vector<32x128xf32>
    %696 = arith.cmpf oge, %677, %695 : vector<32x128xf32>
    %cst_163 = arith.constant 0.000000e+00 : f32
    %697 = vector.broadcast %cst_163 : f32 to vector<32x128xf32>
    %698 = arith.cmpf oge, %684, %697 : vector<32x128xf32>
    %699 = arith.andi %696, %698 : vector<32x128xi1>
    %cst_164 = arith.constant 0.000000e+00 : f32
    %700 = vector.broadcast %cst_164 : f32 to vector<32x128xf32>
    %701 = arith.cmpf oge, %687, %700 : vector<32x128xf32>
    %702 = arith.andi %699, %701 : vector<32x128xi1>
    %703 = arith.cmpf olt, %694, %636 : vector<32x128xf32>
    %704 = arith.andi %702, %703 : vector<32x128xi1>
    %705 = arith.select %704, %694, %636 : vector<32x128xi1>, vector<32x128xf32>
    %706 = vector.broadcast %c9_i32 : i32 to vector<32x128xi32>
    %707 = arith.select %704, %706, %638 : vector<32x128xi1>, vector<32x128xi32>
    %cst_165 = arith.constant 1.000000e+00 : f32
    %708 = vector.broadcast %cst_165 : f32 to vector<32x128xf32>
    %709 = arith.select %702, %708, %640 : vector<32x128xi1>, vector<32x128xf32>
    %c10_i32 = arith.constant 10 : i32
    %c12_i32_166 = arith.constant 12 : i32
    %710 = arith.muli %16, %c12_i32_166 : i32
    %711 = arith.addi %710, %c10_i32 : i32
    %c12_i32_167 = arith.constant 12 : i32
    %712 = arith.muli %711, %c12_i32_167 : i32
    %c0_i32_168 = arith.constant 0 : i32
    %713 = arith.addi %712, %c0_i32_168 : i32
    %714 = arith.index_cast %713 : i32 to index
    %715 = memref.load %arg1[%714] : memref<288xf32, #tpu.memory_space<smem>>
    %c1_i32_169 = arith.constant 1 : i32
    %716 = arith.addi %712, %c1_i32_169 : i32
    %717 = arith.index_cast %716 : i32 to index
    %718 = memref.load %arg1[%717] : memref<288xf32, #tpu.memory_space<smem>>
    %c2_i32_170 = arith.constant 2 : i32
    %719 = arith.addi %712, %c2_i32_170 : i32
    %720 = arith.index_cast %719 : i32 to index
    %721 = memref.load %arg1[%720] : memref<288xf32, #tpu.memory_space<smem>>
    %c3_i32_171 = arith.constant 3 : i32
    %722 = arith.addi %712, %c3_i32_171 : i32
    %723 = arith.index_cast %722 : i32 to index
    %724 = memref.load %arg1[%723] : memref<288xf32, #tpu.memory_space<smem>>
    %c4_i32_172 = arith.constant 4 : i32
    %725 = arith.addi %712, %c4_i32_172 : i32
    %726 = arith.index_cast %725 : i32 to index
    %727 = memref.load %arg1[%726] : memref<288xf32, #tpu.memory_space<smem>>
    %c5_i32_173 = arith.constant 5 : i32
    %728 = arith.addi %712, %c5_i32_173 : i32
    %729 = arith.index_cast %728 : i32 to index
    %730 = memref.load %arg1[%729] : memref<288xf32, #tpu.memory_space<smem>>
    %c6_i32_174 = arith.constant 6 : i32
    %731 = arith.addi %712, %c6_i32_174 : i32
    %732 = arith.index_cast %731 : i32 to index
    %733 = memref.load %arg1[%732] : memref<288xf32, #tpu.memory_space<smem>>
    %c7_i32_175 = arith.constant 7 : i32
    %734 = arith.addi %712, %c7_i32_175 : i32
    %735 = arith.index_cast %734 : i32 to index
    %736 = memref.load %arg1[%735] : memref<288xf32, #tpu.memory_space<smem>>
    %c8_i32_176 = arith.constant 8 : i32
    %737 = arith.addi %712, %c8_i32_176 : i32
    %738 = arith.index_cast %737 : i32 to index
    %739 = memref.load %arg1[%738] : memref<288xf32, #tpu.memory_space<smem>>
    %740 = vector.broadcast %715 : f32 to vector<32x128xf32>
    %741 = arith.mulf %740, %11 : vector<32x128xf32>
    %742 = vector.broadcast %718 : f32 to vector<32x128xf32>
    %743 = arith.mulf %742, %14 : vector<32x128xf32>
    %744 = arith.addf %741, %743 : vector<32x128xf32>
    %745 = vector.broadcast %721 : f32 to vector<32x128xf32>
    %746 = arith.addf %744, %745 : vector<32x128xf32>
    %747 = vector.broadcast %724 : f32 to vector<32x128xf32>
    %748 = arith.mulf %747, %11 : vector<32x128xf32>
    %749 = vector.broadcast %727 : f32 to vector<32x128xf32>
    %750 = arith.mulf %749, %14 : vector<32x128xf32>
    %751 = arith.addf %748, %750 : vector<32x128xf32>
    %752 = vector.broadcast %730 : f32 to vector<32x128xf32>
    %753 = arith.addf %751, %752 : vector<32x128xf32>
    %cst_177 = arith.constant 1.000000e+00 : f32
    %754 = vector.broadcast %cst_177 : f32 to vector<32x128xf32>
    %755 = arith.subf %754, %746 : vector<32x128xf32>
    %756 = arith.subf %755, %753 : vector<32x128xf32>
    %757 = vector.broadcast %733 : f32 to vector<32x128xf32>
    %758 = arith.mulf %757, %11 : vector<32x128xf32>
    %759 = vector.broadcast %736 : f32 to vector<32x128xf32>
    %760 = arith.mulf %759, %14 : vector<32x128xf32>
    %761 = arith.addf %758, %760 : vector<32x128xf32>
    %762 = vector.broadcast %739 : f32 to vector<32x128xf32>
    %763 = arith.addf %761, %762 : vector<32x128xf32>
    %cst_178 = arith.constant 0.000000e+00 : f32
    %764 = vector.broadcast %cst_178 : f32 to vector<32x128xf32>
    %765 = arith.cmpf oge, %746, %764 : vector<32x128xf32>
    %cst_179 = arith.constant 0.000000e+00 : f32
    %766 = vector.broadcast %cst_179 : f32 to vector<32x128xf32>
    %767 = arith.cmpf oge, %753, %766 : vector<32x128xf32>
    %768 = arith.andi %765, %767 : vector<32x128xi1>
    %cst_180 = arith.constant 0.000000e+00 : f32
    %769 = vector.broadcast %cst_180 : f32 to vector<32x128xf32>
    %770 = arith.cmpf oge, %756, %769 : vector<32x128xf32>
    %771 = arith.andi %768, %770 : vector<32x128xi1>
    %772 = arith.cmpf olt, %763, %705 : vector<32x128xf32>
    %773 = arith.andi %771, %772 : vector<32x128xi1>
    %774 = arith.select %773, %763, %705 : vector<32x128xi1>, vector<32x128xf32>
    %775 = vector.broadcast %c10_i32 : i32 to vector<32x128xi32>
    %776 = arith.select %773, %775, %707 : vector<32x128xi1>, vector<32x128xi32>
    %cst_181 = arith.constant 1.000000e+00 : f32
    %777 = vector.broadcast %cst_181 : f32 to vector<32x128xf32>
    %778 = arith.select %771, %777, %709 : vector<32x128xi1>, vector<32x128xf32>
    %c11_i32 = arith.constant 11 : i32
    %c12_i32_182 = arith.constant 12 : i32
    %779 = arith.muli %16, %c12_i32_182 : i32
    %780 = arith.addi %779, %c11_i32 : i32
    %c12_i32_183 = arith.constant 12 : i32
    %781 = arith.muli %780, %c12_i32_183 : i32
    %c0_i32_184 = arith.constant 0 : i32
    %782 = arith.addi %781, %c0_i32_184 : i32
    %783 = arith.index_cast %782 : i32 to index
    %784 = memref.load %arg1[%783] : memref<288xf32, #tpu.memory_space<smem>>
    %c1_i32_185 = arith.constant 1 : i32
    %785 = arith.addi %781, %c1_i32_185 : i32
    %786 = arith.index_cast %785 : i32 to index
    %787 = memref.load %arg1[%786] : memref<288xf32, #tpu.memory_space<smem>>
    %c2_i32_186 = arith.constant 2 : i32
    %788 = arith.addi %781, %c2_i32_186 : i32
    %789 = arith.index_cast %788 : i32 to index
    %790 = memref.load %arg1[%789] : memref<288xf32, #tpu.memory_space<smem>>
    %c3_i32_187 = arith.constant 3 : i32
    %791 = arith.addi %781, %c3_i32_187 : i32
    %792 = arith.index_cast %791 : i32 to index
    %793 = memref.load %arg1[%792] : memref<288xf32, #tpu.memory_space<smem>>
    %c4_i32_188 = arith.constant 4 : i32
    %794 = arith.addi %781, %c4_i32_188 : i32
    %795 = arith.index_cast %794 : i32 to index
    %796 = memref.load %arg1[%795] : memref<288xf32, #tpu.memory_space<smem>>
    %c5_i32_189 = arith.constant 5 : i32
    %797 = arith.addi %781, %c5_i32_189 : i32
    %798 = arith.index_cast %797 : i32 to index
    %799 = memref.load %arg1[%798] : memref<288xf32, #tpu.memory_space<smem>>
    %c6_i32_190 = arith.constant 6 : i32
    %800 = arith.addi %781, %c6_i32_190 : i32
    %801 = arith.index_cast %800 : i32 to index
    %802 = memref.load %arg1[%801] : memref<288xf32, #tpu.memory_space<smem>>
    %c7_i32_191 = arith.constant 7 : i32
    %803 = arith.addi %781, %c7_i32_191 : i32
    %804 = arith.index_cast %803 : i32 to index
    %805 = memref.load %arg1[%804] : memref<288xf32, #tpu.memory_space<smem>>
    %c8_i32_192 = arith.constant 8 : i32
    %806 = arith.addi %781, %c8_i32_192 : i32
    %807 = arith.index_cast %806 : i32 to index
    %808 = memref.load %arg1[%807] : memref<288xf32, #tpu.memory_space<smem>>
    %809 = vector.broadcast %784 : f32 to vector<32x128xf32>
    %810 = arith.mulf %809, %11 : vector<32x128xf32>
    %811 = vector.broadcast %787 : f32 to vector<32x128xf32>
    %812 = arith.mulf %811, %14 : vector<32x128xf32>
    %813 = arith.addf %810, %812 : vector<32x128xf32>
    %814 = vector.broadcast %790 : f32 to vector<32x128xf32>
    %815 = arith.addf %813, %814 : vector<32x128xf32>
    %816 = vector.broadcast %793 : f32 to vector<32x128xf32>
    %817 = arith.mulf %816, %11 : vector<32x128xf32>
    %818 = vector.broadcast %796 : f32 to vector<32x128xf32>
    %819 = arith.mulf %818, %14 : vector<32x128xf32>
    %820 = arith.addf %817, %819 : vector<32x128xf32>
    %821 = vector.broadcast %799 : f32 to vector<32x128xf32>
    %822 = arith.addf %820, %821 : vector<32x128xf32>
    %cst_193 = arith.constant 1.000000e+00 : f32
    %823 = vector.broadcast %cst_193 : f32 to vector<32x128xf32>
    %824 = arith.subf %823, %815 : vector<32x128xf32>
    %825 = arith.subf %824, %822 : vector<32x128xf32>
    %826 = vector.broadcast %802 : f32 to vector<32x128xf32>
    %827 = arith.mulf %826, %11 : vector<32x128xf32>
    %828 = vector.broadcast %805 : f32 to vector<32x128xf32>
    %829 = arith.mulf %828, %14 : vector<32x128xf32>
    %830 = arith.addf %827, %829 : vector<32x128xf32>
    %831 = vector.broadcast %808 : f32 to vector<32x128xf32>
    %832 = arith.addf %830, %831 : vector<32x128xf32>
    %cst_194 = arith.constant 0.000000e+00 : f32
    %833 = vector.broadcast %cst_194 : f32 to vector<32x128xf32>
    %834 = arith.cmpf oge, %815, %833 : vector<32x128xf32>
    %cst_195 = arith.constant 0.000000e+00 : f32
    %835 = vector.broadcast %cst_195 : f32 to vector<32x128xf32>
    %836 = arith.cmpf oge, %822, %835 : vector<32x128xf32>
    %837 = arith.andi %834, %836 : vector<32x128xi1>
    %cst_196 = arith.constant 0.000000e+00 : f32
    %838 = vector.broadcast %cst_196 : f32 to vector<32x128xf32>
    %839 = arith.cmpf oge, %825, %838 : vector<32x128xf32>
    %840 = arith.andi %837, %839 : vector<32x128xi1>
    %841 = arith.cmpf olt, %832, %774 : vector<32x128xf32>
    %842 = arith.andi %840, %841 : vector<32x128xi1>
    %843 = arith.select %842, %832, %774 : vector<32x128xi1>, vector<32x128xf32>
    %844 = vector.broadcast %c11_i32 : i32 to vector<32x128xi32>
    %845 = arith.select %842, %844, %776 : vector<32x128xi1>, vector<32x128xi32>
    %cst_197 = arith.constant 1.000000e+00 : f32
    %846 = vector.broadcast %cst_197 : f32 to vector<32x128xf32>
    %847 = arith.select %840, %846, %778 : vector<32x128xi1>, vector<32x128xf32>
    %c12_i32_198 = arith.constant 12 : i32
    %cst_199 = arith.constant 1.000000e+00 : f32
    %848 = vector.broadcast %cst_199 : f32 to vector<32x128xf32>
    %cst_200 = arith.constant 1.000000e+00 : f32
    %849 = vector.broadcast %cst_200 : f32 to vector<32x128xf32>
    %cst_201 = arith.constant 1.000000e+00 : f32
    %850 = vector.broadcast %cst_201 : f32 to vector<32x128xf32>
    %c0_i32_202 = arith.constant 0 : i32
    %c12_i32_203 = arith.constant 12 : i32
    %851 = arith.muli %16, %c12_i32_203 : i32
    %852 = arith.addi %851, %c0_i32_202 : i32
    %c12_i32_204 = arith.constant 12 : i32
    %853 = arith.muli %852, %c12_i32_204 : i32
    %854 = vector.broadcast %c0_i32_202 : i32 to vector<32x128xi32>
    %855 = arith.cmpi eq, %845, %854 : vector<32x128xi32>
    %c9_i32_205 = arith.constant 9 : i32
    %856 = arith.addi %853, %c9_i32_205 : i32
    %857 = arith.index_cast %856 : i32 to index
    %858 = memref.load %arg1[%857] : memref<288xf32, #tpu.memory_space<smem>>
    %859 = vector.broadcast %858 : f32 to vector<32x128xf32>
    %860 = arith.select %855, %859, %848 : vector<32x128xi1>, vector<32x128xf32>
    %c10_i32_206 = arith.constant 10 : i32
    %861 = arith.addi %853, %c10_i32_206 : i32
    %862 = arith.index_cast %861 : i32 to index
    %863 = memref.load %arg1[%862] : memref<288xf32, #tpu.memory_space<smem>>
    %864 = vector.broadcast %863 : f32 to vector<32x128xf32>
    %865 = arith.select %855, %864, %849 : vector<32x128xi1>, vector<32x128xf32>
    %c11_i32_207 = arith.constant 11 : i32
    %866 = arith.addi %853, %c11_i32_207 : i32
    %867 = arith.index_cast %866 : i32 to index
    %868 = memref.load %arg1[%867] : memref<288xf32, #tpu.memory_space<smem>>
    %869 = vector.broadcast %868 : f32 to vector<32x128xf32>
    %870 = arith.select %855, %869, %850 : vector<32x128xi1>, vector<32x128xf32>
    %c1_i32_208 = arith.constant 1 : i32
    %c12_i32_209 = arith.constant 12 : i32
    %871 = arith.muli %16, %c12_i32_209 : i32
    %872 = arith.addi %871, %c1_i32_208 : i32
    %c12_i32_210 = arith.constant 12 : i32
    %873 = arith.muli %872, %c12_i32_210 : i32
    %874 = vector.broadcast %c1_i32_208 : i32 to vector<32x128xi32>
    %875 = arith.cmpi eq, %845, %874 : vector<32x128xi32>
    %c9_i32_211 = arith.constant 9 : i32
    %876 = arith.addi %873, %c9_i32_211 : i32
    %877 = arith.index_cast %876 : i32 to index
    %878 = memref.load %arg1[%877] : memref<288xf32, #tpu.memory_space<smem>>
    %879 = vector.broadcast %878 : f32 to vector<32x128xf32>
    %880 = arith.select %875, %879, %860 : vector<32x128xi1>, vector<32x128xf32>
    %c10_i32_212 = arith.constant 10 : i32
    %881 = arith.addi %873, %c10_i32_212 : i32
    %882 = arith.index_cast %881 : i32 to index
    %883 = memref.load %arg1[%882] : memref<288xf32, #tpu.memory_space<smem>>
    %884 = vector.broadcast %883 : f32 to vector<32x128xf32>
    %885 = arith.select %875, %884, %865 : vector<32x128xi1>, vector<32x128xf32>
    %c11_i32_213 = arith.constant 11 : i32
    %886 = arith.addi %873, %c11_i32_213 : i32
    %887 = arith.index_cast %886 : i32 to index
    %888 = memref.load %arg1[%887] : memref<288xf32, #tpu.memory_space<smem>>
    %889 = vector.broadcast %888 : f32 to vector<32x128xf32>
    %890 = arith.select %875, %889, %870 : vector<32x128xi1>, vector<32x128xf32>
    %c2_i32_214 = arith.constant 2 : i32
    %c12_i32_215 = arith.constant 12 : i32
    %891 = arith.muli %16, %c12_i32_215 : i32
    %892 = arith.addi %891, %c2_i32_214 : i32
    %c12_i32_216 = arith.constant 12 : i32
    %893 = arith.muli %892, %c12_i32_216 : i32
    %894 = vector.broadcast %c2_i32_214 : i32 to vector<32x128xi32>
    %895 = arith.cmpi eq, %845, %894 : vector<32x128xi32>
    %c9_i32_217 = arith.constant 9 : i32
    %896 = arith.addi %893, %c9_i32_217 : i32
    %897 = arith.index_cast %896 : i32 to index
    %898 = memref.load %arg1[%897] : memref<288xf32, #tpu.memory_space<smem>>
    %899 = vector.broadcast %898 : f32 to vector<32x128xf32>
    %900 = arith.select %895, %899, %880 : vector<32x128xi1>, vector<32x128xf32>
    %c10_i32_218 = arith.constant 10 : i32
    %901 = arith.addi %893, %c10_i32_218 : i32
    %902 = arith.index_cast %901 : i32 to index
    %903 = memref.load %arg1[%902] : memref<288xf32, #tpu.memory_space<smem>>
    %904 = vector.broadcast %903 : f32 to vector<32x128xf32>
    %905 = arith.select %895, %904, %885 : vector<32x128xi1>, vector<32x128xf32>
    %c11_i32_219 = arith.constant 11 : i32
    %906 = arith.addi %893, %c11_i32_219 : i32
    %907 = arith.index_cast %906 : i32 to index
    %908 = memref.load %arg1[%907] : memref<288xf32, #tpu.memory_space<smem>>
    %909 = vector.broadcast %908 : f32 to vector<32x128xf32>
    %910 = arith.select %895, %909, %890 : vector<32x128xi1>, vector<32x128xf32>
    %c3_i32_220 = arith.constant 3 : i32
    %c12_i32_221 = arith.constant 12 : i32
    %911 = arith.muli %16, %c12_i32_221 : i32
    %912 = arith.addi %911, %c3_i32_220 : i32
    %c12_i32_222 = arith.constant 12 : i32
    %913 = arith.muli %912, %c12_i32_222 : i32
    %914 = vector.broadcast %c3_i32_220 : i32 to vector<32x128xi32>
    %915 = arith.cmpi eq, %845, %914 : vector<32x128xi32>
    %c9_i32_223 = arith.constant 9 : i32
    %916 = arith.addi %913, %c9_i32_223 : i32
    %917 = arith.index_cast %916 : i32 to index
    %918 = memref.load %arg1[%917] : memref<288xf32, #tpu.memory_space<smem>>
    %919 = vector.broadcast %918 : f32 to vector<32x128xf32>
    %920 = arith.select %915, %919, %900 : vector<32x128xi1>, vector<32x128xf32>
    %c10_i32_224 = arith.constant 10 : i32
    %921 = arith.addi %913, %c10_i32_224 : i32
    %922 = arith.index_cast %921 : i32 to index
    %923 = memref.load %arg1[%922] : memref<288xf32, #tpu.memory_space<smem>>
    %924 = vector.broadcast %923 : f32 to vector<32x128xf32>
    %925 = arith.select %915, %924, %905 : vector<32x128xi1>, vector<32x128xf32>
    %c11_i32_225 = arith.constant 11 : i32
    %926 = arith.addi %913, %c11_i32_225 : i32
    %927 = arith.index_cast %926 : i32 to index
    %928 = memref.load %arg1[%927] : memref<288xf32, #tpu.memory_space<smem>>
    %929 = vector.broadcast %928 : f32 to vector<32x128xf32>
    %930 = arith.select %915, %929, %910 : vector<32x128xi1>, vector<32x128xf32>
    %c4_i32_226 = arith.constant 4 : i32
    %c12_i32_227 = arith.constant 12 : i32
    %931 = arith.muli %16, %c12_i32_227 : i32
    %932 = arith.addi %931, %c4_i32_226 : i32
    %c12_i32_228 = arith.constant 12 : i32
    %933 = arith.muli %932, %c12_i32_228 : i32
    %934 = vector.broadcast %c4_i32_226 : i32 to vector<32x128xi32>
    %935 = arith.cmpi eq, %845, %934 : vector<32x128xi32>
    %c9_i32_229 = arith.constant 9 : i32
    %936 = arith.addi %933, %c9_i32_229 : i32
    %937 = arith.index_cast %936 : i32 to index
    %938 = memref.load %arg1[%937] : memref<288xf32, #tpu.memory_space<smem>>
    %939 = vector.broadcast %938 : f32 to vector<32x128xf32>
    %940 = arith.select %935, %939, %920 : vector<32x128xi1>, vector<32x128xf32>
    %c10_i32_230 = arith.constant 10 : i32
    %941 = arith.addi %933, %c10_i32_230 : i32
    %942 = arith.index_cast %941 : i32 to index
    %943 = memref.load %arg1[%942] : memref<288xf32, #tpu.memory_space<smem>>
    %944 = vector.broadcast %943 : f32 to vector<32x128xf32>
    %945 = arith.select %935, %944, %925 : vector<32x128xi1>, vector<32x128xf32>
    %c11_i32_231 = arith.constant 11 : i32
    %946 = arith.addi %933, %c11_i32_231 : i32
    %947 = arith.index_cast %946 : i32 to index
    %948 = memref.load %arg1[%947] : memref<288xf32, #tpu.memory_space<smem>>
    %949 = vector.broadcast %948 : f32 to vector<32x128xf32>
    %950 = arith.select %935, %949, %930 : vector<32x128xi1>, vector<32x128xf32>
    %c5_i32_232 = arith.constant 5 : i32
    %c12_i32_233 = arith.constant 12 : i32
    %951 = arith.muli %16, %c12_i32_233 : i32
    %952 = arith.addi %951, %c5_i32_232 : i32
    %c12_i32_234 = arith.constant 12 : i32
    %953 = arith.muli %952, %c12_i32_234 : i32
    %954 = vector.broadcast %c5_i32_232 : i32 to vector<32x128xi32>
    %955 = arith.cmpi eq, %845, %954 : vector<32x128xi32>
    %c9_i32_235 = arith.constant 9 : i32
    %956 = arith.addi %953, %c9_i32_235 : i32
    %957 = arith.index_cast %956 : i32 to index
    %958 = memref.load %arg1[%957] : memref<288xf32, #tpu.memory_space<smem>>
    %959 = vector.broadcast %958 : f32 to vector<32x128xf32>
    %960 = arith.select %955, %959, %940 : vector<32x128xi1>, vector<32x128xf32>
    %c10_i32_236 = arith.constant 10 : i32
    %961 = arith.addi %953, %c10_i32_236 : i32
    %962 = arith.index_cast %961 : i32 to index
    %963 = memref.load %arg1[%962] : memref<288xf32, #tpu.memory_space<smem>>
    %964 = vector.broadcast %963 : f32 to vector<32x128xf32>
    %965 = arith.select %955, %964, %945 : vector<32x128xi1>, vector<32x128xf32>
    %c11_i32_237 = arith.constant 11 : i32
    %966 = arith.addi %953, %c11_i32_237 : i32
    %967 = arith.index_cast %966 : i32 to index
    %968 = memref.load %arg1[%967] : memref<288xf32, #tpu.memory_space<smem>>
    %969 = vector.broadcast %968 : f32 to vector<32x128xf32>
    %970 = arith.select %955, %969, %950 : vector<32x128xi1>, vector<32x128xf32>
    %c6_i32_238 = arith.constant 6 : i32
    %c12_i32_239 = arith.constant 12 : i32
    %971 = arith.muli %16, %c12_i32_239 : i32
    %972 = arith.addi %971, %c6_i32_238 : i32
    %c12_i32_240 = arith.constant 12 : i32
    %973 = arith.muli %972, %c12_i32_240 : i32
    %974 = vector.broadcast %c6_i32_238 : i32 to vector<32x128xi32>
    %975 = arith.cmpi eq, %845, %974 : vector<32x128xi32>
    %c9_i32_241 = arith.constant 9 : i32
    %976 = arith.addi %973, %c9_i32_241 : i32
    %977 = arith.index_cast %976 : i32 to index
    %978 = memref.load %arg1[%977] : memref<288xf32, #tpu.memory_space<smem>>
    %979 = vector.broadcast %978 : f32 to vector<32x128xf32>
    %980 = arith.select %975, %979, %960 : vector<32x128xi1>, vector<32x128xf32>
    %c10_i32_242 = arith.constant 10 : i32
    %981 = arith.addi %973, %c10_i32_242 : i32
    %982 = arith.index_cast %981 : i32 to index
    %983 = memref.load %arg1[%982] : memref<288xf32, #tpu.memory_space<smem>>
    %984 = vector.broadcast %983 : f32 to vector<32x128xf32>
    %985 = arith.select %975, %984, %965 : vector<32x128xi1>, vector<32x128xf32>
    %c11_i32_243 = arith.constant 11 : i32
    %986 = arith.addi %973, %c11_i32_243 : i32
    %987 = arith.index_cast %986 : i32 to index
    %988 = memref.load %arg1[%987] : memref<288xf32, #tpu.memory_space<smem>>
    %989 = vector.broadcast %988 : f32 to vector<32x128xf32>
    %990 = arith.select %975, %989, %970 : vector<32x128xi1>, vector<32x128xf32>
    %c7_i32_244 = arith.constant 7 : i32
    %c12_i32_245 = arith.constant 12 : i32
    %991 = arith.muli %16, %c12_i32_245 : i32
    %992 = arith.addi %991, %c7_i32_244 : i32
    %c12_i32_246 = arith.constant 12 : i32
    %993 = arith.muli %992, %c12_i32_246 : i32
    %994 = vector.broadcast %c7_i32_244 : i32 to vector<32x128xi32>
    %995 = arith.cmpi eq, %845, %994 : vector<32x128xi32>
    %c9_i32_247 = arith.constant 9 : i32
    %996 = arith.addi %993, %c9_i32_247 : i32
    %997 = arith.index_cast %996 : i32 to index
    %998 = memref.load %arg1[%997] : memref<288xf32, #tpu.memory_space<smem>>
    %999 = vector.broadcast %998 : f32 to vector<32x128xf32>
    %1000 = arith.select %995, %999, %980 : vector<32x128xi1>, vector<32x128xf32>
    %c10_i32_248 = arith.constant 10 : i32
    %1001 = arith.addi %993, %c10_i32_248 : i32
    %1002 = arith.index_cast %1001 : i32 to index
    %1003 = memref.load %arg1[%1002] : memref<288xf32, #tpu.memory_space<smem>>
    %1004 = vector.broadcast %1003 : f32 to vector<32x128xf32>
    %1005 = arith.select %995, %1004, %985 : vector<32x128xi1>, vector<32x128xf32>
    %c11_i32_249 = arith.constant 11 : i32
    %1006 = arith.addi %993, %c11_i32_249 : i32
    %1007 = arith.index_cast %1006 : i32 to index
    %1008 = memref.load %arg1[%1007] : memref<288xf32, #tpu.memory_space<smem>>
    %1009 = vector.broadcast %1008 : f32 to vector<32x128xf32>
    %1010 = arith.select %995, %1009, %990 : vector<32x128xi1>, vector<32x128xf32>
    %c8_i32_250 = arith.constant 8 : i32
    %c12_i32_251 = arith.constant 12 : i32
    %1011 = arith.muli %16, %c12_i32_251 : i32
    %1012 = arith.addi %1011, %c8_i32_250 : i32
    %c12_i32_252 = arith.constant 12 : i32
    %1013 = arith.muli %1012, %c12_i32_252 : i32
    %1014 = vector.broadcast %c8_i32_250 : i32 to vector<32x128xi32>
    %1015 = arith.cmpi eq, %845, %1014 : vector<32x128xi32>
    %c9_i32_253 = arith.constant 9 : i32
    %1016 = arith.addi %1013, %c9_i32_253 : i32
    %1017 = arith.index_cast %1016 : i32 to index
    %1018 = memref.load %arg1[%1017] : memref<288xf32, #tpu.memory_space<smem>>
    %1019 = vector.broadcast %1018 : f32 to vector<32x128xf32>
    %1020 = arith.select %1015, %1019, %1000 : vector<32x128xi1>, vector<32x128xf32>
    %c10_i32_254 = arith.constant 10 : i32
    %1021 = arith.addi %1013, %c10_i32_254 : i32
    %1022 = arith.index_cast %1021 : i32 to index
    %1023 = memref.load %arg1[%1022] : memref<288xf32, #tpu.memory_space<smem>>
    %1024 = vector.broadcast %1023 : f32 to vector<32x128xf32>
    %1025 = arith.select %1015, %1024, %1005 : vector<32x128xi1>, vector<32x128xf32>
    %c11_i32_255 = arith.constant 11 : i32
    %1026 = arith.addi %1013, %c11_i32_255 : i32
    %1027 = arith.index_cast %1026 : i32 to index
    %1028 = memref.load %arg1[%1027] : memref<288xf32, #tpu.memory_space<smem>>
    %1029 = vector.broadcast %1028 : f32 to vector<32x128xf32>
    %1030 = arith.select %1015, %1029, %1010 : vector<32x128xi1>, vector<32x128xf32>
    %c9_i32_256 = arith.constant 9 : i32
    %c12_i32_257 = arith.constant 12 : i32
    %1031 = arith.muli %16, %c12_i32_257 : i32
    %1032 = arith.addi %1031, %c9_i32_256 : i32
    %c12_i32_258 = arith.constant 12 : i32
    %1033 = arith.muli %1032, %c12_i32_258 : i32
    %1034 = vector.broadcast %c9_i32_256 : i32 to vector<32x128xi32>
    %1035 = arith.cmpi eq, %845, %1034 : vector<32x128xi32>
    %c9_i32_259 = arith.constant 9 : i32
    %1036 = arith.addi %1033, %c9_i32_259 : i32
    %1037 = arith.index_cast %1036 : i32 to index
    %1038 = memref.load %arg1[%1037] : memref<288xf32, #tpu.memory_space<smem>>
    %1039 = vector.broadcast %1038 : f32 to vector<32x128xf32>
    %1040 = arith.select %1035, %1039, %1020 : vector<32x128xi1>, vector<32x128xf32>
    %c10_i32_260 = arith.constant 10 : i32
    %1041 = arith.addi %1033, %c10_i32_260 : i32
    %1042 = arith.index_cast %1041 : i32 to index
    %1043 = memref.load %arg1[%1042] : memref<288xf32, #tpu.memory_space<smem>>
    %1044 = vector.broadcast %1043 : f32 to vector<32x128xf32>
    %1045 = arith.select %1035, %1044, %1025 : vector<32x128xi1>, vector<32x128xf32>
    %c11_i32_261 = arith.constant 11 : i32
    %1046 = arith.addi %1033, %c11_i32_261 : i32
    %1047 = arith.index_cast %1046 : i32 to index
    %1048 = memref.load %arg1[%1047] : memref<288xf32, #tpu.memory_space<smem>>
    %1049 = vector.broadcast %1048 : f32 to vector<32x128xf32>
    %1050 = arith.select %1035, %1049, %1030 : vector<32x128xi1>, vector<32x128xf32>
    %c10_i32_262 = arith.constant 10 : i32
    %c12_i32_263 = arith.constant 12 : i32
    %1051 = arith.muli %16, %c12_i32_263 : i32
    %1052 = arith.addi %1051, %c10_i32_262 : i32
    %c12_i32_264 = arith.constant 12 : i32
    %1053 = arith.muli %1052, %c12_i32_264 : i32
    %1054 = vector.broadcast %c10_i32_262 : i32 to vector<32x128xi32>
    %1055 = arith.cmpi eq, %845, %1054 : vector<32x128xi32>
    %c9_i32_265 = arith.constant 9 : i32
    %1056 = arith.addi %1053, %c9_i32_265 : i32
    %1057 = arith.index_cast %1056 : i32 to index
    %1058 = memref.load %arg1[%1057] : memref<288xf32, #tpu.memory_space<smem>>
    %1059 = vector.broadcast %1058 : f32 to vector<32x128xf32>
    %1060 = arith.select %1055, %1059, %1040 : vector<32x128xi1>, vector<32x128xf32>
    %c10_i32_266 = arith.constant 10 : i32
    %1061 = arith.addi %1053, %c10_i32_266 : i32
    %1062 = arith.index_cast %1061 : i32 to index
    %1063 = memref.load %arg1[%1062] : memref<288xf32, #tpu.memory_space<smem>>
    %1064 = vector.broadcast %1063 : f32 to vector<32x128xf32>
    %1065 = arith.select %1055, %1064, %1045 : vector<32x128xi1>, vector<32x128xf32>
    %c11_i32_267 = arith.constant 11 : i32
    %1066 = arith.addi %1053, %c11_i32_267 : i32
    %1067 = arith.index_cast %1066 : i32 to index
    %1068 = memref.load %arg1[%1067] : memref<288xf32, #tpu.memory_space<smem>>
    %1069 = vector.broadcast %1068 : f32 to vector<32x128xf32>
    %1070 = arith.select %1055, %1069, %1050 : vector<32x128xi1>, vector<32x128xf32>
    %c11_i32_268 = arith.constant 11 : i32
    %c12_i32_269 = arith.constant 12 : i32
    %1071 = arith.muli %16, %c12_i32_269 : i32
    %1072 = arith.addi %1071, %c11_i32_268 : i32
    %c12_i32_270 = arith.constant 12 : i32
    %1073 = arith.muli %1072, %c12_i32_270 : i32
    %1074 = vector.broadcast %c11_i32_268 : i32 to vector<32x128xi32>
    %1075 = arith.cmpi eq, %845, %1074 : vector<32x128xi32>
    %c9_i32_271 = arith.constant 9 : i32
    %1076 = arith.addi %1073, %c9_i32_271 : i32
    %1077 = arith.index_cast %1076 : i32 to index
    %1078 = memref.load %arg1[%1077] : memref<288xf32, #tpu.memory_space<smem>>
    %1079 = vector.broadcast %1078 : f32 to vector<32x128xf32>
    %1080 = arith.select %1075, %1079, %1060 : vector<32x128xi1>, vector<32x128xf32>
    %c10_i32_272 = arith.constant 10 : i32
    %1081 = arith.addi %1073, %c10_i32_272 : i32
    %1082 = arith.index_cast %1081 : i32 to index
    %1083 = memref.load %arg1[%1082] : memref<288xf32, #tpu.memory_space<smem>>
    %1084 = vector.broadcast %1083 : f32 to vector<32x128xf32>
    %1085 = arith.select %1075, %1084, %1065 : vector<32x128xi1>, vector<32x128xf32>
    %c11_i32_273 = arith.constant 11 : i32
    %1086 = arith.addi %1073, %c11_i32_273 : i32
    %1087 = arith.index_cast %1086 : i32 to index
    %1088 = memref.load %arg1[%1087] : memref<288xf32, #tpu.memory_space<smem>>
    %1089 = vector.broadcast %1088 : f32 to vector<32x128xf32>
    %1090 = arith.select %1075, %1089, %1070 : vector<32x128xi1>, vector<32x128xf32>
    %c12_i32_274 = arith.constant 12 : i32
    %c0 = arith.constant 0 : index
    %c0_275 = arith.constant 0 : index
    %c0_276 = arith.constant 0 : index
    %c0_277 = arith.constant 0 : index
    %1091 = vector.load %arg2[%c0, %c0_275, %c0_276, %c0_277] : memref<2x5x32x128xf32, #tpu.memory_space<vmem>>, vector<1x1x32x128xf32>
    %1092 = vector.shape_cast %1091 : vector<1x1x32x128xf32> to vector<32x128xf32>
    %1093 = vector.shape_cast %1080 : vector<32x128xf32> to vector<1x1x32x128xf32>
    tpu.vector_store %arg2[%c0, %c0_275, %c0_276, %c0_277], %1093 {strides = array<i32>} : memref<2x5x32x128xf32, #tpu.memory_space<vmem>>, vector<1x1x32x128xf32>,
    %c0_278 = arith.constant 0 : index
    %c1 = arith.constant 1 : index
    %c0_279 = arith.constant 0 : index
    %c0_280 = arith.constant 0 : index
    %1094 = vector.load %arg2[%c0_278, %c1, %c0_279, %c0_280] : memref<2x5x32x128xf32, #tpu.memory_space<vmem>>, vector<1x1x32x128xf32>
    %1095 = vector.shape_cast %1094 : vector<1x1x32x128xf32> to vector<32x128xf32>
    %1096 = vector.shape_cast %1085 : vector<32x128xf32> to vector<1x1x32x128xf32>
    tpu.vector_store %arg2[%c0_278, %c1, %c0_279, %c0_280], %1096 {strides = array<i32>} : memref<2x5x32x128xf32, #tpu.memory_space<vmem>>, vector<1x1x32x128xf32>,
    %c0_281 = arith.constant 0 : index
    %c2 = arith.constant 2 : index
    %c0_282 = arith.constant 0 : index
    %c0_283 = arith.constant 0 : index
    %1097 = vector.load %arg2[%c0_281, %c2, %c0_282, %c0_283] : memref<2x5x32x128xf32, #tpu.memory_space<vmem>>, vector<1x1x32x128xf32>
    %1098 = vector.shape_cast %1097 : vector<1x1x32x128xf32> to vector<32x128xf32>
    %1099 = vector.shape_cast %1090 : vector<32x128xf32> to vector<1x1x32x128xf32>
    tpu.vector_store %arg2[%c0_281, %c2, %c0_282, %c0_283], %1099 {strides = array<i32>} : memref<2x5x32x128xf32, #tpu.memory_space<vmem>>, vector<1x1x32x128xf32>,
    %cst_284 = arith.constant 5.000000e+08 : f32
    %1100 = vector.broadcast %cst_284 : f32 to vector<32x128xf32>
    %1101 = arith.cmpf ogt, %843, %1100 : vector<32x128xf32>
    %cst_285 = arith.constant -1.000000e+00 : f32
    %1102 = vector.broadcast %cst_285 : f32 to vector<32x128xf32>
    %1103 = arith.select %1101, %1102, %843 : vector<32x128xi1>, vector<32x128xf32>
    %c0_286 = arith.constant 0 : index
    %c3 = arith.constant 3 : index
    %c0_287 = arith.constant 0 : index
    %c0_288 = arith.constant 0 : index
    %1104 = vector.load %arg2[%c0_286, %c3, %c0_287, %c0_288] : memref<2x5x32x128xf32, #tpu.memory_space<vmem>>, vector<1x1x32x128xf32>
    %1105 = vector.shape_cast %1104 : vector<1x1x32x128xf32> to vector<32x128xf32>
    %1106 = vector.shape_cast %1103 : vector<32x128xf32> to vector<1x1x32x128xf32>
    tpu.vector_store %arg2[%c0_286, %c3, %c0_287, %c0_288], %1106 {strides = array<i32>} : memref<2x5x32x128xf32, #tpu.memory_space<vmem>>, vector<1x1x32x128xf32>,
    %c0_289 = arith.constant 0 : index
    %c4 = arith.constant 4 : index
    %c0_290 = arith.constant 0 : index
    %c0_291 = arith.constant 0 : index
    %1107 = vector.load %arg2[%c0_289, %c4, %c0_290, %c0_291] : memref<2x5x32x128xf32, #tpu.memory_space<vmem>>, vector<1x1x32x128xf32>
    %1108 = vector.shape_cast %1107 : vector<1x1x32x128xf32> to vector<32x128xf32>
    %1109 = vector.shape_cast %847 : vector<32x128xf32> to vector<1x1x32x128xf32>
    tpu.vector_store %arg2[%c0_289, %c4, %c0_290, %c0_291], %1109 {strides = array<i32>} : memref<2x5x32x128xf32, #tpu.memory_space<vmem>>, vector<1x1x32x128xf32>,
    %c2_i32_292 = arith.constant 2 : i32
    %1110 = arith.muli %arg0, %c2_i32_292 : i32
    %c1_i32_293 = arith.constant 1 : i32
    %1111 = arith.addi %1110, %c1_i32_293 : i32
    %cst_294 = arith.constant 1.000000e+09 : f32
    %1112 = vector.broadcast %cst_294 : f32 to vector<32x128xf32>
    %c-1_i32_295 = arith.constant -1 : i32
    %1113 = vector.broadcast %c-1_i32_295 : i32 to vector<32x128xi32>
    %cst_296 = arith.constant 0.000000e+00 : f32
    %1114 = vector.broadcast %cst_296 : f32 to vector<32x128xf32>
    %c0_i32_297 = arith.constant 0 : i32
    %c12_i32_298 = arith.constant 12 : i32
    %1115 = arith.muli %1111, %c12_i32_298 : i32
    %1116 = arith.addi %1115, %c0_i32_297 : i32
    %c12_i32_299 = arith.constant 12 : i32
    %1117 = arith.muli %1116, %c12_i32_299 : i32
    %c0_i32_300 = arith.constant 0 : i32
    %1118 = arith.addi %1117, %c0_i32_300 : i32
    %1119 = arith.index_cast %1118 : i32 to index
    %1120 = memref.load %arg1[%1119] : memref<288xf32, #tpu.memory_space<smem>>
    %c1_i32_301 = arith.constant 1 : i32
    %1121 = arith.addi %1117, %c1_i32_301 : i32
    %1122 = arith.index_cast %1121 : i32 to index
    %1123 = memref.load %arg1[%1122] : memref<288xf32, #tpu.memory_space<smem>>
    %c2_i32_302 = arith.constant 2 : i32
    %1124 = arith.addi %1117, %c2_i32_302 : i32
    %1125 = arith.index_cast %1124 : i32 to index
    %1126 = memref.load %arg1[%1125] : memref<288xf32, #tpu.memory_space<smem>>
    %c3_i32_303 = arith.constant 3 : i32
    %1127 = arith.addi %1117, %c3_i32_303 : i32
    %1128 = arith.index_cast %1127 : i32 to index
    %1129 = memref.load %arg1[%1128] : memref<288xf32, #tpu.memory_space<smem>>
    %c4_i32_304 = arith.constant 4 : i32
    %1130 = arith.addi %1117, %c4_i32_304 : i32
    %1131 = arith.index_cast %1130 : i32 to index
    %1132 = memref.load %arg1[%1131] : memref<288xf32, #tpu.memory_space<smem>>
    %c5_i32_305 = arith.constant 5 : i32
    %1133 = arith.addi %1117, %c5_i32_305 : i32
    %1134 = arith.index_cast %1133 : i32 to index
    %1135 = memref.load %arg1[%1134] : memref<288xf32, #tpu.memory_space<smem>>
    %c6_i32_306 = arith.constant 6 : i32
    %1136 = arith.addi %1117, %c6_i32_306 : i32
    %1137 = arith.index_cast %1136 : i32 to index
    %1138 = memref.load %arg1[%1137] : memref<288xf32, #tpu.memory_space<smem>>
    %c7_i32_307 = arith.constant 7 : i32
    %1139 = arith.addi %1117, %c7_i32_307 : i32
    %1140 = arith.index_cast %1139 : i32 to index
    %1141 = memref.load %arg1[%1140] : memref<288xf32, #tpu.memory_space<smem>>
    %c8_i32_308 = arith.constant 8 : i32
    %1142 = arith.addi %1117, %c8_i32_308 : i32
    %1143 = arith.index_cast %1142 : i32 to index
    %1144 = memref.load %arg1[%1143] : memref<288xf32, #tpu.memory_space<smem>>
    %1145 = vector.broadcast %1120 : f32 to vector<32x128xf32>
    %1146 = arith.mulf %1145, %11 : vector<32x128xf32>
    %1147 = vector.broadcast %1123 : f32 to vector<32x128xf32>
    %1148 = arith.mulf %1147, %14 : vector<32x128xf32>
    %1149 = arith.addf %1146, %1148 : vector<32x128xf32>
    %1150 = vector.broadcast %1126 : f32 to vector<32x128xf32>
    %1151 = arith.addf %1149, %1150 : vector<32x128xf32>
    %1152 = vector.broadcast %1129 : f32 to vector<32x128xf32>
    %1153 = arith.mulf %1152, %11 : vector<32x128xf32>
    %1154 = vector.broadcast %1132 : f32 to vector<32x128xf32>
    %1155 = arith.mulf %1154, %14 : vector<32x128xf32>
    %1156 = arith.addf %1153, %1155 : vector<32x128xf32>
    %1157 = vector.broadcast %1135 : f32 to vector<32x128xf32>
    %1158 = arith.addf %1156, %1157 : vector<32x128xf32>
    %cst_309 = arith.constant 1.000000e+00 : f32
    %1159 = vector.broadcast %cst_309 : f32 to vector<32x128xf32>
    %1160 = arith.subf %1159, %1151 : vector<32x128xf32>
    %1161 = arith.subf %1160, %1158 : vector<32x128xf32>
    %1162 = vector.broadcast %1138 : f32 to vector<32x128xf32>
    %1163 = arith.mulf %1162, %11 : vector<32x128xf32>
    %1164 = vector.broadcast %1141 : f32 to vector<32x128xf32>
    %1165 = arith.mulf %1164, %14 : vector<32x128xf32>
    %1166 = arith.addf %1163, %1165 : vector<32x128xf32>
    %1167 = vector.broadcast %1144 : f32 to vector<32x128xf32>
    %1168 = arith.addf %1166, %1167 : vector<32x128xf32>
    %cst_310 = arith.constant 0.000000e+00 : f32
    %1169 = vector.broadcast %cst_310 : f32 to vector<32x128xf32>
    %1170 = arith.cmpf oge, %1151, %1169 : vector<32x128xf32>
    %cst_311 = arith.constant 0.000000e+00 : f32
    %1171 = vector.broadcast %cst_311 : f32 to vector<32x128xf32>
    %1172 = arith.cmpf oge, %1158, %1171 : vector<32x128xf32>
    %1173 = arith.andi %1170, %1172 : vector<32x128xi1>
    %cst_312 = arith.constant 0.000000e+00 : f32
    %1174 = vector.broadcast %cst_312 : f32 to vector<32x128xf32>
    %1175 = arith.cmpf oge, %1161, %1174 : vector<32x128xf32>
    %1176 = arith.andi %1173, %1175 : vector<32x128xi1>
    %1177 = arith.cmpf olt, %1168, %1112 : vector<32x128xf32>
    %1178 = arith.andi %1176, %1177 : vector<32x128xi1>
    %1179 = arith.select %1178, %1168, %1112 : vector<32x128xi1>, vector<32x128xf32>
    %1180 = vector.broadcast %c0_i32_297 : i32 to vector<32x128xi32>
    %1181 = arith.select %1178, %1180, %1113 : vector<32x128xi1>, vector<32x128xi32>
    %cst_313 = arith.constant 1.000000e+00 : f32
    %1182 = vector.broadcast %cst_313 : f32 to vector<32x128xf32>
    %1183 = arith.select %1176, %1182, %1114 : vector<32x128xi1>, vector<32x128xf32>
    %c1_i32_314 = arith.constant 1 : i32
    %c12_i32_315 = arith.constant 12 : i32
    %1184 = arith.muli %1111, %c12_i32_315 : i32
    %1185 = arith.addi %1184, %c1_i32_314 : i32
    %c12_i32_316 = arith.constant 12 : i32
    %1186 = arith.muli %1185, %c12_i32_316 : i32
    %c0_i32_317 = arith.constant 0 : i32
    %1187 = arith.addi %1186, %c0_i32_317 : i32
    %1188 = arith.index_cast %1187 : i32 to index
    %1189 = memref.load %arg1[%1188] : memref<288xf32, #tpu.memory_space<smem>>
    %c1_i32_318 = arith.constant 1 : i32
    %1190 = arith.addi %1186, %c1_i32_318 : i32
    %1191 = arith.index_cast %1190 : i32 to index
    %1192 = memref.load %arg1[%1191] : memref<288xf32, #tpu.memory_space<smem>>
    %c2_i32_319 = arith.constant 2 : i32
    %1193 = arith.addi %1186, %c2_i32_319 : i32
    %1194 = arith.index_cast %1193 : i32 to index
    %1195 = memref.load %arg1[%1194] : memref<288xf32, #tpu.memory_space<smem>>
    %c3_i32_320 = arith.constant 3 : i32
    %1196 = arith.addi %1186, %c3_i32_320 : i32
    %1197 = arith.index_cast %1196 : i32 to index
    %1198 = memref.load %arg1[%1197] : memref<288xf32, #tpu.memory_space<smem>>
    %c4_i32_321 = arith.constant 4 : i32
    %1199 = arith.addi %1186, %c4_i32_321 : i32
    %1200 = arith.index_cast %1199 : i32 to index
    %1201 = memref.load %arg1[%1200] : memref<288xf32, #tpu.memory_space<smem>>
    %c5_i32_322 = arith.constant 5 : i32
    %1202 = arith.addi %1186, %c5_i32_322 : i32
    %1203 = arith.index_cast %1202 : i32 to index
    %1204 = memref.load %arg1[%1203] : memref<288xf32, #tpu.memory_space<smem>>
    %c6_i32_323 = arith.constant 6 : i32
    %1205 = arith.addi %1186, %c6_i32_323 : i32
    %1206 = arith.index_cast %1205 : i32 to index
    %1207 = memref.load %arg1[%1206] : memref<288xf32, #tpu.memory_space<smem>>
    %c7_i32_324 = arith.constant 7 : i32
    %1208 = arith.addi %1186, %c7_i32_324 : i32
    %1209 = arith.index_cast %1208 : i32 to index
    %1210 = memref.load %arg1[%1209] : memref<288xf32, #tpu.memory_space<smem>>
    %c8_i32_325 = arith.constant 8 : i32
    %1211 = arith.addi %1186, %c8_i32_325 : i32
    %1212 = arith.index_cast %1211 : i32 to index
    %1213 = memref.load %arg1[%1212] : memref<288xf32, #tpu.memory_space<smem>>
    %1214 = vector.broadcast %1189 : f32 to vector<32x128xf32>
    %1215 = arith.mulf %1214, %11 : vector<32x128xf32>
    %1216 = vector.broadcast %1192 : f32 to vector<32x128xf32>
    %1217 = arith.mulf %1216, %14 : vector<32x128xf32>
    %1218 = arith.addf %1215, %1217 : vector<32x128xf32>
    %1219 = vector.broadcast %1195 : f32 to vector<32x128xf32>
    %1220 = arith.addf %1218, %1219 : vector<32x128xf32>
    %1221 = vector.broadcast %1198 : f32 to vector<32x128xf32>
    %1222 = arith.mulf %1221, %11 : vector<32x128xf32>
    %1223 = vector.broadcast %1201 : f32 to vector<32x128xf32>
    %1224 = arith.mulf %1223, %14 : vector<32x128xf32>
    %1225 = arith.addf %1222, %1224 : vector<32x128xf32>
    %1226 = vector.broadcast %1204 : f32 to vector<32x128xf32>
    %1227 = arith.addf %1225, %1226 : vector<32x128xf32>
    %cst_326 = arith.constant 1.000000e+00 : f32
    %1228 = vector.broadcast %cst_326 : f32 to vector<32x128xf32>
    %1229 = arith.subf %1228, %1220 : vector<32x128xf32>
    %1230 = arith.subf %1229, %1227 : vector<32x128xf32>
    %1231 = vector.broadcast %1207 : f32 to vector<32x128xf32>
    %1232 = arith.mulf %1231, %11 : vector<32x128xf32>
    %1233 = vector.broadcast %1210 : f32 to vector<32x128xf32>
    %1234 = arith.mulf %1233, %14 : vector<32x128xf32>
    %1235 = arith.addf %1232, %1234 : vector<32x128xf32>
    %1236 = vector.broadcast %1213 : f32 to vector<32x128xf32>
    %1237 = arith.addf %1235, %1236 : vector<32x128xf32>
    %cst_327 = arith.constant 0.000000e+00 : f32
    %1238 = vector.broadcast %cst_327 : f32 to vector<32x128xf32>
    %1239 = arith.cmpf oge, %1220, %1238 : vector<32x128xf32>
    %cst_328 = arith.constant 0.000000e+00 : f32
    %1240 = vector.broadcast %cst_328 : f32 to vector<32x128xf32>
    %1241 = arith.cmpf oge, %1227, %1240 : vector<32x128xf32>
    %1242 = arith.andi %1239, %1241 : vector<32x128xi1>
    %cst_329 = arith.constant 0.000000e+00 : f32
    %1243 = vector.broadcast %cst_329 : f32 to vector<32x128xf32>
    %1244 = arith.cmpf oge, %1230, %1243 : vector<32x128xf32>
    %1245 = arith.andi %1242, %1244 : vector<32x128xi1>
    %1246 = arith.cmpf olt, %1237, %1179 : vector<32x128xf32>
    %1247 = arith.andi %1245, %1246 : vector<32x128xi1>
    %1248 = arith.select %1247, %1237, %1179 : vector<32x128xi1>, vector<32x128xf32>
    %1249 = vector.broadcast %c1_i32_314 : i32 to vector<32x128xi32>
    %1250 = arith.select %1247, %1249, %1181 : vector<32x128xi1>, vector<32x128xi32>
    %cst_330 = arith.constant 1.000000e+00 : f32
    %1251 = vector.broadcast %cst_330 : f32 to vector<32x128xf32>
    %1252 = arith.select %1245, %1251, %1183 : vector<32x128xi1>, vector<32x128xf32>
    %c2_i32_331 = arith.constant 2 : i32
    %c12_i32_332 = arith.constant 12 : i32
    %1253 = arith.muli %1111, %c12_i32_332 : i32
    %1254 = arith.addi %1253, %c2_i32_331 : i32
    %c12_i32_333 = arith.constant 12 : i32
    %1255 = arith.muli %1254, %c12_i32_333 : i32
    %c0_i32_334 = arith.constant 0 : i32
    %1256 = arith.addi %1255, %c0_i32_334 : i32
    %1257 = arith.index_cast %1256 : i32 to index
    %1258 = memref.load %arg1[%1257] : memref<288xf32, #tpu.memory_space<smem>>
    %c1_i32_335 = arith.constant 1 : i32
    %1259 = arith.addi %1255, %c1_i32_335 : i32
    %1260 = arith.index_cast %1259 : i32 to index
    %1261 = memref.load %arg1[%1260] : memref<288xf32, #tpu.memory_space<smem>>
    %c2_i32_336 = arith.constant 2 : i32
    %1262 = arith.addi %1255, %c2_i32_336 : i32
    %1263 = arith.index_cast %1262 : i32 to index
    %1264 = memref.load %arg1[%1263] : memref<288xf32, #tpu.memory_space<smem>>
    %c3_i32_337 = arith.constant 3 : i32
    %1265 = arith.addi %1255, %c3_i32_337 : i32
    %1266 = arith.index_cast %1265 : i32 to index
    %1267 = memref.load %arg1[%1266] : memref<288xf32, #tpu.memory_space<smem>>
    %c4_i32_338 = arith.constant 4 : i32
    %1268 = arith.addi %1255, %c4_i32_338 : i32
    %1269 = arith.index_cast %1268 : i32 to index
    %1270 = memref.load %arg1[%1269] : memref<288xf32, #tpu.memory_space<smem>>
    %c5_i32_339 = arith.constant 5 : i32
    %1271 = arith.addi %1255, %c5_i32_339 : i32
    %1272 = arith.index_cast %1271 : i32 to index
    %1273 = memref.load %arg1[%1272] : memref<288xf32, #tpu.memory_space<smem>>
    %c6_i32_340 = arith.constant 6 : i32
    %1274 = arith.addi %1255, %c6_i32_340 : i32
    %1275 = arith.index_cast %1274 : i32 to index
    %1276 = memref.load %arg1[%1275] : memref<288xf32, #tpu.memory_space<smem>>
    %c7_i32_341 = arith.constant 7 : i32
    %1277 = arith.addi %1255, %c7_i32_341 : i32
    %1278 = arith.index_cast %1277 : i32 to index
    %1279 = memref.load %arg1[%1278] : memref<288xf32, #tpu.memory_space<smem>>
    %c8_i32_342 = arith.constant 8 : i32
    %1280 = arith.addi %1255, %c8_i32_342 : i32
    %1281 = arith.index_cast %1280 : i32 to index
    %1282 = memref.load %arg1[%1281] : memref<288xf32, #tpu.memory_space<smem>>
    %1283 = vector.broadcast %1258 : f32 to vector<32x128xf32>
    %1284 = arith.mulf %1283, %11 : vector<32x128xf32>
    %1285 = vector.broadcast %1261 : f32 to vector<32x128xf32>
    %1286 = arith.mulf %1285, %14 : vector<32x128xf32>
    %1287 = arith.addf %1284, %1286 : vector<32x128xf32>
    %1288 = vector.broadcast %1264 : f32 to vector<32x128xf32>
    %1289 = arith.addf %1287, %1288 : vector<32x128xf32>
    %1290 = vector.broadcast %1267 : f32 to vector<32x128xf32>
    %1291 = arith.mulf %1290, %11 : vector<32x128xf32>
    %1292 = vector.broadcast %1270 : f32 to vector<32x128xf32>
    %1293 = arith.mulf %1292, %14 : vector<32x128xf32>
    %1294 = arith.addf %1291, %1293 : vector<32x128xf32>
    %1295 = vector.broadcast %1273 : f32 to vector<32x128xf32>
    %1296 = arith.addf %1294, %1295 : vector<32x128xf32>
    %cst_343 = arith.constant 1.000000e+00 : f32
    %1297 = vector.broadcast %cst_343 : f32 to vector<32x128xf32>
    %1298 = arith.subf %1297, %1289 : vector<32x128xf32>
    %1299 = arith.subf %1298, %1296 : vector<32x128xf32>
    %1300 = vector.broadcast %1276 : f32 to vector<32x128xf32>
    %1301 = arith.mulf %1300, %11 : vector<32x128xf32>
    %1302 = vector.broadcast %1279 : f32 to vector<32x128xf32>
    %1303 = arith.mulf %1302, %14 : vector<32x128xf32>
    %1304 = arith.addf %1301, %1303 : vector<32x128xf32>
    %1305 = vector.broadcast %1282 : f32 to vector<32x128xf32>
    %1306 = arith.addf %1304, %1305 : vector<32x128xf32>
    %cst_344 = arith.constant 0.000000e+00 : f32
    %1307 = vector.broadcast %cst_344 : f32 to vector<32x128xf32>
    %1308 = arith.cmpf oge, %1289, %1307 : vector<32x128xf32>
    %cst_345 = arith.constant 0.000000e+00 : f32
    %1309 = vector.broadcast %cst_345 : f32 to vector<32x128xf32>
    %1310 = arith.cmpf oge, %1296, %1309 : vector<32x128xf32>
    %1311 = arith.andi %1308, %1310 : vector<32x128xi1>
    %cst_346 = arith.constant 0.000000e+00 : f32
    %1312 = vector.broadcast %cst_346 : f32 to vector<32x128xf32>
    %1313 = arith.cmpf oge, %1299, %1312 : vector<32x128xf32>
    %1314 = arith.andi %1311, %1313 : vector<32x128xi1>
    %1315 = arith.cmpf olt, %1306, %1248 : vector<32x128xf32>
    %1316 = arith.andi %1314, %1315 : vector<32x128xi1>
    %1317 = arith.select %1316, %1306, %1248 : vector<32x128xi1>, vector<32x128xf32>
    %1318 = vector.broadcast %c2_i32_331 : i32 to vector<32x128xi32>
    %1319 = arith.select %1316, %1318, %1250 : vector<32x128xi1>, vector<32x128xi32>
    %cst_347 = arith.constant 1.000000e+00 : f32
    %1320 = vector.broadcast %cst_347 : f32 to vector<32x128xf32>
    %1321 = arith.select %1314, %1320, %1252 : vector<32x128xi1>, vector<32x128xf32>
    %c3_i32_348 = arith.constant 3 : i32
    %c12_i32_349 = arith.constant 12 : i32
    %1322 = arith.muli %1111, %c12_i32_349 : i32
    %1323 = arith.addi %1322, %c3_i32_348 : i32
    %c12_i32_350 = arith.constant 12 : i32
    %1324 = arith.muli %1323, %c12_i32_350 : i32
    %c0_i32_351 = arith.constant 0 : i32
    %1325 = arith.addi %1324, %c0_i32_351 : i32
    %1326 = arith.index_cast %1325 : i32 to index
    %1327 = memref.load %arg1[%1326] : memref<288xf32, #tpu.memory_space<smem>>
    %c1_i32_352 = arith.constant 1 : i32
    %1328 = arith.addi %1324, %c1_i32_352 : i32
    %1329 = arith.index_cast %1328 : i32 to index
    %1330 = memref.load %arg1[%1329] : memref<288xf32, #tpu.memory_space<smem>>
    %c2_i32_353 = arith.constant 2 : i32
    %1331 = arith.addi %1324, %c2_i32_353 : i32
    %1332 = arith.index_cast %1331 : i32 to index
    %1333 = memref.load %arg1[%1332] : memref<288xf32, #tpu.memory_space<smem>>
    %c3_i32_354 = arith.constant 3 : i32
    %1334 = arith.addi %1324, %c3_i32_354 : i32
    %1335 = arith.index_cast %1334 : i32 to index
    %1336 = memref.load %arg1[%1335] : memref<288xf32, #tpu.memory_space<smem>>
    %c4_i32_355 = arith.constant 4 : i32
    %1337 = arith.addi %1324, %c4_i32_355 : i32
    %1338 = arith.index_cast %1337 : i32 to index
    %1339 = memref.load %arg1[%1338] : memref<288xf32, #tpu.memory_space<smem>>
    %c5_i32_356 = arith.constant 5 : i32
    %1340 = arith.addi %1324, %c5_i32_356 : i32
    %1341 = arith.index_cast %1340 : i32 to index
    %1342 = memref.load %arg1[%1341] : memref<288xf32, #tpu.memory_space<smem>>
    %c6_i32_357 = arith.constant 6 : i32
    %1343 = arith.addi %1324, %c6_i32_357 : i32
    %1344 = arith.index_cast %1343 : i32 to index
    %1345 = memref.load %arg1[%1344] : memref<288xf32, #tpu.memory_space<smem>>
    %c7_i32_358 = arith.constant 7 : i32
    %1346 = arith.addi %1324, %c7_i32_358 : i32
    %1347 = arith.index_cast %1346 : i32 to index
    %1348 = memref.load %arg1[%1347] : memref<288xf32, #tpu.memory_space<smem>>
    %c8_i32_359 = arith.constant 8 : i32
    %1349 = arith.addi %1324, %c8_i32_359 : i32
    %1350 = arith.index_cast %1349 : i32 to index
    %1351 = memref.load %arg1[%1350] : memref<288xf32, #tpu.memory_space<smem>>
    %1352 = vector.broadcast %1327 : f32 to vector<32x128xf32>
    %1353 = arith.mulf %1352, %11 : vector<32x128xf32>
    %1354 = vector.broadcast %1330 : f32 to vector<32x128xf32>
    %1355 = arith.mulf %1354, %14 : vector<32x128xf32>
    %1356 = arith.addf %1353, %1355 : vector<32x128xf32>
    %1357 = vector.broadcast %1333 : f32 to vector<32x128xf32>
    %1358 = arith.addf %1356, %1357 : vector<32x128xf32>
    %1359 = vector.broadcast %1336 : f32 to vector<32x128xf32>
    %1360 = arith.mulf %1359, %11 : vector<32x128xf32>
    %1361 = vector.broadcast %1339 : f32 to vector<32x128xf32>
    %1362 = arith.mulf %1361, %14 : vector<32x128xf32>
    %1363 = arith.addf %1360, %1362 : vector<32x128xf32>
    %1364 = vector.broadcast %1342 : f32 to vector<32x128xf32>
    %1365 = arith.addf %1363, %1364 : vector<32x128xf32>
    %cst_360 = arith.constant 1.000000e+00 : f32
    %1366 = vector.broadcast %cst_360 : f32 to vector<32x128xf32>
    %1367 = arith.subf %1366, %1358 : vector<32x128xf32>
    %1368 = arith.subf %1367, %1365 : vector<32x128xf32>
    %1369 = vector.broadcast %1345 : f32 to vector<32x128xf32>
    %1370 = arith.mulf %1369, %11 : vector<32x128xf32>
    %1371 = vector.broadcast %1348 : f32 to vector<32x128xf32>
    %1372 = arith.mulf %1371, %14 : vector<32x128xf32>
    %1373 = arith.addf %1370, %1372 : vector<32x128xf32>
    %1374 = vector.broadcast %1351 : f32 to vector<32x128xf32>
    %1375 = arith.addf %1373, %1374 : vector<32x128xf32>
    %cst_361 = arith.constant 0.000000e+00 : f32
    %1376 = vector.broadcast %cst_361 : f32 to vector<32x128xf32>
    %1377 = arith.cmpf oge, %1358, %1376 : vector<32x128xf32>
    %cst_362 = arith.constant 0.000000e+00 : f32
    %1378 = vector.broadcast %cst_362 : f32 to vector<32x128xf32>
    %1379 = arith.cmpf oge, %1365, %1378 : vector<32x128xf32>
    %1380 = arith.andi %1377, %1379 : vector<32x128xi1>
    %cst_363 = arith.constant 0.000000e+00 : f32
    %1381 = vector.broadcast %cst_363 : f32 to vector<32x128xf32>
    %1382 = arith.cmpf oge, %1368, %1381 : vector<32x128xf32>
    %1383 = arith.andi %1380, %1382 : vector<32x128xi1>
    %1384 = arith.cmpf olt, %1375, %1317 : vector<32x128xf32>
    %1385 = arith.andi %1383, %1384 : vector<32x128xi1>
    %1386 = arith.select %1385, %1375, %1317 : vector<32x128xi1>, vector<32x128xf32>
    %1387 = vector.broadcast %c3_i32_348 : i32 to vector<32x128xi32>
    %1388 = arith.select %1385, %1387, %1319 : vector<32x128xi1>, vector<32x128xi32>
    %cst_364 = arith.constant 1.000000e+00 : f32
    %1389 = vector.broadcast %cst_364 : f32 to vector<32x128xf32>
    %1390 = arith.select %1383, %1389, %1321 : vector<32x128xi1>, vector<32x128xf32>
    %c4_i32_365 = arith.constant 4 : i32
    %c12_i32_366 = arith.constant 12 : i32
    %1391 = arith.muli %1111, %c12_i32_366 : i32
    %1392 = arith.addi %1391, %c4_i32_365 : i32
    %c12_i32_367 = arith.constant 12 : i32
    %1393 = arith.muli %1392, %c12_i32_367 : i32
    %c0_i32_368 = arith.constant 0 : i32
    %1394 = arith.addi %1393, %c0_i32_368 : i32
    %1395 = arith.index_cast %1394 : i32 to index
    %1396 = memref.load %arg1[%1395] : memref<288xf32, #tpu.memory_space<smem>>
    %c1_i32_369 = arith.constant 1 : i32
    %1397 = arith.addi %1393, %c1_i32_369 : i32
    %1398 = arith.index_cast %1397 : i32 to index
    %1399 = memref.load %arg1[%1398] : memref<288xf32, #tpu.memory_space<smem>>
    %c2_i32_370 = arith.constant 2 : i32
    %1400 = arith.addi %1393, %c2_i32_370 : i32
    %1401 = arith.index_cast %1400 : i32 to index
    %1402 = memref.load %arg1[%1401] : memref<288xf32, #tpu.memory_space<smem>>
    %c3_i32_371 = arith.constant 3 : i32
    %1403 = arith.addi %1393, %c3_i32_371 : i32
    %1404 = arith.index_cast %1403 : i32 to index
    %1405 = memref.load %arg1[%1404] : memref<288xf32, #tpu.memory_space<smem>>
    %c4_i32_372 = arith.constant 4 : i32
    %1406 = arith.addi %1393, %c4_i32_372 : i32
    %1407 = arith.index_cast %1406 : i32 to index
    %1408 = memref.load %arg1[%1407] : memref<288xf32, #tpu.memory_space<smem>>
    %c5_i32_373 = arith.constant 5 : i32
    %1409 = arith.addi %1393, %c5_i32_373 : i32
    %1410 = arith.index_cast %1409 : i32 to index
    %1411 = memref.load %arg1[%1410] : memref<288xf32, #tpu.memory_space<smem>>
    %c6_i32_374 = arith.constant 6 : i32
    %1412 = arith.addi %1393, %c6_i32_374 : i32
    %1413 = arith.index_cast %1412 : i32 to index
    %1414 = memref.load %arg1[%1413] : memref<288xf32, #tpu.memory_space<smem>>
    %c7_i32_375 = arith.constant 7 : i32
    %1415 = arith.addi %1393, %c7_i32_375 : i32
    %1416 = arith.index_cast %1415 : i32 to index
    %1417 = memref.load %arg1[%1416] : memref<288xf32, #tpu.memory_space<smem>>
    %c8_i32_376 = arith.constant 8 : i32
    %1418 = arith.addi %1393, %c8_i32_376 : i32
    %1419 = arith.index_cast %1418 : i32 to index
    %1420 = memref.load %arg1[%1419] : memref<288xf32, #tpu.memory_space<smem>>
    %1421 = vector.broadcast %1396 : f32 to vector<32x128xf32>
    %1422 = arith.mulf %1421, %11 : vector<32x128xf32>
    %1423 = vector.broadcast %1399 : f32 to vector<32x128xf32>
    %1424 = arith.mulf %1423, %14 : vector<32x128xf32>
    %1425 = arith.addf %1422, %1424 : vector<32x128xf32>
    %1426 = vector.broadcast %1402 : f32 to vector<32x128xf32>
    %1427 = arith.addf %1425, %1426 : vector<32x128xf32>
    %1428 = vector.broadcast %1405 : f32 to vector<32x128xf32>
    %1429 = arith.mulf %1428, %11 : vector<32x128xf32>
    %1430 = vector.broadcast %1408 : f32 to vector<32x128xf32>
    %1431 = arith.mulf %1430, %14 : vector<32x128xf32>
    %1432 = arith.addf %1429, %1431 : vector<32x128xf32>
    %1433 = vector.broadcast %1411 : f32 to vector<32x128xf32>
    %1434 = arith.addf %1432, %1433 : vector<32x128xf32>
    %cst_377 = arith.constant 1.000000e+00 : f32
    %1435 = vector.broadcast %cst_377 : f32 to vector<32x128xf32>
    %1436 = arith.subf %1435, %1427 : vector<32x128xf32>
    %1437 = arith.subf %1436, %1434 : vector<32x128xf32>
    %1438 = vector.broadcast %1414 : f32 to vector<32x128xf32>
    %1439 = arith.mulf %1438, %11 : vector<32x128xf32>
    %1440 = vector.broadcast %1417 : f32 to vector<32x128xf32>
    %1441 = arith.mulf %1440, %14 : vector<32x128xf32>
    %1442 = arith.addf %1439, %1441 : vector<32x128xf32>
    %1443 = vector.broadcast %1420 : f32 to vector<32x128xf32>
    %1444 = arith.addf %1442, %1443 : vector<32x128xf32>
    %cst_378 = arith.constant 0.000000e+00 : f32
    %1445 = vector.broadcast %cst_378 : f32 to vector<32x128xf32>
    %1446 = arith.cmpf oge, %1427, %1445 : vector<32x128xf32>
    %cst_379 = arith.constant 0.000000e+00 : f32
    %1447 = vector.broadcast %cst_379 : f32 to vector<32x128xf32>
    %1448 = arith.cmpf oge, %1434, %1447 : vector<32x128xf32>
    %1449 = arith.andi %1446, %1448 : vector<32x128xi1>
    %cst_380 = arith.constant 0.000000e+00 : f32
    %1450 = vector.broadcast %cst_380 : f32 to vector<32x128xf32>
    %1451 = arith.cmpf oge, %1437, %1450 : vector<32x128xf32>
    %1452 = arith.andi %1449, %1451 : vector<32x128xi1>
    %1453 = arith.cmpf olt, %1444, %1386 : vector<32x128xf32>
    %1454 = arith.andi %1452, %1453 : vector<32x128xi1>
    %1455 = arith.select %1454, %1444, %1386 : vector<32x128xi1>, vector<32x128xf32>
    %1456 = vector.broadcast %c4_i32_365 : i32 to vector<32x128xi32>
    %1457 = arith.select %1454, %1456, %1388 : vector<32x128xi1>, vector<32x128xi32>
    %cst_381 = arith.constant 1.000000e+00 : f32
    %1458 = vector.broadcast %cst_381 : f32 to vector<32x128xf32>
    %1459 = arith.select %1452, %1458, %1390 : vector<32x128xi1>, vector<32x128xf32>
    %c5_i32_382 = arith.constant 5 : i32
    %c12_i32_383 = arith.constant 12 : i32
    %1460 = arith.muli %1111, %c12_i32_383 : i32
    %1461 = arith.addi %1460, %c5_i32_382 : i32
    %c12_i32_384 = arith.constant 12 : i32
    %1462 = arith.muli %1461, %c12_i32_384 : i32
    %c0_i32_385 = arith.constant 0 : i32
    %1463 = arith.addi %1462, %c0_i32_385 : i32
    %1464 = arith.index_cast %1463 : i32 to index
    %1465 = memref.load %arg1[%1464] : memref<288xf32, #tpu.memory_space<smem>>
    %c1_i32_386 = arith.constant 1 : i32
    %1466 = arith.addi %1462, %c1_i32_386 : i32
    %1467 = arith.index_cast %1466 : i32 to index
    %1468 = memref.load %arg1[%1467] : memref<288xf32, #tpu.memory_space<smem>>
    %c2_i32_387 = arith.constant 2 : i32
    %1469 = arith.addi %1462, %c2_i32_387 : i32
    %1470 = arith.index_cast %1469 : i32 to index
    %1471 = memref.load %arg1[%1470] : memref<288xf32, #tpu.memory_space<smem>>
    %c3_i32_388 = arith.constant 3 : i32
    %1472 = arith.addi %1462, %c3_i32_388 : i32
    %1473 = arith.index_cast %1472 : i32 to index
    %1474 = memref.load %arg1[%1473] : memref<288xf32, #tpu.memory_space<smem>>
    %c4_i32_389 = arith.constant 4 : i32
    %1475 = arith.addi %1462, %c4_i32_389 : i32
    %1476 = arith.index_cast %1475 : i32 to index
    %1477 = memref.load %arg1[%1476] : memref<288xf32, #tpu.memory_space<smem>>
    %c5_i32_390 = arith.constant 5 : i32
    %1478 = arith.addi %1462, %c5_i32_390 : i32
    %1479 = arith.index_cast %1478 : i32 to index
    %1480 = memref.load %arg1[%1479] : memref<288xf32, #tpu.memory_space<smem>>
    %c6_i32_391 = arith.constant 6 : i32
    %1481 = arith.addi %1462, %c6_i32_391 : i32
    %1482 = arith.index_cast %1481 : i32 to index
    %1483 = memref.load %arg1[%1482] : memref<288xf32, #tpu.memory_space<smem>>
    %c7_i32_392 = arith.constant 7 : i32
    %1484 = arith.addi %1462, %c7_i32_392 : i32
    %1485 = arith.index_cast %1484 : i32 to index
    %1486 = memref.load %arg1[%1485] : memref<288xf32, #tpu.memory_space<smem>>
    %c8_i32_393 = arith.constant 8 : i32
    %1487 = arith.addi %1462, %c8_i32_393 : i32
    %1488 = arith.index_cast %1487 : i32 to index
    %1489 = memref.load %arg1[%1488] : memref<288xf32, #tpu.memory_space<smem>>
    %1490 = vector.broadcast %1465 : f32 to vector<32x128xf32>
    %1491 = arith.mulf %1490, %11 : vector<32x128xf32>
    %1492 = vector.broadcast %1468 : f32 to vector<32x128xf32>
    %1493 = arith.mulf %1492, %14 : vector<32x128xf32>
    %1494 = arith.addf %1491, %1493 : vector<32x128xf32>
    %1495 = vector.broadcast %1471 : f32 to vector<32x128xf32>
    %1496 = arith.addf %1494, %1495 : vector<32x128xf32>
    %1497 = vector.broadcast %1474 : f32 to vector<32x128xf32>
    %1498 = arith.mulf %1497, %11 : vector<32x128xf32>
    %1499 = vector.broadcast %1477 : f32 to vector<32x128xf32>
    %1500 = arith.mulf %1499, %14 : vector<32x128xf32>
    %1501 = arith.addf %1498, %1500 : vector<32x128xf32>
    %1502 = vector.broadcast %1480 : f32 to vector<32x128xf32>
    %1503 = arith.addf %1501, %1502 : vector<32x128xf32>
    %cst_394 = arith.constant 1.000000e+00 : f32
    %1504 = vector.broadcast %cst_394 : f32 to vector<32x128xf32>
    %1505 = arith.subf %1504, %1496 : vector<32x128xf32>
    %1506 = arith.subf %1505, %1503 : vector<32x128xf32>
    %1507 = vector.broadcast %1483 : f32 to vector<32x128xf32>
    %1508 = arith.mulf %1507, %11 : vector<32x128xf32>
    %1509 = vector.broadcast %1486 : f32 to vector<32x128xf32>
    %1510 = arith.mulf %1509, %14 : vector<32x128xf32>
    %1511 = arith.addf %1508, %1510 : vector<32x128xf32>
    %1512 = vector.broadcast %1489 : f32 to vector<32x128xf32>
    %1513 = arith.addf %1511, %1512 : vector<32x128xf32>
    %cst_395 = arith.constant 0.000000e+00 : f32
    %1514 = vector.broadcast %cst_395 : f32 to vector<32x128xf32>
    %1515 = arith.cmpf oge, %1496, %1514 : vector<32x128xf32>
    %cst_396 = arith.constant 0.000000e+00 : f32
    %1516 = vector.broadcast %cst_396 : f32 to vector<32x128xf32>
    %1517 = arith.cmpf oge, %1503, %1516 : vector<32x128xf32>
    %1518 = arith.andi %1515, %1517 : vector<32x128xi1>
    %cst_397 = arith.constant 0.000000e+00 : f32
    %1519 = vector.broadcast %cst_397 : f32 to vector<32x128xf32>
    %1520 = arith.cmpf oge, %1506, %1519 : vector<32x128xf32>
    %1521 = arith.andi %1518, %1520 : vector<32x128xi1>
    %1522 = arith.cmpf olt, %1513, %1455 : vector<32x128xf32>
    %1523 = arith.andi %1521, %1522 : vector<32x128xi1>
    %1524 = arith.select %1523, %1513, %1455 : vector<32x128xi1>, vector<32x128xf32>
    %1525 = vector.broadcast %c5_i32_382 : i32 to vector<32x128xi32>
    %1526 = arith.select %1523, %1525, %1457 : vector<32x128xi1>, vector<32x128xi32>
    %cst_398 = arith.constant 1.000000e+00 : f32
    %1527 = vector.broadcast %cst_398 : f32 to vector<32x128xf32>
    %1528 = arith.select %1521, %1527, %1459 : vector<32x128xi1>, vector<32x128xf32>
    %c6_i32_399 = arith.constant 6 : i32
    %c12_i32_400 = arith.constant 12 : i32
    %1529 = arith.muli %1111, %c12_i32_400 : i32
    %1530 = arith.addi %1529, %c6_i32_399 : i32
    %c12_i32_401 = arith.constant 12 : i32
    %1531 = arith.muli %1530, %c12_i32_401 : i32
    %c0_i32_402 = arith.constant 0 : i32
    %1532 = arith.addi %1531, %c0_i32_402 : i32
    %1533 = arith.index_cast %1532 : i32 to index
    %1534 = memref.load %arg1[%1533] : memref<288xf32, #tpu.memory_space<smem>>
    %c1_i32_403 = arith.constant 1 : i32
    %1535 = arith.addi %1531, %c1_i32_403 : i32
    %1536 = arith.index_cast %1535 : i32 to index
    %1537 = memref.load %arg1[%1536] : memref<288xf32, #tpu.memory_space<smem>>
    %c2_i32_404 = arith.constant 2 : i32
    %1538 = arith.addi %1531, %c2_i32_404 : i32
    %1539 = arith.index_cast %1538 : i32 to index
    %1540 = memref.load %arg1[%1539] : memref<288xf32, #tpu.memory_space<smem>>
    %c3_i32_405 = arith.constant 3 : i32
    %1541 = arith.addi %1531, %c3_i32_405 : i32
    %1542 = arith.index_cast %1541 : i32 to index
    %1543 = memref.load %arg1[%1542] : memref<288xf32, #tpu.memory_space<smem>>
    %c4_i32_406 = arith.constant 4 : i32
    %1544 = arith.addi %1531, %c4_i32_406 : i32
    %1545 = arith.index_cast %1544 : i32 to index
    %1546 = memref.load %arg1[%1545] : memref<288xf32, #tpu.memory_space<smem>>
    %c5_i32_407 = arith.constant 5 : i32
    %1547 = arith.addi %1531, %c5_i32_407 : i32
    %1548 = arith.index_cast %1547 : i32 to index
    %1549 = memref.load %arg1[%1548] : memref<288xf32, #tpu.memory_space<smem>>
    %c6_i32_408 = arith.constant 6 : i32
    %1550 = arith.addi %1531, %c6_i32_408 : i32
    %1551 = arith.index_cast %1550 : i32 to index
    %1552 = memref.load %arg1[%1551] : memref<288xf32, #tpu.memory_space<smem>>
    %c7_i32_409 = arith.constant 7 : i32
    %1553 = arith.addi %1531, %c7_i32_409 : i32
    %1554 = arith.index_cast %1553 : i32 to index
    %1555 = memref.load %arg1[%1554] : memref<288xf32, #tpu.memory_space<smem>>
    %c8_i32_410 = arith.constant 8 : i32
    %1556 = arith.addi %1531, %c8_i32_410 : i32
    %1557 = arith.index_cast %1556 : i32 to index
    %1558 = memref.load %arg1[%1557] : memref<288xf32, #tpu.memory_space<smem>>
    %1559 = vector.broadcast %1534 : f32 to vector<32x128xf32>
    %1560 = arith.mulf %1559, %11 : vector<32x128xf32>
    %1561 = vector.broadcast %1537 : f32 to vector<32x128xf32>
    %1562 = arith.mulf %1561, %14 : vector<32x128xf32>
    %1563 = arith.addf %1560, %1562 : vector<32x128xf32>
    %1564 = vector.broadcast %1540 : f32 to vector<32x128xf32>
    %1565 = arith.addf %1563, %1564 : vector<32x128xf32>
    %1566 = vector.broadcast %1543 : f32 to vector<32x128xf32>
    %1567 = arith.mulf %1566, %11 : vector<32x128xf32>
    %1568 = vector.broadcast %1546 : f32 to vector<32x128xf32>
    %1569 = arith.mulf %1568, %14 : vector<32x128xf32>
    %1570 = arith.addf %1567, %1569 : vector<32x128xf32>
    %1571 = vector.broadcast %1549 : f32 to vector<32x128xf32>
    %1572 = arith.addf %1570, %1571 : vector<32x128xf32>
    %cst_411 = arith.constant 1.000000e+00 : f32
    %1573 = vector.broadcast %cst_411 : f32 to vector<32x128xf32>
    %1574 = arith.subf %1573, %1565 : vector<32x128xf32>
    %1575 = arith.subf %1574, %1572 : vector<32x128xf32>
    %1576 = vector.broadcast %1552 : f32 to vector<32x128xf32>
    %1577 = arith.mulf %1576, %11 : vector<32x128xf32>
    %1578 = vector.broadcast %1555 : f32 to vector<32x128xf32>
    %1579 = arith.mulf %1578, %14 : vector<32x128xf32>
    %1580 = arith.addf %1577, %1579 : vector<32x128xf32>
    %1581 = vector.broadcast %1558 : f32 to vector<32x128xf32>
    %1582 = arith.addf %1580, %1581 : vector<32x128xf32>
    %cst_412 = arith.constant 0.000000e+00 : f32
    %1583 = vector.broadcast %cst_412 : f32 to vector<32x128xf32>
    %1584 = arith.cmpf oge, %1565, %1583 : vector<32x128xf32>
    %cst_413 = arith.constant 0.000000e+00 : f32
    %1585 = vector.broadcast %cst_413 : f32 to vector<32x128xf32>
    %1586 = arith.cmpf oge, %1572, %1585 : vector<32x128xf32>
    %1587 = arith.andi %1584, %1586 : vector<32x128xi1>
    %cst_414 = arith.constant 0.000000e+00 : f32
    %1588 = vector.broadcast %cst_414 : f32 to vector<32x128xf32>
    %1589 = arith.cmpf oge, %1575, %1588 : vector<32x128xf32>
    %1590 = arith.andi %1587, %1589 : vector<32x128xi1>
    %1591 = arith.cmpf olt, %1582, %1524 : vector<32x128xf32>
    %1592 = arith.andi %1590, %1591 : vector<32x128xi1>
    %1593 = arith.select %1592, %1582, %1524 : vector<32x128xi1>, vector<32x128xf32>
    %1594 = vector.broadcast %c6_i32_399 : i32 to vector<32x128xi32>
    %1595 = arith.select %1592, %1594, %1526 : vector<32x128xi1>, vector<32x128xi32>
    %cst_415 = arith.constant 1.000000e+00 : f32
    %1596 = vector.broadcast %cst_415 : f32 to vector<32x128xf32>
    %1597 = arith.select %1590, %1596, %1528 : vector<32x128xi1>, vector<32x128xf32>
    %c7_i32_416 = arith.constant 7 : i32
    %c12_i32_417 = arith.constant 12 : i32
    %1598 = arith.muli %1111, %c12_i32_417 : i32
    %1599 = arith.addi %1598, %c7_i32_416 : i32
    %c12_i32_418 = arith.constant 12 : i32
    %1600 = arith.muli %1599, %c12_i32_418 : i32
    %c0_i32_419 = arith.constant 0 : i32
    %1601 = arith.addi %1600, %c0_i32_419 : i32
    %1602 = arith.index_cast %1601 : i32 to index
    %1603 = memref.load %arg1[%1602] : memref<288xf32, #tpu.memory_space<smem>>
    %c1_i32_420 = arith.constant 1 : i32
    %1604 = arith.addi %1600, %c1_i32_420 : i32
    %1605 = arith.index_cast %1604 : i32 to index
    %1606 = memref.load %arg1[%1605] : memref<288xf32, #tpu.memory_space<smem>>
    %c2_i32_421 = arith.constant 2 : i32
    %1607 = arith.addi %1600, %c2_i32_421 : i32
    %1608 = arith.index_cast %1607 : i32 to index
    %1609 = memref.load %arg1[%1608] : memref<288xf32, #tpu.memory_space<smem>>
    %c3_i32_422 = arith.constant 3 : i32
    %1610 = arith.addi %1600, %c3_i32_422 : i32
    %1611 = arith.index_cast %1610 : i32 to index
    %1612 = memref.load %arg1[%1611] : memref<288xf32, #tpu.memory_space<smem>>
    %c4_i32_423 = arith.constant 4 : i32
    %1613 = arith.addi %1600, %c4_i32_423 : i32
    %1614 = arith.index_cast %1613 : i32 to index
    %1615 = memref.load %arg1[%1614] : memref<288xf32, #tpu.memory_space<smem>>
    %c5_i32_424 = arith.constant 5 : i32
    %1616 = arith.addi %1600, %c5_i32_424 : i32
    %1617 = arith.index_cast %1616 : i32 to index
    %1618 = memref.load %arg1[%1617] : memref<288xf32, #tpu.memory_space<smem>>
    %c6_i32_425 = arith.constant 6 : i32
    %1619 = arith.addi %1600, %c6_i32_425 : i32
    %1620 = arith.index_cast %1619 : i32 to index
    %1621 = memref.load %arg1[%1620] : memref<288xf32, #tpu.memory_space<smem>>
    %c7_i32_426 = arith.constant 7 : i32
    %1622 = arith.addi %1600, %c7_i32_426 : i32
    %1623 = arith.index_cast %1622 : i32 to index
    %1624 = memref.load %arg1[%1623] : memref<288xf32, #tpu.memory_space<smem>>
    %c8_i32_427 = arith.constant 8 : i32
    %1625 = arith.addi %1600, %c8_i32_427 : i32
    %1626 = arith.index_cast %1625 : i32 to index
    %1627 = memref.load %arg1[%1626] : memref<288xf32, #tpu.memory_space<smem>>
    %1628 = vector.broadcast %1603 : f32 to vector<32x128xf32>
    %1629 = arith.mulf %1628, %11 : vector<32x128xf32>
    %1630 = vector.broadcast %1606 : f32 to vector<32x128xf32>
    %1631 = arith.mulf %1630, %14 : vector<32x128xf32>
    %1632 = arith.addf %1629, %1631 : vector<32x128xf32>
    %1633 = vector.broadcast %1609 : f32 to vector<32x128xf32>
    %1634 = arith.addf %1632, %1633 : vector<32x128xf32>
    %1635 = vector.broadcast %1612 : f32 to vector<32x128xf32>
    %1636 = arith.mulf %1635, %11 : vector<32x128xf32>
    %1637 = vector.broadcast %1615 : f32 to vector<32x128xf32>
    %1638 = arith.mulf %1637, %14 : vector<32x128xf32>
    %1639 = arith.addf %1636, %1638 : vector<32x128xf32>
    %1640 = vector.broadcast %1618 : f32 to vector<32x128xf32>
    %1641 = arith.addf %1639, %1640 : vector<32x128xf32>
    %cst_428 = arith.constant 1.000000e+00 : f32
    %1642 = vector.broadcast %cst_428 : f32 to vector<32x128xf32>
    %1643 = arith.subf %1642, %1634 : vector<32x128xf32>
    %1644 = arith.subf %1643, %1641 : vector<32x128xf32>
    %1645 = vector.broadcast %1621 : f32 to vector<32x128xf32>
    %1646 = arith.mulf %1645, %11 : vector<32x128xf32>
    %1647 = vector.broadcast %1624 : f32 to vector<32x128xf32>
    %1648 = arith.mulf %1647, %14 : vector<32x128xf32>
    %1649 = arith.addf %1646, %1648 : vector<32x128xf32>
    %1650 = vector.broadcast %1627 : f32 to vector<32x128xf32>
    %1651 = arith.addf %1649, %1650 : vector<32x128xf32>
    %cst_429 = arith.constant 0.000000e+00 : f32
    %1652 = vector.broadcast %cst_429 : f32 to vector<32x128xf32>
    %1653 = arith.cmpf oge, %1634, %1652 : vector<32x128xf32>
    %cst_430 = arith.constant 0.000000e+00 : f32
    %1654 = vector.broadcast %cst_430 : f32 to vector<32x128xf32>
    %1655 = arith.cmpf oge, %1641, %1654 : vector<32x128xf32>
    %1656 = arith.andi %1653, %1655 : vector<32x128xi1>
    %cst_431 = arith.constant 0.000000e+00 : f32
    %1657 = vector.broadcast %cst_431 : f32 to vector<32x128xf32>
    %1658 = arith.cmpf oge, %1644, %1657 : vector<32x128xf32>
    %1659 = arith.andi %1656, %1658 : vector<32x128xi1>
    %1660 = arith.cmpf olt, %1651, %1593 : vector<32x128xf32>
    %1661 = arith.andi %1659, %1660 : vector<32x128xi1>
    %1662 = arith.select %1661, %1651, %1593 : vector<32x128xi1>, vector<32x128xf32>
    %1663 = vector.broadcast %c7_i32_416 : i32 to vector<32x128xi32>
    %1664 = arith.select %1661, %1663, %1595 : vector<32x128xi1>, vector<32x128xi32>
    %cst_432 = arith.constant 1.000000e+00 : f32
    %1665 = vector.broadcast %cst_432 : f32 to vector<32x128xf32>
    %1666 = arith.select %1659, %1665, %1597 : vector<32x128xi1>, vector<32x128xf32>
    %c8_i32_433 = arith.constant 8 : i32
    %c12_i32_434 = arith.constant 12 : i32
    %1667 = arith.muli %1111, %c12_i32_434 : i32
    %1668 = arith.addi %1667, %c8_i32_433 : i32
    %c12_i32_435 = arith.constant 12 : i32
    %1669 = arith.muli %1668, %c12_i32_435 : i32
    %c0_i32_436 = arith.constant 0 : i32
    %1670 = arith.addi %1669, %c0_i32_436 : i32
    %1671 = arith.index_cast %1670 : i32 to index
    %1672 = memref.load %arg1[%1671] : memref<288xf32, #tpu.memory_space<smem>>
    %c1_i32_437 = arith.constant 1 : i32
    %1673 = arith.addi %1669, %c1_i32_437 : i32
    %1674 = arith.index_cast %1673 : i32 to index
    %1675 = memref.load %arg1[%1674] : memref<288xf32, #tpu.memory_space<smem>>
    %c2_i32_438 = arith.constant 2 : i32
    %1676 = arith.addi %1669, %c2_i32_438 : i32
    %1677 = arith.index_cast %1676 : i32 to index
    %1678 = memref.load %arg1[%1677] : memref<288xf32, #tpu.memory_space<smem>>
    %c3_i32_439 = arith.constant 3 : i32
    %1679 = arith.addi %1669, %c3_i32_439 : i32
    %1680 = arith.index_cast %1679 : i32 to index
    %1681 = memref.load %arg1[%1680] : memref<288xf32, #tpu.memory_space<smem>>
    %c4_i32_440 = arith.constant 4 : i32
    %1682 = arith.addi %1669, %c4_i32_440 : i32
    %1683 = arith.index_cast %1682 : i32 to index
    %1684 = memref.load %arg1[%1683] : memref<288xf32, #tpu.memory_space<smem>>
    %c5_i32_441 = arith.constant 5 : i32
    %1685 = arith.addi %1669, %c5_i32_441 : i32
    %1686 = arith.index_cast %1685 : i32 to index
    %1687 = memref.load %arg1[%1686] : memref<288xf32, #tpu.memory_space<smem>>
    %c6_i32_442 = arith.constant 6 : i32
    %1688 = arith.addi %1669, %c6_i32_442 : i32
    %1689 = arith.index_cast %1688 : i32 to index
    %1690 = memref.load %arg1[%1689] : memref<288xf32, #tpu.memory_space<smem>>
    %c7_i32_443 = arith.constant 7 : i32
    %1691 = arith.addi %1669, %c7_i32_443 : i32
    %1692 = arith.index_cast %1691 : i32 to index
    %1693 = memref.load %arg1[%1692] : memref<288xf32, #tpu.memory_space<smem>>
    %c8_i32_444 = arith.constant 8 : i32
    %1694 = arith.addi %1669, %c8_i32_444 : i32
    %1695 = arith.index_cast %1694 : i32 to index
    %1696 = memref.load %arg1[%1695] : memref<288xf32, #tpu.memory_space<smem>>
    %1697 = vector.broadcast %1672 : f32 to vector<32x128xf32>
    %1698 = arith.mulf %1697, %11 : vector<32x128xf32>
    %1699 = vector.broadcast %1675 : f32 to vector<32x128xf32>
    %1700 = arith.mulf %1699, %14 : vector<32x128xf32>
    %1701 = arith.addf %1698, %1700 : vector<32x128xf32>
    %1702 = vector.broadcast %1678 : f32 to vector<32x128xf32>
    %1703 = arith.addf %1701, %1702 : vector<32x128xf32>
    %1704 = vector.broadcast %1681 : f32 to vector<32x128xf32>
    %1705 = arith.mulf %1704, %11 : vector<32x128xf32>
    %1706 = vector.broadcast %1684 : f32 to vector<32x128xf32>
    %1707 = arith.mulf %1706, %14 : vector<32x128xf32>
    %1708 = arith.addf %1705, %1707 : vector<32x128xf32>
    %1709 = vector.broadcast %1687 : f32 to vector<32x128xf32>
    %1710 = arith.addf %1708, %1709 : vector<32x128xf32>
    %cst_445 = arith.constant 1.000000e+00 : f32
    %1711 = vector.broadcast %cst_445 : f32 to vector<32x128xf32>
    %1712 = arith.subf %1711, %1703 : vector<32x128xf32>
    %1713 = arith.subf %1712, %1710 : vector<32x128xf32>
    %1714 = vector.broadcast %1690 : f32 to vector<32x128xf32>
    %1715 = arith.mulf %1714, %11 : vector<32x128xf32>
    %1716 = vector.broadcast %1693 : f32 to vector<32x128xf32>
    %1717 = arith.mulf %1716, %14 : vector<32x128xf32>
    %1718 = arith.addf %1715, %1717 : vector<32x128xf32>
    %1719 = vector.broadcast %1696 : f32 to vector<32x128xf32>
    %1720 = arith.addf %1718, %1719 : vector<32x128xf32>
    %cst_446 = arith.constant 0.000000e+00 : f32
    %1721 = vector.broadcast %cst_446 : f32 to vector<32x128xf32>
    %1722 = arith.cmpf oge, %1703, %1721 : vector<32x128xf32>
    %cst_447 = arith.constant 0.000000e+00 : f32
    %1723 = vector.broadcast %cst_447 : f32 to vector<32x128xf32>
    %1724 = arith.cmpf oge, %1710, %1723 : vector<32x128xf32>
    %1725 = arith.andi %1722, %1724 : vector<32x128xi1>
    %cst_448 = arith.constant 0.000000e+00 : f32
    %1726 = vector.broadcast %cst_448 : f32 to vector<32x128xf32>
    %1727 = arith.cmpf oge, %1713, %1726 : vector<32x128xf32>
    %1728 = arith.andi %1725, %1727 : vector<32x128xi1>
    %1729 = arith.cmpf olt, %1720, %1662 : vector<32x128xf32>
    %1730 = arith.andi %1728, %1729 : vector<32x128xi1>
    %1731 = arith.select %1730, %1720, %1662 : vector<32x128xi1>, vector<32x128xf32>
    %1732 = vector.broadcast %c8_i32_433 : i32 to vector<32x128xi32>
    %1733 = arith.select %1730, %1732, %1664 : vector<32x128xi1>, vector<32x128xi32>
    %cst_449 = arith.constant 1.000000e+00 : f32
    %1734 = vector.broadcast %cst_449 : f32 to vector<32x128xf32>
    %1735 = arith.select %1728, %1734, %1666 : vector<32x128xi1>, vector<32x128xf32>
    %c9_i32_450 = arith.constant 9 : i32
    %c12_i32_451 = arith.constant 12 : i32
    %1736 = arith.muli %1111, %c12_i32_451 : i32
    %1737 = arith.addi %1736, %c9_i32_450 : i32
    %c12_i32_452 = arith.constant 12 : i32
    %1738 = arith.muli %1737, %c12_i32_452 : i32
    %c0_i32_453 = arith.constant 0 : i32
    %1739 = arith.addi %1738, %c0_i32_453 : i32
    %1740 = arith.index_cast %1739 : i32 to index
    %1741 = memref.load %arg1[%1740] : memref<288xf32, #tpu.memory_space<smem>>
    %c1_i32_454 = arith.constant 1 : i32
    %1742 = arith.addi %1738, %c1_i32_454 : i32
    %1743 = arith.index_cast %1742 : i32 to index
    %1744 = memref.load %arg1[%1743] : memref<288xf32, #tpu.memory_space<smem>>
    %c2_i32_455 = arith.constant 2 : i32
    %1745 = arith.addi %1738, %c2_i32_455 : i32
    %1746 = arith.index_cast %1745 : i32 to index
    %1747 = memref.load %arg1[%1746] : memref<288xf32, #tpu.memory_space<smem>>
    %c3_i32_456 = arith.constant 3 : i32
    %1748 = arith.addi %1738, %c3_i32_456 : i32
    %1749 = arith.index_cast %1748 : i32 to index
    %1750 = memref.load %arg1[%1749] : memref<288xf32, #tpu.memory_space<smem>>
    %c4_i32_457 = arith.constant 4 : i32
    %1751 = arith.addi %1738, %c4_i32_457 : i32
    %1752 = arith.index_cast %1751 : i32 to index
    %1753 = memref.load %arg1[%1752] : memref<288xf32, #tpu.memory_space<smem>>
    %c5_i32_458 = arith.constant 5 : i32
    %1754 = arith.addi %1738, %c5_i32_458 : i32
    %1755 = arith.index_cast %1754 : i32 to index
    %1756 = memref.load %arg1[%1755] : memref<288xf32, #tpu.memory_space<smem>>
    %c6_i32_459 = arith.constant 6 : i32
    %1757 = arith.addi %1738, %c6_i32_459 : i32
    %1758 = arith.index_cast %1757 : i32 to index
    %1759 = memref.load %arg1[%1758] : memref<288xf32, #tpu.memory_space<smem>>
    %c7_i32_460 = arith.constant 7 : i32
    %1760 = arith.addi %1738, %c7_i32_460 : i32
    %1761 = arith.index_cast %1760 : i32 to index
    %1762 = memref.load %arg1[%1761] : memref<288xf32, #tpu.memory_space<smem>>
    %c8_i32_461 = arith.constant 8 : i32
    %1763 = arith.addi %1738, %c8_i32_461 : i32
    %1764 = arith.index_cast %1763 : i32 to index
    %1765 = memref.load %arg1[%1764] : memref<288xf32, #tpu.memory_space<smem>>
    %1766 = vector.broadcast %1741 : f32 to vector<32x128xf32>
    %1767 = arith.mulf %1766, %11 : vector<32x128xf32>
    %1768 = vector.broadcast %1744 : f32 to vector<32x128xf32>
    %1769 = arith.mulf %1768, %14 : vector<32x128xf32>
    %1770 = arith.addf %1767, %1769 : vector<32x128xf32>
    %1771 = vector.broadcast %1747 : f32 to vector<32x128xf32>
    %1772 = arith.addf %1770, %1771 : vector<32x128xf32>
    %1773 = vector.broadcast %1750 : f32 to vector<32x128xf32>
    %1774 = arith.mulf %1773, %11 : vector<32x128xf32>
    %1775 = vector.broadcast %1753 : f32 to vector<32x128xf32>
    %1776 = arith.mulf %1775, %14 : vector<32x128xf32>
    %1777 = arith.addf %1774, %1776 : vector<32x128xf32>
    %1778 = vector.broadcast %1756 : f32 to vector<32x128xf32>
    %1779 = arith.addf %1777, %1778 : vector<32x128xf32>
    %cst_462 = arith.constant 1.000000e+00 : f32
    %1780 = vector.broadcast %cst_462 : f32 to vector<32x128xf32>
    %1781 = arith.subf %1780, %1772 : vector<32x128xf32>
    %1782 = arith.subf %1781, %1779 : vector<32x128xf32>
    %1783 = vector.broadcast %1759 : f32 to vector<32x128xf32>
    %1784 = arith.mulf %1783, %11 : vector<32x128xf32>
    %1785 = vector.broadcast %1762 : f32 to vector<32x128xf32>
    %1786 = arith.mulf %1785, %14 : vector<32x128xf32>
    %1787 = arith.addf %1784, %1786 : vector<32x128xf32>
    %1788 = vector.broadcast %1765 : f32 to vector<32x128xf32>
    %1789 = arith.addf %1787, %1788 : vector<32x128xf32>
    %cst_463 = arith.constant 0.000000e+00 : f32
    %1790 = vector.broadcast %cst_463 : f32 to vector<32x128xf32>
    %1791 = arith.cmpf oge, %1772, %1790 : vector<32x128xf32>
    %cst_464 = arith.constant 0.000000e+00 : f32
    %1792 = vector.broadcast %cst_464 : f32 to vector<32x128xf32>
    %1793 = arith.cmpf oge, %1779, %1792 : vector<32x128xf32>
    %1794 = arith.andi %1791, %1793 : vector<32x128xi1>
    %cst_465 = arith.constant 0.000000e+00 : f32
    %1795 = vector.broadcast %cst_465 : f32 to vector<32x128xf32>
    %1796 = arith.cmpf oge, %1782, %1795 : vector<32x128xf32>
    %1797 = arith.andi %1794, %1796 : vector<32x128xi1>
    %1798 = arith.cmpf olt, %1789, %1731 : vector<32x128xf32>
    %1799 = arith.andi %1797, %1798 : vector<32x128xi1>
    %1800 = arith.select %1799, %1789, %1731 : vector<32x128xi1>, vector<32x128xf32>
    %1801 = vector.broadcast %c9_i32_450 : i32 to vector<32x128xi32>
    %1802 = arith.select %1799, %1801, %1733 : vector<32x128xi1>, vector<32x128xi32>
    %cst_466 = arith.constant 1.000000e+00 : f32
    %1803 = vector.broadcast %cst_466 : f32 to vector<32x128xf32>
    %1804 = arith.select %1797, %1803, %1735 : vector<32x128xi1>, vector<32x128xf32>
    %c10_i32_467 = arith.constant 10 : i32
    %c12_i32_468 = arith.constant 12 : i32
    %1805 = arith.muli %1111, %c12_i32_468 : i32
    %1806 = arith.addi %1805, %c10_i32_467 : i32
    %c12_i32_469 = arith.constant 12 : i32
    %1807 = arith.muli %1806, %c12_i32_469 : i32
    %c0_i32_470 = arith.constant 0 : i32
    %1808 = arith.addi %1807, %c0_i32_470 : i32
    %1809 = arith.index_cast %1808 : i32 to index
    %1810 = memref.load %arg1[%1809] : memref<288xf32, #tpu.memory_space<smem>>
    %c1_i32_471 = arith.constant 1 : i32
    %1811 = arith.addi %1807, %c1_i32_471 : i32
    %1812 = arith.index_cast %1811 : i32 to index
    %1813 = memref.load %arg1[%1812] : memref<288xf32, #tpu.memory_space<smem>>
    %c2_i32_472 = arith.constant 2 : i32
    %1814 = arith.addi %1807, %c2_i32_472 : i32
    %1815 = arith.index_cast %1814 : i32 to index
    %1816 = memref.load %arg1[%1815] : memref<288xf32, #tpu.memory_space<smem>>
    %c3_i32_473 = arith.constant 3 : i32
    %1817 = arith.addi %1807, %c3_i32_473 : i32
    %1818 = arith.index_cast %1817 : i32 to index
    %1819 = memref.load %arg1[%1818] : memref<288xf32, #tpu.memory_space<smem>>
    %c4_i32_474 = arith.constant 4 : i32
    %1820 = arith.addi %1807, %c4_i32_474 : i32
    %1821 = arith.index_cast %1820 : i32 to index
    %1822 = memref.load %arg1[%1821] : memref<288xf32, #tpu.memory_space<smem>>
    %c5_i32_475 = arith.constant 5 : i32
    %1823 = arith.addi %1807, %c5_i32_475 : i32
    %1824 = arith.index_cast %1823 : i32 to index
    %1825 = memref.load %arg1[%1824] : memref<288xf32, #tpu.memory_space<smem>>
    %c6_i32_476 = arith.constant 6 : i32
    %1826 = arith.addi %1807, %c6_i32_476 : i32
    %1827 = arith.index_cast %1826 : i32 to index
    %1828 = memref.load %arg1[%1827] : memref<288xf32, #tpu.memory_space<smem>>
    %c7_i32_477 = arith.constant 7 : i32
    %1829 = arith.addi %1807, %c7_i32_477 : i32
    %1830 = arith.index_cast %1829 : i32 to index
    %1831 = memref.load %arg1[%1830] : memref<288xf32, #tpu.memory_space<smem>>
    %c8_i32_478 = arith.constant 8 : i32
    %1832 = arith.addi %1807, %c8_i32_478 : i32
    %1833 = arith.index_cast %1832 : i32 to index
    %1834 = memref.load %arg1[%1833] : memref<288xf32, #tpu.memory_space<smem>>
    %1835 = vector.broadcast %1810 : f32 to vector<32x128xf32>
    %1836 = arith.mulf %1835, %11 : vector<32x128xf32>
    %1837 = vector.broadcast %1813 : f32 to vector<32x128xf32>
    %1838 = arith.mulf %1837, %14 : vector<32x128xf32>
    %1839 = arith.addf %1836, %1838 : vector<32x128xf32>
    %1840 = vector.broadcast %1816 : f32 to vector<32x128xf32>
    %1841 = arith.addf %1839, %1840 : vector<32x128xf32>
    %1842 = vector.broadcast %1819 : f32 to vector<32x128xf32>
    %1843 = arith.mulf %1842, %11 : vector<32x128xf32>
    %1844 = vector.broadcast %1822 : f32 to vector<32x128xf32>
    %1845 = arith.mulf %1844, %14 : vector<32x128xf32>
    %1846 = arith.addf %1843, %1845 : vector<32x128xf32>
    %1847 = vector.broadcast %1825 : f32 to vector<32x128xf32>
    %1848 = arith.addf %1846, %1847 : vector<32x128xf32>
    %cst_479 = arith.constant 1.000000e+00 : f32
    %1849 = vector.broadcast %cst_479 : f32 to vector<32x128xf32>
    %1850 = arith.subf %1849, %1841 : vector<32x128xf32>
    %1851 = arith.subf %1850, %1848 : vector<32x128xf32>
    %1852 = vector.broadcast %1828 : f32 to vector<32x128xf32>
    %1853 = arith.mulf %1852, %11 : vector<32x128xf32>
    %1854 = vector.broadcast %1831 : f32 to vector<32x128xf32>
    %1855 = arith.mulf %1854, %14 : vector<32x128xf32>
    %1856 = arith.addf %1853, %1855 : vector<32x128xf32>
    %1857 = vector.broadcast %1834 : f32 to vector<32x128xf32>
    %1858 = arith.addf %1856, %1857 : vector<32x128xf32>
    %cst_480 = arith.constant 0.000000e+00 : f32
    %1859 = vector.broadcast %cst_480 : f32 to vector<32x128xf32>
    %1860 = arith.cmpf oge, %1841, %1859 : vector<32x128xf32>
    %cst_481 = arith.constant 0.000000e+00 : f32
    %1861 = vector.broadcast %cst_481 : f32 to vector<32x128xf32>
    %1862 = arith.cmpf oge, %1848, %1861 : vector<32x128xf32>
    %1863 = arith.andi %1860, %1862 : vector<32x128xi1>
    %cst_482 = arith.constant 0.000000e+00 : f32
    %1864 = vector.broadcast %cst_482 : f32 to vector<32x128xf32>
    %1865 = arith.cmpf oge, %1851, %1864 : vector<32x128xf32>
    %1866 = arith.andi %1863, %1865 : vector<32x128xi1>
    %1867 = arith.cmpf olt, %1858, %1800 : vector<32x128xf32>
    %1868 = arith.andi %1866, %1867 : vector<32x128xi1>
    %1869 = arith.select %1868, %1858, %1800 : vector<32x128xi1>, vector<32x128xf32>
    %1870 = vector.broadcast %c10_i32_467 : i32 to vector<32x128xi32>
    %1871 = arith.select %1868, %1870, %1802 : vector<32x128xi1>, vector<32x128xi32>
    %cst_483 = arith.constant 1.000000e+00 : f32
    %1872 = vector.broadcast %cst_483 : f32 to vector<32x128xf32>
    %1873 = arith.select %1866, %1872, %1804 : vector<32x128xi1>, vector<32x128xf32>
    %c11_i32_484 = arith.constant 11 : i32
    %c12_i32_485 = arith.constant 12 : i32
    %1874 = arith.muli %1111, %c12_i32_485 : i32
    %1875 = arith.addi %1874, %c11_i32_484 : i32
    %c12_i32_486 = arith.constant 12 : i32
    %1876 = arith.muli %1875, %c12_i32_486 : i32
    %c0_i32_487 = arith.constant 0 : i32
    %1877 = arith.addi %1876, %c0_i32_487 : i32
    %1878 = arith.index_cast %1877 : i32 to index
    %1879 = memref.load %arg1[%1878] : memref<288xf32, #tpu.memory_space<smem>>
    %c1_i32_488 = arith.constant 1 : i32
    %1880 = arith.addi %1876, %c1_i32_488 : i32
    %1881 = arith.index_cast %1880 : i32 to index
    %1882 = memref.load %arg1[%1881] : memref<288xf32, #tpu.memory_space<smem>>
    %c2_i32_489 = arith.constant 2 : i32
    %1883 = arith.addi %1876, %c2_i32_489 : i32
    %1884 = arith.index_cast %1883 : i32 to index
    %1885 = memref.load %arg1[%1884] : memref<288xf32, #tpu.memory_space<smem>>
    %c3_i32_490 = arith.constant 3 : i32
    %1886 = arith.addi %1876, %c3_i32_490 : i32
    %1887 = arith.index_cast %1886 : i32 to index
    %1888 = memref.load %arg1[%1887] : memref<288xf32, #tpu.memory_space<smem>>
    %c4_i32_491 = arith.constant 4 : i32
    %1889 = arith.addi %1876, %c4_i32_491 : i32
    %1890 = arith.index_cast %1889 : i32 to index
    %1891 = memref.load %arg1[%1890] : memref<288xf32, #tpu.memory_space<smem>>
    %c5_i32_492 = arith.constant 5 : i32
    %1892 = arith.addi %1876, %c5_i32_492 : i32
    %1893 = arith.index_cast %1892 : i32 to index
    %1894 = memref.load %arg1[%1893] : memref<288xf32, #tpu.memory_space<smem>>
    %c6_i32_493 = arith.constant 6 : i32
    %1895 = arith.addi %1876, %c6_i32_493 : i32
    %1896 = arith.index_cast %1895 : i32 to index
    %1897 = memref.load %arg1[%1896] : memref<288xf32, #tpu.memory_space<smem>>
    %c7_i32_494 = arith.constant 7 : i32
    %1898 = arith.addi %1876, %c7_i32_494 : i32
    %1899 = arith.index_cast %1898 : i32 to index
    %1900 = memref.load %arg1[%1899] : memref<288xf32, #tpu.memory_space<smem>>
    %c8_i32_495 = arith.constant 8 : i32
    %1901 = arith.addi %1876, %c8_i32_495 : i32
    %1902 = arith.index_cast %1901 : i32 to index
    %1903 = memref.load %arg1[%1902] : memref<288xf32, #tpu.memory_space<smem>>
    %1904 = vector.broadcast %1879 : f32 to vector<32x128xf32>
    %1905 = arith.mulf %1904, %11 : vector<32x128xf32>
    %1906 = vector.broadcast %1882 : f32 to vector<32x128xf32>
    %1907 = arith.mulf %1906, %14 : vector<32x128xf32>
    %1908 = arith.addf %1905, %1907 : vector<32x128xf32>
    %1909 = vector.broadcast %1885 : f32 to vector<32x128xf32>
    %1910 = arith.addf %1908, %1909 : vector<32x128xf32>
    %1911 = vector.broadcast %1888 : f32 to vector<32x128xf32>
    %1912 = arith.mulf %1911, %11 : vector<32x128xf32>
    %1913 = vector.broadcast %1891 : f32 to vector<32x128xf32>
    %1914 = arith.mulf %1913, %14 : vector<32x128xf32>
    %1915 = arith.addf %1912, %1914 : vector<32x128xf32>
    %1916 = vector.broadcast %1894 : f32 to vector<32x128xf32>
    %1917 = arith.addf %1915, %1916 : vector<32x128xf32>
    %cst_496 = arith.constant 1.000000e+00 : f32
    %1918 = vector.broadcast %cst_496 : f32 to vector<32x128xf32>
    %1919 = arith.subf %1918, %1910 : vector<32x128xf32>
    %1920 = arith.subf %1919, %1917 : vector<32x128xf32>
    %1921 = vector.broadcast %1897 : f32 to vector<32x128xf32>
    %1922 = arith.mulf %1921, %11 : vector<32x128xf32>
    %1923 = vector.broadcast %1900 : f32 to vector<32x128xf32>
    %1924 = arith.mulf %1923, %14 : vector<32x128xf32>
    %1925 = arith.addf %1922, %1924 : vector<32x128xf32>
    %1926 = vector.broadcast %1903 : f32 to vector<32x128xf32>
    %1927 = arith.addf %1925, %1926 : vector<32x128xf32>
    %cst_497 = arith.constant 0.000000e+00 : f32
    %1928 = vector.broadcast %cst_497 : f32 to vector<32x128xf32>
    %1929 = arith.cmpf oge, %1910, %1928 : vector<32x128xf32>
    %cst_498 = arith.constant 0.000000e+00 : f32
    %1930 = vector.broadcast %cst_498 : f32 to vector<32x128xf32>
    %1931 = arith.cmpf oge, %1917, %1930 : vector<32x128xf32>
    %1932 = arith.andi %1929, %1931 : vector<32x128xi1>
    %cst_499 = arith.constant 0.000000e+00 : f32
    %1933 = vector.broadcast %cst_499 : f32 to vector<32x128xf32>
    %1934 = arith.cmpf oge, %1920, %1933 : vector<32x128xf32>
    %1935 = arith.andi %1932, %1934 : vector<32x128xi1>
    %1936 = arith.cmpf olt, %1927, %1869 : vector<32x128xf32>
    %1937 = arith.andi %1935, %1936 : vector<32x128xi1>
    %1938 = arith.select %1937, %1927, %1869 : vector<32x128xi1>, vector<32x128xf32>
    %1939 = vector.broadcast %c11_i32_484 : i32 to vector<32x128xi32>
    %1940 = arith.select %1937, %1939, %1871 : vector<32x128xi1>, vector<32x128xi32>
    %cst_500 = arith.constant 1.000000e+00 : f32
    %1941 = vector.broadcast %cst_500 : f32 to vector<32x128xf32>
    %1942 = arith.select %1935, %1941, %1873 : vector<32x128xi1>, vector<32x128xf32>
    %c12_i32_501 = arith.constant 12 : i32
    %cst_502 = arith.constant 1.000000e+00 : f32
    %1943 = vector.broadcast %cst_502 : f32 to vector<32x128xf32>
    %cst_503 = arith.constant 1.000000e+00 : f32
    %1944 = vector.broadcast %cst_503 : f32 to vector<32x128xf32>
    %cst_504 = arith.constant 1.000000e+00 : f32
    %1945 = vector.broadcast %cst_504 : f32 to vector<32x128xf32>
    %c0_i32_505 = arith.constant 0 : i32
    %c12_i32_506 = arith.constant 12 : i32
    %1946 = arith.muli %1111, %c12_i32_506 : i32
    %1947 = arith.addi %1946, %c0_i32_505 : i32
    %c12_i32_507 = arith.constant 12 : i32
    %1948 = arith.muli %1947, %c12_i32_507 : i32
    %1949 = vector.broadcast %c0_i32_505 : i32 to vector<32x128xi32>
    %1950 = arith.cmpi eq, %1940, %1949 : vector<32x128xi32>
    %c9_i32_508 = arith.constant 9 : i32
    %1951 = arith.addi %1948, %c9_i32_508 : i32
    %1952 = arith.index_cast %1951 : i32 to index
    %1953 = memref.load %arg1[%1952] : memref<288xf32, #tpu.memory_space<smem>>
    %1954 = vector.broadcast %1953 : f32 to vector<32x128xf32>
    %1955 = arith.select %1950, %1954, %1943 : vector<32x128xi1>, vector<32x128xf32>
    %c10_i32_509 = arith.constant 10 : i32
    %1956 = arith.addi %1948, %c10_i32_509 : i32
    %1957 = arith.index_cast %1956 : i32 to index
    %1958 = memref.load %arg1[%1957] : memref<288xf32, #tpu.memory_space<smem>>
    %1959 = vector.broadcast %1958 : f32 to vector<32x128xf32>
    %1960 = arith.select %1950, %1959, %1944 : vector<32x128xi1>, vector<32x128xf32>
    %c11_i32_510 = arith.constant 11 : i32
    %1961 = arith.addi %1948, %c11_i32_510 : i32
    %1962 = arith.index_cast %1961 : i32 to index
    %1963 = memref.load %arg1[%1962] : memref<288xf32, #tpu.memory_space<smem>>
    %1964 = vector.broadcast %1963 : f32 to vector<32x128xf32>
    %1965 = arith.select %1950, %1964, %1945 : vector<32x128xi1>, vector<32x128xf32>
    %c1_i32_511 = arith.constant 1 : i32
    %c12_i32_512 = arith.constant 12 : i32
    %1966 = arith.muli %1111, %c12_i32_512 : i32
    %1967 = arith.addi %1966, %c1_i32_511 : i32
    %c12_i32_513 = arith.constant 12 : i32
    %1968 = arith.muli %1967, %c12_i32_513 : i32
    %1969 = vector.broadcast %c1_i32_511 : i32 to vector<32x128xi32>
    %1970 = arith.cmpi eq, %1940, %1969 : vector<32x128xi32>
    %c9_i32_514 = arith.constant 9 : i32
    %1971 = arith.addi %1968, %c9_i32_514 : i32
    %1972 = arith.index_cast %1971 : i32 to index
    %1973 = memref.load %arg1[%1972] : memref<288xf32, #tpu.memory_space<smem>>
    %1974 = vector.broadcast %1973 : f32 to vector<32x128xf32>
    %1975 = arith.select %1970, %1974, %1955 : vector<32x128xi1>, vector<32x128xf32>
    %c10_i32_515 = arith.constant 10 : i32
    %1976 = arith.addi %1968, %c10_i32_515 : i32
    %1977 = arith.index_cast %1976 : i32 to index
    %1978 = memref.load %arg1[%1977] : memref<288xf32, #tpu.memory_space<smem>>
    %1979 = vector.broadcast %1978 : f32 to vector<32x128xf32>
    %1980 = arith.select %1970, %1979, %1960 : vector<32x128xi1>, vector<32x128xf32>
    %c11_i32_516 = arith.constant 11 : i32
    %1981 = arith.addi %1968, %c11_i32_516 : i32
    %1982 = arith.index_cast %1981 : i32 to index
    %1983 = memref.load %arg1[%1982] : memref<288xf32, #tpu.memory_space<smem>>
    %1984 = vector.broadcast %1983 : f32 to vector<32x128xf32>
    %1985 = arith.select %1970, %1984, %1965 : vector<32x128xi1>, vector<32x128xf32>
    %c2_i32_517 = arith.constant 2 : i32
    %c12_i32_518 = arith.constant 12 : i32
    %1986 = arith.muli %1111, %c12_i32_518 : i32
    %1987 = arith.addi %1986, %c2_i32_517 : i32
    %c12_i32_519 = arith.constant 12 : i32
    %1988 = arith.muli %1987, %c12_i32_519 : i32
    %1989 = vector.broadcast %c2_i32_517 : i32 to vector<32x128xi32>
    %1990 = arith.cmpi eq, %1940, %1989 : vector<32x128xi32>
    %c9_i32_520 = arith.constant 9 : i32
    %1991 = arith.addi %1988, %c9_i32_520 : i32
    %1992 = arith.index_cast %1991 : i32 to index
    %1993 = memref.load %arg1[%1992] : memref<288xf32, #tpu.memory_space<smem>>
    %1994 = vector.broadcast %1993 : f32 to vector<32x128xf32>
    %1995 = arith.select %1990, %1994, %1975 : vector<32x128xi1>, vector<32x128xf32>
    %c10_i32_521 = arith.constant 10 : i32
    %1996 = arith.addi %1988, %c10_i32_521 : i32
    %1997 = arith.index_cast %1996 : i32 to index
    %1998 = memref.load %arg1[%1997] : memref<288xf32, #tpu.memory_space<smem>>
    %1999 = vector.broadcast %1998 : f32 to vector<32x128xf32>
    %2000 = arith.select %1990, %1999, %1980 : vector<32x128xi1>, vector<32x128xf32>
    %c11_i32_522 = arith.constant 11 : i32
    %2001 = arith.addi %1988, %c11_i32_522 : i32
    %2002 = arith.index_cast %2001 : i32 to index
    %2003 = memref.load %arg1[%2002] : memref<288xf32, #tpu.memory_space<smem>>
    %2004 = vector.broadcast %2003 : f32 to vector<32x128xf32>
    %2005 = arith.select %1990, %2004, %1985 : vector<32x128xi1>, vector<32x128xf32>
    %c3_i32_523 = arith.constant 3 : i32
    %c12_i32_524 = arith.constant 12 : i32
    %2006 = arith.muli %1111, %c12_i32_524 : i32
    %2007 = arith.addi %2006, %c3_i32_523 : i32
    %c12_i32_525 = arith.constant 12 : i32
    %2008 = arith.muli %2007, %c12_i32_525 : i32
    %2009 = vector.broadcast %c3_i32_523 : i32 to vector<32x128xi32>
    %2010 = arith.cmpi eq, %1940, %2009 : vector<32x128xi32>
    %c9_i32_526 = arith.constant 9 : i32
    %2011 = arith.addi %2008, %c9_i32_526 : i32
    %2012 = arith.index_cast %2011 : i32 to index
    %2013 = memref.load %arg1[%2012] : memref<288xf32, #tpu.memory_space<smem>>
    %2014 = vector.broadcast %2013 : f32 to vector<32x128xf32>
    %2015 = arith.select %2010, %2014, %1995 : vector<32x128xi1>, vector<32x128xf32>
    %c10_i32_527 = arith.constant 10 : i32
    %2016 = arith.addi %2008, %c10_i32_527 : i32
    %2017 = arith.index_cast %2016 : i32 to index
    %2018 = memref.load %arg1[%2017] : memref<288xf32, #tpu.memory_space<smem>>
    %2019 = vector.broadcast %2018 : f32 to vector<32x128xf32>
    %2020 = arith.select %2010, %2019, %2000 : vector<32x128xi1>, vector<32x128xf32>
    %c11_i32_528 = arith.constant 11 : i32
    %2021 = arith.addi %2008, %c11_i32_528 : i32
    %2022 = arith.index_cast %2021 : i32 to index
    %2023 = memref.load %arg1[%2022] : memref<288xf32, #tpu.memory_space<smem>>
    %2024 = vector.broadcast %2023 : f32 to vector<32x128xf32>
    %2025 = arith.select %2010, %2024, %2005 : vector<32x128xi1>, vector<32x128xf32>
    %c4_i32_529 = arith.constant 4 : i32
    %c12_i32_530 = arith.constant 12 : i32
    %2026 = arith.muli %1111, %c12_i32_530 : i32
    %2027 = arith.addi %2026, %c4_i32_529 : i32
    %c12_i32_531 = arith.constant 12 : i32
    %2028 = arith.muli %2027, %c12_i32_531 : i32
    %2029 = vector.broadcast %c4_i32_529 : i32 to vector<32x128xi32>
    %2030 = arith.cmpi eq, %1940, %2029 : vector<32x128xi32>
    %c9_i32_532 = arith.constant 9 : i32
    %2031 = arith.addi %2028, %c9_i32_532 : i32
    %2032 = arith.index_cast %2031 : i32 to index
    %2033 = memref.load %arg1[%2032] : memref<288xf32, #tpu.memory_space<smem>>
    %2034 = vector.broadcast %2033 : f32 to vector<32x128xf32>
    %2035 = arith.select %2030, %2034, %2015 : vector<32x128xi1>, vector<32x128xf32>
    %c10_i32_533 = arith.constant 10 : i32
    %2036 = arith.addi %2028, %c10_i32_533 : i32
    %2037 = arith.index_cast %2036 : i32 to index
    %2038 = memref.load %arg1[%2037] : memref<288xf32, #tpu.memory_space<smem>>
    %2039 = vector.broadcast %2038 : f32 to vector<32x128xf32>
    %2040 = arith.select %2030, %2039, %2020 : vector<32x128xi1>, vector<32x128xf32>
    %c11_i32_534 = arith.constant 11 : i32
    %2041 = arith.addi %2028, %c11_i32_534 : i32
    %2042 = arith.index_cast %2041 : i32 to index
    %2043 = memref.load %arg1[%2042] : memref<288xf32, #tpu.memory_space<smem>>
    %2044 = vector.broadcast %2043 : f32 to vector<32x128xf32>
    %2045 = arith.select %2030, %2044, %2025 : vector<32x128xi1>, vector<32x128xf32>
    %c5_i32_535 = arith.constant 5 : i32
    %c12_i32_536 = arith.constant 12 : i32
    %2046 = arith.muli %1111, %c12_i32_536 : i32
    %2047 = arith.addi %2046, %c5_i32_535 : i32
    %c12_i32_537 = arith.constant 12 : i32
    %2048 = arith.muli %2047, %c12_i32_537 : i32
    %2049 = vector.broadcast %c5_i32_535 : i32 to vector<32x128xi32>
    %2050 = arith.cmpi eq, %1940, %2049 : vector<32x128xi32>
    %c9_i32_538 = arith.constant 9 : i32
    %2051 = arith.addi %2048, %c9_i32_538 : i32
    %2052 = arith.index_cast %2051 : i32 to index
    %2053 = memref.load %arg1[%2052] : memref<288xf32, #tpu.memory_space<smem>>
    %2054 = vector.broadcast %2053 : f32 to vector<32x128xf32>
    %2055 = arith.select %2050, %2054, %2035 : vector<32x128xi1>, vector<32x128xf32>
    %c10_i32_539 = arith.constant 10 : i32
    %2056 = arith.addi %2048, %c10_i32_539 : i32
    %2057 = arith.index_cast %2056 : i32 to index
    %2058 = memref.load %arg1[%2057] : memref<288xf32, #tpu.memory_space<smem>>
    %2059 = vector.broadcast %2058 : f32 to vector<32x128xf32>
    %2060 = arith.select %2050, %2059, %2040 : vector<32x128xi1>, vector<32x128xf32>
    %c11_i32_540 = arith.constant 11 : i32
    %2061 = arith.addi %2048, %c11_i32_540 : i32
    %2062 = arith.index_cast %2061 : i32 to index
    %2063 = memref.load %arg1[%2062] : memref<288xf32, #tpu.memory_space<smem>>
    %2064 = vector.broadcast %2063 : f32 to vector<32x128xf32>
    %2065 = arith.select %2050, %2064, %2045 : vector<32x128xi1>, vector<32x128xf32>
    %c6_i32_541 = arith.constant 6 : i32
    %c12_i32_542 = arith.constant 12 : i32
    %2066 = arith.muli %1111, %c12_i32_542 : i32
    %2067 = arith.addi %2066, %c6_i32_541 : i32
    %c12_i32_543 = arith.constant 12 : i32
    %2068 = arith.muli %2067, %c12_i32_543 : i32
    %2069 = vector.broadcast %c6_i32_541 : i32 to vector<32x128xi32>
    %2070 = arith.cmpi eq, %1940, %2069 : vector<32x128xi32>
    %c9_i32_544 = arith.constant 9 : i32
    %2071 = arith.addi %2068, %c9_i32_544 : i32
    %2072 = arith.index_cast %2071 : i32 to index
    %2073 = memref.load %arg1[%2072] : memref<288xf32, #tpu.memory_space<smem>>
    %2074 = vector.broadcast %2073 : f32 to vector<32x128xf32>
    %2075 = arith.select %2070, %2074, %2055 : vector<32x128xi1>, vector<32x128xf32>
    %c10_i32_545 = arith.constant 10 : i32
    %2076 = arith.addi %2068, %c10_i32_545 : i32
    %2077 = arith.index_cast %2076 : i32 to index
    %2078 = memref.load %arg1[%2077] : memref<288xf32, #tpu.memory_space<smem>>
    %2079 = vector.broadcast %2078 : f32 to vector<32x128xf32>
    %2080 = arith.select %2070, %2079, %2060 : vector<32x128xi1>, vector<32x128xf32>
    %c11_i32_546 = arith.constant 11 : i32
    %2081 = arith.addi %2068, %c11_i32_546 : i32
    %2082 = arith.index_cast %2081 : i32 to index
    %2083 = memref.load %arg1[%2082] : memref<288xf32, #tpu.memory_space<smem>>
    %2084 = vector.broadcast %2083 : f32 to vector<32x128xf32>
    %2085 = arith.select %2070, %2084, %2065 : vector<32x128xi1>, vector<32x128xf32>
    %c7_i32_547 = arith.constant 7 : i32
    %c12_i32_548 = arith.constant 12 : i32
    %2086 = arith.muli %1111, %c12_i32_548 : i32
    %2087 = arith.addi %2086, %c7_i32_547 : i32
    %c12_i32_549 = arith.constant 12 : i32
    %2088 = arith.muli %2087, %c12_i32_549 : i32
    %2089 = vector.broadcast %c7_i32_547 : i32 to vector<32x128xi32>
    %2090 = arith.cmpi eq, %1940, %2089 : vector<32x128xi32>
    %c9_i32_550 = arith.constant 9 : i32
    %2091 = arith.addi %2088, %c9_i32_550 : i32
    %2092 = arith.index_cast %2091 : i32 to index
    %2093 = memref.load %arg1[%2092] : memref<288xf32, #tpu.memory_space<smem>>
    %2094 = vector.broadcast %2093 : f32 to vector<32x128xf32>
    %2095 = arith.select %2090, %2094, %2075 : vector<32x128xi1>, vector<32x128xf32>
    %c10_i32_551 = arith.constant 10 : i32
    %2096 = arith.addi %2088, %c10_i32_551 : i32
    %2097 = arith.index_cast %2096 : i32 to index
    %2098 = memref.load %arg1[%2097] : memref<288xf32, #tpu.memory_space<smem>>
    %2099 = vector.broadcast %2098 : f32 to vector<32x128xf32>
    %2100 = arith.select %2090, %2099, %2080 : vector<32x128xi1>, vector<32x128xf32>
    %c11_i32_552 = arith.constant 11 : i32
    %2101 = arith.addi %2088, %c11_i32_552 : i32
    %2102 = arith.index_cast %2101 : i32 to index
    %2103 = memref.load %arg1[%2102] : memref<288xf32, #tpu.memory_space<smem>>
    %2104 = vector.broadcast %2103 : f32 to vector<32x128xf32>
    %2105 = arith.select %2090, %2104, %2085 : vector<32x128xi1>, vector<32x128xf32>
    %c8_i32_553 = arith.constant 8 : i32
    %c12_i32_554 = arith.constant 12 : i32
    %2106 = arith.muli %1111, %c12_i32_554 : i32
    %2107 = arith.addi %2106, %c8_i32_553 : i32
    %c12_i32_555 = arith.constant 12 : i32
    %2108 = arith.muli %2107, %c12_i32_555 : i32
    %2109 = vector.broadcast %c8_i32_553 : i32 to vector<32x128xi32>
    %2110 = arith.cmpi eq, %1940, %2109 : vector<32x128xi32>
    %c9_i32_556 = arith.constant 9 : i32
    %2111 = arith.addi %2108, %c9_i32_556 : i32
    %2112 = arith.index_cast %2111 : i32 to index
    %2113 = memref.load %arg1[%2112] : memref<288xf32, #tpu.memory_space<smem>>
    %2114 = vector.broadcast %2113 : f32 to vector<32x128xf32>
    %2115 = arith.select %2110, %2114, %2095 : vector<32x128xi1>, vector<32x128xf32>
    %c10_i32_557 = arith.constant 10 : i32
    %2116 = arith.addi %2108, %c10_i32_557 : i32
    %2117 = arith.index_cast %2116 : i32 to index
    %2118 = memref.load %arg1[%2117] : memref<288xf32, #tpu.memory_space<smem>>
    %2119 = vector.broadcast %2118 : f32 to vector<32x128xf32>
    %2120 = arith.select %2110, %2119, %2100 : vector<32x128xi1>, vector<32x128xf32>
    %c11_i32_558 = arith.constant 11 : i32
    %2121 = arith.addi %2108, %c11_i32_558 : i32
    %2122 = arith.index_cast %2121 : i32 to index
    %2123 = memref.load %arg1[%2122] : memref<288xf32, #tpu.memory_space<smem>>
    %2124 = vector.broadcast %2123 : f32 to vector<32x128xf32>
    %2125 = arith.select %2110, %2124, %2105 : vector<32x128xi1>, vector<32x128xf32>
    %c9_i32_559 = arith.constant 9 : i32
    %c12_i32_560 = arith.constant 12 : i32
    %2126 = arith.muli %1111, %c12_i32_560 : i32
    %2127 = arith.addi %2126, %c9_i32_559 : i32
    %c12_i32_561 = arith.constant 12 : i32
    %2128 = arith.muli %2127, %c12_i32_561 : i32
    %2129 = vector.broadcast %c9_i32_559 : i32 to vector<32x128xi32>
    %2130 = arith.cmpi eq, %1940, %2129 : vector<32x128xi32>
    %c9_i32_562 = arith.constant 9 : i32
    %2131 = arith.addi %2128, %c9_i32_562 : i32
    %2132 = arith.index_cast %2131 : i32 to index
    %2133 = memref.load %arg1[%2132] : memref<288xf32, #tpu.memory_space<smem>>
    %2134 = vector.broadcast %2133 : f32 to vector<32x128xf32>
    %2135 = arith.select %2130, %2134, %2115 : vector<32x128xi1>, vector<32x128xf32>
    %c10_i32_563 = arith.constant 10 : i32
    %2136 = arith.addi %2128, %c10_i32_563 : i32
    %2137 = arith.index_cast %2136 : i32 to index
    %2138 = memref.load %arg1[%2137] : memref<288xf32, #tpu.memory_space<smem>>
    %2139 = vector.broadcast %2138 : f32 to vector<32x128xf32>
    %2140 = arith.select %2130, %2139, %2120 : vector<32x128xi1>, vector<32x128xf32>
    %c11_i32_564 = arith.constant 11 : i32
    %2141 = arith.addi %2128, %c11_i32_564 : i32
    %2142 = arith.index_cast %2141 : i32 to index
    %2143 = memref.load %arg1[%2142] : memref<288xf32, #tpu.memory_space<smem>>
    %2144 = vector.broadcast %2143 : f32 to vector<32x128xf32>
    %2145 = arith.select %2130, %2144, %2125 : vector<32x128xi1>, vector<32x128xf32>
    %c10_i32_565 = arith.constant 10 : i32
    %c12_i32_566 = arith.constant 12 : i32
    %2146 = arith.muli %1111, %c12_i32_566 : i32
    %2147 = arith.addi %2146, %c10_i32_565 : i32
    %c12_i32_567 = arith.constant 12 : i32
    %2148 = arith.muli %2147, %c12_i32_567 : i32
    %2149 = vector.broadcast %c10_i32_565 : i32 to vector<32x128xi32>
    %2150 = arith.cmpi eq, %1940, %2149 : vector<32x128xi32>
    %c9_i32_568 = arith.constant 9 : i32
    %2151 = arith.addi %2148, %c9_i32_568 : i32
    %2152 = arith.index_cast %2151 : i32 to index
    %2153 = memref.load %arg1[%2152] : memref<288xf32, #tpu.memory_space<smem>>
    %2154 = vector.broadcast %2153 : f32 to vector<32x128xf32>
    %2155 = arith.select %2150, %2154, %2135 : vector<32x128xi1>, vector<32x128xf32>
    %c10_i32_569 = arith.constant 10 : i32
    %2156 = arith.addi %2148, %c10_i32_569 : i32
    %2157 = arith.index_cast %2156 : i32 to index
    %2158 = memref.load %arg1[%2157] : memref<288xf32, #tpu.memory_space<smem>>
    %2159 = vector.broadcast %2158 : f32 to vector<32x128xf32>
    %2160 = arith.select %2150, %2159, %2140 : vector<32x128xi1>, vector<32x128xf32>
    %c11_i32_570 = arith.constant 11 : i32
    %2161 = arith.addi %2148, %c11_i32_570 : i32
    %2162 = arith.index_cast %2161 : i32 to index
    %2163 = memref.load %arg1[%2162] : memref<288xf32, #tpu.memory_space<smem>>
    %2164 = vector.broadcast %2163 : f32 to vector<32x128xf32>
    %2165 = arith.select %2150, %2164, %2145 : vector<32x128xi1>, vector<32x128xf32>
    %c11_i32_571 = arith.constant 11 : i32
    %c12_i32_572 = arith.constant 12 : i32
    %2166 = arith.muli %1111, %c12_i32_572 : i32
    %2167 = arith.addi %2166, %c11_i32_571 : i32
    %c12_i32_573 = arith.constant 12 : i32
    %2168 = arith.muli %2167, %c12_i32_573 : i32
    %2169 = vector.broadcast %c11_i32_571 : i32 to vector<32x128xi32>
    %2170 = arith.cmpi eq, %1940, %2169 : vector<32x128xi32>
    %c9_i32_574 = arith.constant 9 : i32
    %2171 = arith.addi %2168, %c9_i32_574 : i32
    %2172 = arith.index_cast %2171 : i32 to index
    %2173 = memref.load %arg1[%2172] : memref<288xf32, #tpu.memory_space<smem>>
    %2174 = vector.broadcast %2173 : f32 to vector<32x128xf32>
    %2175 = arith.select %2170, %2174, %2155 : vector<32x128xi1>, vector<32x128xf32>
    %c10_i32_575 = arith.constant 10 : i32
    %2176 = arith.addi %2168, %c10_i32_575 : i32
    %2177 = arith.index_cast %2176 : i32 to index
    %2178 = memref.load %arg1[%2177] : memref<288xf32, #tpu.memory_space<smem>>
    %2179 = vector.broadcast %2178 : f32 to vector<32x128xf32>
    %2180 = arith.select %2170, %2179, %2160 : vector<32x128xi1>, vector<32x128xf32>
    %c11_i32_576 = arith.constant 11 : i32
    %2181 = arith.addi %2168, %c11_i32_576 : i32
    %2182 = arith.index_cast %2181 : i32 to index
    %2183 = memref.load %arg1[%2182] : memref<288xf32, #tpu.memory_space<smem>>
    %2184 = vector.broadcast %2183 : f32 to vector<32x128xf32>
    %2185 = arith.select %2170, %2184, %2165 : vector<32x128xi1>, vector<32x128xf32>
    %c12_i32_577 = arith.constant 12 : i32
    %c1_578 = arith.constant 1 : index
    %c0_579 = arith.constant 0 : index
    %c0_580 = arith.constant 0 : index
    %c0_581 = arith.constant 0 : index
    %2186 = vector.load %arg2[%c1_578, %c0_579, %c0_580, %c0_581] : memref<2x5x32x128xf32, #tpu.memory_space<vmem>>, vector<1x1x32x128xf32>
    %2187 = vector.shape_cast %2186 : vector<1x1x32x128xf32> to vector<32x128xf32>
    %2188 = vector.shape_cast %2175 : vector<32x128xf32> to vector<1x1x32x128xf32>
    tpu.vector_store %arg2[%c1_578, %c0_579, %c0_580, %c0_581], %2188 {strides = array<i32>} : memref<2x5x32x128xf32, #tpu.memory_space<vmem>>, vector<1x1x32x128xf32>,
    %c1_582 = arith.constant 1 : index
    %c1_583 = arith.constant 1 : index
    %c0_584 = arith.constant 0 : index
    %c0_585 = arith.constant 0 : index
    %2189 = vector.load %arg2[%c1_582, %c1_583, %c0_584, %c0_585] : memref<2x5x32x128xf32, #tpu.memory_space<vmem>>, vector<1x1x32x128xf32>
    %2190 = vector.shape_cast %2189 : vector<1x1x32x128xf32> to vector<32x128xf32>
    %2191 = vector.shape_cast %2180 : vector<32x128xf32> to vector<1x1x32x128xf32>
    tpu.vector_store %arg2[%c1_582, %c1_583, %c0_584, %c0_585], %2191 {strides = array<i32>} : memref<2x5x32x128xf32, #tpu.memory_space<vmem>>, vector<1x1x32x128xf32>,
    %c1_586 = arith.constant 1 : index
    %c2_587 = arith.constant 2 : index
    %c0_588 = arith.constant 0 : index
    %c0_589 = arith.constant 0 : index
    %2192 = vector.load %arg2[%c1_586, %c2_587, %c0_588, %c0_589] : memref<2x5x32x128xf32, #tpu.memory_space<vmem>>, vector<1x1x32x128xf32>
    %2193 = vector.shape_cast %2192 : vector<1x1x32x128xf32> to vector<32x128xf32>
    %2194 = vector.shape_cast %2185 : vector<32x128xf32> to vector<1x1x32x128xf32>
    tpu.vector_store %arg2[%c1_586, %c2_587, %c0_588, %c0_589], %2194 {strides = array<i32>} : memref<2x5x32x128xf32, #tpu.memory_space<vmem>>, vector<1x1x32x128xf32>,
    %cst_590 = arith.constant 5.000000e+08 : f32
    %2195 = vector.broadcast %cst_590 : f32 to vector<32x128xf32>
    %2196 = arith.cmpf ogt, %1938, %2195 : vector<32x128xf32>
    %cst_591 = arith.constant -1.000000e+00 : f32
    %2197 = vector.broadcast %cst_591 : f32 to vector<32x128xf32>
    %2198 = arith.select %2196, %2197, %1938 : vector<32x128xi1>, vector<32x128xf32>
    %c1_592 = arith.constant 1 : index
    %c3_593 = arith.constant 3 : index
    %c0_594 = arith.constant 0 : index
    %c0_595 = arith.constant 0 : index
    %2199 = vector.load %arg2[%c1_592, %c3_593, %c0_594, %c0_595] : memref<2x5x32x128xf32, #tpu.memory_space<vmem>>, vector<1x1x32x128xf32>
    %2200 = vector.shape_cast %2199 : vector<1x1x32x128xf32> to vector<32x128xf32>
    %2201 = vector.shape_cast %2198 : vector<32x128xf32> to vector<1x1x32x128xf32>
    tpu.vector_store %arg2[%c1_592, %c3_593, %c0_594, %c0_595], %2201 {strides = array<i32>} : memref<2x5x32x128xf32, #tpu.memory_space<vmem>>, vector<1x1x32x128xf32>,
    %c1_596 = arith.constant 1 : index
    %c4_597 = arith.constant 4 : index
    %c0_598 = arith.constant 0 : index
    %c0_599 = arith.constant 0 : index
    %2202 = vector.load %arg2[%c1_596, %c4_597, %c0_598, %c0_599] : memref<2x5x32x128xf32, #tpu.memory_space<vmem>>, vector<1x1x32x128xf32>
    %2203 = vector.shape_cast %2202 : vector<1x1x32x128xf32> to vector<32x128xf32>
    %2204 = vector.shape_cast %1942 : vector<32x128xf32> to vector<1x1x32x128xf32>
    tpu.vector_store %arg2[%c1_596, %c4_597, %c0_598, %c0_599], %2204 {strides = array<i32>} : memref<2x5x32x128xf32, #tpu.memory_space<vmem>>, vector<1x1x32x128xf32>,
    return
  }
  func.func @transform_0(%arg0: i32) -> i32 {
    %c0_i32 = arith.constant 0 : i32
    %c0_i32_0 = arith.constant 0 : i32
    return %c0_i32 : i32
  }
  func.func @transform_1(%arg0: i32) -> (i32, i32, i32, i32) {
    %c0_i32 = arith.constant 0 : i32
    %c0_i32_0 = arith.constant 0 : i32
    %c0_i32_1 = arith.constant 0 : i32
    %c0_i32_2 = arith.constant 0 : i32
    return %arg0, %c0_i32, %c0_i32_0, %c0_i32_1 : i32, i32, i32, i32
  }
}

</mosaic_0001>

<llo_original>
// kernel: drender_forward.1
$region0: #{drender_forward.1}
  #allocation0 [shape = 'u32[]', space=smem, size = 0x4, offset = 0x4, fixed_abs, tag = 'smem constant byte address 0x4 - core index']
  #allocation1 [shape = 'u32[144,128]{1,0:T(1,128)}', space=vmem, size = 0x12000, scoped, tag = 'internal scratch']
  %s0 = inlined_call_operand.vmem [shape: f32[288], index: 0, kind: input, shape index: {}]
  %s1 = inlined_call_operand.vmem [shape: f32[2,5,32,128], index: 1, kind: output, shape index: {}]
  %s2 = sld [smem:[#allocation0]]
  $region18: #{drender_forward.1} parent=0
    _
  %s4 = ssub.s32 1, %s2
  %s5 = scalar_select 0, %s4, %s2
  $region1: #{drender_forward.1} parent=0
    #allocation2 [shape = 'u8[1536]{0}', space=smem, size = 0x600, scoped, tag = 'input window, operand 0, single buffered']
    #allocation3 [shape = 's32[1]{0}', space=sflag, size = 0x4, scoped, tag = 'scoped memory for drender_forward.1']
    %6 = vsyncpa [#allocation3], 0
    // Predicated region
    $region2: #{drender_forward.1} parent=1 // pred_check
      _
    $region3: #{drender_forward.1} parent=1 // pred_check_branch
      %8 = sbr.rel (0) target = $region5
    $region4: #{drender_forward.1} parent=1 // pred_region
      %s10 = ssub.s32 48, 48
      %11 = vsyncadd [#allocation3], %s10
      %s13 = sshll.u32 %s0, 4
      %s14 = int_to_ptr.vmem [resolvable:$true] %s13
      %16 = dma.vmem_to_smem %s14, 48, [#allocation2], [#allocation3]
    $region5: #{drender_forward.1} parent=1 // pred_fallthru
      _
    // Predicated region
    $region6: #{drender_forward.1} parent=1 // pred_check
      _
    $region7: #{drender_forward.1} parent=1 // pred_check_branch
      %18 = sbr.rel (0) target = $region9
    $region8: #{drender_forward.1} parent=1 // pred_region
      %19 = dma.done [#allocation3], 48
    $region9: #{drender_forward.1} parent=1 // pred_fallthru
      _
    %20 = sfence
    %v21 = vlaneseq
    %v22 = vshrl.u32 %v21, 7
    %v23 = vadd.s32 %v22, 8
    %v24 = vadd.s32 %v22, 16
    %v25 = vadd.s32 %v22, 24
    %v26 = vlaneseq
    %v27 = vand.u32 %v26, 127
    %v28 = vshll.u32 %v22, 1
    %v29 = vshll.u32 %v23, 1
    %v30 = vshll.u32 %v24, 1
    %v31 = vshll.u32 %v25, 1
    %v32 = vshra.s32 %v27, 6
    %v33 = vadd.s32 %v28, %v32
    %v34 = vadd.s32 %v29, %v32
    %v35 = vadd.s32 %v30, %v32
    %v36 = vadd.s32 %v31, %v32
    %v37 = vand.u32 %v27, 63
    %v38 = vcvt.s32.f32 %v37
    %v39 = vadd.f32 %v38, 0.5
    %v40 = vcvt.s32.f32 %v33
    %v41 = vcvt.s32.f32 %v34
    %v42 = vcvt.s32.f32 %v35
    %v43 = vcvt.s32.f32 %v36
    %v44 = vadd.f32 %v40, 0.5
    %v45 = vadd.f32 %v41, 0.5
    %v46 = vadd.f32 %v42, 0.5
    %v47 = vadd.f32 %v43, 0.5
    %s48 = smul.u32 0, 288
    %s49 = sld [smem:[#allocation2 + %s48]]
    %s50 = sadd.s32 %s48, 1
    %s51 = sld [smem:[#allocation2 + %s50]]
    %s52 = sadd.s32 %s48, 2
    %s53 = sld [smem:[#allocation2 + %s52]]
    %s54 = sadd.s32 %s48, 3
    %s55 = sld [smem:[#allocation2 + %s54]]
    %s56 = sadd.s32 %s48, 4
    %s57 = sld [smem:[#allocation2 + %s56]]
    %s58 = sadd.s32 %s48, 5
    %s59 = sld [smem:[#allocation2 + %s58]]
    %s60 = sadd.s32 %s48, 6
    %s61 = sld [smem:[#allocation2 + %s60]]
    %s62 = sadd.s32 %s48, 7
    %s63 = sld [smem:[#allocation2 + %s62]]
    %s64 = sadd.s32 %s48, 8
    %s65 = sld [smem:[#allocation2 + %s64]]
    %v66 = vstv %s49
    %v67 = vmul.f32 %v66, %v39
    %v68 = vstv %s51
    %v69 = vmul.f32 %v68, %v44
    %v70 = vmul.f32 %v68, %v45
    %v71 = vmul.f32 %v68, %v46
    %v72 = vmul.f32 %v68, %v47
    %v73 = vadd.f32 %v67, %v69
    %v74 = vadd.f32 %v67, %v70
    %v75 = vadd.f32 %v67, %v71
    %v76 = vadd.f32 %v67, %v72
    %v77 = vstv %s53
    %v78 = vadd.f32 %v73, %v77
    %v79 = vadd.f32 %v74, %v77
    %v80 = vadd.f32 %v75, %v77
    %v81 = vadd.f32 %v76, %v77
    %v82 = vstv %s55
    %v83 = vmul.f32 %v82, %v39
    %v84 = vstv %s57
    %v85 = vmul.f32 %v84, %v44
    %v86 = vmul.f32 %v84, %v45
    %v87 = vmul.f32 %v84, %v46
    %v88 = vmul.f32 %v84, %v47
    %v89 = vadd.f32 %v83, %v85
    %v90 = vadd.f32 %v83, %v86
    %v91 = vadd.f32 %v83, %v87
    %v92 = vadd.f32 %v83, %v88
    %v93 = vstv %s59
    %v94 = vadd.f32 %v89, %v93
    %v95 = vadd.f32 %v90, %v93
    %v96 = vadd.f32 %v91, %v93
    %v97 = vadd.f32 %v92, %v93
    %v98 = vsub.f32 1.0, %v78
    %v99 = vsub.f32 1.0, %v79
    %v100 = vsub.f32 1.0, %v80
    %v101 = vsub.f32 1.0, %v81
    %v102 = vsub.f32 %v98, %v94
    %v103 = vsub.f32 %v99, %v95
    %v104 = vsub.f32 %v100, %v96
    %v105 = vsub.f32 %v101, %v97
    %v106 = vstv %s61
    %v107 = vmul.f32 %v106, %v39
    %v108 = vstv %s63
    %v109 = vmul.f32 %v108, %v44
    %v110 = vmul.f32 %v108, %v45
    %v111 = vmul.f32 %v108, %v46
    %v112 = vmul.f32 %v108, %v47
    %v113 = vadd.f32 %v107, %v109
    %v114 = vadd.f32 %v107, %v110
    %v115 = vadd.f32 %v107, %v111
    %v116 = vadd.f32 %v107, %v112
    %v117 = vstv %s65
    %v118 = vadd.f32 %v113, %v117
    %v119 = vadd.f32 %v114, %v117
    %v120 = vadd.f32 %v115, %v117
    %v121 = vadd.f32 %v116, %v117
    %vm122 = vcmp.ge.f32.partialorder %v78, 0.0
    %vm123 = vcmp.ge.f32.partialorder %v79, 0.0
    %vm124 = vcmp.ge.f32.partialorder %v80, 0.0
    %vm125 = vcmp.ge.f32.partialorder %v81, 0.0
    %vm126 = vcmp.ge.f32.partialorder %v94, 0.0
    %vm127 = vcmp.ge.f32.partialorder %v95, 0.0
    %vm128 = vcmp.ge.f32.partialorder %v96, 0.0
    %vm129 = vcmp.ge.f32.partialorder %v97, 0.0
    %vm130 = vmand %vm122, %vm126
    %vm131 = vmand %vm123, %vm127
    %vm132 = vmand %vm124, %vm128
    %vm133 = vmand %vm125, %vm129
    %vm134 = vcmp.ge.f32.partialorder %v102, 0.0
    %vm135 = vcmp.ge.f32.partialorder %v103, 0.0
    %vm136 = vcmp.ge.f32.partialorder %v104, 0.0
    %vm137 = vcmp.ge.f32.partialorder %v105, 0.0
    %vm138 = vmand %vm130, %vm134
    %vm139 = vmand %vm131, %vm135
    %vm140 = vmand %vm132, %vm136
    %vm141 = vmand %vm133, %vm137
    %vm142 = vcmp.lt.f32.partialorder %v118, 1e+09
    %vm143 = vcmp.lt.f32.partialorder %v119, 1e+09
    %vm144 = vcmp.lt.f32.partialorder %v120, 1e+09
    %vm145 = vcmp.lt.f32.partialorder %v121, 1e+09
    %vm146 = vmand %vm138, %vm142
    %vm147 = vmand %vm139, %vm143
    %vm148 = vmand %vm140, %vm144
    %vm149 = vmand %vm141, %vm145
    %v150 = vsel %vm146, %v118, 1e+09
    %v151 = vsel %vm147, %v119, 1e+09
    %v152 = vsel %vm148, %v120, 1e+09
    %v153 = vsel %vm149, %v121, 1e+09
    %v154 = vsel %vm146, 0, 4294967295
    %v155 = vsel %vm147, 0, 4294967295
    %v156 = vsel %vm148, 0, 4294967295
    %v157 = vsel %vm149, 0, 4294967295
    %v158 = vsel %vm138, 1.0, 0.0
    %v159 = vsel %vm139, 1.0, 0.0
    %v160 = vsel %vm140, 1.0, 0.0
    %v161 = vsel %vm141, 1.0, 0.0
    %s162 = smul.u32 0, 24
    %s163 = sadd.s32 %s162, 1
    %s164 = smul.u32 %s163, 12
    %s165 = sld [smem:[#allocation2 + %s164]]
    %s166 = sadd.s32 %s164, 1
    %s167 = sld [smem:[#allocation2 + %s166]]
    %s168 = sadd.s32 %s164, 2
    %s169 = sld [smem:[#allocation2 + %s168]]
    %s170 = sadd.s32 %s164, 3
    %s171 = sld [smem:[#allocation2 + %s170]]
    %s172 = sadd.s32 %s164, 4
    %s173 = sld [smem:[#allocation2 + %s172]]
    %s174 = sadd.s32 %s164, 5
    %s175 = sld [smem:[#allocation2 + %s174]]
    %s176 = sadd.s32 %s164, 6
    %s177 = sld [smem:[#allocation2 + %s176]]
    %s178 = sadd.s32 %s164, 7
    %s179 = sld [smem:[#allocation2 + %s178]]
    %s180 = sadd.s32 %s164, 8
    %s181 = sld [smem:[#allocation2 + %s180]]
    %v182 = vstv %s165
    %v183 = vmul.f32 %v182, %v39
    %v184 = vstv %s167
    %v185 = vmul.f32 %v184, %v44
    %v186 = vmul.f32 %v184, %v45
    %v187 = vmul.f32 %v184, %v46
    %v188 = vmul.f32 %v184, %v47
    %v189 = vadd.f32 %v183, %v185
    %v190 = vadd.f32 %v183, %v186
    %v191 = vadd.f32 %v183, %v187
    %v192 = vadd.f32 %v183, %v188
    %v193 = vstv %s169
    %v194 = vadd.f32 %v189, %v193
    %v195 = vadd.f32 %v190, %v193
    %v196 = vadd.f32 %v191, %v193
    %v197 = vadd.f32 %v192, %v193
    %v198 = vstv %s171
    %v199 = vmul.f32 %v198, %v39
    %v200 = vstv %s173
    %v201 = vmul.f32 %v200, %v44
    %v202 = vmul.f32 %v200, %v45
    %v203 = vmul.f32 %v200, %v46
    %v204 = vmul.f32 %v200, %v47
    %v205 = vadd.f32 %v199, %v201
    %v206 = vadd.f32 %v199, %v202
    %v207 = vadd.f32 %v199, %v203
    %v208 = vadd.f32 %v199, %v204
    %v209 = vstv %s175
    %v210 = vadd.f32 %v205, %v209
    %v211 = vadd.f32 %v206, %v209
    %v212 = vadd.f32 %v207, %v209
    %v213 = vadd.f32 %v208, %v209
    %v214 = vsub.f32 1.0, %v194
    %v215 = vsub.f32 1.0, %v195
    %v216 = vsub.f32 1.0, %v196
    %v217 = vsub.f32 1.0, %v197
    %v218 = vsub.f32 %v214, %v210
    %v219 = vsub.f32 %v215, %v211
    %v220 = vsub.f32 %v216, %v212
    %v221 = vsub.f32 %v217, %v213
    %v222 = vstv %s177
    %v223 = vmul.f32 %v222, %v39
    %v224 = vstv %s179
    %v225 = vmul.f32 %v224, %v44
    %v226 = vmul.f32 %v224, %v45
    %v227 = vmul.f32 %v224, %v46
    %v228 = vmul.f32 %v224, %v47
    %v229 = vadd.f32 %v223, %v225
    %v230 = vadd.f32 %v223, %v226
    %v231 = vadd.f32 %v223, %v227
    %v232 = vadd.f32 %v223, %v228
    %v233 = vstv %s181
    %v234 = vadd.f32 %v229, %v233
    %v235 = vadd.f32 %v230, %v233
    %v236 = vadd.f32 %v231, %v233
    %v237 = vadd.f32 %v232, %v233
    %vm238 = vcmp.ge.f32.partialorder %v194, 0.0
    %vm239 = vcmp.ge.f32.partialorder %v195, 0.0
    %vm240 = vcmp.ge.f32.partialorder %v196, 0.0
    %vm241 = vcmp.ge.f32.partialorder %v197, 0.0
    %vm242 = vcmp.ge.f32.partialorder %v210, 0.0
    %vm243 = vcmp.ge.f32.partialorder %v211, 0.0
    %vm244 = vcmp.ge.f32.partialorder %v212, 0.0
    %vm245 = vcmp.ge.f32.partialorder %v213, 0.0
    %vm246 = vmand %vm238, %vm242
    %vm247 = vmand %vm239, %vm243
    %vm248 = vmand %vm240, %vm244
    %vm249 = vmand %vm241, %vm245
    %vm250 = vcmp.ge.f32.partialorder %v218, 0.0
    %vm251 = vcmp.ge.f32.partialorder %v219, 0.0
    %vm252 = vcmp.ge.f32.partialorder %v220, 0.0
    %vm253 = vcmp.ge.f32.partialorder %v221, 0.0
    %vm254 = vmand %vm246, %vm250
    %vm255 = vmand %vm247, %vm251
    %vm256 = vmand %vm248, %vm252
    %vm257 = vmand %vm249, %vm253
    %vm258 = vcmp.lt.f32.partialorder %v234, %v150
    %vm259 = vcmp.lt.f32.partialorder %v235, %v151
    %vm260 = vcmp.lt.f32.partialorder %v236, %v152
    %vm261 = vcmp.lt.f32.partialorder %v237, %v153
    %vm262 = vmand %vm254, %vm258
    %vm263 = vmand %vm255, %vm259
    %vm264 = vmand %vm256, %vm260
    %vm265 = vmand %vm257, %vm261
    %v266 = vsel %vm262, %v234, %v150
    %v267 = vsel %vm263, %v235, %v151
    %v268 = vsel %vm264, %v236, %v152
    %v269 = vsel %vm265, %v237, %v153
    %v270 = vsel %vm262, 1, %v154
    %v271 = vsel %vm263, 1, %v155
    %v272 = vsel %vm264, 1, %v156
    %v273 = vsel %vm265, 1, %v157
    %v274 = vsel %vm254, 1.0, %v158
    %v275 = vsel %vm255, 1.0, %v159
    %v276 = vsel %vm256, 1.0, %v160
    %v277 = vsel %vm257, 1.0, %v161
    %s278 = sadd.s32 %s162, 2
    %s279 = smul.u32 %s278, 12
    %s280 = sld [smem:[#allocation2 + %s279]]
    %s281 = sadd.s32 %s279, 1
    %s282 = sld [smem:[#allocation2 + %s281]]
    %s283 = sadd.s32 %s279, 2
    %s284 = sld [smem:[#allocation2 + %s283]]
    %s285 = sadd.s32 %s279, 3
    %s286 = sld [smem:[#allocation2 + %s285]]
    %s287 = sadd.s32 %s279, 4
    %s288 = sld [smem:[#allocation2 + %s287]]
    %s289 = sadd.s32 %s279, 5
    %s290 = sld [smem:[#allocation2 + %s289]]
    %s291 = sadd.s32 %s279, 6
    %s292 = sld [smem:[#allocation2 + %s291]]
    %s293 = sadd.s32 %s279, 7
    %s294 = sld [smem:[#allocation2 + %s293]]
    %s295 = sadd.s32 %s279, 8
    %s296 = sld [smem:[#allocation2 + %s295]]
    %v297 = vstv %s280
    %v298 = vmul.f32 %v297, %v39
    %v299 = vstv %s282
    %v300 = vmul.f32 %v299, %v44
    %v301 = vmul.f32 %v299, %v45
    %v302 = vmul.f32 %v299, %v46
    %v303 = vmul.f32 %v299, %v47
    %v304 = vadd.f32 %v298, %v300
    %v305 = vadd.f32 %v298, %v301
    %v306 = vadd.f32 %v298, %v302
    %v307 = vadd.f32 %v298, %v303
    %v308 = vstv %s284
    %v309 = vadd.f32 %v304, %v308
    %v310 = vadd.f32 %v305, %v308
    %v311 = vadd.f32 %v306, %v308
    %v312 = vadd.f32 %v307, %v308
    %v313 = vstv %s286
    %v314 = vmul.f32 %v313, %v39
    %v315 = vstv %s288
    %v316 = vmul.f32 %v315, %v44
    %v317 = vmul.f32 %v315, %v45
    %v318 = vmul.f32 %v315, %v46
    %v319 = vmul.f32 %v315, %v47
    %v320 = vadd.f32 %v314, %v316
    %v321 = vadd.f32 %v314, %v317
    %v322 = vadd.f32 %v314, %v318
    %v323 = vadd.f32 %v314, %v319
    %v324 = vstv %s290
    %v325 = vadd.f32 %v320, %v324
    %v326 = vadd.f32 %v321, %v324
    %v327 = vadd.f32 %v322, %v324
    %v328 = vadd.f32 %v323, %v324
    %v329 = vsub.f32 1.0, %v309
    %v330 = vsub.f32 1.0, %v310
    %v331 = vsub.f32 1.0, %v311
    %v332 = vsub.f32 1.0, %v312
    %v333 = vsub.f32 %v329, %v325
    %v334 = vsub.f32 %v330, %v326
    %v335 = vsub.f32 %v331, %v327
    %v336 = vsub.f32 %v332, %v328
    %v337 = vstv %s292
    %v338 = vmul.f32 %v337, %v39
    %v339 = vstv %s294
    %v340 = vmul.f32 %v339, %v44
    %v341 = vmul.f32 %v339, %v45
    %v342 = vmul.f32 %v339, %v46
    %v343 = vmul.f32 %v339, %v47
    %v344 = vadd.f32 %v338, %v340
    %v345 = vadd.f32 %v338, %v341
    %v346 = vadd.f32 %v338, %v342
    %v347 = vadd.f32 %v338, %v343
    %v348 = vstv %s296
    %v349 = vadd.f32 %v344, %v348
    %v350 = vadd.f32 %v345, %v348
    %v351 = vadd.f32 %v346, %v348
    %v352 = vadd.f32 %v347, %v348
    %vm353 = vcmp.ge.f32.partialorder %v309, 0.0
    %vm354 = vcmp.ge.f32.partialorder %v310, 0.0
    %vm355 = vcmp.ge.f32.partialorder %v311, 0.0
    %vm356 = vcmp.ge.f32.partialorder %v312, 0.0
    %vm357 = vcmp.ge.f32.partialorder %v325, 0.0
    %vm358 = vcmp.ge.f32.partialorder %v326, 0.0
    %vm359 = vcmp.ge.f32.partialorder %v327, 0.0
    %vm360 = vcmp.ge.f32.partialorder %v328, 0.0
    %vm361 = vmand %vm353, %vm357
    %vm362 = vmand %vm354, %vm358
    %vm363 = vmand %vm355, %vm359
    %vm364 = vmand %vm356, %vm360
    %vm365 = vcmp.ge.f32.partialorder %v333, 0.0
    %vm366 = vcmp.ge.f32.partialorder %v334, 0.0
    %vm367 = vcmp.ge.f32.partialorder %v335, 0.0
    %vm368 = vcmp.ge.f32.partialorder %v336, 0.0
    %vm369 = vmand %vm361, %vm365
    %vm370 = vmand %vm362, %vm366
    %vm371 = vmand %vm363, %vm367
    %vm372 = vmand %vm364, %vm368
    %vm373 = vcmp.lt.f32.partialorder %v349, %v266
    %vm374 = vcmp.lt.f32.partialorder %v350, %v267
    %vm375 = vcmp.lt.f32.partialorder %v351, %v268
    %vm376 = vcmp.lt.f32.partialorder %v352, %v269
    %vm377 = vmand %vm369, %vm373
    %vm378 = vmand %vm370, %vm374
    %vm379 = vmand %vm371, %vm375
    %vm380 = vmand %vm372, %vm376
    %v381 = vsel %vm377, %v349, %v266
    %v382 = vsel %vm378, %v350, %v267
    %v383 = vsel %vm379, %v351, %v268
    %v384 = vsel %vm380, %v352, %v269
    %v385 = vsel %vm377, 2, %v270
    %v386 = vsel %vm378, 2, %v271
    %v387 = vsel %vm379, 2, %v272
    %v388 = vsel %vm380, 2, %v273
    %v389 = vsel %vm369, 1.0, %v274
    %v390 = vsel %vm370, 1.0, %v275
    %v391 = vsel %vm371, 1.0, %v276
    %v392 = vsel %vm372, 1.0, %v277
    %s393 = sadd.s32 %s162, 3
    %s394 = smul.u32 %s393, 12
    %s395 = sld [smem:[#allocation2 + %s394]]
    %s396 = sadd.s32 %s394, 1
    %s397 = sld [smem:[#allocation2 + %s396]]
    %s398 = sadd.s32 %s394, 2
    %s399 = sld [smem:[#allocation2 + %s398]]
    %s400 = sadd.s32 %s394, 3
    %s401 = sld [smem:[#allocation2 + %s400]]
    %s402 = sadd.s32 %s394, 4
    %s403 = sld [smem:[#allocation2 + %s402]]
    %s404 = sadd.s32 %s394, 5
    %s405 = sld [smem:[#allocation2 + %s404]]
    %s406 = sadd.s32 %s394, 6
    %s407 = sld [smem:[#allocation2 + %s406]]
    %s408 = sadd.s32 %s394, 7
    %s409 = sld [smem:[#allocation2 + %s408]]
    %s410 = sadd.s32 %s394, 8
    %s411 = sld [smem:[#allocation2 + %s410]]
    %v412 = vstv %s395
    %v413 = vmul.f32 %v412, %v39
    %v414 = vstv %s397
    %v415 = vmul.f32 %v414, %v44
    %v416 = vmul.f32 %v414, %v45
    %v417 = vmul.f32 %v414, %v46
    %v418 = vmul.f32 %v414, %v47
    %v419 = vadd.f32 %v413, %v415
    %v420 = vadd.f32 %v413, %v416
    %v421 = vadd.f32 %v413, %v417
    %v422 = vadd.f32 %v413, %v418
    %v423 = vstv %s399
    %v424 = vadd.f32 %v419, %v423
    %v425 = vadd.f32 %v420, %v423
    %v426 = vadd.f32 %v421, %v423
    %v427 = vadd.f32 %v422, %v423
    %v428 = vstv %s401
    %v429 = vmul.f32 %v428, %v39
    %v430 = vstv %s403
    %v431 = vmul.f32 %v430, %v44
    %v432 = vmul.f32 %v430, %v45
    %v433 = vmul.f32 %v430, %v46
    %v434 = vmul.f32 %v430, %v47
    %v435 = vadd.f32 %v429, %v431
    %v436 = vadd.f32 %v429, %v432
    %v437 = vadd.f32 %v429, %v433
    %v438 = vadd.f32 %v429, %v434
    %v439 = vstv %s405
    %v440 = vadd.f32 %v435, %v439
    %v441 = vadd.f32 %v436, %v439
    %v442 = vadd.f32 %v437, %v439
    %v443 = vadd.f32 %v438, %v439
    %v444 = vsub.f32 1.0, %v424
    %v445 = vsub.f32 1.0, %v425
    %v446 = vsub.f32 1.0, %v426
    %v447 = vsub.f32 1.0, %v427
    %v448 = vsub.f32 %v444, %v440
    %v449 = vsub.f32 %v445, %v441
    %v450 = vsub.f32 %v446, %v442
    %v451 = vsub.f32 %v447, %v443
    %v452 = vstv %s407
    %v453 = vmul.f32 %v452, %v39
    %v454 = vstv %s409
    %v455 = vmul.f32 %v454, %v44
    %v456 = vmul.f32 %v454, %v45
    %v457 = vmul.f32 %v454, %v46
    %v458 = vmul.f32 %v454, %v47
    %v459 = vadd.f32 %v453, %v455
    %v460 = vadd.f32 %v453, %v456
    %v461 = vadd.f32 %v453, %v457
    %v462 = vadd.f32 %v453, %v458
    %v463 = vstv %s411
    %v464 = vadd.f32 %v459, %v463
    %v465 = vadd.f32 %v460, %v463
    %v466 = vadd.f32 %v461, %v463
    %v467 = vadd.f32 %v462, %v463
    %vm468 = vcmp.ge.f32.partialorder %v424, 0.0
    %vm469 = vcmp.ge.f32.partialorder %v425, 0.0
    %vm470 = vcmp.ge.f32.partialorder %v426, 0.0
    %vm471 = vcmp.ge.f32.partialorder %v427, 0.0
    %vm472 = vcmp.ge.f32.partialorder %v440, 0.0
    %vm473 = vcmp.ge.f32.partialorder %v441, 0.0
    %vm474 = vcmp.ge.f32.partialorder %v442, 0.0
    %vm475 = vcmp.ge.f32.partialorder %v443, 0.0
    %vm476 = vmand %vm468, %vm472
    %vm477 = vmand %vm469, %vm473
    %vm478 = vmand %vm470, %vm474
    %vm479 = vmand %vm471, %vm475
    %vm480 = vcmp.ge.f32.partialorder %v448, 0.0
    %vm481 = vcmp.ge.f32.partialorder %v449, 0.0
    %vm482 = vcmp.ge.f32.partialorder %v450, 0.0
    %vm483 = vcmp.ge.f32.partialorder %v451, 0.0
    %vm484 = vmand %vm476, %vm480
    %vm485 = vmand %vm477, %vm481
    %vm486 = vmand %vm478, %vm482
    %vm487 = vmand %vm479, %vm483
    %vm488 = vcmp.lt.f32.partialorder %v464, %v381
    %vm489 = vcmp.lt.f32.partialorder %v465, %v382
    %vm490 = vcmp.lt.f32.partialorder %v466, %v383
    %vm491 = vcmp.lt.f32.partialorder %v467, %v384
    %vm492 = vmand %vm484, %vm488
    %vm493 = vmand %vm485, %vm489
    %vm494 = vmand %vm486, %vm490
    %vm495 = vmand %vm487, %vm491
    %v496 = vsel %vm492, %v464, %v381
    %v497 = vsel %vm493, %v465, %v382
    %v498 = vsel %vm494, %v466, %v383
    %v499 = vsel %vm495, %v467, %v384
    %v500 = vsel %vm492, 3, %v385
    %v501 = vsel %vm493, 3, %v386
    %v502 = vsel %vm494, 3, %v387
    %v503 = vsel %vm495, 3, %v388
    %v504 = vsel %vm484, 1.0, %v389
    %v505 = vsel %vm485, 1.0, %v390
    %v506 = vsel %vm486, 1.0, %v391
    %v507 = vsel %vm487, 1.0, %v392
    %s508 = sadd.s32 %s162, 4
    %s509 = smul.u32 %s508, 12
    %s510 = sld [smem:[#allocation2 + %s509]]
    %s511 = sadd.s32 %s509, 1
    %s512 = sld [smem:[#allocation2 + %s511]]
    %s513 = sadd.s32 %s509, 2
    %s514 = sld [smem:[#allocation2 + %s513]]
    %s515 = sadd.s32 %s509, 3
    %s516 = sld [smem:[#allocation2 + %s515]]
    %s517 = sadd.s32 %s509, 4
    %s518 = sld [smem:[#allocation2 + %s517]]
    %s519 = sadd.s32 %s509, 5
    %s520 = sld [smem:[#allocation2 + %s519]]
    %s521 = sadd.s32 %s509, 6
    %s522 = sld [smem:[#allocation2 + %s521]]
    %s523 = sadd.s32 %s509, 7
    %s524 = sld [smem:[#allocation2 + %s523]]
    %s525 = sadd.s32 %s509, 8
    %s526 = sld [smem:[#allocation2 + %s525]]
    %v527 = vstv %s510
    %v528 = vmul.f32 %v527, %v39
    %v529 = vstv %s512
    %v530 = vmul.f32 %v529, %v44
    %v531 = vmul.f32 %v529, %v45
    %v532 = vmul.f32 %v529, %v46
    %v533 = vmul.f32 %v529, %v47
    %v534 = vadd.f32 %v528, %v530
    %v535 = vadd.f32 %v528, %v531
    %v536 = vadd.f32 %v528, %v532
    %v537 = vadd.f32 %v528, %v533
    %v538 = vstv %s514
    %v539 = vadd.f32 %v534, %v538
    %v540 = vadd.f32 %v535, %v538
    %v541 = vadd.f32 %v536, %v538
    %v542 = vadd.f32 %v537, %v538
    %v543 = vstv %s516
    %v544 = vmul.f32 %v543, %v39
    %v545 = vstv %s518
    %v546 = vmul.f32 %v545, %v44
    %v547 = vmul.f32 %v545, %v45
    %v548 = vmul.f32 %v545, %v46
    %v549 = vmul.f32 %v545, %v47
    %v550 = vadd.f32 %v544, %v546
    %v551 = vadd.f32 %v544, %v547
    %v552 = vadd.f32 %v544, %v548
    %v553 = vadd.f32 %v544, %v549
    %v554 = vstv %s520
    %v555 = vadd.f32 %v550, %v554
    %v556 = vadd.f32 %v551, %v554
    %v557 = vadd.f32 %v552, %v554
    %v558 = vadd.f32 %v553, %v554
    %v559 = vsub.f32 1.0, %v539
    %v560 = vsub.f32 1.0, %v540
    %v561 = vsub.f32 1.0, %v541
    %v562 = vsub.f32 1.0, %v542
    %v563 = vsub.f32 %v559, %v555
    %v564 = vsub.f32 %v560, %v556
    %v565 = vsub.f32 %v561, %v557
    %v566 = vsub.f32 %v562, %v558
    %v567 = vstv %s522
    %v568 = vmul.f32 %v567, %v39
    %v569 = vstv %s524
    %v570 = vmul.f32 %v569, %v44
    %v571 = vmul.f32 %v569, %v45
    %v572 = vmul.f32 %v569, %v46
    %v573 = vmul.f32 %v569, %v47
    %v574 = vadd.f32 %v568, %v570
    %v575 = vadd.f32 %v568, %v571
    %v576 = vadd.f32 %v568, %v572
    %v577 = vadd.f32 %v568, %v573
    %v578 = vstv %s526
    %v579 = vadd.f32 %v574, %v578
    %v580 = vadd.f32 %v575, %v578
    %v581 = vadd.f32 %v576, %v578
    %v582 = vadd.f32 %v577, %v578
    %vm583 = vcmp.ge.f32.partialorder %v539, 0.0
    %vm584 = vcmp.ge.f32.partialorder %v540, 0.0
    %vm585 = vcmp.ge.f32.partialorder %v541, 0.0
    %vm586 = vcmp.ge.f32.partialorder %v542, 0.0
    %vm587 = vcmp.ge.f32.partialorder %v555, 0.0
    %vm588 = vcmp.ge.f32.partialorder %v556, 0.0
    %vm589 = vcmp.ge.f32.partialorder %v557, 0.0
    %vm590 = vcmp.ge.f32.partialorder %v558, 0.0
    %vm591 = vmand %vm583, %vm587
    %vm592 = vmand %vm584, %vm588
    %vm593 = vmand %vm585, %vm589
    %vm594 = vmand %vm586, %vm590
    %vm595 = vcmp.ge.f32.partialorder %v563, 0.0
    %vm596 = vcmp.ge.f32.partialorder %v564, 0.0
    %vm597 = vcmp.ge.f32.partialorder %v565, 0.0
    %vm598 = vcmp.ge.f32.partialorder %v566, 0.0
    %vm599 = vmand %vm591, %vm595
    %vm600 = vmand %vm592, %vm596
    %vm601 = vmand %vm593, %vm597
    %vm602 = vmand %vm594, %vm598
    %vm603 = vcmp.lt.f32.partialorder %v579, %v496
    %vm604 = vcmp.lt.f32.partialorder %v580, %v497
    %vm605 = vcmp.lt.f32.partialorder %v581, %v498
    %vm606 = vcmp.lt.f32.partialorder %v582, %v499
    %vm607 = vmand %vm599, %vm603
    %vm608 = vmand %vm600, %vm604
    %vm609 = vmand %vm601, %vm605
    %vm610 = vmand %vm602, %vm606
    %v611 = vsel %vm607, %v579, %v496
    %v612 = vsel %vm608, %v580, %v497
    %v613 = vsel %vm609, %v581, %v498
    %v614 = vsel %vm610, %v582, %v499
    %v615 = vsel %vm607, 4, %v500
    %v616 = vsel %vm608, 4, %v501
    %v617 = vsel %vm609, 4, %v502
    %v618 = vsel %vm610, 4, %v503
    %v619 = vsel %vm599, 1.0, %v504
    %v620 = vsel %vm600, 1.0, %v505
    %v621 = vsel %vm601, 1.0, %v506
    %v622 = vsel %vm602, 1.0, %v507
    %s623 = sadd.s32 %s162, 5
    %s624 = smul.u32 %s623, 12
    %s625 = sld [smem:[#allocation2 + %s624]]
    %s626 = sadd.s32 %s624, 1
    %s627 = sld [smem:[#allocation2 + %s626]]
    %s628 = sadd.s32 %s624, 2
    %s629 = sld [smem:[#allocation2 + %s628]]
    %s630 = sadd.s32 %s624, 3
    %s631 = sld [smem:[#allocation2 + %s630]]
    %s632 = sadd.s32 %s624, 4
    %s633 = sld [smem:[#allocation2 + %s632]]
    %s634 = sadd.s32 %s624, 5
    %s635 = sld [smem:[#allocation2 + %s634]]
    %s636 = sadd.s32 %s624, 6
    %s637 = sld [smem:[#allocation2 + %s636]]
    %s638 = sadd.s32 %s624, 7
    %s639 = sld [smem:[#allocation2 + %s638]]
    %s640 = sadd.s32 %s624, 8
    %s641 = sld [smem:[#allocation2 + %s640]]
    %v642 = vstv %s625
    %v643 = vmul.f32 %v642, %v39
    %v644 = vstv %s627
    %v645 = vmul.f32 %v644, %v44
    %v646 = vmul.f32 %v644, %v45
    %v647 = vmul.f32 %v644, %v46
    %v648 = vmul.f32 %v644, %v47
    %v649 = vadd.f32 %v643, %v645
    %v650 = vadd.f32 %v643, %v646
    %v651 = vadd.f32 %v643, %v647
    %v652 = vadd.f32 %v643, %v648
    %v653 = vstv %s629
    %v654 = vadd.f32 %v649, %v653
    %v655 = vadd.f32 %v650, %v653
    %v656 = vadd.f32 %v651, %v653
    %v657 = vadd.f32 %v652, %v653
    %v658 = vstv %s631
    %v659 = vmul.f32 %v658, %v39
    %v660 = vstv %s633
    %v661 = vmul.f32 %v660, %v44
    %v662 = vmul.f32 %v660, %v45
    %v663 = vmul.f32 %v660, %v46
    %v664 = vmul.f32 %v660, %v47
    %v665 = vadd.f32 %v659, %v661
    %v666 = vadd.f32 %v659, %v662
    %v667 = vadd.f32 %v659, %v663
    %v668 = vadd.f32 %v659, %v664
    %v669 = vstv %s635
    %v670 = vadd.f32 %v665, %v669
    %v671 = vadd.f32 %v666, %v669
    %v672 = vadd.f32 %v667, %v669
    %v673 = vadd.f32 %v668, %v669
    %v674 = vsub.f32 1.0, %v654
    %v675 = vsub.f32 1.0, %v655
    %v676 = vsub.f32 1.0, %v656
    %v677 = vsub.f32 1.0, %v657
    %v678 = vsub.f32 %v674, %v670
    %v679 = vsub.f32 %v675, %v671
    %v680 = vsub.f32 %v676, %v672
    %v681 = vsub.f32 %v677, %v673
    %v682 = vstv %s637
    %v683 = vmul.f32 %v682, %v39
    %v684 = vstv %s639
    %v685 = vmul.f32 %v684, %v44
    %v686 = vmul.f32 %v684, %v45
    %v687 = vmul.f32 %v684, %v46
    %v688 = vmul.f32 %v684, %v47
    %v689 = vadd.f32 %v683, %v685
    %v690 = vadd.f32 %v683, %v686
    %v691 = vadd.f32 %v683, %v687
    %v692 = vadd.f32 %v683, %v688
    %v693 = vstv %s641
    %v694 = vadd.f32 %v689, %v693
    %v695 = vadd.f32 %v690, %v693
    %v696 = vadd.f32 %v691, %v693
    %v697 = vadd.f32 %v692, %v693
    %vm698 = vcmp.ge.f32.partialorder %v654, 0.0
    %vm699 = vcmp.ge.f32.partialorder %v655, 0.0
    %vm700 = vcmp.ge.f32.partialorder %v656, 0.0
    %vm701 = vcmp.ge.f32.partialorder %v657, 0.0
    %vm702 = vcmp.ge.f32.partialorder %v670, 0.0
    %vm703 = vcmp.ge.f32.partialorder %v671, 0.0
    %vm704 = vcmp.ge.f32.partialorder %v672, 0.0
    %vm705 = vcmp.ge.f32.partialorder %v673, 0.0
    %vm706 = vmand %vm698, %vm702
    %vm707 = vmand %vm699, %vm703
    %vm708 = vmand %vm700, %vm704
    %vm709 = vmand %vm701, %vm705
    %vm710 = vcmp.ge.f32.partialorder %v678, 0.0
    %vm711 = vcmp.ge.f32.partialorder %v679, 0.0
    %vm712 = vcmp.ge.f32.partialorder %v680, 0.0
    %vm713 = vcmp.ge.f32.partialorder %v681, 0.0
    %vm714 = vmand %vm706, %vm710
    %vm715 = vmand %vm707, %vm711
    %vm716 = vmand %vm708, %vm712
    %vm717 = vmand %vm709, %vm713
    %vm718 = vcmp.lt.f32.partialorder %v694, %v611
    %vm719 = vcmp.lt.f32.partialorder %v695, %v612
    %vm720 = vcmp.lt.f32.partialorder %v696, %v613
    %vm721 = vcmp.lt.f32.partialorder %v697, %v614
    %vm722 = vmand %vm714, %vm718
    %vm723 = vmand %vm715, %vm719
    %vm724 = vmand %vm716, %vm720
    %vm725 = vmand %vm717, %vm721
    %v726 = vsel %vm722, %v694, %v611
    %v727 = vsel %vm723, %v695, %v612
    %v728 = vsel %vm724, %v696, %v613
    %v729 = vsel %vm725, %v697, %v614
    %v730 = vsel %vm722, 5, %v615
    %v731 = vsel %vm723, 5, %v616
    %v732 = vsel %vm724, 5, %v617
    %v733 = vsel %vm725, 5, %v618
    %v734 = vsel %vm714, 1.0, %v619
    %v735 = vsel %vm715, 1.0, %v620
    %v736 = vsel %vm716, 1.0, %v621
    %v737 = vsel %vm717, 1.0, %v622
    %s738 = sadd.s32 %s162, 6
    %s739 = smul.u32 %s738, 12
    %s740 = sld [smem:[#allocation2 + %s739]]
    %s741 = sadd.s32 %s739, 1
    %s742 = sld [smem:[#allocation2 + %s741]]
    %s743 = sadd.s32 %s739, 2
    %s744 = sld [smem:[#allocation2 + %s743]]
    %s745 = sadd.s32 %s739, 3
    %s746 = sld [smem:[#allocation2 + %s745]]
    %s747 = sadd.s32 %s739, 4
    %s748 = sld [smem:[#allocation2 + %s747]]
    %s749 = sadd.s32 %s739, 5
    %s750 = sld [smem:[#allocation2 + %s749]]
    %s751 = sadd.s32 %s739, 6
    %s752 = sld [smem:[#allocation2 + %s751]]
    %s753 = sadd.s32 %s739, 7
    %s754 = sld [smem:[#allocation2 + %s753]]
    %s755 = sadd.s32 %s739, 8
    %s756 = sld [smem:[#allocation2 + %s755]]
    %v757 = vstv %s740
    %v758 = vmul.f32 %v757, %v39
    %v759 = vstv %s742
    %v760 = vmul.f32 %v759, %v44
    %v761 = vmul.f32 %v759, %v45
    %v762 = vmul.f32 %v759, %v46
    %v763 = vmul.f32 %v759, %v47
    %v764 = vadd.f32 %v758, %v760
    %v765 = vadd.f32 %v758, %v761
    %v766 = vadd.f32 %v758, %v762
    %v767 = vadd.f32 %v758, %v763
    %v768 = vstv %s744
    %v769 = vadd.f32 %v764, %v768
    %v770 = vadd.f32 %v765, %v768
    %v771 = vadd.f32 %v766, %v768
    %v772 = vadd.f32 %v767, %v768
    %v773 = vstv %s746
    %v774 = vmul.f32 %v773, %v39
    %v775 = vstv %s748
    %v776 = vmul.f32 %v775, %v44
    %v777 = vmul.f32 %v775, %v45
    %v778 = vmul.f32 %v775, %v46
    %v779 = vmul.f32 %v775, %v47
    %v780 = vadd.f32 %v774, %v776
    %v781 = vadd.f32 %v774, %v777
    %v782 = vadd.f32 %v774, %v778
    %v783 = vadd.f32 %v774, %v779
    %v784 = vstv %s750
    %v785 = vadd.f32 %v780, %v784
    %v786 = vadd.f32 %v781, %v784
    %v787 = vadd.f32 %v782, %v784
    %v788 = vadd.f32 %v783, %v784
    %v789 = vsub.f32 1.0, %v769
    %v790 = vsub.f32 1.0, %v770
    %v791 = vsub.f32 1.0, %v771
    %v792 = vsub.f32 1.0, %v772
    %v793 = vsub.f32 %v789, %v785
    %v794 = vsub.f32 %v790, %v786
    %v795 = vsub.f32 %v791, %v787
    %v796 = vsub.f32 %v792, %v788
    %v797 = vstv %s752
    %v798 = vmul.f32 %v797, %v39
    %v799 = vstv %s754
    %v800 = vmul.f32 %v799, %v44
    %v801 = vmul.f32 %v799, %v45
    %v802 = vmul.f32 %v799, %v46
    %v803 = vmul.f32 %v799, %v47
    %v804 = vadd.f32 %v798, %v800
    %v805 = vadd.f32 %v798, %v801
    %v806 = vadd.f32 %v798, %v802
    %v807 = vadd.f32 %v798, %v803
    %v808 = vstv %s756
    %v809 = vadd.f32 %v804, %v808
    %v810 = vadd.f32 %v805, %v808
    %v811 = vadd.f32 %v806, %v808
    %v812 = vadd.f32 %v807, %v808
    %vm813 = vcmp.ge.f32.partialorder %v769, 0.0
    %vm814 = vcmp.ge.f32.partialorder %v770, 0.0
    %vm815 = vcmp.ge.f32.partialorder %v771, 0.0
    %vm816 = vcmp.ge.f32.partialorder %v772, 0.0
    %vm817 = vcmp.ge.f32.partialorder %v785, 0.0
    %vm818 = vcmp.ge.f32.partialorder %v786, 0.0
    %vm819 = vcmp.ge.f32.partialorder %v787, 0.0
    %vm820 = vcmp.ge.f32.partialorder %v788, 0.0
    %vm821 = vmand %vm813, %vm817
    %vm822 = vmand %vm814, %vm818
    %vm823 = vmand %vm815, %vm819
    %vm824 = vmand %vm816, %vm820
    %vm825 = vcmp.ge.f32.partialorder %v793, 0.0
    %vm826 = vcmp.ge.f32.partialorder %v794, 0.0
    %vm827 = vcmp.ge.f32.partialorder %v795, 0.0
    %vm828 = vcmp.ge.f32.partialorder %v796, 0.0
    %vm829 = vmand %vm821, %vm825
    %vm830 = vmand %vm822, %vm826
    %vm831 = vmand %vm823, %vm827
    %vm832 = vmand %vm824, %vm828
    %vm833 = vcmp.lt.f32.partialorder %v809, %v726
    %vm834 = vcmp.lt.f32.partialorder %v810, %v727
    %vm835 = vcmp.lt.f32.partialorder %v811, %v728
    %vm836 = vcmp.lt.f32.partialorder %v812, %v729
    %vm837 = vmand %vm829, %vm833
    %vm838 = vmand %vm830, %vm834
    %vm839 = vmand %vm831, %vm835
    %vm840 = vmand %vm832, %vm836
    %v841 = vsel %vm837, %v809, %v726
    %v842 = vsel %vm838, %v810, %v727
    %v843 = vsel %vm839, %v811, %v728
    %v844 = vsel %vm840, %v812, %v729
    %v845 = vsel %vm837, 6, %v730
    %v846 = vsel %vm838, 6, %v731
    %v847 = vsel %vm839, 6, %v732
    %v848 = vsel %vm840, 6, %v733
    %v849 = vsel %vm829, 1.0, %v734
    %v850 = vsel %vm830, 1.0, %v735
    %v851 = vsel %vm831, 1.0, %v736
    %v852 = vsel %vm832, 1.0, %v737
    %s853 = sadd.s32 %s162, 7
    %s854 = smul.u32 %s853, 12
    %s855 = sld [smem:[#allocation2 + %s854]]
    %s856 = sadd.s32 %s854, 1
    %s857 = sld [smem:[#allocation2 + %s856]]
    %s858 = sadd.s32 %s854, 2
    %s859 = sld [smem:[#allocation2 + %s858]]
    %s860 = sadd.s32 %s854, 3
    %s861 = sld [smem:[#allocation2 + %s860]]
    %s862 = sadd.s32 %s854, 4
    %s863 = sld [smem:[#allocation2 + %s862]]
    %s864 = sadd.s32 %s854, 5
    %s865 = sld [smem:[#allocation2 + %s864]]
    %s866 = sadd.s32 %s854, 6
    %s867 = sld [smem:[#allocation2 + %s866]]
    %s868 = sadd.s32 %s854, 7
    %s869 = sld [smem:[#allocation2 + %s868]]
    %s870 = sadd.s32 %s854, 8
    %s871 = sld [smem:[#allocation2 + %s870]]
    %v872 = vstv %s855
    %v873 = vmul.f32 %v872, %v39
    %v874 = vstv %s857
    %v875 = vmul.f32 %v874, %v44
    %v876 = vmul.f32 %v874, %v45
    %v877 = vmul.f32 %v874, %v46
    %v878 = vmul.f32 %v874, %v47
    %v879 = vadd.f32 %v873, %v875
    %v880 = vadd.f32 %v873, %v876
    %v881 = vadd.f32 %v873, %v877
    %v882 = vadd.f32 %v873, %v878
    %v883 = vstv %s859
    %v884 = vadd.f32 %v879, %v883
    %v885 = vadd.f32 %v880, %v883
    %v886 = vadd.f32 %v881, %v883
    %v887 = vadd.f32 %v882, %v883
    %v888 = vstv %s861
    %v889 = vmul.f32 %v888, %v39
    %v890 = vstv %s863
    %v891 = vmul.f32 %v890, %v44
    %v892 = vmul.f32 %v890, %v45
    %v893 = vmul.f32 %v890, %v46
    %v894 = vmul.f32 %v890, %v47
    %v895 = vadd.f32 %v889, %v891
    %v896 = vadd.f32 %v889, %v892
    %v897 = vadd.f32 %v889, %v893
    %v898 = vadd.f32 %v889, %v894
    %v899 = vstv %s865
    %v900 = vadd.f32 %v895, %v899
    %v901 = vadd.f32 %v896, %v899
    %v902 = vadd.f32 %v897, %v899
    %v903 = vadd.f32 %v898, %v899
    %v904 = vsub.f32 1.0, %v884
    %v905 = vsub.f32 1.0, %v885
    %v906 = vsub.f32 1.0, %v886
    %v907 = vsub.f32 1.0, %v887
    %v908 = vsub.f32 %v904, %v900
    %v909 = vsub.f32 %v905, %v901
    %v910 = vsub.f32 %v906, %v902
    %v911 = vsub.f32 %v907, %v903
    %v912 = vstv %s867
    %v913 = vmul.f32 %v912, %v39
    %v914 = vstv %s869
    %v915 = vmul.f32 %v914, %v44
    %v916 = vmul.f32 %v914, %v45
    %v917 = vmul.f32 %v914, %v46
    %v918 = vmul.f32 %v914, %v47
    %v919 = vadd.f32 %v913, %v915
    %v920 = vadd.f32 %v913, %v916
    %v921 = vadd.f32 %v913, %v917
    %v922 = vadd.f32 %v913, %v918
    %v923 = vstv %s871
    %v924 = vadd.f32 %v919, %v923
    %v925 = vadd.f32 %v920, %v923
    %v926 = vadd.f32 %v921, %v923
    %v927 = vadd.f32 %v922, %v923
    %vm928 = vcmp.ge.f32.partialorder %v884, 0.0
    %vm929 = vcmp.ge.f32.partialorder %v885, 0.0
    %vm930 = vcmp.ge.f32.partialorder %v886, 0.0
    %vm931 = vcmp.ge.f32.partialorder %v887, 0.0
    %vm932 = vcmp.ge.f32.partialorder %v900, 0.0
    %vm933 = vcmp.ge.f32.partialorder %v901, 0.0
    %vm934 = vcmp.ge.f32.partialorder %v902, 0.0
    %vm935 = vcmp.ge.f32.partialorder %v903, 0.0
    %vm936 = vmand %vm928, %vm932
    %vm937 = vmand %vm929, %vm933
    %vm938 = vmand %vm930, %vm934
    %vm939 = vmand %vm931, %vm935
    %vm940 = vcmp.ge.f32.partialorder %v908, 0.0
    %vm941 = vcmp.ge.f32.partialorder %v909, 0.0
    %vm942 = vcmp.ge.f32.partialorder %v910, 0.0
    %vm943 = vcmp.ge.f32.partialorder %v911, 0.0
    %vm944 = vmand %vm936, %vm940
    %vm945 = vmand %vm937, %vm941
    %vm946 = vmand %vm938, %vm942
    %vm947 = vmand %vm939, %vm943
    %vm948 = vcmp.lt.f32.partialorder %v924, %v841
    %vm949 = vcmp.lt.f32.partialorder %v925, %v842
    %vm950 = vcmp.lt.f32.partialorder %v926, %v843
    %vm951 = vcmp.lt.f32.partialorder %v927, %v844
    %vm952 = vmand %vm944, %vm948
    %vm953 = vmand %vm945, %vm949
    %vm954 = vmand %vm946, %vm950
    %vm955 = vmand %vm947, %vm951
    %v956 = vsel %vm952, %v924, %v841
    %v957 = vsel %vm953, %v925, %v842
    %v958 = vsel %vm954, %v926, %v843
    %v959 = vsel %vm955, %v927, %v844
    %v960 = vsel %vm952, 7, %v845
    %v961 = vsel %vm953, 7, %v846
    %v962 = vsel %vm954, 7, %v847
    %v963 = vsel %vm955, 7, %v848
    %v964 = vsel %vm944, 1.0, %v849
    %v965 = vsel %vm945, 1.0, %v850
    %v966 = vsel %vm946, 1.0, %v851
    %v967 = vsel %vm947, 1.0, %v852
    %s968 = sadd.s32 %s162, 8
    %s969 = smul.u32 %s968, 12
    %s970 = sld [smem:[#allocation2 + %s969]]
    %s971 = sadd.s32 %s969, 1
    %s972 = sld [smem:[#allocation2 + %s971]]
    %s973 = sadd.s32 %s969, 2
    %s974 = sld [smem:[#allocation2 + %s973]]
    %s975 = sadd.s32 %s969, 3
    %s976 = sld [smem:[#allocation2 + %s975]]
    %s977 = sadd.s32 %s969, 4
    %s978 = sld [smem:[#allocation2 + %s977]]
    %s979 = sadd.s32 %s969, 5
    %s980 = sld [smem:[#allocation2 + %s979]]
    %s981 = sadd.s32 %s969, 6
    %s982 = sld [smem:[#allocation2 + %s981]]
    %s983 = sadd.s32 %s969, 7
    %s984 = sld [smem:[#allocation2 + %s983]]
    %s985 = sadd.s32 %s969, 8
    %s986 = sld [smem:[#allocation2 + %s985]]
    %v987 = vstv %s970
    %v988 = vmul.f32 %v987, %v39
    %v989 = vstv %s972
    %v990 = vmul.f32 %v989, %v44
    %v991 = vmul.f32 %v989, %v45
    %v992 = vmul.f32 %v989, %v46
    %v993 = vmul.f32 %v989, %v47
    %v994 = vadd.f32 %v988, %v990
    %v995 = vadd.f32 %v988, %v991
    %v996 = vadd.f32 %v988, %v992
    %v997 = vadd.f32 %v988, %v993
    %v998 = vstv %s974
    %v999 = vadd.f32 %v994, %v998
    %v1000 = vadd.f32 %v995, %v998
    %v1001 = vadd.f32 %v996, %v998
    %v1002 = vadd.f32 %v997, %v998
    %v1003 = vstv %s976
    %v1004 = vmul.f32 %v1003, %v39
    %v1005 = vstv %s978
    %v1006 = vmul.f32 %v1005, %v44
    %v1007 = vmul.f32 %v1005, %v45
    %v1008 = vmul.f32 %v1005, %v46
    %v1009 = vmul.f32 %v1005, %v47
    %v1010 = vadd.f32 %v1004, %v1006
    %v1011 = vadd.f32 %v1004, %v1007
    %v1012 = vadd.f32 %v1004, %v1008
    %v1013 = vadd.f32 %v1004, %v1009
    %v1014 = vstv %s980
    %v1015 = vadd.f32 %v1010, %v1014
    %v1016 = vadd.f32 %v1011, %v1014
    %v1017 = vadd.f32 %v1012, %v1014
    %v1018 = vadd.f32 %v1013, %v1014
    %v1019 = vsub.f32 1.0, %v999
    %v1020 = vsub.f32 1.0, %v1000
    %v1021 = vsub.f32 1.0, %v1001
    %v1022 = vsub.f32 1.0, %v1002
    %v1023 = vsub.f32 %v1019, %v1015
    %v1024 = vsub.f32 %v1020, %v1016
    %v1025 = vsub.f32 %v1021, %v1017
    %v1026 = vsub.f32 %v1022, %v1018
    %v1027 = vstv %s982
    %v1028 = vmul.f32 %v1027, %v39
    %v1029 = vstv %s984
    %v1030 = vmul.f32 %v1029, %v44
    %v1031 = vmul.f32 %v1029, %v45
    %v1032 = vmul.f32 %v1029, %v46
    %v1033 = vmul.f32 %v1029, %v47
    %v1034 = vadd.f32 %v1028, %v1030
    %v1035 = vadd.f32 %v1028, %v1031
    %v1036 = vadd.f32 %v1028, %v1032
    %v1037 = vadd.f32 %v1028, %v1033
    %v1038 = vstv %s986
    %v1039 = vadd.f32 %v1034, %v1038
    %v1040 = vadd.f32 %v1035, %v1038
    %v1041 = vadd.f32 %v1036, %v1038
    %v1042 = vadd.f32 %v1037, %v1038
    %vm1043 = vcmp.ge.f32.partialorder %v999, 0.0
    %vm1044 = vcmp.ge.f32.partialorder %v1000, 0.0
    %vm1045 = vcmp.ge.f32.partialorder %v1001, 0.0
    %vm1046 = vcmp.ge.f32.partialorder %v1002, 0.0
    %vm1047 = vcmp.ge.f32.partialorder %v1015, 0.0
    %vm1048 = vcmp.ge.f32.partialorder %v1016, 0.0
    %vm1049 = vcmp.ge.f32.partialorder %v1017, 0.0
    %vm1050 = vcmp.ge.f32.partialorder %v1018, 0.0
    %vm1051 = vmand %vm1043, %vm1047
    %vm1052 = vmand %vm1044, %vm1048
    %vm1053 = vmand %vm1045, %vm1049
    %vm1054 = vmand %vm1046, %vm1050
    %vm1055 = vcmp.ge.f32.partialorder %v1023, 0.0
    %vm1056 = vcmp.ge.f32.partialorder %v1024, 0.0
    %vm1057 = vcmp.ge.f32.partialorder %v1025, 0.0
    %vm1058 = vcmp.ge.f32.partialorder %v1026, 0.0
    %vm1059 = vmand %vm1051, %vm1055
    %vm1060 = vmand %vm1052, %vm1056
    %vm1061 = vmand %vm1053, %vm1057
    %vm1062 = vmand %vm1054, %vm1058
    %vm1063 = vcmp.lt.f32.partialorder %v1039, %v956
    %vm1064 = vcmp.lt.f32.partialorder %v1040, %v957
    %vm1065 = vcmp.lt.f32.partialorder %v1041, %v958
    %vm1066 = vcmp.lt.f32.partialorder %v1042, %v959
    %vm1067 = vmand %vm1059, %vm1063
    %vm1068 = vmand %vm1060, %vm1064
    %vm1069 = vmand %vm1061, %vm1065
    %vm1070 = vmand %vm1062, %vm1066
    %v1071 = vsel %vm1067, %v1039, %v956
    %v1072 = vsel %vm1068, %v1040, %v957
    %v1073 = vsel %vm1069, %v1041, %v958
    %v1074 = vsel %vm1070, %v1042, %v959
    %v1075 = vsel %vm1067, 8, %v960
    %v1076 = vsel %vm1068, 8, %v961
    %v1077 = vsel %vm1069, 8, %v962
    %v1078 = vsel %vm1070, 8, %v963
    %v1079 = vsel %vm1059, 1.0, %v964
    %v1080 = vsel %vm1060, 1.0, %v965
    %v1081 = vsel %vm1061, 1.0, %v966
    %v1082 = vsel %vm1062, 1.0, %v967
    %s1083 = sadd.s32 %s162, 9
    %s1084 = smul.u32 %s1083, 12
    %s1085 = sld [smem:[#allocation2 + %s1084]]
    %s1086 = sadd.s32 %s1084, 1
    %s1087 = sld [smem:[#allocation2 + %s1086]]
    %s1088 = sadd.s32 %s1084, 2
    %s1089 = sld [smem:[#allocation2 + %s1088]]
    %s1090 = sadd.s32 %s1084, 3
    %s1091 = sld [smem:[#allocation2 + %s1090]]
    %s1092 = sadd.s32 %s1084, 4
    %s1093 = sld [smem:[#allocation2 + %s1092]]
    %s1094 = sadd.s32 %s1084, 5
    %s1095 = sld [smem:[#allocation2 + %s1094]]
    %s1096 = sadd.s32 %s1084, 6
    %s1097 = sld [smem:[#allocation2 + %s1096]]
    %s1098 = sadd.s32 %s1084, 7
    %s1099 = sld [smem:[#allocation2 + %s1098]]
    %s1100 = sadd.s32 %s1084, 8
    %s1101 = sld [smem:[#allocation2 + %s1100]]
    %v1102 = vstv %s1085
    %v1103 = vmul.f32 %v1102, %v39
    %v1104 = vstv %s1087
    %v1105 = vmul.f32 %v1104, %v44
    %v1106 = vmul.f32 %v1104, %v45
    %v1107 = vmul.f32 %v1104, %v46
    %v1108 = vmul.f32 %v1104, %v47
    %v1109 = vadd.f32 %v1103, %v1105
    %v1110 = vadd.f32 %v1103, %v1106
    %v1111 = vadd.f32 %v1103, %v1107
    %v1112 = vadd.f32 %v1103, %v1108
    %v1113 = vstv %s1089
    %v1114 = vadd.f32 %v1109, %v1113
    %v1115 = vadd.f32 %v1110, %v1113
    %v1116 = vadd.f32 %v1111, %v1113
    %v1117 = vadd.f32 %v1112, %v1113
    %v1118 = vstv %s1091
    %v1119 = vmul.f32 %v1118, %v39
    %v1120 = vstv %s1093
    %v1121 = vmul.f32 %v1120, %v44
    %v1122 = vmul.f32 %v1120, %v45
    %v1123 = vmul.f32 %v1120, %v46
    %v1124 = vmul.f32 %v1120, %v47
    %v1125 = vadd.f32 %v1119, %v1121
    %v1126 = vadd.f32 %v1119, %v1122
    %v1127 = vadd.f32 %v1119, %v1123
    %v1128 = vadd.f32 %v1119, %v1124
    %v1129 = vstv %s1095
    %v1130 = vadd.f32 %v1125, %v1129
    %v1131 = vadd.f32 %v1126, %v1129
    %v1132 = vadd.f32 %v1127, %v1129
    %v1133 = vadd.f32 %v1128, %v1129
    %v1134 = vsub.f32 1.0, %v1114
    %v1135 = vsub.f32 1.0, %v1115
    %v1136 = vsub.f32 1.0, %v1116
    %v1137 = vsub.f32 1.0, %v1117
    %v1138 = vsub.f32 %v1134, %v1130
    %v1139 = vsub.f32 %v1135, %v1131
    %v1140 = vsub.f32 %v1136, %v1132
    %v1141 = vsub.f32 %v1137, %v1133
    %v1142 = vstv %s1097
    %v1143 = vmul.f32 %v1142, %v39
    %v1144 = vstv %s1099
    %v1145 = vmul.f32 %v1144, %v44
    %v1146 = vmul.f32 %v1144, %v45
    %v1147 = vmul.f32 %v1144, %v46
    %v1148 = vmul.f32 %v1144, %v47
    %v1149 = vadd.f32 %v1143, %v1145
    %v1150 = vadd.f32 %v1143, %v1146
    %v1151 = vadd.f32 %v1143, %v1147
    %v1152 = vadd.f32 %v1143, %v1148
    %v1153 = vstv %s1101
    %v1154 = vadd.f32 %v1149, %v1153
    %v1155 = vadd.f32 %v1150, %v1153
    %v1156 = vadd.f32 %v1151, %v1153
    %v1157 = vadd.f32 %v1152, %v1153
    %vm1158 = vcmp.ge.f32.partialorder %v1114, 0.0
    %vm1159 = vcmp.ge.f32.partialorder %v1115, 0.0
    %vm1160 = vcmp.ge.f32.partialorder %v1116, 0.0
    %vm1161 = vcmp.ge.f32.partialorder %v1117, 0.0
    %vm1162 = vcmp.ge.f32.partialorder %v1130, 0.0
    %vm1163 = vcmp.ge.f32.partialorder %v1131, 0.0
    %vm1164 = vcmp.ge.f32.partialorder %v1132, 0.0
    %vm1165 = vcmp.ge.f32.partialorder %v1133, 0.0
    %vm1166 = vmand %vm1158, %vm1162
    %vm1167 = vmand %vm1159, %vm1163
    %vm1168 = vmand %vm1160, %vm1164
    %vm1169 = vmand %vm1161, %vm1165
    %vm1170 = vcmp.ge.f32.partialorder %v1138, 0.0
    %vm1171 = vcmp.ge.f32.partialorder %v1139, 0.0
    %vm1172 = vcmp.ge.f32.partialorder %v1140, 0.0
    %vm1173 = vcmp.ge.f32.partialorder %v1141, 0.0
    %vm1174 = vmand %vm1166, %vm1170
    %vm1175 = vmand %vm1167, %vm1171
    %vm1176 = vmand %vm1168, %vm1172
    %vm1177 = vmand %vm1169, %vm1173
    %vm1178 = vcmp.lt.f32.partialorder %v1154, %v1071
    %vm1179 = vcmp.lt.f32.partialorder %v1155, %v1072
    %vm1180 = vcmp.lt.f32.partialorder %v1156, %v1073
    %vm1181 = vcmp.lt.f32.partialorder %v1157, %v1074
    %vm1182 = vmand %vm1174, %vm1178
    %vm1183 = vmand %vm1175, %vm1179
    %vm1184 = vmand %vm1176, %vm1180
    %vm1185 = vmand %vm1177, %vm1181
    %v1186 = vsel %vm1182, %v1154, %v1071
    %v1187 = vsel %vm1183, %v1155, %v1072
    %v1188 = vsel %vm1184, %v1156, %v1073
    %v1189 = vsel %vm1185, %v1157, %v1074
    %v1190 = vsel %vm1182, 9, %v1075
    %v1191 = vsel %vm1183, 9, %v1076
    %v1192 = vsel %vm1184, 9, %v1077
    %v1193 = vsel %vm1185, 9, %v1078
    %v1194 = vsel %vm1174, 1.0, %v1079
    %v1195 = vsel %vm1175, 1.0, %v1080
    %v1196 = vsel %vm1176, 1.0, %v1081
    %v1197 = vsel %vm1177, 1.0, %v1082
    %s1198 = sadd.s32 %s162, 10
    %s1199 = smul.u32 %s1198, 12
    %s1200 = sld [smem:[#allocation2 + %s1199]]
    %s1201 = sadd.s32 %s1199, 1
    %s1202 = sld [smem:[#allocation2 + %s1201]]
    %s1203 = sadd.s32 %s1199, 2
    %s1204 = sld [smem:[#allocation2 + %s1203]]
    %s1205 = sadd.s32 %s1199, 3
    %s1206 = sld [smem:[#allocation2 + %s1205]]
    %s1207 = sadd.s32 %s1199, 4
    %s1208 = sld [smem:[#allocation2 + %s1207]]
    %s1209 = sadd.s32 %s1199, 5
    %s1210 = sld [smem:[#allocation2 + %s1209]]
    %s1211 = sadd.s32 %s1199, 6
    %s1212 = sld [smem:[#allocation2 + %s1211]]
    %s1213 = sadd.s32 %s1199, 7
    %s1214 = sld [smem:[#allocation2 + %s1213]]
    %s1215 = sadd.s32 %s1199, 8
    %s1216 = sld [smem:[#allocation2 + %s1215]]
    %v1217 = vstv %s1200
    %v1218 = vmul.f32 %v1217, %v39
    %v1219 = vstv %s1202
    %v1220 = vmul.f32 %v1219, %v44
    %v1221 = vmul.f32 %v1219, %v45
    %v1222 = vmul.f32 %v1219, %v46
    %v1223 = vmul.f32 %v1219, %v47
    %v1224 = vadd.f32 %v1218, %v1220
    %v1225 = vadd.f32 %v1218, %v1221
    %v1226 = vadd.f32 %v1218, %v1222
    %v1227 = vadd.f32 %v1218, %v1223
    %v1228 = vstv %s1204
    %v1229 = vadd.f32 %v1224, %v1228
    %v1230 = vadd.f32 %v1225, %v1228
    %v1231 = vadd.f32 %v1226, %v1228
    %v1232 = vadd.f32 %v1227, %v1228
    %v1233 = vstv %s1206
    %v1234 = vmul.f32 %v1233, %v39
    %v1235 = vstv %s1208
    %v1236 = vmul.f32 %v1235, %v44
    %v1237 = vmul.f32 %v1235, %v45
    %v1238 = vmul.f32 %v1235, %v46
    %v1239 = vmul.f32 %v1235, %v47
    %v1240 = vadd.f32 %v1234, %v1236
    %v1241 = vadd.f32 %v1234, %v1237
    %v1242 = vadd.f32 %v1234, %v1238
    %v1243 = vadd.f32 %v1234, %v1239
    %v1244 = vstv %s1210
    %v1245 = vadd.f32 %v1240, %v1244
    %v1246 = vadd.f32 %v1241, %v1244
    %v1247 = vadd.f32 %v1242, %v1244
    %v1248 = vadd.f32 %v1243, %v1244
    %v1249 = vsub.f32 1.0, %v1229
    %v1250 = vsub.f32 1.0, %v1230
    %v1251 = vsub.f32 1.0, %v1231
    %v1252 = vsub.f32 1.0, %v1232
    %v1253 = vsub.f32 %v1249, %v1245
    %v1254 = vsub.f32 %v1250, %v1246
    %v1255 = vsub.f32 %v1251, %v1247
    %v1256 = vsub.f32 %v1252, %v1248
    %v1257 = vstv %s1212
    %v1258 = vmul.f32 %v1257, %v39
    %v1259 = vstv %s1214
    %v1260 = vmul.f32 %v1259, %v44
    %v1261 = vmul.f32 %v1259, %v45
    %v1262 = vmul.f32 %v1259, %v46
    %v1263 = vmul.f32 %v1259, %v47
    %v1264 = vadd.f32 %v1258, %v1260
    %v1265 = vadd.f32 %v1258, %v1261
    %v1266 = vadd.f32 %v1258, %v1262
    %v1267 = vadd.f32 %v1258, %v1263
    %v1268 = vstv %s1216
    %v1269 = vadd.f32 %v1264, %v1268
    %v1270 = vadd.f32 %v1265, %v1268
    %v1271 = vadd.f32 %v1266, %v1268
    %v1272 = vadd.f32 %v1267, %v1268
    %vm1273 = vcmp.ge.f32.partialorder %v1229, 0.0
    %vm1274 = vcmp.ge.f32.partialorder %v1230, 0.0
    %vm1275 = vcmp.ge.f32.partialorder %v1231, 0.0
    %vm1276 = vcmp.ge.f32.partialorder %v1232, 0.0
    %vm1277 = vcmp.ge.f32.partialorder %v1245, 0.0
    %vm1278 = vcmp.ge.f32.partialorder %v1246, 0.0
    %vm1279 = vcmp.ge.f32.partialorder %v1247, 0.0
    %vm1280 = vcmp.ge.f32.partialorder %v1248, 0.0
    %vm1281 = vmand %vm1273, %vm1277
    %vm1282 = vmand %vm1274, %vm1278
    %vm1283 = vmand %vm1275, %vm1279
    %vm1284 = vmand %vm1276, %vm1280
    %vm1285 = vcmp.ge.f32.partialorder %v1253, 0.0
    %vm1286 = vcmp.ge.f32.partialorder %v1254, 0.0
    %vm1287 = vcmp.ge.f32.partialorder %v1255, 0.0
    %vm1288 = vcmp.ge.f32.partialorder %v1256, 0.0
    %vm1289 = vmand %vm1281, %vm1285
    %vm1290 = vmand %vm1282, %vm1286
    %vm1291 = vmand %vm1283, %vm1287
    %vm1292 = vmand %vm1284, %vm1288
    %vm1293 = vcmp.lt.f32.partialorder %v1269, %v1186
    %vm1294 = vcmp.lt.f32.partialorder %v1270, %v1187
    %vm1295 = vcmp.lt.f32.partialorder %v1271, %v1188
    %vm1296 = vcmp.lt.f32.partialorder %v1272, %v1189
    %vm1297 = vmand %vm1289, %vm1293
    %vm1298 = vmand %vm1290, %vm1294
    %vm1299 = vmand %vm1291, %vm1295
    %vm1300 = vmand %vm1292, %vm1296
    %v1301 = vsel %vm1297, %v1269, %v1186
    %v1302 = vsel %vm1298, %v1270, %v1187
    %v1303 = vsel %vm1299, %v1271, %v1188
    %v1304 = vsel %vm1300, %v1272, %v1189
    %v1305 = vsel %vm1297, 10, %v1190
    %v1306 = vsel %vm1298, 10, %v1191
    %v1307 = vsel %vm1299, 10, %v1192
    %v1308 = vsel %vm1300, 10, %v1193
    %v1309 = vsel %vm1289, 1.0, %v1194
    %v1310 = vsel %vm1290, 1.0, %v1195
    %v1311 = vsel %vm1291, 1.0, %v1196
    %v1312 = vsel %vm1292, 1.0, %v1197
    %s1313 = sadd.s32 %s162, 11
    %s1314 = smul.u32 %s1313, 12
    %s1315 = sld [smem:[#allocation2 + %s1314]]
    %s1316 = sadd.s32 %s1314, 1
    %s1317 = sld [smem:[#allocation2 + %s1316]]
    %s1318 = sadd.s32 %s1314, 2
    %s1319 = sld [smem:[#allocation2 + %s1318]]
    %s1320 = sadd.s32 %s1314, 3
    %s1321 = sld [smem:[#allocation2 + %s1320]]
    %s1322 = sadd.s32 %s1314, 4
    %s1323 = sld [smem:[#allocation2 + %s1322]]
    %s1324 = sadd.s32 %s1314, 5
    %s1325 = sld [smem:[#allocation2 + %s1324]]
    %s1326 = sadd.s32 %s1314, 6
    %s1327 = sld [smem:[#allocation2 + %s1326]]
    %s1328 = sadd.s32 %s1314, 7
    %s1329 = sld [smem:[#allocation2 + %s1328]]
    %s1330 = sadd.s32 %s1314, 8
    %s1331 = sld [smem:[#allocation2 + %s1330]]
    %v1332 = vstv %s1315
    %v1333 = vmul.f32 %v1332, %v39
    %v1334 = vstv %s1317
    %v1335 = vmul.f32 %v1334, %v44
    %v1336 = vmul.f32 %v1334, %v45
    %v1337 = vmul.f32 %v1334, %v46
    %v1338 = vmul.f32 %v1334, %v47
    %v1339 = vadd.f32 %v1333, %v1335
    %v1340 = vadd.f32 %v1333, %v1336
    %v1341 = vadd.f32 %v1333, %v1337
    %v1342 = vadd.f32 %v1333, %v1338
    %v1343 = vstv %s1319
    %v1344 = vadd.f32 %v1339, %v1343
    %v1345 = vadd.f32 %v1340, %v1343
    %v1346 = vadd.f32 %v1341, %v1343
    %v1347 = vadd.f32 %v1342, %v1343
    %v1348 = vstv %s1321
    %v1349 = vmul.f32 %v1348, %v39
    %v1350 = vstv %s1323
    %v1351 = vmul.f32 %v1350, %v44
    %v1352 = vmul.f32 %v1350, %v45
    %v1353 = vmul.f32 %v1350, %v46
    %v1354 = vmul.f32 %v1350, %v47
    %v1355 = vadd.f32 %v1349, %v1351
    %v1356 = vadd.f32 %v1349, %v1352
    %v1357 = vadd.f32 %v1349, %v1353
    %v1358 = vadd.f32 %v1349, %v1354
    %v1359 = vstv %s1325
    %v1360 = vadd.f32 %v1355, %v1359
    %v1361 = vadd.f32 %v1356, %v1359
    %v1362 = vadd.f32 %v1357, %v1359
    %v1363 = vadd.f32 %v1358, %v1359
    %v1364 = vsub.f32 1.0, %v1344
    %v1365 = vsub.f32 1.0, %v1345
    %v1366 = vsub.f32 1.0, %v1346
    %v1367 = vsub.f32 1.0, %v1347
    %v1368 = vsub.f32 %v1364, %v1360
    %v1369 = vsub.f32 %v1365, %v1361
    %v1370 = vsub.f32 %v1366, %v1362
    %v1371 = vsub.f32 %v1367, %v1363
    %v1372 = vstv %s1327
    %v1373 = vmul.f32 %v1372, %v39
    %v1374 = vstv %s1329
    %v1375 = vmul.f32 %v1374, %v44
    %v1376 = vmul.f32 %v1374, %v45
    %v1377 = vmul.f32 %v1374, %v46
    %v1378 = vmul.f32 %v1374, %v47
    %v1379 = vadd.f32 %v1373, %v1375
    %v1380 = vadd.f32 %v1373, %v1376
    %v1381 = vadd.f32 %v1373, %v1377
    %v1382 = vadd.f32 %v1373, %v1378
    %v1383 = vstv %s1331
    %v1384 = vadd.f32 %v1379, %v1383
    %v1385 = vadd.f32 %v1380, %v1383
    %v1386 = vadd.f32 %v1381, %v1383
    %v1387 = vadd.f32 %v1382, %v1383
    %vm1388 = vcmp.ge.f32.partialorder %v1344, 0.0
    %vm1389 = vcmp.ge.f32.partialorder %v1345, 0.0
    %vm1390 = vcmp.ge.f32.partialorder %v1346, 0.0
    %vm1391 = vcmp.ge.f32.partialorder %v1347, 0.0
    %vm1392 = vcmp.ge.f32.partialorder %v1360, 0.0
    %vm1393 = vcmp.ge.f32.partialorder %v1361, 0.0
    %vm1394 = vcmp.ge.f32.partialorder %v1362, 0.0
    %vm1395 = vcmp.ge.f32.partialorder %v1363, 0.0
    %vm1396 = vmand %vm1388, %vm1392
    %vm1397 = vmand %vm1389, %vm1393
    %vm1398 = vmand %vm1390, %vm1394
    %vm1399 = vmand %vm1391, %vm1395
    %vm1400 = vcmp.ge.f32.partialorder %v1368, 0.0
    %vm1401 = vcmp.ge.f32.partialorder %v1369, 0.0
    %vm1402 = vcmp.ge.f32.partialorder %v1370, 0.0
    %vm1403 = vcmp.ge.f32.partialorder %v1371, 0.0
    %vm1404 = vmand %vm1396, %vm1400
    %vm1405 = vmand %vm1397, %vm1401
    %vm1406 = vmand %vm1398, %vm1402
    %vm1407 = vmand %vm1399, %vm1403
    %vm1408 = vcmp.lt.f32.partialorder %v1384, %v1301
    %vm1409 = vcmp.lt.f32.partialorder %v1385, %v1302
    %vm1410 = vcmp.lt.f32.partialorder %v1386, %v1303
    %vm1411 = vcmp.lt.f32.partialorder %v1387, %v1304
    %vm1412 = vmand %vm1404, %vm1408
    %vm1413 = vmand %vm1405, %vm1409
    %vm1414 = vmand %vm1406, %vm1410
    %vm1415 = vmand %vm1407, %vm1411
    %v1416 = vsel %vm1412, %v1384, %v1301
    %v1417 = vsel %vm1413, %v1385, %v1302
    %v1418 = vsel %vm1414, %v1386, %v1303
    %v1419 = vsel %vm1415, %v1387, %v1304
    %v1420 = vsel %vm1412, 11, %v1305
    %v1421 = vsel %vm1413, 11, %v1306
    %v1422 = vsel %vm1414, 11, %v1307
    %v1423 = vsel %vm1415, 11, %v1308
    %v1424 = vsel %vm1404, 1.0, %v1309
    %v1425 = vsel %vm1405, 1.0, %v1310
    %v1426 = vsel %vm1406, 1.0, %v1311
    %v1427 = vsel %vm1407, 1.0, %v1312
    %vm1428 = vcmp.eq.s32.totalorder %v1420, 0
    %vm1429 = vcmp.eq.s32.totalorder %v1421, 0
    %vm1430 = vcmp.eq.s32.totalorder %v1422, 0
    %vm1431 = vcmp.eq.s32.totalorder %v1423, 0
    %s1432 = sadd.s32 %s48, 9
    %s1433 = sld [smem:[#allocation2 + %s1432]]
    %v1434 = vstv %s1433
    %v1435 = vsel %vm1428, %v1434, 1.0
    %v1436 = vsel %vm1429, %v1434, 1.0
    %v1437 = vsel %vm1430, %v1434, 1.0
    %v1438 = vsel %vm1431, %v1434, 1.0
    %s1439 = sadd.s32 %s48, 10
    %s1440 = sld [smem:[#allocation2 + %s1439]]
    %v1441 = vstv %s1440
    %v1442 = vsel %vm1428, %v1441, 1.0
    %v1443 = vsel %vm1429, %v1441, 1.0
    %v1444 = vsel %vm1430, %v1441, 1.0
    %v1445 = vsel %vm1431, %v1441, 1.0
    %s1446 = sadd.s32 %s48, 11
    %s1447 = sld [smem:[#allocation2 + %s1446]]
    %v1448 = vstv %s1447
    %v1449 = vsel %vm1428, %v1448, 1.0
    %v1450 = vsel %vm1429, %v1448, 1.0
    %v1451 = vsel %vm1430, %v1448, 1.0
    %v1452 = vsel %vm1431, %v1448, 1.0
    %vm1453 = vcmp.eq.s32.totalorder %v1420, 1
    %vm1454 = vcmp.eq.s32.totalorder %v1421, 1
    %vm1455 = vcmp.eq.s32.totalorder %v1422, 1
    %vm1456 = vcmp.eq.s32.totalorder %v1423, 1
    %s1457 = sadd.s32 %s164, 9
    %s1458 = sld [smem:[#allocation2 + %s1457]]
    %v1459 = vstv %s1458
    %v1460 = vsel %vm1453, %v1459, %v1435
    %v1461 = vsel %vm1454, %v1459, %v1436
    %v1462 = vsel %vm1455, %v1459, %v1437
    %v1463 = vsel %vm1456, %v1459, %v1438
    %s1464 = sadd.s32 %s164, 10
    %s1465 = sld [smem:[#allocation2 + %s1464]]
    %v1466 = vstv %s1465
    %v1467 = vsel %vm1453, %v1466, %v1442
    %v1468 = vsel %vm1454, %v1466, %v1443
    %v1469 = vsel %vm1455, %v1466, %v1444
    %v1470 = vsel %vm1456, %v1466, %v1445
    %s1471 = sadd.s32 %s164, 11
    %s1472 = sld [smem:[#allocation2 + %s1471]]
    %v1473 = vstv %s1472
    %v1474 = vsel %vm1453, %v1473, %v1449
    %v1475 = vsel %vm1454, %v1473, %v1450
    %v1476 = vsel %vm1455, %v1473, %v1451
    %v1477 = vsel %vm1456, %v1473, %v1452
    %vm1478 = vcmp.eq.s32.totalorder %v1420, 2
    %vm1479 = vcmp.eq.s32.totalorder %v1421, 2
    %vm1480 = vcmp.eq.s32.totalorder %v1422, 2
    %vm1481 = vcmp.eq.s32.totalorder %v1423, 2
    %s1482 = sadd.s32 %s279, 9
    %s1483 = sld [smem:[#allocation2 + %s1482]]
    %v1484 = vstv %s1483
    %v1485 = vsel %vm1478, %v1484, %v1460
    %v1486 = vsel %vm1479, %v1484, %v1461
    %v1487 = vsel %vm1480, %v1484, %v1462
    %v1488 = vsel %vm1481, %v1484, %v1463
    %s1489 = sadd.s32 %s279, 10
    %s1490 = sld [smem:[#allocation2 + %s1489]]
    %v1491 = vstv %s1490
    %v1492 = vsel %vm1478, %v1491, %v1467
    %v1493 = vsel %vm1479, %v1491, %v1468
    %v1494 = vsel %vm1480, %v1491, %v1469
    %v1495 = vsel %vm1481, %v1491, %v1470
    %s1496 = sadd.s32 %s279, 11
    %s1497 = sld [smem:[#allocation2 + %s1496]]
    %v1498 = vstv %s1497
    %v1499 = vsel %vm1478, %v1498, %v1474
    %v1500 = vsel %vm1479, %v1498, %v1475
    %v1501 = vsel %vm1480, %v1498, %v1476
    %v1502 = vsel %vm1481, %v1498, %v1477
    %vm1503 = vcmp.eq.s32.totalorder %v1420, 3
    %vm1504 = vcmp.eq.s32.totalorder %v1421, 3
    %vm1505 = vcmp.eq.s32.totalorder %v1422, 3
    %vm1506 = vcmp.eq.s32.totalorder %v1423, 3
    %s1507 = sadd.s32 %s394, 9
    %s1508 = sld [smem:[#allocation2 + %s1507]]
    %v1509 = vstv %s1508
    %v1510 = vsel %vm1503, %v1509, %v1485
    %v1511 = vsel %vm1504, %v1509, %v1486
    %v1512 = vsel %vm1505, %v1509, %v1487
    %v1513 = vsel %vm1506, %v1509, %v1488
    %s1514 = sadd.s32 %s394, 10
    %s1515 = sld [smem:[#allocation2 + %s1514]]
    %v1516 = vstv %s1515
    %v1517 = vsel %vm1503, %v1516, %v1492
    %v1518 = vsel %vm1504, %v1516, %v1493
    %v1519 = vsel %vm1505, %v1516, %v1494
    %v1520 = vsel %vm1506, %v1516, %v1495
    %s1521 = sadd.s32 %s394, 11
    %s1522 = sld [smem:[#allocation2 + %s1521]]
    %v1523 = vstv %s1522
    %v1524 = vsel %vm1503, %v1523, %v1499
    %v1525 = vsel %vm1504, %v1523, %v1500
    %v1526 = vsel %vm1505, %v1523, %v1501
    %v1527 = vsel %vm1506, %v1523, %v1502
    %vm1528 = vcmp.eq.s32.totalorder %v1420, 4
    %vm1529 = vcmp.eq.s32.totalorder %v1421, 4
    %vm1530 = vcmp.eq.s32.totalorder %v1422, 4
    %vm1531 = vcmp.eq.s32.totalorder %v1423, 4
    %s1532 = sadd.s32 %s509, 9
    %s1533 = sld [smem:[#allocation2 + %s1532]]
    %v1534 = vstv %s1533
    %v1535 = vsel %vm1528, %v1534, %v1510
    %v1536 = vsel %vm1529, %v1534, %v1511
    %v1537 = vsel %vm1530, %v1534, %v1512
    %v1538 = vsel %vm1531, %v1534, %v1513
    %s1539 = sadd.s32 %s509, 10
    %s1540 = sld [smem:[#allocation2 + %s1539]]
    %v1541 = vstv %s1540
    %v1542 = vsel %vm1528, %v1541, %v1517
    %v1543 = vsel %vm1529, %v1541, %v1518
    %v1544 = vsel %vm1530, %v1541, %v1519
    %v1545 = vsel %vm1531, %v1541, %v1520
    %s1546 = sadd.s32 %s509, 11
    %s1547 = sld [smem:[#allocation2 + %s1546]]
    %v1548 = vstv %s1547
    %v1549 = vsel %vm1528, %v1548, %v1524
    %v1550 = vsel %vm1529, %v1548, %v1525
    %v1551 = vsel %vm1530, %v1548, %v1526
    %v1552 = vsel %vm1531, %v1548, %v1527
    %vm1553 = vcmp.eq.s32.totalorder %v1420, 5
    %vm1554 = vcmp.eq.s32.totalorder %v1421, 5
    %vm1555 = vcmp.eq.s32.totalorder %v1422, 5
    %vm1556 = vcmp.eq.s32.totalorder %v1423, 5
    %s1557 = sadd.s32 %s624, 9
    %s1558 = sld [smem:[#allocation2 + %s1557]]
    %v1559 = vstv %s1558
    %v1560 = vsel %vm1553, %v1559, %v1535
    %v1561 = vsel %vm1554, %v1559, %v1536
    %v1562 = vsel %vm1555, %v1559, %v1537
    %v1563 = vsel %vm1556, %v1559, %v1538
    %s1564 = sadd.s32 %s624, 10
    %s1565 = sld [smem:[#allocation2 + %s1564]]
    %v1566 = vstv %s1565
    %v1567 = vsel %vm1553, %v1566, %v1542
    %v1568 = vsel %vm1554, %v1566, %v1543
    %v1569 = vsel %vm1555, %v1566, %v1544
    %v1570 = vsel %vm1556, %v1566, %v1545
    %s1571 = sadd.s32 %s624, 11
    %s1572 = sld [smem:[#allocation2 + %s1571]]
    %v1573 = vstv %s1572
    %v1574 = vsel %vm1553, %v1573, %v1549
    %v1575 = vsel %vm1554, %v1573, %v1550
    %v1576 = vsel %vm1555, %v1573, %v1551
    %v1577 = vsel %vm1556, %v1573, %v1552
    %vm1578 = vcmp.eq.s32.totalorder %v1420, 6
    %vm1579 = vcmp.eq.s32.totalorder %v1421, 6
    %vm1580 = vcmp.eq.s32.totalorder %v1422, 6
    %vm1581 = vcmp.eq.s32.totalorder %v1423, 6
    %s1582 = sadd.s32 %s739, 9
    %s1583 = sld [smem:[#allocation2 + %s1582]]
    %v1584 = vstv %s1583
    %v1585 = vsel %vm1578, %v1584, %v1560
    %v1586 = vsel %vm1579, %v1584, %v1561
    %v1587 = vsel %vm1580, %v1584, %v1562
    %v1588 = vsel %vm1581, %v1584, %v1563
    %s1589 = sadd.s32 %s739, 10
    %s1590 = sld [smem:[#allocation2 + %s1589]]
    %v1591 = vstv %s1590
    %v1592 = vsel %vm1578, %v1591, %v1567
    %v1593 = vsel %vm1579, %v1591, %v1568
    %v1594 = vsel %vm1580, %v1591, %v1569
    %v1595 = vsel %vm1581, %v1591, %v1570
    %s1596 = sadd.s32 %s739, 11
    %s1597 = sld [smem:[#allocation2 + %s1596]]
    %v1598 = vstv %s1597
    %v1599 = vsel %vm1578, %v1598, %v1574
    %v1600 = vsel %vm1579, %v1598, %v1575
    %v1601 = vsel %vm1580, %v1598, %v1576
    %v1602 = vsel %vm1581, %v1598, %v1577
    %vm1603 = vcmp.eq.s32.totalorder %v1420, 7
    %vm1604 = vcmp.eq.s32.totalorder %v1421, 7
    %vm1605 = vcmp.eq.s32.totalorder %v1422, 7
    %vm1606 = vcmp.eq.s32.totalorder %v1423, 7
    %s1607 = sadd.s32 %s854, 9
    %s1608 = sld [smem:[#allocation2 + %s1607]]
    %v1609 = vstv %s1608
    %v1610 = vsel %vm1603, %v1609, %v1585
    %v1611 = vsel %vm1604, %v1609, %v1586
    %v1612 = vsel %vm1605, %v1609, %v1587
    %v1613 = vsel %vm1606, %v1609, %v1588
    %s1614 = sadd.s32 %s854, 10
    %s1615 = sld [smem:[#allocation2 + %s1614]]
    %v1616 = vstv %s1615
    %v1617 = vsel %vm1603, %v1616, %v1592
    %v1618 = vsel %vm1604, %v1616, %v1593
    %v1619 = vsel %vm1605, %v1616, %v1594
    %v1620 = vsel %vm1606, %v1616, %v1595
    %s1621 = sadd.s32 %s854, 11
    %s1622 = sld [smem:[#allocation2 + %s1621]]
    %v1623 = vstv %s1622
    %v1624 = vsel %vm1603, %v1623, %v1599
    %v1625 = vsel %vm1604, %v1623, %v1600
    %v1626 = vsel %vm1605, %v1623, %v1601
    %v1627 = vsel %vm1606, %v1623, %v1602
    %vm1628 = vcmp.eq.s32.totalorder %v1420, 8
    %vm1629 = vcmp.eq.s32.totalorder %v1421, 8
    %vm1630 = vcmp.eq.s32.totalorder %v1422, 8
    %vm1631 = vcmp.eq.s32.totalorder %v1423, 8
    %s1632 = sadd.s32 %s969, 9
    %s1633 = sld [smem:[#allocation2 + %s1632]]
    %v1634 = vstv %s1633
    %v1635 = vsel %vm1628, %v1634, %v1610
    %v1636 = vsel %vm1629, %v1634, %v1611
    %v1637 = vsel %vm1630, %v1634, %v1612
    %v1638 = vsel %vm1631, %v1634, %v1613
    %s1639 = sadd.s32 %s969, 10
    %s1640 = sld [smem:[#allocation2 + %s1639]]
    %v1641 = vstv %s1640
    %v1642 = vsel %vm1628, %v1641, %v1617
    %v1643 = vsel %vm1629, %v1641, %v1618
    %v1644 = vsel %vm1630, %v1641, %v1619
    %v1645 = vsel %vm1631, %v1641, %v1620
    %s1646 = sadd.s32 %s969, 11
    %s1647 = sld [smem:[#allocation2 + %s1646]]
    %v1648 = vstv %s1647
    %v1649 = vsel %vm1628, %v1648, %v1624
    %v1650 = vsel %vm1629, %v1648, %v1625
    %v1651 = vsel %vm1630, %v1648, %v1626
    %v1652 = vsel %vm1631, %v1648, %v1627
    %vm1653 = vcmp.eq.s32.totalorder %v1420, 9
    %vm1654 = vcmp.eq.s32.totalorder %v1421, 9
    %vm1655 = vcmp.eq.s32.totalorder %v1422, 9
    %vm1656 = vcmp.eq.s32.totalorder %v1423, 9
    %s1657 = sadd.s32 %s1084, 9
    %s1658 = sld [smem:[#allocation2 + %s1657]]
    %v1659 = vstv %s1658
    %v1660 = vsel %vm1653, %v1659, %v1635
    %v1661 = vsel %vm1654, %v1659, %v1636
    %v1662 = vsel %vm1655, %v1659, %v1637
    %v1663 = vsel %vm1656, %v1659, %v1638
    %s1664 = sadd.s32 %s1084, 10
    %s1665 = sld [smem:[#allocation2 + %s1664]]
    %v1666 = vstv %s1665
    %v1667 = vsel %vm1653, %v1666, %v1642
    %v1668 = vsel %vm1654, %v1666, %v1643
    %v1669 = vsel %vm1655, %v1666, %v1644
    %v1670 = vsel %vm1656, %v1666, %v1645
    %s1671 = sadd.s32 %s1084, 11
    %s1672 = sld [smem:[#allocation2 + %s1671]]
    %v1673 = vstv %s1672
    %v1674 = vsel %vm1653, %v1673, %v1649
    %v1675 = vsel %vm1654, %v1673, %v1650
    %v1676 = vsel %vm1655, %v1673, %v1651
    %v1677 = vsel %vm1656, %v1673, %v1652
    %vm1678 = vcmp.eq.s32.totalorder %v1420, 10
    %vm1679 = vcmp.eq.s32.totalorder %v1421, 10
    %vm1680 = vcmp.eq.s32.totalorder %v1422, 10
    %vm1681 = vcmp.eq.s32.totalorder %v1423, 10
    %s1682 = sadd.s32 %s1199, 9
    %s1683 = sld [smem:[#allocation2 + %s1682]]
    %v1684 = vstv %s1683
    %v1685 = vsel %vm1678, %v1684, %v1660
    %v1686 = vsel %vm1679, %v1684, %v1661
    %v1687 = vsel %vm1680, %v1684, %v1662
    %v1688 = vsel %vm1681, %v1684, %v1663
    %s1689 = sadd.s32 %s1199, 10
    %s1690 = sld [smem:[#allocation2 + %s1689]]
    %v1691 = vstv %s1690
    %v1692 = vsel %vm1678, %v1691, %v1667
    %v1693 = vsel %vm1679, %v1691, %v1668
    %v1694 = vsel %vm1680, %v1691, %v1669
    %v1695 = vsel %vm1681, %v1691, %v1670
    %s1696 = sadd.s32 %s1199, 11
    %s1697 = sld [smem:[#allocation2 + %s1696]]
    %v1698 = vstv %s1697
    %v1699 = vsel %vm1678, %v1698, %v1674
    %v1700 = vsel %vm1679, %v1698, %v1675
    %v1701 = vsel %vm1680, %v1698, %v1676
    %v1702 = vsel %vm1681, %v1698, %v1677
    %vm1703 = vcmp.eq.s32.totalorder %v1420, 11
    %vm1704 = vcmp.eq.s32.totalorder %v1421, 11
    %vm1705 = vcmp.eq.s32.totalorder %v1422, 11
    %vm1706 = vcmp.eq.s32.totalorder %v1423, 11
    %s1707 = sadd.s32 %s1314, 9
    %s1708 = sld [smem:[#allocation2 + %s1707]]
    %v1709 = vstv %s1708
    %v1710 = vsel %vm1703, %v1709, %v1685
    %v1711 = vsel %vm1704, %v1709, %v1686
    %v1712 = vsel %vm1705, %v1709, %v1687
    %v1713 = vsel %vm1706, %v1709, %v1688
    %s1714 = sadd.s32 %s1314, 10
    %s1715 = sld [smem:[#allocation2 + %s1714]]
    %v1716 = vstv %s1715
    %v1717 = vsel %vm1703, %v1716, %v1692
    %v1718 = vsel %vm1704, %v1716, %v1693
    %v1719 = vsel %vm1705, %v1716, %v1694
    %v1720 = vsel %vm1706, %v1716, %v1695
    %s1721 = sadd.s32 %s1314, 11
    %s1722 = sld [smem:[#allocation2 + %s1721]]
    %v1723 = vstv %s1722
    %v1724 = vsel %vm1703, %v1723, %v1699
    %v1725 = vsel %vm1704, %v1723, %v1700
    %v1726 = vsel %vm1705, %v1723, %v1701
    %v1727 = vsel %vm1706, %v1723, %v1702
    %1728 = vst [vmem:[%s1] sm:$0xff] %v1710
    %1729 = vst [vmem:[%s1 + $0x8] sm:$0xff] %v1711
    %1730 = vst [vmem:[%s1 + $0x10] sm:$0xff] %v1712
    %1731 = vst [vmem:[%s1 + $0x18] sm:$0xff] %v1713
    %s1732 = scalar_lea.vmem %s1, 32
    %1733 = vst [vmem:[%s1732] sm:$0xff] %v1717
    %1734 = vst [vmem:[%s1732 + $0x8] sm:$0xff] %v1718
    %1735 = vst [vmem:[%s1732 + $0x10] sm:$0xff] %v1719
    %1736 = vst [vmem:[%s1732 + $0x18] sm:$0xff] %v1720
    %s1737 = scalar_lea.vmem %s1, 64
    %1738 = vst [vmem:[%s1737] sm:$0xff] %v1724
    %1739 = vst [vmem:[%s1737 + $0x8] sm:$0xff] %v1725
    %1740 = vst [vmem:[%s1737 + $0x10] sm:$0xff] %v1726
    %1741 = vst [vmem:[%s1737 + $0x18] sm:$0xff] %v1727
    %vm1742 = vcmp.gt.f32.partialorder %v1416, 5e+08
    %vm1743 = vcmp.gt.f32.partialorder %v1417, 5e+08
    %vm1744 = vcmp.gt.f32.partialorder %v1418, 5e+08
    %vm1745 = vcmp.gt.f32.partialorder %v1419, 5e+08
    %v1746 = vsel %vm1742, -1.0, %v1416
    %v1747 = vsel %vm1743, -1.0, %v1417
    %v1748 = vsel %vm1744, -1.0, %v1418
    %v1749 = vsel %vm1745, -1.0, %v1419
    %s1750 = scalar_lea.vmem %s1, 96
    %1751 = vst [vmem:[%s1750] sm:$0xff] %v1746
    %1752 = vst [vmem:[%s1750 + $0x8] sm:$0xff] %v1747
    %1753 = vst [vmem:[%s1750 + $0x10] sm:$0xff] %v1748
    %1754 = vst [vmem:[%s1750 + $0x18] sm:$0xff] %v1749
    %s1755 = scalar_lea.vmem %s1, 128
    %1756 = vst [vmem:[%s1755] sm:$0xff] %v1424
    %1757 = vst [vmem:[%s1755 + $0x8] sm:$0xff] %v1425
    %1758 = vst [vmem:[%s1755 + $0x10] sm:$0xff] %v1426
    %1759 = vst [vmem:[%s1755 + $0x18] sm:$0xff] %v1427
    %s1760 = smul.u32 0, 2
    %s1761 = sadd.s32 %s1760, 1
    %s1762 = smul.u32 %s1761, 144
    %s1763 = sld [smem:[#allocation2 + %s1762]]
    %s1764 = sadd.s32 %s1762, 1
    %s1765 = sld [smem:[#allocation2 + %s1764]]
    %s1766 = sadd.s32 %s1762, 2
    %s1767 = sld [smem:[#allocation2 + %s1766]]
    %s1768 = sadd.s32 %s1762, 3
    %s1769 = sld [smem:[#allocation2 + %s1768]]
    %s1770 = sadd.s32 %s1762, 4
    %s1771 = sld [smem:[#allocation2 + %s1770]]
    %s1772 = sadd.s32 %s1762, 5
    %s1773 = sld [smem:[#allocation2 + %s1772]]
    %s1774 = sadd.s32 %s1762, 6
    %s1775 = sld [smem:[#allocation2 + %s1774]]
    %s1776 = sadd.s32 %s1762, 7
    %s1777 = sld [smem:[#allocation2 + %s1776]]
    %s1778 = sadd.s32 %s1762, 8
    %s1779 = sld [smem:[#allocation2 + %s1778]]
    %v1780 = vstv %s1763
    %v1781 = vmul.f32 %v1780, %v39
    %v1782 = vstv %s1765
    %v1783 = vmul.f32 %v1782, %v44
    %v1784 = vmul.f32 %v1782, %v45
    %v1785 = vmul.f32 %v1782, %v46
    %v1786 = vmul.f32 %v1782, %v47
    %v1787 = vadd.f32 %v1781, %v1783
    %v1788 = vadd.f32 %v1781, %v1784
    %v1789 = vadd.f32 %v1781, %v1785
    %v1790 = vadd.f32 %v1781, %v1786
    %v1791 = vstv %s1767
    %v1792 = vadd.f32 %v1787, %v1791
    %v1793 = vadd.f32 %v1788, %v1791
    %v1794 = vadd.f32 %v1789, %v1791
    %v1795 = vadd.f32 %v1790, %v1791
    %v1796 = vstv %s1769
    %v1797 = vmul.f32 %v1796, %v39
    %v1798 = vstv %s1771
    %v1799 = vmul.f32 %v1798, %v44
    %v1800 = vmul.f32 %v1798, %v45
    %v1801 = vmul.f32 %v1798, %v46
    %v1802 = vmul.f32 %v1798, %v47
    %v1803 = vadd.f32 %v1797, %v1799
    %v1804 = vadd.f32 %v1797, %v1800
    %v1805 = vadd.f32 %v1797, %v1801
    %v1806 = vadd.f32 %v1797, %v1802
    %v1807 = vstv %s1773
    %v1808 = vadd.f32 %v1803, %v1807
    %v1809 = vadd.f32 %v1804, %v1807
    %v1810 = vadd.f32 %v1805, %v1807
    %v1811 = vadd.f32 %v1806, %v1807
    %v1812 = vsub.f32 1.0, %v1792
    %v1813 = vsub.f32 1.0, %v1793
    %v1814 = vsub.f32 1.0, %v1794
    %v1815 = vsub.f32 1.0, %v1795
    %v1816 = vsub.f32 %v1812, %v1808
    %v1817 = vsub.f32 %v1813, %v1809
    %v1818 = vsub.f32 %v1814, %v1810
    %v1819 = vsub.f32 %v1815, %v1811
    %v1820 = vstv %s1775
    %v1821 = vmul.f32 %v1820, %v39
    %v1822 = vstv %s1777
    %v1823 = vmul.f32 %v1822, %v44
    %v1824 = vmul.f32 %v1822, %v45
    %v1825 = vmul.f32 %v1822, %v46
    %v1826 = vmul.f32 %v1822, %v47
    %v1827 = vadd.f32 %v1821, %v1823
    %v1828 = vadd.f32 %v1821, %v1824
    %v1829 = vadd.f32 %v1821, %v1825
    %v1830 = vadd.f32 %v1821, %v1826
    %v1831 = vstv %s1779
    %v1832 = vadd.f32 %v1827, %v1831
    %v1833 = vadd.f32 %v1828, %v1831
    %v1834 = vadd.f32 %v1829, %v1831
    %v1835 = vadd.f32 %v1830, %v1831
    %vm1836 = vcmp.ge.f32.partialorder %v1792, 0.0
    %vm1837 = vcmp.ge.f32.partialorder %v1793, 0.0
    %vm1838 = vcmp.ge.f32.partialorder %v1794, 0.0
    %vm1839 = vcmp.ge.f32.partialorder %v1795, 0.0
    %vm1840 = vcmp.ge.f32.partialorder %v1808, 0.0
    %vm1841 = vcmp.ge.f32.partialorder %v1809, 0.0
    %vm1842 = vcmp.ge.f32.partialorder %v1810, 0.0
    %vm1843 = vcmp.ge.f32.partialorder %v1811, 0.0
    %vm1844 = vmand %vm1836, %vm1840
    %vm1845 = vmand %vm1837, %vm1841
    %vm1846 = vmand %vm1838, %vm1842
    %vm1847 = vmand %vm1839, %vm1843
    %vm1848 = vcmp.ge.f32.partialorder %v1816, 0.0
    %vm1849 = vcmp.ge.f32.partialorder %v1817, 0.0
    %vm1850 = vcmp.ge.f32.partialorder %v1818, 0.0
    %vm1851 = vcmp.ge.f32.partialorder %v1819, 0.0
    %vm1852 = vmand %vm1844, %vm1848
    %vm1853 = vmand %vm1845, %vm1849
    %vm1854 = vmand %vm1846, %vm1850
    %vm1855 = vmand %vm1847, %vm1851
    %vm1856 = vcmp.lt.f32.partialorder %v1832, 1e+09
    %vm1857 = vcmp.lt.f32.partialorder %v1833, 1e+09
    %vm1858 = vcmp.lt.f32.partialorder %v1834, 1e+09
    %vm1859 = vcmp.lt.f32.partialorder %v1835, 1e+09
    %vm1860 = vmand %vm1852, %vm1856
    %vm1861 = vmand %vm1853, %vm1857
    %vm1862 = vmand %vm1854, %vm1858
    %vm1863 = vmand %vm1855, %vm1859
    %v1864 = vsel %vm1860, %v1832, 1e+09
    %v1865 = vsel %vm1861, %v1833, 1e+09
    %v1866 = vsel %vm1862, %v1834, 1e+09
    %v1867 = vsel %vm1863, %v1835, 1e+09
    %v1868 = vsel %vm1860, 0, 4294967295
    %v1869 = vsel %vm1861, 0, 4294967295
    %v1870 = vsel %vm1862, 0, 4294967295
    %v1871 = vsel %vm1863, 0, 4294967295
    %v1872 = vsel %vm1852, 1.0, 0.0
    %v1873 = vsel %vm1853, 1.0, 0.0
    %v1874 = vsel %vm1854, 1.0, 0.0
    %v1875 = vsel %vm1855, 1.0, 0.0
    %s1876 = smul.u32 %s1761, 12
    %s1877 = sadd.s32 %s1876, 1
    %s1878 = smul.u32 %s1877, 12
    %s1879 = sld [smem:[#allocation2 + %s1878]]
    %s1880 = sadd.s32 %s1878, 1
    %s1881 = sld [smem:[#allocation2 + %s1880]]
    %s1882 = sadd.s32 %s1878, 2
    %s1883 = sld [smem:[#allocation2 + %s1882]]
    %s1884 = sadd.s32 %s1878, 3
    %s1885 = sld [smem:[#allocation2 + %s1884]]
    %s1886 = sadd.s32 %s1878, 4
    %s1887 = sld [smem:[#allocation2 + %s1886]]
    %s1888 = sadd.s32 %s1878, 5
    %s1889 = sld [smem:[#allocation2 + %s1888]]
    %s1890 = sadd.s32 %s1878, 6
    %s1891 = sld [smem:[#allocation2 + %s1890]]
    %s1892 = sadd.s32 %s1878, 7
    %s1893 = sld [smem:[#allocation2 + %s1892]]
    %s1894 = sadd.s32 %s1878, 8
    %s1895 = sld [smem:[#allocation2 + %s1894]]
    %v1896 = vstv %s1879
    %v1897 = vmul.f32 %v1896, %v39
    %v1898 = vstv %s1881
    %v1899 = vmul.f32 %v1898, %v44
    %v1900 = vmul.f32 %v1898, %v45
    %v1901 = vmul.f32 %v1898, %v46
    %v1902 = vmul.f32 %v1898, %v47
    %v1903 = vadd.f32 %v1897, %v1899
    %v1904 = vadd.f32 %v1897, %v1900
    %v1905 = vadd.f32 %v1897, %v1901
    %v1906 = vadd.f32 %v1897, %v1902
    %v1907 = vstv %s1883
    %v1908 = vadd.f32 %v1903, %v1907
    %v1909 = vadd.f32 %v1904, %v1907
    %v1910 = vadd.f32 %v1905, %v1907
    %v1911 = vadd.f32 %v1906, %v1907
    %v1912 = vstv %s1885
    %v1913 = vmul.f32 %v1912, %v39
    %v1914 = vstv %s1887
    %v1915 = vmul.f32 %v1914, %v44
    %v1916 = vmul.f32 %v1914, %v45
    %v1917 = vmul.f32 %v1914, %v46
    %v1918 = vmul.f32 %v1914, %v47
    %v1919 = vadd.f32 %v1913, %v1915
    %v1920 = vadd.f32 %v1913, %v1916
    %v1921 = vadd.f32 %v1913, %v1917
    %v1922 = vadd.f32 %v1913, %v1918
    %v1923 = vstv %s1889
    %v1924 = vadd.f32 %v1919, %v1923
    %v1925 = vadd.f32 %v1920, %v1923
    %v1926 = vadd.f32 %v1921, %v1923
    %v1927 = vadd.f32 %v1922, %v1923
    %v1928 = vsub.f32 1.0, %v1908
    %v1929 = vsub.f32 1.0, %v1909
    %v1930 = vsub.f32 1.0, %v1910
    %v1931 = vsub.f32 1.0, %v1911
    %v1932 = vsub.f32 %v1928, %v1924
    %v1933 = vsub.f32 %v1929, %v1925
    %v1934 = vsub.f32 %v1930, %v1926
    %v1935 = vsub.f32 %v1931, %v1927
    %v1936 = vstv %s1891
    %v1937 = vmul.f32 %v1936, %v39
    %v1938 = vstv %s1893
    %v1939 = vmul.f32 %v1938, %v44
    %v1940 = vmul.f32 %v1938, %v45
    %v1941 = vmul.f32 %v1938, %v46
    %v1942 = vmul.f32 %v1938, %v47
    %v1943 = vadd.f32 %v1937, %v1939
    %v1944 = vadd.f32 %v1937, %v1940
    %v1945 = vadd.f32 %v1937, %v1941
    %v1946 = vadd.f32 %v1937, %v1942
    %v1947 = vstv %s1895
    %v1948 = vadd.f32 %v1943, %v1947
    %v1949 = vadd.f32 %v1944, %v1947
    %v1950 = vadd.f32 %v1945, %v1947
    %v1951 = vadd.f32 %v1946, %v1947
    %vm1952 = vcmp.ge.f32.partialorder %v1908, 0.0
    %vm1953 = vcmp.ge.f32.partialorder %v1909, 0.0
    %vm1954 = vcmp.ge.f32.partialorder %v1910, 0.0
    %vm1955 = vcmp.ge.f32.partialorder %v1911, 0.0
    %vm1956 = vcmp.ge.f32.partialorder %v1924, 0.0
    %vm1957 = vcmp.ge.f32.partialorder %v1925, 0.0
    %vm1958 = vcmp.ge.f32.partialorder %v1926, 0.0
    %vm1959 = vcmp.ge.f32.partialorder %v1927, 0.0
    %vm1960 = vmand %vm1952, %vm1956
    %vm1961 = vmand %vm1953, %vm1957
    %vm1962 = vmand %vm1954, %vm1958
    %vm1963 = vmand %vm1955, %vm1959
    %vm1964 = vcmp.ge.f32.partialorder %v1932, 0.0
    %vm1965 = vcmp.ge.f32.partialorder %v1933, 0.0
    %vm1966 = vcmp.ge.f32.partialorder %v1934, 0.0
    %vm1967 = vcmp.ge.f32.partialorder %v1935, 0.0
    %vm1968 = vmand %vm1960, %vm1964
    %vm1969 = vmand %vm1961, %vm1965
    %vm1970 = vmand %vm1962, %vm1966
    %vm1971 = vmand %vm1963, %vm1967
    %vm1972 = vcmp.lt.f32.partialorder %v1948, %v1864
    %vm1973 = vcmp.lt.f32.partialorder %v1949, %v1865
    %vm1974 = vcmp.lt.f32.partialorder %v1950, %v1866
    %vm1975 = vcmp.lt.f32.partialorder %v1951, %v1867
    %vm1976 = vmand %vm1968, %vm1972
    %vm1977 = vmand %vm1969, %vm1973
    %vm1978 = vmand %vm1970, %vm1974
    %vm1979 = vmand %vm1971, %vm1975
    %v1980 = vsel %vm1976, %v1948, %v1864
    %v1981 = vsel %vm1977, %v1949, %v1865
    %v1982 = vsel %vm1978, %v1950, %v1866
    %v1983 = vsel %vm1979, %v1951, %v1867
    %v1984 = vsel %vm1976, 1, %v1868
    %v1985 = vsel %vm1977, 1, %v1869
    %v1986 = vsel %vm1978, 1, %v1870
    %v1987 = vsel %vm1979, 1, %v1871
    %v1988 = vsel %vm1968, 1.0, %v1872
    %v1989 = vsel %vm1969, 1.0, %v1873
    %v1990 = vsel %vm1970, 1.0, %v1874
    %v1991 = vsel %vm1971, 1.0, %v1875
    %s1992 = sadd.s32 %s1876, 2
    %s1993 = smul.u32 %s1992, 12
    %s1994 = sld [smem:[#allocation2 + %s1993]]
    %s1995 = sadd.s32 %s1993, 1
    %s1996 = sld [smem:[#allocation2 + %s1995]]
    %s1997 = sadd.s32 %s1993, 2
    %s1998 = sld [smem:[#allocation2 + %s1997]]
    %s1999 = sadd.s32 %s1993, 3
    %s2000 = sld [smem:[#allocation2 + %s1999]]
    %s2001 = sadd.s32 %s1993, 4
    %s2002 = sld [smem:[#allocation2 + %s2001]]
    %s2003 = sadd.s32 %s1993, 5
    %s2004 = sld [smem:[#allocation2 + %s2003]]
    %s2005 = sadd.s32 %s1993, 6
    %s2006 = sld [smem:[#allocation2 + %s2005]]
    %s2007 = sadd.s32 %s1993, 7
    %s2008 = sld [smem:[#allocation2 + %s2007]]
    %s2009 = sadd.s32 %s1993, 8
    %s2010 = sld [smem:[#allocation2 + %s2009]]
    %v2011 = vstv %s1994
    %v2012 = vmul.f32 %v2011, %v39
    %v2013 = vstv %s1996
    %v2014 = vmul.f32 %v2013, %v44
    %v2015 = vmul.f32 %v2013, %v45
    %v2016 = vmul.f32 %v2013, %v46
    %v2017 = vmul.f32 %v2013, %v47
    %v2018 = vadd.f32 %v2012, %v2014
    %v2019 = vadd.f32 %v2012, %v2015
    %v2020 = vadd.f32 %v2012, %v2016
    %v2021 = vadd.f32 %v2012, %v2017
    %v2022 = vstv %s1998
    %v2023 = vadd.f32 %v2018, %v2022
    %v2024 = vadd.f32 %v2019, %v2022
    %v2025 = vadd.f32 %v2020, %v2022
    %v2026 = vadd.f32 %v2021, %v2022
    %v2027 = vstv %s2000
    %v2028 = vmul.f32 %v2027, %v39
    %v2029 = vstv %s2002
    %v2030 = vmul.f32 %v2029, %v44
    %v2031 = vmul.f32 %v2029, %v45
    %v2032 = vmul.f32 %v2029, %v46
    %v2033 = vmul.f32 %v2029, %v47
    %v2034 = vadd.f32 %v2028, %v2030
    %v2035 = vadd.f32 %v2028, %v2031
    %v2036 = vadd.f32 %v2028, %v2032
    %v2037 = vadd.f32 %v2028, %v2033
    %v2038 = vstv %s2004
    %v2039 = vadd.f32 %v2034, %v2038
    %v2040 = vadd.f32 %v2035, %v2038
    %v2041 = vadd.f32 %v2036, %v2038
    %v2042 = vadd.f32 %v2037, %v2038
    %v2043 = vsub.f32 1.0, %v2023
    %v2044 = vsub.f32 1.0, %v2024
    %v2045 = vsub.f32 1.0, %v2025
    %v2046 = vsub.f32 1.0, %v2026
    %v2047 = vsub.f32 %v2043, %v2039
    %v2048 = vsub.f32 %v2044, %v2040
    %v2049 = vsub.f32 %v2045, %v2041
    %v2050 = vsub.f32 %v2046, %v2042
    %v2051 = vstv %s2006
    %v2052 = vmul.f32 %v2051, %v39
    %v2053 = vstv %s2008
    %v2054 = vmul.f32 %v2053, %v44
    %v2055 = vmul.f32 %v2053, %v45
    %v2056 = vmul.f32 %v2053, %v46
    %v2057 = vmul.f32 %v2053, %v47
    %v2058 = vadd.f32 %v2052, %v2054
    %v2059 = vadd.f32 %v2052, %v2055
    %v2060 = vadd.f32 %v2052, %v2056
    %v2061 = vadd.f32 %v2052, %v2057
    %v2062 = vstv %s2010
    %v2063 = vadd.f32 %v2058, %v2062
    %v2064 = vadd.f32 %v2059, %v2062
    %v2065 = vadd.f32 %v2060, %v2062
    %v2066 = vadd.f32 %v2061, %v2062
    %vm2067 = vcmp.ge.f32.partialorder %v2023, 0.0
    %vm2068 = vcmp.ge.f32.partialorder %v2024, 0.0
    %vm2069 = vcmp.ge.f32.partialorder %v2025, 0.0
    %vm2070 = vcmp.ge.f32.partialorder %v2026, 0.0
    %vm2071 = vcmp.ge.f32.partialorder %v2039, 0.0
    %vm2072 = vcmp.ge.f32.partialorder %v2040, 0.0
    %vm2073 = vcmp.ge.f32.partialorder %v2041, 0.0
    %vm2074 = vcmp.ge.f32.partialorder %v2042, 0.0
    %vm2075 = vmand %vm2067, %vm2071
    %vm2076 = vmand %vm2068, %vm2072
    %vm2077 = vmand %vm2069, %vm2073
    %vm2078 = vmand %vm2070, %vm2074
    %vm2079 = vcmp.ge.f32.partialorder %v2047, 0.0
    %vm2080 = vcmp.ge.f32.partialorder %v2048, 0.0
    %vm2081 = vcmp.ge.f32.partialorder %v2049, 0.0
    %vm2082 = vcmp.ge.f32.partialorder %v2050, 0.0
    %vm2083 = vmand %vm2075, %vm2079
    %vm2084 = vmand %vm2076, %vm2080
    %vm2085 = vmand %vm2077, %vm2081
    %vm2086 = vmand %vm2078, %vm2082
    %vm2087 = vcmp.lt.f32.partialorder %v2063, %v1980
    %vm2088 = vcmp.lt.f32.partialorder %v2064, %v1981
    %vm2089 = vcmp.lt.f32.partialorder %v2065, %v1982
    %vm2090 = vcmp.lt.f32.partialorder %v2066, %v1983
    %vm2091 = vmand %vm2083, %vm2087
    %vm2092 = vmand %vm2084, %vm2088
    %vm2093 = vmand %vm2085, %vm2089
    %vm2094 = vmand %vm2086, %vm2090
    %v2095 = vsel %vm2091, %v2063, %v1980
    %v2096 = vsel %vm2092, %v2064, %v1981
    %v2097 = vsel %vm2093, %v2065, %v1982
    %v2098 = vsel %vm2094, %v2066, %v1983
    %v2099 = vsel %vm2091, 2, %v1984
    %v2100 = vsel %vm2092, 2, %v1985
    %v2101 = vsel %vm2093, 2, %v1986
    %v2102 = vsel %vm2094, 2, %v1987
    %v2103 = vsel %vm2083, 1.0, %v1988
    %v2104 = vsel %vm2084, 1.0, %v1989
    %v2105 = vsel %vm2085, 1.0, %v1990
    %v2106 = vsel %vm2086, 1.0, %v1991
    %s2107 = sadd.s32 %s1876, 3
    %s2108 = smul.u32 %s2107, 12
    %s2109 = sld [smem:[#allocation2 + %s2108]]
    %s2110 = sadd.s32 %s2108, 1
    %s2111 = sld [smem:[#allocation2 + %s2110]]
    %s2112 = sadd.s32 %s2108, 2
    %s2113 = sld [smem:[#allocation2 + %s2112]]
    %s2114 = sadd.s32 %s2108, 3
    %s2115 = sld [smem:[#allocation2 + %s2114]]
    %s2116 = sadd.s32 %s2108, 4
    %s2117 = sld [smem:[#allocation2 + %s2116]]
    %s2118 = sadd.s32 %s2108, 5
    %s2119 = sld [smem:[#allocation2 + %s2118]]
    %s2120 = sadd.s32 %s2108, 6
    %s2121 = sld [smem:[#allocation2 + %s2120]]
    %s2122 = sadd.s32 %s2108, 7
    %s2123 = sld [smem:[#allocation2 + %s2122]]
    %s2124 = sadd.s32 %s2108, 8
    %s2125 = sld [smem:[#allocation2 + %s2124]]
    %v2126 = vstv %s2109
    %v2127 = vmul.f32 %v2126, %v39
    %v2128 = vstv %s2111
    %v2129 = vmul.f32 %v2128, %v44
    %v2130 = vmul.f32 %v2128, %v45
    %v2131 = vmul.f32 %v2128, %v46
    %v2132 = vmul.f32 %v2128, %v47
    %v2133 = vadd.f32 %v2127, %v2129
    %v2134 = vadd.f32 %v2127, %v2130
    %v2135 = vadd.f32 %v2127, %v2131
    %v2136 = vadd.f32 %v2127, %v2132
    %v2137 = vstv %s2113
    %v2138 = vadd.f32 %v2133, %v2137
    %v2139 = vadd.f32 %v2134, %v2137
    %v2140 = vadd.f32 %v2135, %v2137
    %v2141 = vadd.f32 %v2136, %v2137
    %v2142 = vstv %s2115
    %v2143 = vmul.f32 %v2142, %v39
    %v2144 = vstv %s2117
    %v2145 = vmul.f32 %v2144, %v44
    %v2146 = vmul.f32 %v2144, %v45
    %v2147 = vmul.f32 %v2144, %v46
    %v2148 = vmul.f32 %v2144, %v47
    %v2149 = vadd.f32 %v2143, %v2145
    %v2150 = vadd.f32 %v2143, %v2146
    %v2151 = vadd.f32 %v2143, %v2147
    %v2152 = vadd.f32 %v2143, %v2148
    %v2153 = vstv %s2119
    %v2154 = vadd.f32 %v2149, %v2153
    %v2155 = vadd.f32 %v2150, %v2153
    %v2156 = vadd.f32 %v2151, %v2153
    %v2157 = vadd.f32 %v2152, %v2153
    %v2158 = vsub.f32 1.0, %v2138
    %v2159 = vsub.f32 1.0, %v2139
    %v2160 = vsub.f32 1.0, %v2140
    %v2161 = vsub.f32 1.0, %v2141
    %v2162 = vsub.f32 %v2158, %v2154
    %v2163 = vsub.f32 %v2159, %v2155
    %v2164 = vsub.f32 %v2160, %v2156
    %v2165 = vsub.f32 %v2161, %v2157
    %v2166 = vstv %s2121
    %v2167 = vmul.f32 %v2166, %v39
    %v2168 = vstv %s2123
    %v2169 = vmul.f32 %v2168, %v44
    %v2170 = vmul.f32 %v2168, %v45
    %v2171 = vmul.f32 %v2168, %v46
    %v2172 = vmul.f32 %v2168, %v47
    %v2173 = vadd.f32 %v2167, %v2169
    %v2174 = vadd.f32 %v2167, %v2170
    %v2175 = vadd.f32 %v2167, %v2171
    %v2176 = vadd.f32 %v2167, %v2172
    %v2177 = vstv %s2125
    %v2178 = vadd.f32 %v2173, %v2177
    %v2179 = vadd.f32 %v2174, %v2177
    %v2180 = vadd.f32 %v2175, %v2177
    %v2181 = vadd.f32 %v2176, %v2177
    %vm2182 = vcmp.ge.f32.partialorder %v2138, 0.0
    %vm2183 = vcmp.ge.f32.partialorder %v2139, 0.0
    %vm2184 = vcmp.ge.f32.partialorder %v2140, 0.0
    %vm2185 = vcmp.ge.f32.partialorder %v2141, 0.0
    %vm2186 = vcmp.ge.f32.partialorder %v2154, 0.0
    %vm2187 = vcmp.ge.f32.partialorder %v2155, 0.0
    %vm2188 = vcmp.ge.f32.partialorder %v2156, 0.0
    %vm2189 = vcmp.ge.f32.partialorder %v2157, 0.0
    %vm2190 = vmand %vm2182, %vm2186
    %vm2191 = vmand %vm2183, %vm2187
    %vm2192 = vmand %vm2184, %vm2188
    %vm2193 = vmand %vm2185, %vm2189
    %vm2194 = vcmp.ge.f32.partialorder %v2162, 0.0
    %vm2195 = vcmp.ge.f32.partialorder %v2163, 0.0
    %vm2196 = vcmp.ge.f32.partialorder %v2164, 0.0
    %vm2197 = vcmp.ge.f32.partialorder %v2165, 0.0
    %vm2198 = vmand %vm2190, %vm2194
    %vm2199 = vmand %vm2191, %vm2195
    %vm2200 = vmand %vm2192, %vm2196
    %vm2201 = vmand %vm2193, %vm2197
    %vm2202 = vcmp.lt.f32.partialorder %v2178, %v2095
    %vm2203 = vcmp.lt.f32.partialorder %v2179, %v2096
    %vm2204 = vcmp.lt.f32.partialorder %v2180, %v2097
    %vm2205 = vcmp.lt.f32.partialorder %v2181, %v2098
    %vm2206 = vmand %vm2198, %vm2202
    %vm2207 = vmand %vm2199, %vm2203
    %vm2208 = vmand %vm2200, %vm2204
    %vm2209 = vmand %vm2201, %vm2205
    %v2210 = vsel %vm2206, %v2178, %v2095
    %v2211 = vsel %vm2207, %v2179, %v2096
    %v2212 = vsel %vm2208, %v2180, %v2097
    %v2213 = vsel %vm2209, %v2181, %v2098
    %v2214 = vsel %vm2206, 3, %v2099
    %v2215 = vsel %vm2207, 3, %v2100
    %v2216 = vsel %vm2208, 3, %v2101
    %v2217 = vsel %vm2209, 3, %v2102
    %v2218 = vsel %vm2198, 1.0, %v2103
    %v2219 = vsel %vm2199, 1.0, %v2104
    %v2220 = vsel %vm2200, 1.0, %v2105
    %v2221 = vsel %vm2201, 1.0, %v2106
    %s2222 = sadd.s32 %s1876, 4
    %s2223 = smul.u32 %s2222, 12
    %s2224 = sld [smem:[#allocation2 + %s2223]]
    %s2225 = sadd.s32 %s2223, 1
    %s2226 = sld [smem:[#allocation2 + %s2225]]
    %s2227 = sadd.s32 %s2223, 2
    %s2228 = sld [smem:[#allocation2 + %s2227]]
    %s2229 = sadd.s32 %s2223, 3
    %s2230 = sld [smem:[#allocation2 + %s2229]]
    %s2231 = sadd.s32 %s2223, 4
    %s2232 = sld [smem:[#allocation2 + %s2231]]
    %s2233 = sadd.s32 %s2223, 5
    %s2234 = sld [smem:[#allocation2 + %s2233]]
    %s2235 = sadd.s32 %s2223, 6
    %s2236 = sld [smem:[#allocation2 + %s2235]]
    %s2237 = sadd.s32 %s2223, 7
    %s2238 = sld [smem:[#allocation2 + %s2237]]
    %s2239 = sadd.s32 %s2223, 8
    %s2240 = sld [smem:[#allocation2 + %s2239]]
    %v2241 = vstv %s2224
    %v2242 = vmul.f32 %v2241, %v39
    %v2243 = vstv %s2226
    %v2244 = vmul.f32 %v2243, %v44
    %v2245 = vmul.f32 %v2243, %v45
    %v2246 = vmul.f32 %v2243, %v46
    %v2247 = vmul.f32 %v2243, %v47
    %v2248 = vadd.f32 %v2242, %v2244
    %v2249 = vadd.f32 %v2242, %v2245
    %v2250 = vadd.f32 %v2242, %v2246
    %v2251 = vadd.f32 %v2242, %v2247
    %v2252 = vstv %s2228
    %v2253 = vadd.f32 %v2248, %v2252
    %v2254 = vadd.f32 %v2249, %v2252
    %v2255 = vadd.f32 %v2250, %v2252
    %v2256 = vadd.f32 %v2251, %v2252
    %v2257 = vstv %s2230
    %v2258 = vmul.f32 %v2257, %v39
    %v2259 = vstv %s2232
    %v2260 = vmul.f32 %v2259, %v44
    %v2261 = vmul.f32 %v2259, %v45
    %v2262 = vmul.f32 %v2259, %v46
    %v2263 = vmul.f32 %v2259, %v47
    %v2264 = vadd.f32 %v2258, %v2260
    %v2265 = vadd.f32 %v2258, %v2261
    %v2266 = vadd.f32 %v2258, %v2262
    %v2267 = vadd.f32 %v2258, %v2263
    %v2268 = vstv %s2234
    %v2269 = vadd.f32 %v2264, %v2268
    %v2270 = vadd.f32 %v2265, %v2268
    %v2271 = vadd.f32 %v2266, %v2268
    %v2272 = vadd.f32 %v2267, %v2268
    %v2273 = vsub.f32 1.0, %v2253
    %v2274 = vsub.f32 1.0, %v2254
    %v2275 = vsub.f32 1.0, %v2255
    %v2276 = vsub.f32 1.0, %v2256
    %v2277 = vsub.f32 %v2273, %v2269
    %v2278 = vsub.f32 %v2274, %v2270
    %v2279 = vsub.f32 %v2275, %v2271
    %v2280 = vsub.f32 %v2276, %v2272
    %v2281 = vstv %s2236
    %v2282 = vmul.f32 %v2281, %v39
    %v2283 = vstv %s2238
    %v2284 = vmul.f32 %v2283, %v44
    %v2285 = vmul.f32 %v2283, %v45
    %v2286 = vmul.f32 %v2283, %v46
    %v2287 = vmul.f32 %v2283, %v47
    %v2288 = vadd.f32 %v2282, %v2284
    %v2289 = vadd.f32 %v2282, %v2285
    %v2290 = vadd.f32 %v2282, %v2286
    %v2291 = vadd.f32 %v2282, %v2287
    %v2292 = vstv %s2240
    %v2293 = vadd.f32 %v2288, %v2292
    %v2294 = vadd.f32 %v2289, %v2292
    %v2295 = vadd.f32 %v2290, %v2292
    %v2296 = vadd.f32 %v2291, %v2292
    %vm2297 = vcmp.ge.f32.partialorder %v2253, 0.0
    %vm2298 = vcmp.ge.f32.partialorder %v2254, 0.0
    %vm2299 = vcmp.ge.f32.partialorder %v2255, 0.0
    %vm2300 = vcmp.ge.f32.partialorder %v2256, 0.0
    %vm2301 = vcmp.ge.f32.partialorder %v2269, 0.0
    %vm2302 = vcmp.ge.f32.partialorder %v2270, 0.0
    %vm2303 = vcmp.ge.f32.partialorder %v2271, 0.0
    %vm2304 = vcmp.ge.f32.partialorder %v2272, 0.0
    %vm2305 = vmand %vm2297, %vm2301
    %vm2306 = vmand %vm2298, %vm2302
    %vm2307 = vmand %vm2299, %vm2303
    %vm2308 = vmand %vm2300, %vm2304
    %vm2309 = vcmp.ge.f32.partialorder %v2277, 0.0
    %vm2310 = vcmp.ge.f32.partialorder %v2278, 0.0
    %vm2311 = vcmp.ge.f32.partialorder %v2279, 0.0
    %vm2312 = vcmp.ge.f32.partialorder %v2280, 0.0
    %vm2313 = vmand %vm2305, %vm2309
    %vm2314 = vmand %vm2306, %vm2310
    %vm2315 = vmand %vm2307, %vm2311
    %vm2316 = vmand %vm2308, %vm2312
    %vm2317 = vcmp.lt.f32.partialorder %v2293, %v2210
    %vm2318 = vcmp.lt.f32.partialorder %v2294, %v2211
    %vm2319 = vcmp.lt.f32.partialorder %v2295, %v2212
    %vm2320 = vcmp.lt.f32.partialorder %v2296, %v2213
    %vm2321 = vmand %vm2313, %vm2317
    %vm2322 = vmand %vm2314, %vm2318
    %vm2323 = vmand %vm2315, %vm2319
    %vm2324 = vmand %vm2316, %vm2320
    %v2325 = vsel %vm2321, %v2293, %v2210
    %v2326 = vsel %vm2322, %v2294, %v2211
    %v2327 = vsel %vm2323, %v2295, %v2212
    %v2328 = vsel %vm2324, %v2296, %v2213
    %v2329 = vsel %vm2321, 4, %v2214
    %v2330 = vsel %vm2322, 4, %v2215
    %v2331 = vsel %vm2323, 4, %v2216
    %v2332 = vsel %vm2324, 4, %v2217
    %v2333 = vsel %vm2313, 1.0, %v2218
    %v2334 = vsel %vm2314, 1.0, %v2219
    %v2335 = vsel %vm2315, 1.0, %v2220
    %v2336 = vsel %vm2316, 1.0, %v2221
    %s2337 = sadd.s32 %s1876, 5
    %s2338 = smul.u32 %s2337, 12
    %s2339 = sld [smem:[#allocation2 + %s2338]]
    %s2340 = sadd.s32 %s2338, 1
    %s2341 = sld [smem:[#allocation2 + %s2340]]
    %s2342 = sadd.s32 %s2338, 2
    %s2343 = sld [smem:[#allocation2 + %s2342]]
    %s2344 = sadd.s32 %s2338, 3
    %s2345 = sld [smem:[#allocation2 + %s2344]]
    %s2346 = sadd.s32 %s2338, 4
    %s2347 = sld [smem:[#allocation2 + %s2346]]
    %s2348 = sadd.s32 %s2338, 5
    %s2349 = sld [smem:[#allocation2 + %s2348]]
    %s2350 = sadd.s32 %s2338, 6
    %s2351 = sld [smem:[#allocation2 + %s2350]]
    %s2352 = sadd.s32 %s2338, 7
    %s2353 = sld [smem:[#allocation2 + %s2352]]
    %s2354 = sadd.s32 %s2338, 8
    %s2355 = sld [smem:[#allocation2 + %s2354]]
    %v2356 = vstv %s2339
    %v2357 = vmul.f32 %v2356, %v39
    %v2358 = vstv %s2341
    %v2359 = vmul.f32 %v2358, %v44
    %v2360 = vmul.f32 %v2358, %v45
    %v2361 = vmul.f32 %v2358, %v46
    %v2362 = vmul.f32 %v2358, %v47
    %v2363 = vadd.f32 %v2357, %v2359
    %v2364 = vadd.f32 %v2357, %v2360
    %v2365 = vadd.f32 %v2357, %v2361
    %v2366 = vadd.f32 %v2357, %v2362
    %v2367 = vstv %s2343
    %v2368 = vadd.f32 %v2363, %v2367
    %v2369 = vadd.f32 %v2364, %v2367
    %v2370 = vadd.f32 %v2365, %v2367
    %v2371 = vadd.f32 %v2366, %v2367
    %v2372 = vstv %s2345
    %v2373 = vmul.f32 %v2372, %v39
    %v2374 = vstv %s2347
    %v2375 = vmul.f32 %v2374, %v44
    %v2376 = vmul.f32 %v2374, %v45
    %v2377 = vmul.f32 %v2374, %v46
    %v2378 = vmul.f32 %v2374, %v47
    %v2379 = vadd.f32 %v2373, %v2375
    %v2380 = vadd.f32 %v2373, %v2376
    %v2381 = vadd.f32 %v2373, %v2377
    %v2382 = vadd.f32 %v2373, %v2378
    %v2383 = vstv %s2349
    %v2384 = vadd.f32 %v2379, %v2383
    %v2385 = vadd.f32 %v2380, %v2383
    %v2386 = vadd.f32 %v2381, %v2383
    %v2387 = vadd.f32 %v2382, %v2383
    %v2388 = vsub.f32 1.0, %v2368
    %v2389 = vsub.f32 1.0, %v2369
    %v2390 = vsub.f32 1.0, %v2370
    %v2391 = vsub.f32 1.0, %v2371
    %v2392 = vsub.f32 %v2388, %v2384
    %v2393 = vsub.f32 %v2389, %v2385
    %v2394 = vsub.f32 %v2390, %v2386
    %v2395 = vsub.f32 %v2391, %v2387
    %v2396 = vstv %s2351
    %v2397 = vmul.f32 %v2396, %v39
    %v2398 = vstv %s2353
    %v2399 = vmul.f32 %v2398, %v44
    %v2400 = vmul.f32 %v2398, %v45
    %v2401 = vmul.f32 %v2398, %v46
    %v2402 = vmul.f32 %v2398, %v47
    %v2403 = vadd.f32 %v2397, %v2399
    %v2404 = vadd.f32 %v2397, %v2400
    %v2405 = vadd.f32 %v2397, %v2401
    %v2406 = vadd.f32 %v2397, %v2402
    %v2407 = vstv %s2355
    %v2408 = vadd.f32 %v2403, %v2407
    %v2409 = vadd.f32 %v2404, %v2407
    %v2410 = vadd.f32 %v2405, %v2407
    %v2411 = vadd.f32 %v2406, %v2407
    %vm2412 = vcmp.ge.f32.partialorder %v2368, 0.0
    %vm2413 = vcmp.ge.f32.partialorder %v2369, 0.0
    %vm2414 = vcmp.ge.f32.partialorder %v2370, 0.0
    %vm2415 = vcmp.ge.f32.partialorder %v2371, 0.0
    %vm2416 = vcmp.ge.f32.partialorder %v2384, 0.0
    %vm2417 = vcmp.ge.f32.partialorder %v2385, 0.0
    %vm2418 = vcmp.ge.f32.partialorder %v2386, 0.0
    %vm2419 = vcmp.ge.f32.partialorder %v2387, 0.0
    %vm2420 = vmand %vm2412, %vm2416
    %vm2421 = vmand %vm2413, %vm2417
    %vm2422 = vmand %vm2414, %vm2418
    %vm2423 = vmand %vm2415, %vm2419
    %vm2424 = vcmp.ge.f32.partialorder %v2392, 0.0
    %vm2425 = vcmp.ge.f32.partialorder %v2393, 0.0
    %vm2426 = vcmp.ge.f32.partialorder %v2394, 0.0
    %vm2427 = vcmp.ge.f32.partialorder %v2395, 0.0
    %vm2428 = vmand %vm2420, %vm2424
    %vm2429 = vmand %vm2421, %vm2425
    %vm2430 = vmand %vm2422, %vm2426
    %vm2431 = vmand %vm2423, %vm2427
    %vm2432 = vcmp.lt.f32.partialorder %v2408, %v2325
    %vm2433 = vcmp.lt.f32.partialorder %v2409, %v2326
    %vm2434 = vcmp.lt.f32.partialorder %v2410, %v2327
    %vm2435 = vcmp.lt.f32.partialorder %v2411, %v2328
    %vm2436 = vmand %vm2428, %vm2432
    %vm2437 = vmand %vm2429, %vm2433
    %vm2438 = vmand %vm2430, %vm2434
    %vm2439 = vmand %vm2431, %vm2435
    %v2440 = vsel %vm2436, %v2408, %v2325
    %v2441 = vsel %vm2437, %v2409, %v2326
    %v2442 = vsel %vm2438, %v2410, %v2327
    %v2443 = vsel %vm2439, %v2411, %v2328
    %v2444 = vsel %vm2436, 5, %v2329
    %v2445 = vsel %vm2437, 5, %v2330
    %v2446 = vsel %vm2438, 5, %v2331
    %v2447 = vsel %vm2439, 5, %v2332
    %v2448 = vsel %vm2428, 1.0, %v2333
    %v2449 = vsel %vm2429, 1.0, %v2334
    %v2450 = vsel %vm2430, 1.0, %v2335
    %v2451 = vsel %vm2431, 1.0, %v2336
    %s2452 = sadd.s32 %s1876, 6
    %s2453 = smul.u32 %s2452, 12
    %s2454 = sld [smem:[#allocation2 + %s2453]]
    %s2455 = sadd.s32 %s2453, 1
    %s2456 = sld [smem:[#allocation2 + %s2455]]
    %s2457 = sadd.s32 %s2453, 2
    %s2458 = sld [smem:[#allocation2 + %s2457]]
    %s2459 = sadd.s32 %s2453, 3
    %s2460 = sld [smem:[#allocation2 + %s2459]]
    %s2461 = sadd.s32 %s2453, 4
    %s2462 = sld [smem:[#allocation2 + %s2461]]
    %s2463 = sadd.s32 %s2453, 5
    %s2464 = sld [smem:[#allocation2 + %s2463]]
    %s2465 = sadd.s32 %s2453, 6
    %s2466 = sld [smem:[#allocation2 + %s2465]]
    %s2467 = sadd.s32 %s2453, 7
    %s2468 = sld [smem:[#allocation2 + %s2467]]
    %s2469 = sadd.s32 %s2453, 8
    %s2470 = sld [smem:[#allocation2 + %s2469]]
    %v2471 = vstv %s2454
    %v2472 = vmul.f32 %v2471, %v39
    %v2473 = vstv %s2456
    %v2474 = vmul.f32 %v2473, %v44
    %v2475 = vmul.f32 %v2473, %v45
    %v2476 = vmul.f32 %v2473, %v46
    %v2477 = vmul.f32 %v2473, %v47
    %v2478 = vadd.f32 %v2472, %v2474
    %v2479 = vadd.f32 %v2472, %v2475
    %v2480 = vadd.f32 %v2472, %v2476
    %v2481 = vadd.f32 %v2472, %v2477
    %v2482 = vstv %s2458
    %v2483 = vadd.f32 %v2478, %v2482
    %v2484 = vadd.f32 %v2479, %v2482
    %v2485 = vadd.f32 %v2480, %v2482
    %v2486 = vadd.f32 %v2481, %v2482
    %v2487 = vstv %s2460
    %v2488 = vmul.f32 %v2487, %v39
    %v2489 = vstv %s2462
    %v2490 = vmul.f32 %v2489, %v44
    %v2491 = vmul.f32 %v2489, %v45
    %v2492 = vmul.f32 %v2489, %v46
    %v2493 = vmul.f32 %v2489, %v47
    %v2494 = vadd.f32 %v2488, %v2490
    %v2495 = vadd.f32 %v2488, %v2491
    %v2496 = vadd.f32 %v2488, %v2492
    %v2497 = vadd.f32 %v2488, %v2493
    %v2498 = vstv %s2464
    %v2499 = vadd.f32 %v2494, %v2498
    %v2500 = vadd.f32 %v2495, %v2498
    %v2501 = vadd.f32 %v2496, %v2498
    %v2502 = vadd.f32 %v2497, %v2498
    %v2503 = vsub.f32 1.0, %v2483
    %v2504 = vsub.f32 1.0, %v2484
    %v2505 = vsub.f32 1.0, %v2485
    %v2506 = vsub.f32 1.0, %v2486
    %v2507 = vsub.f32 %v2503, %v2499
    %v2508 = vsub.f32 %v2504, %v2500
    %v2509 = vsub.f32 %v2505, %v2501
    %v2510 = vsub.f32 %v2506, %v2502
    %v2511 = vstv %s2466
    %v2512 = vmul.f32 %v2511, %v39
    %v2513 = vstv %s2468
    %v2514 = vmul.f32 %v2513, %v44
    %v2515 = vmul.f32 %v2513, %v45
    %v2516 = vmul.f32 %v2513, %v46
    %v2517 = vmul.f32 %v2513, %v47
    %v2518 = vadd.f32 %v2512, %v2514
    %v2519 = vadd.f32 %v2512, %v2515
    %v2520 = vadd.f32 %v2512, %v2516
    %v2521 = vadd.f32 %v2512, %v2517
    %v2522 = vstv %s2470
    %v2523 = vadd.f32 %v2518, %v2522
    %v2524 = vadd.f32 %v2519, %v2522
    %v2525 = vadd.f32 %v2520, %v2522
    %v2526 = vadd.f32 %v2521, %v2522
    %vm2527 = vcmp.ge.f32.partialorder %v2483, 0.0
    %vm2528 = vcmp.ge.f32.partialorder %v2484, 0.0
    %vm2529 = vcmp.ge.f32.partialorder %v2485, 0.0
    %vm2530 = vcmp.ge.f32.partialorder %v2486, 0.0
    %vm2531 = vcmp.ge.f32.partialorder %v2499, 0.0
    %vm2532 = vcmp.ge.f32.partialorder %v2500, 0.0
    %vm2533 = vcmp.ge.f32.partialorder %v2501, 0.0
    %vm2534 = vcmp.ge.f32.partialorder %v2502, 0.0
    %vm2535 = vmand %vm2527, %vm2531
    %vm2536 = vmand %vm2528, %vm2532
    %vm2537 = vmand %vm2529, %vm2533
    %vm2538 = vmand %vm2530, %vm2534
    %vm2539 = vcmp.ge.f32.partialorder %v2507, 0.0
    %vm2540 = vcmp.ge.f32.partialorder %v2508, 0.0
    %vm2541 = vcmp.ge.f32.partialorder %v2509, 0.0
    %vm2542 = vcmp.ge.f32.partialorder %v2510, 0.0
    %vm2543 = vmand %vm2535, %vm2539
    %vm2544 = vmand %vm2536, %vm2540
    %vm2545 = vmand %vm2537, %vm2541
    %vm2546 = vmand %vm2538, %vm2542
    %vm2547 = vcmp.lt.f32.partialorder %v2523, %v2440
    %vm2548 = vcmp.lt.f32.partialorder %v2524, %v2441
    %vm2549 = vcmp.lt.f32.partialorder %v2525, %v2442
    %vm2550 = vcmp.lt.f32.partialorder %v2526, %v2443
    %vm2551 = vmand %vm2543, %vm2547
    %vm2552 = vmand %vm2544, %vm2548
    %vm2553 = vmand %vm2545, %vm2549
    %vm2554 = vmand %vm2546, %vm2550
    %v2555 = vsel %vm2551, %v2523, %v2440
    %v2556 = vsel %vm2552, %v2524, %v2441
    %v2557 = vsel %vm2553, %v2525, %v2442
    %v2558 = vsel %vm2554, %v2526, %v2443
    %v2559 = vsel %vm2551, 6, %v2444
    %v2560 = vsel %vm2552, 6, %v2445
    %v2561 = vsel %vm2553, 6, %v2446
    %v2562 = vsel %vm2554, 6, %v2447
    %v2563 = vsel %vm2543, 1.0, %v2448
    %v2564 = vsel %vm2544, 1.0, %v2449
    %v2565 = vsel %vm2545, 1.0, %v2450
    %v2566 = vsel %vm2546, 1.0, %v2451
    %s2567 = sadd.s32 %s1876, 7
    %s2568 = smul.u32 %s2567, 12
    %s2569 = sld [smem:[#allocation2 + %s2568]]
    %s2570 = sadd.s32 %s2568, 1
    %s2571 = sld [smem:[#allocation2 + %s2570]]
    %s2572 = sadd.s32 %s2568, 2
    %s2573 = sld [smem:[#allocation2 + %s2572]]
    %s2574 = sadd.s32 %s2568, 3
    %s2575 = sld [smem:[#allocation2 + %s2574]]
    %s2576 = sadd.s32 %s2568, 4
    %s2577 = sld [smem:[#allocation2 + %s2576]]
    %s2578 = sadd.s32 %s2568, 5
    %s2579 = sld [smem:[#allocation2 + %s2578]]
    %s2580 = sadd.s32 %s2568, 6
    %s2581 = sld [smem:[#allocation2 + %s2580]]
    %s2582 = sadd.s32 %s2568, 7
    %s2583 = sld [smem:[#allocation2 + %s2582]]
    %s2584 = sadd.s32 %s2568, 8
    %s2585 = sld [smem:[#allocation2 + %s2584]]
    %v2586 = vstv %s2569
    %v2587 = vmul.f32 %v2586, %v39
    %v2588 = vstv %s2571
    %v2589 = vmul.f32 %v2588, %v44
    %v2590 = vmul.f32 %v2588, %v45
    %v2591 = vmul.f32 %v2588, %v46
    %v2592 = vmul.f32 %v2588, %v47
    %v2593 = vadd.f32 %v2587, %v2589
    %v2594 = vadd.f32 %v2587, %v2590
    %v2595 = vadd.f32 %v2587, %v2591
    %v2596 = vadd.f32 %v2587, %v2592
    %v2597 = vstv %s2573
    %v2598 = vadd.f32 %v2593, %v2597
    %v2599 = vadd.f32 %v2594, %v2597
    %v2600 = vadd.f32 %v2595, %v2597
    %v2601 = vadd.f32 %v2596, %v2597
    %v2602 = vstv %s2575
    %v2603 = vmul.f32 %v2602, %v39
    %v2604 = vstv %s2577
    %v2605 = vmul.f32 %v2604, %v44
    %v2606 = vmul.f32 %v2604, %v45
    %v2607 = vmul.f32 %v2604, %v46
    %v2608 = vmul.f32 %v2604, %v47
    %v2609 = vadd.f32 %v2603, %v2605
    %v2610 = vadd.f32 %v2603, %v2606
    %v2611 = vadd.f32 %v2603, %v2607
    %v2612 = vadd.f32 %v2603, %v2608
    %v2613 = vstv %s2579
    %v2614 = vadd.f32 %v2609, %v2613
    %v2615 = vadd.f32 %v2610, %v2613
    %v2616 = vadd.f32 %v2611, %v2613
    %v2617 = vadd.f32 %v2612, %v2613
    %v2618 = vsub.f32 1.0, %v2598
    %v2619 = vsub.f32 1.0, %v2599
    %v2620 = vsub.f32 1.0, %v2600
    %v2621 = vsub.f32 1.0, %v2601
    %v2622 = vsub.f32 %v2618, %v2614
    %v2623 = vsub.f32 %v2619, %v2615
    %v2624 = vsub.f32 %v2620, %v2616
    %v2625 = vsub.f32 %v2621, %v2617
    %v2626 = vstv %s2581
    %v2627 = vmul.f32 %v2626, %v39
    %v2628 = vstv %s2583
    %v2629 = vmul.f32 %v2628, %v44
    %v2630 = vmul.f32 %v2628, %v45
    %v2631 = vmul.f32 %v2628, %v46
    %v2632 = vmul.f32 %v2628, %v47
    %v2633 = vadd.f32 %v2627, %v2629
    %v2634 = vadd.f32 %v2627, %v2630
    %v2635 = vadd.f32 %v2627, %v2631
    %v2636 = vadd.f32 %v2627, %v2632
    %v2637 = vstv %s2585
    %v2638 = vadd.f32 %v2633, %v2637
    %v2639 = vadd.f32 %v2634, %v2637
    %v2640 = vadd.f32 %v2635, %v2637
    %v2641 = vadd.f32 %v2636, %v2637
    %vm2642 = vcmp.ge.f32.partialorder %v2598, 0.0
    %vm2643 = vcmp.ge.f32.partialorder %v2599, 0.0
    %vm2644 = vcmp.ge.f32.partialorder %v2600, 0.0
    %vm2645 = vcmp.ge.f32.partialorder %v2601, 0.0
    %vm2646 = vcmp.ge.f32.partialorder %v2614, 0.0
    %vm2647 = vcmp.ge.f32.partialorder %v2615, 0.0
    %vm2648 = vcmp.ge.f32.partialorder %v2616, 0.0
    %vm2649 = vcmp.ge.f32.partialorder %v2617, 0.0
    %vm2650 = vmand %vm2642, %vm2646
    %vm2651 = vmand %vm2643, %vm2647
    %vm2652 = vmand %vm2644, %vm2648
    %vm2653 = vmand %vm2645, %vm2649
    %vm2654 = vcmp.ge.f32.partialorder %v2622, 0.0
    %vm2655 = vcmp.ge.f32.partialorder %v2623, 0.0
    %vm2656 = vcmp.ge.f32.partialorder %v2624, 0.0
    %vm2657 = vcmp.ge.f32.partialorder %v2625, 0.0
    %vm2658 = vmand %vm2650, %vm2654
    %vm2659 = vmand %vm2651, %vm2655
    %vm2660 = vmand %vm2652, %vm2656
    %vm2661 = vmand %vm2653, %vm2657
    %vm2662 = vcmp.lt.f32.partialorder %v2638, %v2555
    %vm2663 = vcmp.lt.f32.partialorder %v2639, %v2556
    %vm2664 = vcmp.lt.f32.partialorder %v2640, %v2557
    %vm2665 = vcmp.lt.f32.partialorder %v2641, %v2558
    %vm2666 = vmand %vm2658, %vm2662
    %vm2667 = vmand %vm2659, %vm2663
    %vm2668 = vmand %vm2660, %vm2664
    %vm2669 = vmand %vm2661, %vm2665
    %v2670 = vsel %vm2666, %v2638, %v2555
    %v2671 = vsel %vm2667, %v2639, %v2556
    %v2672 = vsel %vm2668, %v2640, %v2557
    %v2673 = vsel %vm2669, %v2641, %v2558
    %v2674 = vsel %vm2666, 7, %v2559
    %v2675 = vsel %vm2667, 7, %v2560
    %v2676 = vsel %vm2668, 7, %v2561
    %v2677 = vsel %vm2669, 7, %v2562
    %v2678 = vsel %vm2658, 1.0, %v2563
    %v2679 = vsel %vm2659, 1.0, %v2564
    %v2680 = vsel %vm2660, 1.0, %v2565
    %v2681 = vsel %vm2661, 1.0, %v2566
    %s2682 = sadd.s32 %s1876, 8
    %s2683 = smul.u32 %s2682, 12
    %s2684 = sld [smem:[#allocation2 + %s2683]]
    %s2685 = sadd.s32 %s2683, 1
    %s2686 = sld [smem:[#allocation2 + %s2685]]
    %s2687 = sadd.s32 %s2683, 2
    %s2688 = sld [smem:[#allocation2 + %s2687]]
    %s2689 = sadd.s32 %s2683, 3
    %s2690 = sld [smem:[#allocation2 + %s2689]]
    %s2691 = sadd.s32 %s2683, 4
    %s2692 = sld [smem:[#allocation2 + %s2691]]
    %s2693 = sadd.s32 %s2683, 5
    %s2694 = sld [smem:[#allocation2 + %s2693]]
    %s2695 = sadd.s32 %s2683, 6
    %s2696 = sld [smem:[#allocation2 + %s2695]]
    %s2697 = sadd.s32 %s2683, 7
    %s2698 = sld [smem:[#allocation2 + %s2697]]
    %s2699 = sadd.s32 %s2683, 8
    %s2700 = sld [smem:[#allocation2 + %s2699]]
    %v2701 = vstv %s2684
    %v2702 = vmul.f32 %v2701, %v39
    %v2703 = vstv %s2686
    %v2704 = vmul.f32 %v2703, %v44
    %v2705 = vmul.f32 %v2703, %v45
    %v2706 = vmul.f32 %v2703, %v46
    %v2707 = vmul.f32 %v2703, %v47
    %v2708 = vadd.f32 %v2702, %v2704
    %v2709 = vadd.f32 %v2702, %v2705
    %v2710 = vadd.f32 %v2702, %v2706
    %v2711 = vadd.f32 %v2702, %v2707
    %v2712 = vstv %s2688
    %v2713 = vadd.f32 %v2708, %v2712
    %v2714 = vadd.f32 %v2709, %v2712
    %v2715 = vadd.f32 %v2710, %v2712
    %v2716 = vadd.f32 %v2711, %v2712
    %v2717 = vstv %s2690
    %v2718 = vmul.f32 %v2717, %v39
    %v2719 = vstv %s2692
    %v2720 = vmul.f32 %v2719, %v44
    %v2721 = vmul.f32 %v2719, %v45
    %v2722 = vmul.f32 %v2719, %v46
    %v2723 = vmul.f32 %v2719, %v47
    %v2724 = vadd.f32 %v2718, %v2720
    %v2725 = vadd.f32 %v2718, %v2721
    %v2726 = vadd.f32 %v2718, %v2722
    %v2727 = vadd.f32 %v2718, %v2723
    %v2728 = vstv %s2694
    %v2729 = vadd.f32 %v2724, %v2728
    %v2730 = vadd.f32 %v2725, %v2728
    %v2731 = vadd.f32 %v2726, %v2728
    %v2732 = vadd.f32 %v2727, %v2728
    %v2733 = vsub.f32 1.0, %v2713
    %v2734 = vsub.f32 1.0, %v2714
    %v2735 = vsub.f32 1.0, %v2715
    %v2736 = vsub.f32 1.0, %v2716
    %v2737 = vsub.f32 %v2733, %v2729
    %v2738 = vsub.f32 %v2734, %v2730
    %v2739 = vsub.f32 %v2735, %v2731
    %v2740 = vsub.f32 %v2736, %v2732
    %v2741 = vstv %s2696
    %v2742 = vmul.f32 %v2741, %v39
    %v2743 = vstv %s2698
    %v2744 = vmul.f32 %v2743, %v44
    %v2745 = vmul.f32 %v2743, %v45
    %v2746 = vmul.f32 %v2743, %v46
    %v2747 = vmul.f32 %v2743, %v47
    %v2748 = vadd.f32 %v2742, %v2744
    %v2749 = vadd.f32 %v2742, %v2745
    %v2750 = vadd.f32 %v2742, %v2746
    %v2751 = vadd.f32 %v2742, %v2747
    %v2752 = vstv %s2700
    %v2753 = vadd.f32 %v2748, %v2752
    %v2754 = vadd.f32 %v2749, %v2752
    %v2755 = vadd.f32 %v2750, %v2752
    %v2756 = vadd.f32 %v2751, %v2752
    %vm2757 = vcmp.ge.f32.partialorder %v2713, 0.0
    %vm2758 = vcmp.ge.f32.partialorder %v2714, 0.0
    %vm2759 = vcmp.ge.f32.partialorder %v2715, 0.0
    %vm2760 = vcmp.ge.f32.partialorder %v2716, 0.0
    %vm2761 = vcmp.ge.f32.partialorder %v2729, 0.0
    %vm2762 = vcmp.ge.f32.partialorder %v2730, 0.0
    %vm2763 = vcmp.ge.f32.partialorder %v2731, 0.0
    %vm2764 = vcmp.ge.f32.partialorder %v2732, 0.0
    %vm2765 = vmand %vm2757, %vm2761
    %vm2766 = vmand %vm2758, %vm2762
    %vm2767 = vmand %vm2759, %vm2763
    %vm2768 = vmand %vm2760, %vm2764
    %vm2769 = vcmp.ge.f32.partialorder %v2737, 0.0
    %vm2770 = vcmp.ge.f32.partialorder %v2738, 0.0
    %vm2771 = vcmp.ge.f32.partialorder %v2739, 0.0
    %vm2772 = vcmp.ge.f32.partialorder %v2740, 0.0
    %vm2773 = vmand %vm2765, %vm2769
    %vm2774 = vmand %vm2766, %vm2770
    %vm2775 = vmand %vm2767, %vm2771
    %vm2776 = vmand %vm2768, %vm2772
    %vm2777 = vcmp.lt.f32.partialorder %v2753, %v2670
    %vm2778 = vcmp.lt.f32.partialorder %v2754, %v2671
    %vm2779 = vcmp.lt.f32.partialorder %v2755, %v2672
    %vm2780 = vcmp.lt.f32.partialorder %v2756, %v2673
    %vm2781 = vmand %vm2773, %vm2777
    %vm2782 = vmand %vm2774, %vm2778
    %vm2783 = vmand %vm2775, %vm2779
    %vm2784 = vmand %vm2776, %vm2780
    %v2785 = vsel %vm2781, %v2753, %v2670
    %v2786 = vsel %vm2782, %v2754, %v2671
    %v2787 = vsel %vm2783, %v2755, %v2672
    %v2788 = vsel %vm2784, %v2756, %v2673
    %v2789 = vsel %vm2781, 8, %v2674
    %v2790 = vsel %vm2782, 8, %v2675
    %v2791 = vsel %vm2783, 8, %v2676
    %v2792 = vsel %vm2784, 8, %v2677
    %v2793 = vsel %vm2773, 1.0, %v2678
    %v2794 = vsel %vm2774, 1.0, %v2679
    %v2795 = vsel %vm2775, 1.0, %v2680
    %v2796 = vsel %vm2776, 1.0, %v2681
    %s2797 = sadd.s32 %s1876, 9
    %s2798 = smul.u32 %s2797, 12
    %s2799 = sld [smem:[#allocation2 + %s2798]]
    %s2800 = sadd.s32 %s2798, 1
    %s2801 = sld [smem:[#allocation2 + %s2800]]
    %s2802 = sadd.s32 %s2798, 2
    %s2803 = sld [smem:[#allocation2 + %s2802]]
    %s2804 = sadd.s32 %s2798, 3
    %s2805 = sld [smem:[#allocation2 + %s2804]]
    %s2806 = sadd.s32 %s2798, 4
    %s2807 = sld [smem:[#allocation2 + %s2806]]
    %s2808 = sadd.s32 %s2798, 5
    %s2809 = sld [smem:[#allocation2 + %s2808]]
    %s2810 = sadd.s32 %s2798, 6
    %s2811 = sld [smem:[#allocation2 + %s2810]]
    %s2812 = sadd.s32 %s2798, 7
    %s2813 = sld [smem:[#allocation2 + %s2812]]
    %s2814 = sadd.s32 %s2798, 8
    %s2815 = sld [smem:[#allocation2 + %s2814]]
    %v2816 = vstv %s2799
    %v2817 = vmul.f32 %v2816, %v39
    %v2818 = vstv %s2801
    %v2819 = vmul.f32 %v2818, %v44
    %v2820 = vmul.f32 %v2818, %v45
    %v2821 = vmul.f32 %v2818, %v46
    %v2822 = vmul.f32 %v2818, %v47
    %v2823 = vadd.f32 %v2817, %v2819
    %v2824 = vadd.f32 %v2817, %v2820
    %v2825 = vadd.f32 %v2817, %v2821
    %v2826 = vadd.f32 %v2817, %v2822
    %v2827 = vstv %s2803
    %v2828 = vadd.f32 %v2823, %v2827
    %v2829 = vadd.f32 %v2824, %v2827
    %v2830 = vadd.f32 %v2825, %v2827
    %v2831 = vadd.f32 %v2826, %v2827
    %v2832 = vstv %s2805
    %v2833 = vmul.f32 %v2832, %v39
    %v2834 = vstv %s2807
    %v2835 = vmul.f32 %v2834, %v44
    %v2836 = vmul.f32 %v2834, %v45
    %v2837 = vmul.f32 %v2834, %v46
    %v2838 = vmul.f32 %v2834, %v47
    %v2839 = vadd.f32 %v2833, %v2835
    %v2840 = vadd.f32 %v2833, %v2836
    %v2841 = vadd.f32 %v2833, %v2837
    %v2842 = vadd.f32 %v2833, %v2838
    %v2843 = vstv %s2809
    %v2844 = vadd.f32 %v2839, %v2843
    %v2845 = vadd.f32 %v2840, %v2843
    %v2846 = vadd.f32 %v2841, %v2843
    %v2847 = vadd.f32 %v2842, %v2843
    %v2848 = vsub.f32 1.0, %v2828
    %v2849 = vsub.f32 1.0, %v2829
    %v2850 = vsub.f32 1.0, %v2830
    %v2851 = vsub.f32 1.0, %v2831
    %v2852 = vsub.f32 %v2848, %v2844
    %v2853 = vsub.f32 %v2849, %v2845
    %v2854 = vsub.f32 %v2850, %v2846
    %v2855 = vsub.f32 %v2851, %v2847
    %v2856 = vstv %s2811
    %v2857 = vmul.f32 %v2856, %v39
    %v2858 = vstv %s2813
    %v2859 = vmul.f32 %v2858, %v44
    %v2860 = vmul.f32 %v2858, %v45
    %v2861 = vmul.f32 %v2858, %v46
    %v2862 = vmul.f32 %v2858, %v47
    %v2863 = vadd.f32 %v2857, %v2859
    %v2864 = vadd.f32 %v2857, %v2860
    %v2865 = vadd.f32 %v2857, %v2861
    %v2866 = vadd.f32 %v2857, %v2862
    %v2867 = vstv %s2815
    %v2868 = vadd.f32 %v2863, %v2867
    %v2869 = vadd.f32 %v2864, %v2867
    %v2870 = vadd.f32 %v2865, %v2867
    %v2871 = vadd.f32 %v2866, %v2867
    %vm2872 = vcmp.ge.f32.partialorder %v2828, 0.0
    %vm2873 = vcmp.ge.f32.partialorder %v2829, 0.0
    %vm2874 = vcmp.ge.f32.partialorder %v2830, 0.0
    %vm2875 = vcmp.ge.f32.partialorder %v2831, 0.0
    %vm2876 = vcmp.ge.f32.partialorder %v2844, 0.0
    %vm2877 = vcmp.ge.f32.partialorder %v2845, 0.0
    %vm2878 = vcmp.ge.f32.partialorder %v2846, 0.0
    %vm2879 = vcmp.ge.f32.partialorder %v2847, 0.0
    %vm2880 = vmand %vm2872, %vm2876
    %vm2881 = vmand %vm2873, %vm2877
    %vm2882 = vmand %vm2874, %vm2878
    %vm2883 = vmand %vm2875, %vm2879
    %vm2884 = vcmp.ge.f32.partialorder %v2852, 0.0
    %vm2885 = vcmp.ge.f32.partialorder %v2853, 0.0
    %vm2886 = vcmp.ge.f32.partialorder %v2854, 0.0
    %vm2887 = vcmp.ge.f32.partialorder %v2855, 0.0
    %vm2888 = vmand %vm2880, %vm2884
    %vm2889 = vmand %vm2881, %vm2885
    %vm2890 = vmand %vm2882, %vm2886
    %vm2891 = vmand %vm2883, %vm2887
    %vm2892 = vcmp.lt.f32.partialorder %v2868, %v2785
    %vm2893 = vcmp.lt.f32.partialorder %v2869, %v2786
    %vm2894 = vcmp.lt.f32.partialorder %v2870, %v2787
    %vm2895 = vcmp.lt.f32.partialorder %v2871, %v2788
    %vm2896 = vmand %vm2888, %vm2892
    %vm2897 = vmand %vm2889, %vm2893
    %vm2898 = vmand %vm2890, %vm2894
    %vm2899 = vmand %vm2891, %vm2895
    %v2900 = vsel %vm2896, %v2868, %v2785
    %v2901 = vsel %vm2897, %v2869, %v2786
    %v2902 = vsel %vm2898, %v2870, %v2787
    %v2903 = vsel %vm2899, %v2871, %v2788
    %v2904 = vsel %vm2896, 9, %v2789
    %v2905 = vsel %vm2897, 9, %v2790
    %v2906 = vsel %vm2898, 9, %v2791
    %v2907 = vsel %vm2899, 9, %v2792
    %v2908 = vsel %vm2888, 1.0, %v2793
    %v2909 = vsel %vm2889, 1.0, %v2794
    %v2910 = vsel %vm2890, 1.0, %v2795
    %v2911 = vsel %vm2891, 1.0, %v2796
    %s2912 = sadd.s32 %s1876, 10
    %s2913 = smul.u32 %s2912, 12
    %s2914 = sld [smem:[#allocation2 + %s2913]]
    %s2915 = sadd.s32 %s2913, 1
    %s2916 = sld [smem:[#allocation2 + %s2915]]
    %s2917 = sadd.s32 %s2913, 2
    %s2918 = sld [smem:[#allocation2 + %s2917]]
    %s2919 = sadd.s32 %s2913, 3
    %s2920 = sld [smem:[#allocation2 + %s2919]]
    %s2921 = sadd.s32 %s2913, 4
    %s2922 = sld [smem:[#allocation2 + %s2921]]
    %s2923 = sadd.s32 %s2913, 5
    %s2924 = sld [smem:[#allocation2 + %s2923]]
    %s2925 = sadd.s32 %s2913, 6
    %s2926 = sld [smem:[#allocation2 + %s2925]]
    %s2927 = sadd.s32 %s2913, 7
    %s2928 = sld [smem:[#allocation2 + %s2927]]
    %s2929 = sadd.s32 %s2913, 8
    %s2930 = sld [smem:[#allocation2 + %s2929]]
    %v2931 = vstv %s2914
    %v2932 = vmul.f32 %v2931, %v39
    %v2933 = vstv %s2916
    %v2934 = vmul.f32 %v2933, %v44
    %v2935 = vmul.f32 %v2933, %v45
    %v2936 = vmul.f32 %v2933, %v46
    %v2937 = vmul.f32 %v2933, %v47
    %v2938 = vadd.f32 %v2932, %v2934
    %v2939 = vadd.f32 %v2932, %v2935
    %v2940 = vadd.f32 %v2932, %v2936
    %v2941 = vadd.f32 %v2932, %v2937
    %v2942 = vstv %s2918
    %v2943 = vadd.f32 %v2938, %v2942
    %v2944 = vadd.f32 %v2939, %v2942
    %v2945 = vadd.f32 %v2940, %v2942
    %v2946 = vadd.f32 %v2941, %v2942
    %v2947 = vstv %s2920
    %v2948 = vmul.f32 %v2947, %v39
    %v2949 = vstv %s2922
    %v2950 = vmul.f32 %v2949, %v44
    %v2951 = vmul.f32 %v2949, %v45
    %v2952 = vmul.f32 %v2949, %v46
    %v2953 = vmul.f32 %v2949, %v47
    %v2954 = vadd.f32 %v2948, %v2950
    %v2955 = vadd.f32 %v2948, %v2951
    %v2956 = vadd.f32 %v2948, %v2952
    %v2957 = vadd.f32 %v2948, %v2953
    %v2958 = vstv %s2924
    %v2959 = vadd.f32 %v2954, %v2958
    %v2960 = vadd.f32 %v2955, %v2958
    %v2961 = vadd.f32 %v2956, %v2958
    %v2962 = vadd.f32 %v2957, %v2958
    %v2963 = vsub.f32 1.0, %v2943
    %v2964 = vsub.f32 1.0, %v2944
    %v2965 = vsub.f32 1.0, %v2945
    %v2966 = vsub.f32 1.0, %v2946
    %v2967 = vsub.f32 %v2963, %v2959
    %v2968 = vsub.f32 %v2964, %v2960
    %v2969 = vsub.f32 %v2965, %v2961
    %v2970 = vsub.f32 %v2966, %v2962
    %v2971 = vstv %s2926
    %v2972 = vmul.f32 %v2971, %v39
    %v2973 = vstv %s2928
    %v2974 = vmul.f32 %v2973, %v44
    %v2975 = vmul.f32 %v2973, %v45
    %v2976 = vmul.f32 %v2973, %v46
    %v2977 = vmul.f32 %v2973, %v47
    %v2978 = vadd.f32 %v2972, %v2974
    %v2979 = vadd.f32 %v2972, %v2975
    %v2980 = vadd.f32 %v2972, %v2976
    %v2981 = vadd.f32 %v2972, %v2977
    %v2982 = vstv %s2930
    %v2983 = vadd.f32 %v2978, %v2982
    %v2984 = vadd.f32 %v2979, %v2982
    %v2985 = vadd.f32 %v2980, %v2982
    %v2986 = vadd.f32 %v2981, %v2982
    %vm2987 = vcmp.ge.f32.partialorder %v2943, 0.0
    %vm2988 = vcmp.ge.f32.partialorder %v2944, 0.0
    %vm2989 = vcmp.ge.f32.partialorder %v2945, 0.0
    %vm2990 = vcmp.ge.f32.partialorder %v2946, 0.0
    %vm2991 = vcmp.ge.f32.partialorder %v2959, 0.0
    %vm2992 = vcmp.ge.f32.partialorder %v2960, 0.0
    %vm2993 = vcmp.ge.f32.partialorder %v2961, 0.0
    %vm2994 = vcmp.ge.f32.partialorder %v2962, 0.0
    %vm2995 = vmand %vm2987, %vm2991
    %vm2996 = vmand %vm2988, %vm2992
    %vm2997 = vmand %vm2989, %vm2993
    %vm2998 = vmand %vm2990, %vm2994
    %vm2999 = vcmp.ge.f32.partialorder %v2967, 0.0
    %vm3000 = vcmp.ge.f32.partialorder %v2968, 0.0
    %vm3001 = vcmp.ge.f32.partialorder %v2969, 0.0
    %vm3002 = vcmp.ge.f32.partialorder %v2970, 0.0
    %vm3003 = vmand %vm2995, %vm2999
    %vm3004 = vmand %vm2996, %vm3000
    %vm3005 = vmand %vm2997, %vm3001
    %vm3006 = vmand %vm2998, %vm3002
    %vm3007 = vcmp.lt.f32.partialorder %v2983, %v2900
    %vm3008 = vcmp.lt.f32.partialorder %v2984, %v2901
    %vm3009 = vcmp.lt.f32.partialorder %v2985, %v2902
    %vm3010 = vcmp.lt.f32.partialorder %v2986, %v2903
    %vm3011 = vmand %vm3003, %vm3007
    %vm3012 = vmand %vm3004, %vm3008
    %vm3013 = vmand %vm3005, %vm3009
    %vm3014 = vmand %vm3006, %vm3010
    %v3015 = vsel %vm3011, %v2983, %v2900
    %v3016 = vsel %vm3012, %v2984, %v2901
    %v3017 = vsel %vm3013, %v2985, %v2902
    %v3018 = vsel %vm3014, %v2986, %v2903
    %v3019 = vsel %vm3011, 10, %v2904
    %v3020 = vsel %vm3012, 10, %v2905
    %v3021 = vsel %vm3013, 10, %v2906
    %v3022 = vsel %vm3014, 10, %v2907
    %v3023 = vsel %vm3003, 1.0, %v2908
    %v3024 = vsel %vm3004, 1.0, %v2909
    %v3025 = vsel %vm3005, 1.0, %v2910
    %v3026 = vsel %vm3006, 1.0, %v2911
    %s3027 = sadd.s32 %s1876, 11
    %s3028 = smul.u32 %s3027, 12
    %s3029 = sld [smem:[#allocation2 + %s3028]]
    %s3030 = sadd.s32 %s3028, 1
    %s3031 = sld [smem:[#allocation2 + %s3030]]
    %s3032 = sadd.s32 %s3028, 2
    %s3033 = sld [smem:[#allocation2 + %s3032]]
    %s3034 = sadd.s32 %s3028, 3
    %s3035 = sld [smem:[#allocation2 + %s3034]]
    %s3036 = sadd.s32 %s3028, 4
    %s3037 = sld [smem:[#allocation2 + %s3036]]
    %s3038 = sadd.s32 %s3028, 5
    %s3039 = sld [smem:[#allocation2 + %s3038]]
    %s3040 = sadd.s32 %s3028, 6
    %s3041 = sld [smem:[#allocation2 + %s3040]]
    %s3042 = sadd.s32 %s3028, 7
    %s3043 = sld [smem:[#allocation2 + %s3042]]
    %s3044 = sadd.s32 %s3028, 8
    %s3045 = sld [smem:[#allocation2 + %s3044]]
    %v3046 = vstv %s3029
    %v3047 = vmul.f32 %v3046, %v39
    %v3048 = vstv %s3031
    %v3049 = vmul.f32 %v3048, %v44
    %v3050 = vmul.f32 %v3048, %v45
    %v3051 = vmul.f32 %v3048, %v46
    %v3052 = vmul.f32 %v3048, %v47
    %v3053 = vadd.f32 %v3047, %v3049
    %v3054 = vadd.f32 %v3047, %v3050
    %v3055 = vadd.f32 %v3047, %v3051
    %v3056 = vadd.f32 %v3047, %v3052
    %v3057 = vstv %s3033
    %v3058 = vadd.f32 %v3053, %v3057
    %v3059 = vadd.f32 %v3054, %v3057
    %v3060 = vadd.f32 %v3055, %v3057
    %v3061 = vadd.f32 %v3056, %v3057
    %v3062 = vstv %s3035
    %v3063 = vmul.f32 %v3062, %v39
    %v3064 = vstv %s3037
    %v3065 = vmul.f32 %v3064, %v44
    %v3066 = vmul.f32 %v3064, %v45
    %v3067 = vmul.f32 %v3064, %v46
    %v3068 = vmul.f32 %v3064, %v47
    %v3069 = vadd.f32 %v3063, %v3065
    %v3070 = vadd.f32 %v3063, %v3066
    %v3071 = vadd.f32 %v3063, %v3067
    %v3072 = vadd.f32 %v3063, %v3068
    %v3073 = vstv %s3039
    %v3074 = vadd.f32 %v3069, %v3073
    %v3075 = vadd.f32 %v3070, %v3073
    %v3076 = vadd.f32 %v3071, %v3073
    %v3077 = vadd.f32 %v3072, %v3073
    %v3078 = vsub.f32 1.0, %v3058
    %v3079 = vsub.f32 1.0, %v3059
    %v3080 = vsub.f32 1.0, %v3060
    %v3081 = vsub.f32 1.0, %v3061
    %v3082 = vsub.f32 %v3078, %v3074
    %v3083 = vsub.f32 %v3079, %v3075
    %v3084 = vsub.f32 %v3080, %v3076
    %v3085 = vsub.f32 %v3081, %v3077
    %v3086 = vstv %s3041
    %v3087 = vmul.f32 %v3086, %v39
    %v3088 = vstv %s3043
    %v3089 = vmul.f32 %v3088, %v44
    %v3090 = vmul.f32 %v3088, %v45
    %v3091 = vmul.f32 %v3088, %v46
    %v3092 = vmul.f32 %v3088, %v47
    %v3093 = vadd.f32 %v3087, %v3089
    %v3094 = vadd.f32 %v3087, %v3090
    %v3095 = vadd.f32 %v3087, %v3091
    %v3096 = vadd.f32 %v3087, %v3092
    %v3097 = vstv %s3045
    %v3098 = vadd.f32 %v3093, %v3097
    %v3099 = vadd.f32 %v3094, %v3097
    %v3100 = vadd.f32 %v3095, %v3097
    %v3101 = vadd.f32 %v3096, %v3097
    %vm3102 = vcmp.ge.f32.partialorder %v3058, 0.0
    %vm3103 = vcmp.ge.f32.partialorder %v3059, 0.0
    %vm3104 = vcmp.ge.f32.partialorder %v3060, 0.0
    %vm3105 = vcmp.ge.f32.partialorder %v3061, 0.0
    %vm3106 = vcmp.ge.f32.partialorder %v3074, 0.0
    %vm3107 = vcmp.ge.f32.partialorder %v3075, 0.0
    %vm3108 = vcmp.ge.f32.partialorder %v3076, 0.0
    %vm3109 = vcmp.ge.f32.partialorder %v3077, 0.0
    %vm3110 = vmand %vm3102, %vm3106
    %vm3111 = vmand %vm3103, %vm3107
    %vm3112 = vmand %vm3104, %vm3108
    %vm3113 = vmand %vm3105, %vm3109
    %vm3114 = vcmp.ge.f32.partialorder %v3082, 0.0
    %vm3115 = vcmp.ge.f32.partialorder %v3083, 0.0
    %vm3116 = vcmp.ge.f32.partialorder %v3084, 0.0
    %vm3117 = vcmp.ge.f32.partialorder %v3085, 0.0
    %vm3118 = vmand %vm3110, %vm3114
    %vm3119 = vmand %vm3111, %vm3115
    %vm3120 = vmand %vm3112, %vm3116
    %vm3121 = vmand %vm3113, %vm3117
    %vm3122 = vcmp.lt.f32.partialorder %v3098, %v3015
    %vm3123 = vcmp.lt.f32.partialorder %v3099, %v3016
    %vm3124 = vcmp.lt.f32.partialorder %v3100, %v3017
    %vm3125 = vcmp.lt.f32.partialorder %v3101, %v3018
    %vm3126 = vmand %vm3118, %vm3122
    %vm3127 = vmand %vm3119, %vm3123
    %vm3128 = vmand %vm3120, %vm3124
    %vm3129 = vmand %vm3121, %vm3125
    %v3130 = vsel %vm3126, %v3098, %v3015
    %v3131 = vsel %vm3127, %v3099, %v3016
    %v3132 = vsel %vm3128, %v3100, %v3017
    %v3133 = vsel %vm3129, %v3101, %v3018
    %v3134 = vsel %vm3126, 11, %v3019
    %v3135 = vsel %vm3127, 11, %v3020
    %v3136 = vsel %vm3128, 11, %v3021
    %v3137 = vsel %vm3129, 11, %v3022
    %v3138 = vsel %vm3118, 1.0, %v3023
    %v3139 = vsel %vm3119, 1.0, %v3024
    %v3140 = vsel %vm3120, 1.0, %v3025
    %v3141 = vsel %vm3121, 1.0, %v3026
    %vm3142 = vcmp.eq.s32.totalorder %v3134, 0
    %vm3143 = vcmp.eq.s32.totalorder %v3135, 0
    %vm3144 = vcmp.eq.s32.totalorder %v3136, 0
    %vm3145 = vcmp.eq.s32.totalorder %v3137, 0
    %s3146 = sadd.s32 %s1762, 9
    %s3147 = sld [smem:[#allocation2 + %s3146]]
    %v3148 = vstv %s3147
    %v3149 = vsel %vm3142, %v3148, 1.0
    %v3150 = vsel %vm3143, %v3148, 1.0
    %v3151 = vsel %vm3144, %v3148, 1.0
    %v3152 = vsel %vm3145, %v3148, 1.0
    %s3153 = sadd.s32 %s1762, 10
    %s3154 = sld [smem:[#allocation2 + %s3153]]
    %v3155 = vstv %s3154
    %v3156 = vsel %vm3142, %v3155, 1.0
    %v3157 = vsel %vm3143, %v3155, 1.0
    %v3158 = vsel %vm3144, %v3155, 1.0
    %v3159 = vsel %vm3145, %v3155, 1.0
    %s3160 = sadd.s32 %s1762, 11
    %s3161 = sld [smem:[#allocation2 + %s3160]]
    %v3162 = vstv %s3161
    %v3163 = vsel %vm3142, %v3162, 1.0
    %v3164 = vsel %vm3143, %v3162, 1.0
    %v3165 = vsel %vm3144, %v3162, 1.0
    %v3166 = vsel %vm3145, %v3162, 1.0
    %vm3167 = vcmp.eq.s32.totalorder %v3134, 1
    %vm3168 = vcmp.eq.s32.totalorder %v3135, 1
    %vm3169 = vcmp.eq.s32.totalorder %v3136, 1
    %vm3170 = vcmp.eq.s32.totalorder %v3137, 1
    %s3171 = sadd.s32 %s1878, 9
    %s3172 = sld [smem:[#allocation2 + %s3171]]
    %v3173 = vstv %s3172
    %v3174 = vsel %vm3167, %v3173, %v3149
    %v3175 = vsel %vm3168, %v3173, %v3150
    %v3176 = vsel %vm3169, %v3173, %v3151
    %v3177 = vsel %vm3170, %v3173, %v3152
    %s3178 = sadd.s32 %s1878, 10
    %s3179 = sld [smem:[#allocation2 + %s3178]]
    %v3180 = vstv %s3179
    %v3181 = vsel %vm3167, %v3180, %v3156
    %v3182 = vsel %vm3168, %v3180, %v3157
    %v3183 = vsel %vm3169, %v3180, %v3158
    %v3184 = vsel %vm3170, %v3180, %v3159
    %s3185 = sadd.s32 %s1878, 11
    %s3186 = sld [smem:[#allocation2 + %s3185]]
    %v3187 = vstv %s3186
    %v3188 = vsel %vm3167, %v3187, %v3163
    %v3189 = vsel %vm3168, %v3187, %v3164
    %v3190 = vsel %vm3169, %v3187, %v3165
    %v3191 = vsel %vm3170, %v3187, %v3166
    %vm3192 = vcmp.eq.s32.totalorder %v3134, 2
    %vm3193 = vcmp.eq.s32.totalorder %v3135, 2
    %vm3194 = vcmp.eq.s32.totalorder %v3136, 2
    %vm3195 = vcmp.eq.s32.totalorder %v3137, 2
    %s3196 = sadd.s32 %s1993, 9
    %s3197 = sld [smem:[#allocation2 + %s3196]]
    %v3198 = vstv %s3197
    %v3199 = vsel %vm3192, %v3198, %v3174
    %v3200 = vsel %vm3193, %v3198, %v3175
    %v3201 = vsel %vm3194, %v3198, %v3176
    %v3202 = vsel %vm3195, %v3198, %v3177
    %s3203 = sadd.s32 %s1993, 10
    %s3204 = sld [smem:[#allocation2 + %s3203]]
    %v3205 = vstv %s3204
    %v3206 = vsel %vm3192, %v3205, %v3181
    %v3207 = vsel %vm3193, %v3205, %v3182
    %v3208 = vsel %vm3194, %v3205, %v3183
    %v3209 = vsel %vm3195, %v3205, %v3184
    %s3210 = sadd.s32 %s1993, 11
    %s3211 = sld [smem:[#allocation2 + %s3210]]
    %v3212 = vstv %s3211
    %v3213 = vsel %vm3192, %v3212, %v3188
    %v3214 = vsel %vm3193, %v3212, %v3189
    %v3215 = vsel %vm3194, %v3212, %v3190
    %v3216 = vsel %vm3195, %v3212, %v3191
    %vm3217 = vcmp.eq.s32.totalorder %v3134, 3
    %vm3218 = vcmp.eq.s32.totalorder %v3135, 3
    %vm3219 = vcmp.eq.s32.totalorder %v3136, 3
    %vm3220 = vcmp.eq.s32.totalorder %v3137, 3
    %s3221 = sadd.s32 %s2108, 9
    %s3222 = sld [smem:[#allocation2 + %s3221]]
    %v3223 = vstv %s3222
    %v3224 = vsel %vm3217, %v3223, %v3199
    %v3225 = vsel %vm3218, %v3223, %v3200
    %v3226 = vsel %vm3219, %v3223, %v3201
    %v3227 = vsel %vm3220, %v3223, %v3202
    %s3228 = sadd.s32 %s2108, 10
    %s3229 = sld [smem:[#allocation2 + %s3228]]
    %v3230 = vstv %s3229
    %v3231 = vsel %vm3217, %v3230, %v3206
    %v3232 = vsel %vm3218, %v3230, %v3207
    %v3233 = vsel %vm3219, %v3230, %v3208
    %v3234 = vsel %vm3220, %v3230, %v3209
    %s3235 = sadd.s32 %s2108, 11
    %s3236 = sld [smem:[#allocation2 + %s3235]]
    %v3237 = vstv %s3236
    %v3238 = vsel %vm3217, %v3237, %v3213
    %v3239 = vsel %vm3218, %v3237, %v3214
    %v3240 = vsel %vm3219, %v3237, %v3215
    %v3241 = vsel %vm3220, %v3237, %v3216
    %vm3242 = vcmp.eq.s32.totalorder %v3134, 4
    %vm3243 = vcmp.eq.s32.totalorder %v3135, 4
    %vm3244 = vcmp.eq.s32.totalorder %v3136, 4
    %vm3245 = vcmp.eq.s32.totalorder %v3137, 4
    %s3246 = sadd.s32 %s2223, 9
    %s3247 = sld [smem:[#allocation2 + %s3246]]
    %v3248 = vstv %s3247
    %v3249 = vsel %vm3242, %v3248, %v3224
    %v3250 = vsel %vm3243, %v3248, %v3225
    %v3251 = vsel %vm3244, %v3248, %v3226
    %v3252 = vsel %vm3245, %v3248, %v3227
    %s3253 = sadd.s32 %s2223, 10
    %s3254 = sld [smem:[#allocation2 + %s3253]]
    %v3255 = vstv %s3254
    %v3256 = vsel %vm3242, %v3255, %v3231
    %v3257 = vsel %vm3243, %v3255, %v3232
    %v3258 = vsel %vm3244, %v3255, %v3233
    %v3259 = vsel %vm3245, %v3255, %v3234
    %s3260 = sadd.s32 %s2223, 11
    %s3261 = sld [smem:[#allocation2 + %s3260]]
    %v3262 = vstv %s3261
    %v3263 = vsel %vm3242, %v3262, %v3238
    %v3264 = vsel %vm3243, %v3262, %v3239
    %v3265 = vsel %vm3244, %v3262, %v3240
    %v3266 = vsel %vm3245, %v3262, %v3241
    %vm3267 = vcmp.eq.s32.totalorder %v3134, 5
    %vm3268 = vcmp.eq.s32.totalorder %v3135, 5
    %vm3269 = vcmp.eq.s32.totalorder %v3136, 5
    %vm3270 = vcmp.eq.s32.totalorder %v3137, 5
    %s3271 = sadd.s32 %s2338, 9
    %s3272 = sld [smem:[#allocation2 + %s3271]]
    %v3273 = vstv %s3272
    %v3274 = vsel %vm3267, %v3273, %v3249
    %v3275 = vsel %vm3268, %v3273, %v3250
    %v3276 = vsel %vm3269, %v3273, %v3251
    %v3277 = vsel %vm3270, %v3273, %v3252
    %s3278 = sadd.s32 %s2338, 10
    %s3279 = sld [smem:[#allocation2 + %s3278]]
    %v3280 = vstv %s3279
    %v3281 = vsel %vm3267, %v3280, %v3256
    %v3282 = vsel %vm3268, %v3280, %v3257
    %v3283 = vsel %vm3269, %v3280, %v3258
    %v3284 = vsel %vm3270, %v3280, %v3259
    %s3285 = sadd.s32 %s2338, 11
    %s3286 = sld [smem:[#allocation2 + %s3285]]
    %v3287 = vstv %s3286
    %v3288 = vsel %vm3267, %v3287, %v3263
    %v3289 = vsel %vm3268, %v3287, %v3264
    %v3290 = vsel %vm3269, %v3287, %v3265
    %v3291 = vsel %vm3270, %v3287, %v3266
    %vm3292 = vcmp.eq.s32.totalorder %v3134, 6
    %vm3293 = vcmp.eq.s32.totalorder %v3135, 6
    %vm3294 = vcmp.eq.s32.totalorder %v3136, 6
    %vm3295 = vcmp.eq.s32.totalorder %v3137, 6
    %s3296 = sadd.s32 %s2453, 9
    %s3297 = sld [smem:[#allocation2 + %s3296]]
    %v3298 = vstv %s3297
    %v3299 = vsel %vm3292, %v3298, %v3274
    %v3300 = vsel %vm3293, %v3298, %v3275
    %v3301 = vsel %vm3294, %v3298, %v3276
    %v3302 = vsel %vm3295, %v3298, %v3277
    %s3303 = sadd.s32 %s2453, 10
    %s3304 = sld [smem:[#allocation2 + %s3303]]
    %v3305 = vstv %s3304
    %v3306 = vsel %vm3292, %v3305, %v3281
    %v3307 = vsel %vm3293, %v3305, %v3282
    %v3308 = vsel %vm3294, %v3305, %v3283
    %v3309 = vsel %vm3295, %v3305, %v3284
    %s3310 = sadd.s32 %s2453, 11
    %s3311 = sld [smem:[#allocation2 + %s3310]]
    %v3312 = vstv %s3311
    %v3313 = vsel %vm3292, %v3312, %v3288
    %v3314 = vsel %vm3293, %v3312, %v3289
    %v3315 = vsel %vm3294, %v3312, %v3290
    %v3316 = vsel %vm3295, %v3312, %v3291
    %vm3317 = vcmp.eq.s32.totalorder %v3134, 7
    %vm3318 = vcmp.eq.s32.totalorder %v3135, 7
    %vm3319 = vcmp.eq.s32.totalorder %v3136, 7
    %vm3320 = vcmp.eq.s32.totalorder %v3137, 7
    %s3321 = sadd.s32 %s2568, 9
    %s3322 = sld [smem:[#allocation2 + %s3321]]
    %v3323 = vstv %s3322
    %v3324 = vsel %vm3317, %v3323, %v3299
    %v3325 = vsel %vm3318, %v3323, %v3300
    %v3326 = vsel %vm3319, %v3323, %v3301
    %v3327 = vsel %vm3320, %v3323, %v3302
    %s3328 = sadd.s32 %s2568, 10
    %s3329 = sld [smem:[#allocation2 + %s3328]]
    %v3330 = vstv %s3329
    %v3331 = vsel %vm3317, %v3330, %v3306
    %v3332 = vsel %vm3318, %v3330, %v3307
    %v3333 = vsel %vm3319, %v3330, %v3308
    %v3334 = vsel %vm3320, %v3330, %v3309
    %s3335 = sadd.s32 %s2568, 11
    %s3336 = sld [smem:[#allocation2 + %s3335]]
    %v3337 = vstv %s3336
    %v3338 = vsel %vm3317, %v3337, %v3313
    %v3339 = vsel %vm3318, %v3337, %v3314
    %v3340 = vsel %vm3319, %v3337, %v3315
    %v3341 = vsel %vm3320, %v3337, %v3316
    %vm3342 = vcmp.eq.s32.totalorder %v3134, 8
    %vm3343 = vcmp.eq.s32.totalorder %v3135, 8
    %vm3344 = vcmp.eq.s32.totalorder %v3136, 8
    %vm3345 = vcmp.eq.s32.totalorder %v3137, 8
    %s3346 = sadd.s32 %s2683, 9
    %s3347 = sld [smem:[#allocation2 + %s3346]]
    %v3348 = vstv %s3347
    %v3349 = vsel %vm3342, %v3348, %v3324
    %v3350 = vsel %vm3343, %v3348, %v3325
    %v3351 = vsel %vm3344, %v3348, %v3326
    %v3352 = vsel %vm3345, %v3348, %v3327
    %s3353 = sadd.s32 %s2683, 10
    %s3354 = sld [smem:[#allocation2 + %s3353]]
    %v3355 = vstv %s3354
    %v3356 = vsel %vm3342, %v3355, %v3331
    %v3357 = vsel %vm3343, %v3355, %v3332
    %v3358 = vsel %vm3344, %v3355, %v3333
    %v3359 = vsel %vm3345, %v3355, %v3334
    %s3360 = sadd.s32 %s2683, 11
    %s3361 = sld [smem:[#allocation2 + %s3360]]
    %v3362 = vstv %s3361
    %v3363 = vsel %vm3342, %v3362, %v3338
    %v3364 = vsel %vm3343, %v3362, %v3339
    %v3365 = vsel %vm3344, %v3362, %v3340
    %v3366 = vsel %vm3345, %v3362, %v3341
    %vm3367 = vcmp.eq.s32.totalorder %v3134, 9
    %vm3368 = vcmp.eq.s32.totalorder %v3135, 9
    %vm3369 = vcmp.eq.s32.totalorder %v3136, 9
    %vm3370 = vcmp.eq.s32.totalorder %v3137, 9
    %s3371 = sadd.s32 %s2798, 9
    %s3372 = sld [smem:[#allocation2 + %s3371]]
    %v3373 = vstv %s3372
    %v3374 = vsel %vm3367, %v3373, %v3349
    %v3375 = vsel %vm3368, %v3373, %v3350
    %v3376 = vsel %vm3369, %v3373, %v3351
    %v3377 = vsel %vm3370, %v3373, %v3352
    %s3378 = sadd.s32 %s2798, 10
    %s3379 = sld [smem:[#allocation2 + %s3378]]
    %v3380 = vstv %s3379
    %v3381 = vsel %vm3367, %v3380, %v3356
    %v3382 = vsel %vm3368, %v3380, %v3357
    %v3383 = vsel %vm3369, %v3380, %v3358
    %v3384 = vsel %vm3370, %v3380, %v3359
    %s3385 = sadd.s32 %s2798, 11
    %s3386 = sld [smem:[#allocation2 + %s3385]]
    %v3387 = vstv %s3386
    %v3388 = vsel %vm3367, %v3387, %v3363
    %v3389 = vsel %vm3368, %v3387, %v3364
    %v3390 = vsel %vm3369, %v3387, %v3365
    %v3391 = vsel %vm3370, %v3387, %v3366
    %vm3392 = vcmp.eq.s32.totalorder %v3134, 10
    %vm3393 = vcmp.eq.s32.totalorder %v3135, 10
    %vm3394 = vcmp.eq.s32.totalorder %v3136, 10
    %vm3395 = vcmp.eq.s32.totalorder %v3137, 10
    %s3396 = sadd.s32 %s2913, 9
    %s3397 = sld [smem:[#allocation2 + %s3396]]
    %v3398 = vstv %s3397
    %v3399 = vsel %vm3392, %v3398, %v3374
    %v3400 = vsel %vm3393, %v3398, %v3375
    %v3401 = vsel %vm3394, %v3398, %v3376
    %v3402 = vsel %vm3395, %v3398, %v3377
    %s3403 = sadd.s32 %s2913, 10
    %s3404 = sld [smem:[#allocation2 + %s3403]]
    %v3405 = vstv %s3404
    %v3406 = vsel %vm3392, %v3405, %v3381
    %v3407 = vsel %vm3393, %v3405, %v3382
    %v3408 = vsel %vm3394, %v3405, %v3383
    %v3409 = vsel %vm3395, %v3405, %v3384
    %s3410 = sadd.s32 %s2913, 11
    %s3411 = sld [smem:[#allocation2 + %s3410]]
    %v3412 = vstv %s3411
    %v3413 = vsel %vm3392, %v3412, %v3388
    %v3414 = vsel %vm3393, %v3412, %v3389
    %v3415 = vsel %vm3394, %v3412, %v3390
    %v3416 = vsel %vm3395, %v3412, %v3391
    %vm3417 = vcmp.eq.s32.totalorder %v3134, 11
    %vm3418 = vcmp.eq.s32.totalorder %v3135, 11
    %vm3419 = vcmp.eq.s32.totalorder %v3136, 11
    %vm3420 = vcmp.eq.s32.totalorder %v3137, 11
    %s3421 = sadd.s32 %s3028, 9
    %s3422 = sld [smem:[#allocation2 + %s3421]]
    %v3423 = vstv %s3422
    %v3424 = vsel %vm3417, %v3423, %v3399
    %v3425 = vsel %vm3418, %v3423, %v3400
    %v3426 = vsel %vm3419, %v3423, %v3401
    %v3427 = vsel %vm3420, %v3423, %v3402
    %s3428 = sadd.s32 %s3028, 10
    %s3429 = sld [smem:[#allocation2 + %s3428]]
    %v3430 = vstv %s3429
    %v3431 = vsel %vm3417, %v3430, %v3406
    %v3432 = vsel %vm3418, %v3430, %v3407
    %v3433 = vsel %vm3419, %v3430, %v3408
    %v3434 = vsel %vm3420, %v3430, %v3409
    %s3435 = sadd.s32 %s3028, 11
    %s3436 = sld [smem:[#allocation2 + %s3435]]
    %v3437 = vstv %s3436
    %v3438 = vsel %vm3417, %v3437, %v3413
    %v3439 = vsel %vm3418, %v3437, %v3414
    %v3440 = vsel %vm3419, %v3437, %v3415
    %v3441 = vsel %vm3420, %v3437, %v3416
    %s3442 = scalar_lea.vmem %s1, 160
    %3443 = vst [vmem:[%s3442] sm:$0xff] %v3424
    %3444 = vst [vmem:[%s3442 + $0x8] sm:$0xff] %v3425
    %3445 = vst [vmem:[%s3442 + $0x10] sm:$0xff] %v3426
    %3446 = vst [vmem:[%s3442 + $0x18] sm:$0xff] %v3427
    %s3447 = scalar_lea.vmem %s1, 192
    %3448 = vst [vmem:[%s3447] sm:$0xff] %v3431
    %3449 = vst [vmem:[%s3447 + $0x8] sm:$0xff] %v3432
    %3450 = vst [vmem:[%s3447 + $0x10] sm:$0xff] %v3433
    %3451 = vst [vmem:[%s3447 + $0x18] sm:$0xff] %v3434
    %s3452 = scalar_lea.vmem %s1, 224
    %3453 = vst [vmem:[%s3452] sm:$0xff] %v3438
    %3454 = vst [vmem:[%s3452 + $0x8] sm:$0xff] %v3439
    %3455 = vst [vmem:[%s3452 + $0x10] sm:$0xff] %v3440
    %3456 = vst [vmem:[%s3452 + $0x18] sm:$0xff] %v3441
    %vm3457 = vcmp.gt.f32.partialorder %v3130, 5e+08
    %vm3458 = vcmp.gt.f32.partialorder %v3131, 5e+08
    %vm3459 = vcmp.gt.f32.partialorder %v3132, 5e+08
    %vm3460 = vcmp.gt.f32.partialorder %v3133, 5e+08
    %v3461 = vsel %vm3457, -1.0, %v3130
    %v3462 = vsel %vm3458, -1.0, %v3131
    %v3463 = vsel %vm3459, -1.0, %v3132
    %v3464 = vsel %vm3460, -1.0, %v3133
    %s3465 = scalar_lea.vmem %s1, 256
    %3466 = vst [vmem:[%s3465] sm:$0xff] %v3461
    %3467 = vst [vmem:[%s3465 + $0x8] sm:$0xff] %v3462
    %3468 = vst [vmem:[%s3465 + $0x10] sm:$0xff] %v3463
    %3469 = vst [vmem:[%s3465 + $0x18] sm:$0xff] %v3464
    %s3470 = scalar_lea.vmem %s1, 288
    %3471 = vst [vmem:[%s3470] sm:$0xff] %v3138
    %3472 = vst [vmem:[%s3470 + $0x8] sm:$0xff] %v3139
    %3473 = vst [vmem:[%s3470 + $0x10] sm:$0xff] %v3140
    %3474 = vst [vmem:[%s3470 + $0x18] sm:$0xff] %v3141
    // Predicated region
    $region10: #{drender_forward.1} parent=1 // pred_check
      _
    $region11: #{drender_forward.1} parent=1 // pred_check_branch
      %3476 = sbr.rel (0) target = $region13
    $region12: #{drender_forward.1} parent=1 // pred_region
      _
    $region13: #{drender_forward.1} parent=1 // pred_fallthru
      _
    // Predicated region
    $region14: #{drender_forward.1} parent=1 // pred_check
      _
    $region15: #{drender_forward.1} parent=1 // pred_check_branch
      %3478 = sbr.rel (0) target = $region17
    $region16: #{drender_forward.1} parent=1 // pred_region
      _
    $region17: #{drender_forward.1} parent=1 // pred_fallthru
      _
    %3479 = vsyncpa [#allocation3], 1

</llo_original>
